<compile_context>
chip_gen: v5e
topology: v5e:2x2
jax: 0.10.0
libtpu: 0.0.40
codegen_flags: <defaults>
</compile_context>

<pallas_src>
import jax
import jax.numpy as jnp
from jax.experimental import pallas as pl
from jax.experimental.pallas import tpu as pltpu


# ----------------------------------------------------------------------------
# Kernel
# ----------------------------------------------------------------------------
def _mlp_kernel(x_ref, wgu_ref, wd_ref, o_ref):
    """One token-tile of the fused SwiGLU MLP (weights VMEM-resident).

    x_ref   : [tile_t, H]   bf16
    wgu_ref : [H, 2*I]      bf16   (gate | up packed side by side, constant block)
    wd_ref  : [I, H]        bf16   (constant block)
    o_ref   : [tile_t, H]   bf16
    """
    x = x_ref[...]                                                       # [tt, H] bf16
    # One fused MXU dot produces both the gate and the up projection.
    gu = jnp.dot(x, wgu_ref[...], preferred_element_type=jnp.float32)   # [tt, 2I] f32
    i = gu.shape[1] // 2
    g = gu[:, :i]
    u = gu[:, i:]
    h = (g * jax.nn.sigmoid(g)) * u                                      # SiLU(g)*u, f32
    out = jnp.dot(h.astype(wd_ref.dtype), wd_ref[...],
                  preferred_element_type=jnp.float32)                    # [tt, H] f32
    o_ref[...] = out.astype(o_ref.dtype)                                 # bf16 store


# ----------------------------------------------------------------------------
# Load-time weight packing (hoisted out of the forward path)
# ----------------------------------------------------------------------------
def pack_mlp_weights(wg_pt, wu_pt, wd_pt, dtype=jnp.bfloat16):
    """Pre-cast / pre-pack the SwiGLU weights ONCE (not per forward call).

    wg_pt, wu_pt : [I, H]  (PyTorch nn.Linear (out, in) layout)
    wd_pt        : [H, I]
    Returns:
      wgu : [H, 2*I]  = [ gate | up ] columns, `dtype`
      wd  : [I, H]                         `dtype`
    """
    wgu = jnp.concatenate([wg_pt.T, wu_pt.T], axis=1).astype(dtype)
    wd = wd_pt.T.astype(dtype)
    return wgu, wd


# ----------------------------------------------------------------------------
# Forward wrapper (activation glue only)
# ----------------------------------------------------------------------------
def _round_up(x, m):
    return ((x + m - 1) // m) * m


def _choose_tile_t(T, max_tile=512):
    """Pick a token-tile size: small T -> whole thing; otherwise guarantee
    >=2 tiles so v7x's two TensorCores both get work; cap for prefill."""
    if T <= 16:
        return _round_up(max(T, 8), 8)
    if T <= 2 * max_tile:
        return _round_up(-(-T // 2), 16)          # ~T/2, bf16-sublane aligned
    return max_tile


def llama_mlp(x, wgu, wd, *, max_tile_t=512):
    """x: [T, H] any float dtype; wgu: [H, 2I] bf16; wd: [I, H] bf16 -> [T, H] bf16."""
    T, H = x.shape
    I, H2 = wd.shape
    assert H2 == H and wgu.shape == (H, 2 * I), "packed weight shapes mismatch"

    tile_t = _choose_tile_t(T, max_tile_t)
    T_pad = _round_up(T, tile_t)
    n_t = T_pad // tile_t

    xb = x.astype(jnp.bfloat16)
    if T_pad != T:
        xb = jnp.pad(xb, ((0, T_pad - T), (0, 0)))   # pad rows are sliced off below

    out = pl.pallas_call(
        _mlp_kernel,
        out_shape=jax.ShapeDtypeStruct((T_pad, H), jnp.bfloat16),
        grid_spec=pltpu.PrefetchScalarGridSpec(
            num_scalar_prefetch=0,
            grid=(n_t,),                                            # token tiles only
            in_specs=[
                pl.BlockSpec((tile_t, H), lambda t: (t, 0)),        # x tile
                pl.BlockSpec((H, 2 * I), lambda t: (0, 0)),         # [gate|up], resident
                pl.BlockSpec((I, H), lambda t: (0, 0)),             # down,      resident
            ],
            out_specs=pl.BlockSpec((tile_t, H), lambda t: (t, 0)),
        ),
        compiler_params=pltpu.CompilerParams(
            dimension_semantics=("parallel",),                      # megacore over tokens
            vmem_limit_bytes=32 << 20,                              # ~13 MB actual footprint
        ),
    )(xb, wgu, wd)

    return out[:T] if T_pad != T else out


# ----------------------------------------------------------------------------
# Pure-JAX reference (same bf16-weights / f32-accum / bf16-out path)
# ----------------------------------------------------------------------------
def reference_mlp(x, wg_pt, wu_pt, wd_pt):
    xb = x.astype(jnp.bfloat16)
    g = jnp.dot(xb, wg_pt.T.astype(jnp.bfloat16), preferred_element_type=jnp.float32)
    u = jnp.dot(xb, wu_pt.T.astype(jnp.bfloat16), preferred_element_type=jnp.float32)
    h = (jax.nn.silu(g) * u).astype(jnp.bfloat16)
    o = jnp.dot(h, wd_pt.T.astype(jnp.bfloat16), preferred_element_type=jnp.float32)
    return o.astype(jnp.bfloat16)


if __name__ == "__main__":
    # SmolLM2 config dims
    hidden_size = 576
    intermediate_size = 1536
    initializer_range = 0.041666666666666664

    # Small activation shape: batch=2, seq=8
    batch, seq = 2, 8

    key = jax.random.PRNGKey(0)
    kx, kg, ku, kd = jax.random.split(key, 4)

    x = jax.random.normal(kx, (batch, seq, hidden_size), dtype=jnp.float32)

    # PyTorch nn.Linear weights are (out_features, in_features), init N(0, std).
    wg_pt = initializer_range * jax.random.normal(
        kg, (intermediate_size, hidden_size), dtype=jnp.float32)
    wu_pt = initializer_range * jax.random.normal(
        ku, (intermediate_size, hidden_size), dtype=jnp.float32)
    wd_pt = initializer_range * jax.random.normal(
        kd, (hidden_size, intermediate_size), dtype=jnp.float32)

    # --- load-time packing (done ONCE, not in the forward path) ---
    wgu, wd = pack_mlp_weights(wg_pt, wu_pt, wd_pt)

    # --- forward ---
    x2d = x.reshape(batch * seq, hidden_size)     # tokens-major [T, H]
    out = llama_mlp(x2d, wgu, wd)
    out = jax.block_until_ready(out)

    ref = reference_mlp(x2d, wg_pt, wu_pt, wd_pt)
    assert out.shape == (batch * seq, hidden_size)
    assert out.dtype == jnp.bfloat16
    ok = jnp.allclose(out.astype(jnp.float32), ref.astype(jnp.float32),
                      atol=3e-2, rtol=3e-2)
    assert bool(ok), "mismatch vs reference"

    # Restore original [B, S, H] activation shape (glue).
    out = out.reshape(batch, seq, hidden_size)
    jax.block_until_ready(out)
    print("KERNEL_OK")
</pallas_src>

<mosaic_0001>
module attributes {stable_mosaic.version = 11 : i64} {
  func.func @_mlp_kernel(%arg0: i32, %arg1: memref<16x576xbf16, #tpu.memory_space<vmem>>, %arg2: memref<576x3072xbf16, #tpu.memory_space<vmem>>, %arg3: memref<1536x576xbf16, #tpu.memory_space<vmem>>, %arg4: memref<16x576xbf16, #tpu.memory_space<vmem>>) attributes {dimension_semantics = [#tpu.dimension_semantics<parallel>], iteration_bounds = array<i64: 1>, scalar_prefetch = 0 : i64, scratch_operands = 0 : i64, tpu.core_type = #tpu.core_type<tc>, window_params = [{transform_indices = @transform_0, window_bounds = array<i64: 16, 576>}, {pipeline_mode = #tpu.pipeline_mode<synchronous>, transform_indices = @transform_1, window_bounds = array<i64: 576, 3072>}, {pipeline_mode = #tpu.pipeline_mode<synchronous>, transform_indices = @transform_2, window_bounds = array<i64: 1536, 576>}, {transform_indices = @transform_3, window_bounds = array<i64: 16, 576>}]} {
    %c0 = arith.constant 0 : index
    %c0_0 = arith.constant 0 : index
    %0 = vector.load %arg1[%c0, %c0_0] : memref<16x576xbf16, #tpu.memory_space<vmem>>, vector<16x576xbf16>
    %c0_1 = arith.constant 0 : index
    %c0_2 = arith.constant 0 : index
    %1 = vector.load %arg2[%c0_1, %c0_2] : memref<576x3072xbf16, #tpu.memory_space<vmem>>, vector<576x3072xbf16>
    %cst = arith.constant dense<0.000000e+00> : vector<16x3072xf32>
    %2 = tpu.matmul %0, %1, %cst {dimension_numbers = #tpu.dot_dimension_numbers<[1], [0], [0], [1], [0, 0, 1, 1], [], []>} : vector<16x576xbf16>, vector<576x3072xbf16>, vector<16x3072xf32> -> vector<16x3072xf32>
    %3 = vector.extract_strided_slice %2 {offsets = [0, 0], sizes = [16, 1536], strides = [1, 1]} : vector<16x3072xf32> to vector<16x1536xf32>
    %4 = vector.extract_strided_slice %2 {offsets = [0, 1536], sizes = [16, 1536], strides = [1, 1]} : vector<16x3072xf32> to vector<16x1536xf32>
    %5 = arith.negf %3 : vector<16x1536xf32>
    %6 = math.exp %5 : vector<16x1536xf32>
    %cst_3 = arith.constant 1.000000e+00 : f32
    %7 = vector.broadcast %cst_3 : f32 to vector<16x1536xf32>
    %8 = arith.addf %7, %6 : vector<16x1536xf32>
    %9 = arith.divf %7, %8 : vector<16x1536xf32>
    %10 = arith.mulf %3, %9 : vector<16x1536xf32>
    %11 = arith.mulf %10, %4 : vector<16x1536xf32>
    %12 = arith.truncf %11 : vector<16x1536xf32> to vector<16x1536xbf16>
    %c0_4 = arith.constant 0 : index
    %c0_5 = arith.constant 0 : index
    %13 = vector.load %arg3[%c0_4, %c0_5] : memref<1536x576xbf16, #tpu.memory_space<vmem>>, vector<1536x576xbf16>
    %cst_6 = arith.constant dense<0.000000e+00> : vector<16x576xf32>
    %14 = tpu.matmul %12, %13, %cst_6 {dimension_numbers = #tpu.dot_dimension_numbers<[1], [0], [0], [1], [0, 0, 1, 1], [], []>} : vector<16x1536xbf16>, vector<1536x576xbf16>, vector<16x576xf32> -> vector<16x576xf32>
    %15 = arith.truncf %14 : vector<16x576xf32> to vector<16x576xbf16>
    %c0_7 = arith.constant 0 : index
    %c0_8 = arith.constant 0 : index
    %16 = vector.load %arg4[%c0_7, %c0_8] : memref<16x576xbf16, #tpu.memory_space<vmem>>, vector<16x576xbf16>
    tpu.vector_store %arg4[%c0_7, %c0_8], %15 {strides = array<i32>} : memref<16x576xbf16, #tpu.memory_space<vmem>>, vector<16x576xbf16>,
    return
  }
  func.func @transform_0(%arg0: i32) -> (i32, i32) {
    %c0_i32 = arith.constant 0 : i32
    %c0_i32_0 = arith.constant 0 : i32
    return %arg0, %c0_i32 : i32, i32
  }
  func.func @transform_1(%arg0: i32) -> (i32, i32) {
    %c0_i32 = arith.constant 0 : i32
    %c0_i32_0 = arith.constant 0 : i32
    %c0_i32_1 = arith.constant 0 : i32
    return %c0_i32, %c0_i32_0 : i32, i32
  }
  func.func @transform_2(%arg0: i32) -> (i32, i32) {
    %c0_i32 = arith.constant 0 : i32
    %c0_i32_0 = arith.constant 0 : i32
    %c0_i32_1 = arith.constant 0 : i32
    return %c0_i32, %c0_i32_0 : i32, i32
  }
  func.func @transform_3(%arg0: i32) -> (i32, i32) {
    %c0_i32 = arith.constant 0 : i32
    %c0_i32_0 = arith.constant 0 : i32
    return %arg0, %c0_i32 : i32, i32
  }
}

</mosaic_0001>

<llo_original>
// kernel: tpu_custom_call.1
$region0: #{tpu_custom_call.1}
  #allocation0 [shape = 'u32[]', space=smem, size = 0x4, offset = 0x4, fixed_abs, tag = 'smem constant byte address 0x4 - core index']
  #allocation1 [shape = 'u32[72,128]{1,0:T(1,128)}', space=vmem, size = 0x9000, scoped, tag = 'internal scratch']
  %s0 = inlined_call_operand.vmem [shape: bf16[16,576], index: 0, kind: input, shape index: {}]
  %s1 = inlined_call_operand.vmem [shape: bf16[576,3072], index: 1, kind: input, shape index: {}]
  %s2 = inlined_call_operand.vmem [shape: bf16[1536,576], index: 2, kind: input, shape index: {}]
  %s3 = inlined_call_operand.hbm [shape: bf16[16,576], index: 3, kind: output, shape index: {}]
  %s4 = sld [smem:[#allocation0]]
  $region22: #{tpu_custom_call.1} parent=0
    _
  %s6 = ssub.s32 1, %s4
  %s7 = scalar_select 0, %s6, %s4
  $region1: #{tpu_custom_call.1} parent=0
    #allocation2 [shape = 'u8[20480]{0}', space=vmem, size = 0x5000, scoped, tag = 'output window, operand 0, single buffered']
    #allocation3 [shape = 's32[1]{0}', space=sflag, size = 0x4, scoped, tag = 'scoped memory for tpu_custom_call.1']
    %8 = vsyncpa [#allocation3], 0
    // Predicated region
    $region2: #{tpu_custom_call.1} parent=1 // pred_check
      _
    $region3: #{tpu_custom_call.1} parent=1 // pred_check_branch
      %10 = sbr.rel (0) target = $region5
    $region4: #{tpu_custom_call.1} parent=1 // pred_region
      _
    $region5: #{tpu_custom_call.1} parent=1 // pred_fallthru
      _
    // Predicated region
    $region6: #{tpu_custom_call.1} parent=1 // pred_check
      _
    $region7: #{tpu_custom_call.1} parent=1 // pred_check_branch
      %12 = sbr.rel (0) target = $region9
    $region8: #{tpu_custom_call.1} parent=1 // pred_region
      _
    $region9: #{tpu_custom_call.1} parent=1 // pred_fallthru
      _
    // Predicated region
    $region10: #{tpu_custom_call.1} parent=1 // pred_check
      _
    $region11: #{tpu_custom_call.1} parent=1 // pred_check_branch
      %14 = sbr.rel (0) target = $region13
    $region12: #{tpu_custom_call.1} parent=1 // pred_region
      _
    $region13: #{tpu_custom_call.1} parent=1 // pred_fallthru
      _
    %v16 = vld [vmem:[%s0] sm:$0xff]
    %v17 = vld [vmem:[%s0 + $0x8] sm:$0xff]
    %v18 = vld [vmem:[%s0 + $0x10] sm:$0xf]
    %v19 = vld [vmem:[%s0 + $0x14] sm:$0xff]
    %v20 = vld [vmem:[%s0 + $0x1c] sm:$0xff]
    %v21 = vld [vmem:[%s0 + $0x24] sm:$0xf]
    %v22 = vld [vmem:[%s1] sm:$0xff]
    %v23 = vld [vmem:[%s1 + $0x8] sm:$0xff]
    %v24 = vld [vmem:[%s1 + $0x10] sm:$0xff]
    %v25 = vld [vmem:[%s1 + $0x18] sm:$0xff]
    %v26 = vld [vmem:[%s1 + $0x20] sm:$0xff]
    %v27 = vld [vmem:[%s1 + $0x28] sm:$0xff]
    %v28 = vld [vmem:[%s1 + $0x30] sm:$0xff]
    %v29 = vld [vmem:[%s1 + $0x38] sm:$0xff]
    %v30 = vld [vmem:[%s1 + $0x40] sm:$0xff]
    %v31 = vld [vmem:[%s1 + $0x48] sm:$0xff]
    %v32 = vld [vmem:[%s1 + $0x50] sm:$0xff]
    %v33 = vld [vmem:[%s1 + $0x58] sm:$0xff]
    %v34 = vld [vmem:[%s1 + $0x60] sm:$0xff]
    %v35 = vld [vmem:[%s1 + $0x68] sm:$0xff]
    %v36 = vld [vmem:[%s1 + $0x70] sm:$0xff]
    %v37 = vld [vmem:[%s1 + $0x78] sm:$0xff]
    %v38 = vld [vmem:[%s1 + $0x80] sm:$0xff]
    %v39 = vld [vmem:[%s1 + $0x88] sm:$0xff]
    %v40 = vld [vmem:[%s1 + $0x90] sm:$0xff]
    %v41 = vld [vmem:[%s1 + $0x98] sm:$0xff]
    %v42 = vld [vmem:[%s1 + $0xa0] sm:$0xff]
    %v43 = vld [vmem:[%s1 + $0xa8] sm:$0xff]
    %v44 = vld [vmem:[%s1 + $0xb0] sm:$0xff]
    %v45 = vld [vmem:[%s1 + $0xb8] sm:$0xff]
    %v46 = vld [vmem:[%s1 + $0xc0] sm:$0xff]
    %v47 = vld [vmem:[%s1 + $0xc8] sm:$0xff]
    %v48 = vld [vmem:[%s1 + $0xd0] sm:$0xff]
    %v49 = vld [vmem:[%s1 + $0xd8] sm:$0xff]
    %v50 = vld [vmem:[%s1 + $0xe0] sm:$0xff]
    %v51 = vld [vmem:[%s1 + $0xe8] sm:$0xff]
    %v52 = vld [vmem:[%s1 + $0xf0] sm:$0xff]
    %v53 = vld [vmem:[%s1 + $0xf8] sm:$0xff]
    %v54 = vld [vmem:[%s1 + $0x100] sm:$0xff]
    %v55 = vld [vmem:[%s1 + $0x108] sm:$0xff]
    %v56 = vld [vmem:[%s1 + $0x110] sm:$0xff]
    %v57 = vld [vmem:[%s1 + $0x118] sm:$0xff]
    %v58 = vld [vmem:[%s1 + $0x120] sm:$0xff]
    %v59 = vld [vmem:[%s1 + $0x128] sm:$0xff]
    %v60 = vld [vmem:[%s1 + $0x130] sm:$0xff]
    %v61 = vld [vmem:[%s1 + $0x138] sm:$0xff]
    %v62 = vld [vmem:[%s1 + $0x140] sm:$0xff]
    %v63 = vld [vmem:[%s1 + $0x148] sm:$0xff]
    %v64 = vld [vmem:[%s1 + $0x150] sm:$0xff]
    %v65 = vld [vmem:[%s1 + $0x158] sm:$0xff]
    %v66 = vld [vmem:[%s1 + $0x160] sm:$0xff]
    %v67 = vld [vmem:[%s1 + $0x168] sm:$0xff]
    %v68 = vld [vmem:[%s1 + $0x170] sm:$0xff]
    %v69 = vld [vmem:[%s1 + $0x178] sm:$0xff]
    %v70 = vld [vmem:[%s1 + $0x180] sm:$0xff]
    %v71 = vld [vmem:[%s1 + $0x188] sm:$0xff]
    %v72 = vld [vmem:[%s1 + $0x190] sm:$0xff]
    %v73 = vld [vmem:[%s1 + $0x198] sm:$0xff]
    %v74 = vld [vmem:[%s1 + $0x1a0] sm:$0xff]
    %v75 = vld [vmem:[%s1 + $0x1a8] sm:$0xff]
    %v76 = vld [vmem:[%s1 + $0x1b0] sm:$0xff]
    %v77 = vld [vmem:[%s1 + $0x1b8] sm:$0xff]
    %v78 = vld [vmem:[%s1 + $0x1c0] sm:$0xff]
    %v79 = vld [vmem:[%s1 + $0x1c8] sm:$0xff]
    %v80 = vld [vmem:[%s1 + $0x1d0] sm:$0xff]
    %v81 = vld [vmem:[%s1 + $0x1d8] sm:$0xff]
    %v82 = vld [vmem:[%s1 + $0x1e0] sm:$0xff]
    %v83 = vld [vmem:[%s1 + $0x1e8] sm:$0xff]
    %v84 = vld [vmem:[%s1 + $0x1f0] sm:$0xff]
    %v85 = vld [vmem:[%s1 + $0x1f8] sm:$0xff]
    %v86 = vld [vmem:[%s1 + $0x200] sm:$0xff]
    %v87 = vld [vmem:[%s1 + $0x208] sm:$0xff]
    %v88 = vld [vmem:[%s1 + $0x210] sm:$0xff]
    %v89 = vld [vmem:[%s1 + $0x218] sm:$0xff]
    %v90 = vld [vmem:[%s1 + $0x220] sm:$0xff]
    %v91 = vld [vmem:[%s1 + $0x228] sm:$0xff]
    %v92 = vld [vmem:[%s1 + $0x230] sm:$0xff]
    %v93 = vld [vmem:[%s1 + $0x238] sm:$0xff]
    %v94 = vld [vmem:[%s1 + $0x240] sm:$0xff]
    %v95 = vld [vmem:[%s1 + $0x248] sm:$0xff]
    %v96 = vld [vmem:[%s1 + $0x250] sm:$0xff]
    %v97 = vld [vmem:[%s1 + $0x258] sm:$0xff]
    %v98 = vld [vmem:[%s1 + $0x260] sm:$0xff]
    %v99 = vld [vmem:[%s1 + $0x268] sm:$0xff]
    %v100 = vld [vmem:[%s1 + $0x270] sm:$0xff]
    %v101 = vld [vmem:[%s1 + $0x278] sm:$0xff]
    %v102 = vld [vmem:[%s1 + $0x280] sm:$0xff]
    %v103 = vld [vmem:[%s1 + $0x288] sm:$0xff]
    %v104 = vld [vmem:[%s1 + $0x290] sm:$0xff]
    %v105 = vld [vmem:[%s1 + $0x298] sm:$0xff]
    %v106 = vld [vmem:[%s1 + $0x2a0] sm:$0xff]
    %v107 = vld [vmem:[%s1 + $0x2a8] sm:$0xff]
    %v108 = vld [vmem:[%s1 + $0x2b0] sm:$0xff]
    %v109 = vld [vmem:[%s1 + $0x2b8] sm:$0xff]
    %v110 = vld [vmem:[%s1 + $0x2c0] sm:$0xff]
    %v111 = vld [vmem:[%s1 + $0x2c8] sm:$0xff]
    %v112 = vld [vmem:[%s1 + $0x2d0] sm:$0xff]
    %v113 = vld [vmem:[%s1 + $0x2d8] sm:$0xff]
    %v114 = vld [vmem:[%s1 + $0x2e0] sm:$0xff]
    %v115 = vld [vmem:[%s1 + $0x2e8] sm:$0xff]
    %v116 = vld [vmem:[%s1 + $0x2f0] sm:$0xff]
    %v117 = vld [vmem:[%s1 + $0x2f8] sm:$0xff]
    %v118 = vld [vmem:[%s1 + $0x300] sm:$0xff]
    %v119 = vld [vmem:[%s1 + $0x308] sm:$0xff]
    %v120 = vld [vmem:[%s1 + $0x310] sm:$0xff]
    %v121 = vld [vmem:[%s1 + $0x318] sm:$0xff]
    %v122 = vld [vmem:[%s1 + $0x320] sm:$0xff]
    %v123 = vld [vmem:[%s1 + $0x328] sm:$0xff]
    %v124 = vld [vmem:[%s1 + $0x330] sm:$0xff]
    %v125 = vld [vmem:[%s1 + $0x338] sm:$0xff]
    %v126 = vld [vmem:[%s1 + $0x340] sm:$0xff]
    %v127 = vld [vmem:[%s1 + $0x348] sm:$0xff]
    %v128 = vld [vmem:[%s1 + $0x350] sm:$0xff]
    %v129 = vld [vmem:[%s1 + $0x358] sm:$0xff]
    %v130 = vld [vmem:[%s1 + $0x360] sm:$0xff]
    %v131 = vld [vmem:[%s1 + $0x368] sm:$0xff]
    %v132 = vld [vmem:[%s1 + $0x370] sm:$0xff]
    %v133 = vld [vmem:[%s1 + $0x378] sm:$0xff]
    %v134 = vld [vmem:[%s1 + $0x380] sm:$0xff]
    %v135 = vld [vmem:[%s1 + $0x388] sm:$0xff]
    %v136 = vld [vmem:[%s1 + $0x390] sm:$0xff]
    %v137 = vld [vmem:[%s1 + $0x398] sm:$0xff]
    %v138 = vld [vmem:[%s1 + $0x3a0] sm:$0xff]
    %v139 = vld [vmem:[%s1 + $0x3a8] sm:$0xff]
    %v140 = vld [vmem:[%s1 + $0x3b0] sm:$0xff]
    %v141 = vld [vmem:[%s1 + $0x3b8] sm:$0xff]
    %v142 = vld [vmem:[%s1 + $0x3c0] sm:$0xff]
    %v143 = vld [vmem:[%s1 + $0x3c8] sm:$0xff]
    %v144 = vld [vmem:[%s1 + $0x3d0] sm:$0xff]
    %v145 = vld [vmem:[%s1 + $0x3d8] sm:$0xff]
    %v146 = vld [vmem:[%s1 + $0x3e0] sm:$0xff]
    %v147 = vld [vmem:[%s1 + $0x3e8] sm:$0xff]
    %v148 = vld [vmem:[%s1 + $0x3f0] sm:$0xff]
    %v149 = vld [vmem:[%s1 + $0x3f8] sm:$0xff]
    %v150 = vld [vmem:[%s1 + $0x400] sm:$0xff]
    %v151 = vld [vmem:[%s1 + $0x408] sm:$0xff]
    %v152 = vld [vmem:[%s1 + $0x410] sm:$0xff]
    %v153 = vld [vmem:[%s1 + $0x418] sm:$0xff]
    %v154 = vld [vmem:[%s1 + $0x420] sm:$0xff]
    %v155 = vld [vmem:[%s1 + $0x428] sm:$0xff]
    %v156 = vld [vmem:[%s1 + $0x430] sm:$0xff]
    %v157 = vld [vmem:[%s1 + $0x438] sm:$0xff]
    %v158 = vld [vmem:[%s1 + $0x440] sm:$0xff]
    %v159 = vld [vmem:[%s1 + $0x448] sm:$0xff]
    %v160 = vld [vmem:[%s1 + $0x450] sm:$0xff]
    %v161 = vld [vmem:[%s1 + $0x458] sm:$0xff]
    %v162 = vld [vmem:[%s1 + $0x460] sm:$0xff]
    %v163 = vld [vmem:[%s1 + $0x468] sm:$0xff]
    %v164 = vld [vmem:[%s1 + $0x470] sm:$0xff]
    %v165 = vld [vmem:[%s1 + $0x478] sm:$0xff]
    %v166 = vld [vmem:[%s1 + $0x480] sm:$0xff]
    %v167 = vld [vmem:[%s1 + $0x488] sm:$0xff]
    %v168 = vld [vmem:[%s1 + $0x490] sm:$0xff]
    %v169 = vld [vmem:[%s1 + $0x498] sm:$0xff]
    %v170 = vld [vmem:[%s1 + $0x4a0] sm:$0xff]
    %v171 = vld [vmem:[%s1 + $0x4a8] sm:$0xff]
    %v172 = vld [vmem:[%s1 + $0x4b0] sm:$0xff]
    %v173 = vld [vmem:[%s1 + $0x4b8] sm:$0xff]
    %v174 = vld [vmem:[%s1 + $0x4c0] sm:$0xff]
    %v175 = vld [vmem:[%s1 + $0x4c8] sm:$0xff]
    %v176 = vld [vmem:[%s1 + $0x4d0] sm:$0xff]
    %v177 = vld [vmem:[%s1 + $0x4d8] sm:$0xff]
    %v178 = vld [vmem:[%s1 + $0x4e0] sm:$0xff]
    %v179 = vld [vmem:[%s1 + $0x4e8] sm:$0xff]
    %v180 = vld [vmem:[%s1 + $0x4f0] sm:$0xff]
    %v181 = vld [vmem:[%s1 + $0x4f8] sm:$0xff]
    %v182 = vld [vmem:[%s1 + $0x500] sm:$0xff]
    %v183 = vld [vmem:[%s1 + $0x508] sm:$0xff]
    %v184 = vld [vmem:[%s1 + $0x510] sm:$0xff]
    %v185 = vld [vmem:[%s1 + $0x518] sm:$0xff]
    %v186 = vld [vmem:[%s1 + $0x520] sm:$0xff]
    %v187 = vld [vmem:[%s1 + $0x528] sm:$0xff]
    %v188 = vld [vmem:[%s1 + $0x530] sm:$0xff]
    %v189 = vld [vmem:[%s1 + $0x538] sm:$0xff]
    %v190 = vld [vmem:[%s1 + $0x540] sm:$0xff]
    %v191 = vld [vmem:[%s1 + $0x548] sm:$0xff]
    %v192 = vld [vmem:[%s1 + $0x550] sm:$0xff]
    %v193 = vld [vmem:[%s1 + $0x558] sm:$0xff]
    %v194 = vld [vmem:[%s1 + $0x560] sm:$0xff]
    %v195 = vld [vmem:[%s1 + $0x568] sm:$0xff]
    %v196 = vld [vmem:[%s1 + $0x570] sm:$0xff]
    %v197 = vld [vmem:[%s1 + $0x578] sm:$0xff]
    %v198 = vld [vmem:[%s1 + $0x580] sm:$0xff]
    %v199 = vld [vmem:[%s1 + $0x588] sm:$0xff]
    %v200 = vld [vmem:[%s1 + $0x590] sm:$0xff]
    %v201 = vld [vmem:[%s1 + $0x598] sm:$0xff]
    %v202 = vld [vmem:[%s1 + $0x5a0] sm:$0xff]
    %v203 = vld [vmem:[%s1 + $0x5a8] sm:$0xff]
    %v204 = vld [vmem:[%s1 + $0x5b0] sm:$0xff]
    %v205 = vld [vmem:[%s1 + $0x5b8] sm:$0xff]
    %v206 = vld [vmem:[%s1 + $0x5c0] sm:$0xff]
    %v207 = vld [vmem:[%s1 + $0x5c8] sm:$0xff]
    %v208 = vld [vmem:[%s1 + $0x5d0] sm:$0xff]
    %v209 = vld [vmem:[%s1 + $0x5d8] sm:$0xff]
    %v210 = vld [vmem:[%s1 + $0x5e0] sm:$0xff]
    %v211 = vld [vmem:[%s1 + $0x5e8] sm:$0xff]
    %v212 = vld [vmem:[%s1 + $0x5f0] sm:$0xff]
    %v213 = vld [vmem:[%s1 + $0x5f8] sm:$0xff]
    %v214 = vld [vmem:[%s1 + $0x600] sm:$0xff]
    %v215 = vld [vmem:[%s1 + $0x608] sm:$0xff]
    %v216 = vld [vmem:[%s1 + $0x610] sm:$0xff]
    %v217 = vld [vmem:[%s1 + $0x618] sm:$0xff]
    %v218 = vld [vmem:[%s1 + $0x620] sm:$0xff]
    %v219 = vld [vmem:[%s1 + $0x628] sm:$0xff]
    %v220 = vld [vmem:[%s1 + $0x630] sm:$0xff]
    %v221 = vld [vmem:[%s1 + $0x638] sm:$0xff]
    %v222 = vld [vmem:[%s1 + $0x640] sm:$0xff]
    %v223 = vld [vmem:[%s1 + $0x648] sm:$0xff]
    %v224 = vld [vmem:[%s1 + $0x650] sm:$0xff]
    %v225 = vld [vmem:[%s1 + $0x658] sm:$0xff]
    %v226 = vld [vmem:[%s1 + $0x660] sm:$0xff]
    %v227 = vld [vmem:[%s1 + $0x668] sm:$0xff]
    %v228 = vld [vmem:[%s1 + $0x670] sm:$0xff]
    %v229 = vld [vmem:[%s1 + $0x678] sm:$0xff]
    %v230 = vld [vmem:[%s1 + $0x680] sm:$0xff]
    %v231 = vld [vmem:[%s1 + $0x688] sm:$0xff]
    %v232 = vld [vmem:[%s1 + $0x690] sm:$0xff]
    %v233 = vld [vmem:[%s1 + $0x698] sm:$0xff]
    %v234 = vld [vmem:[%s1 + $0x6a0] sm:$0xff]
    %v235 = vld [vmem:[%s1 + $0x6a8] sm:$0xff]
    %v236 = vld [vmem:[%s1 + $0x6b0] sm:$0xff]
    %v237 = vld [vmem:[%s1 + $0x6b8] sm:$0xff]
    %v238 = vld [vmem:[%s1 + $0x6c0] sm:$0xff]
    %v239 = vld [vmem:[%s1 + $0x6c8] sm:$0xff]
    %v240 = vld [vmem:[%s1 + $0x6d0] sm:$0xff]
    %v241 = vld [vmem:[%s1 + $0x6d8] sm:$0xff]
    %v242 = vld [vmem:[%s1 + $0x6e0] sm:$0xff]
    %v243 = vld [vmem:[%s1 + $0x6e8] sm:$0xff]
    %v244 = vld [vmem:[%s1 + $0x6f0] sm:$0xff]
    %v245 = vld [vmem:[%s1 + $0x6f8] sm:$0xff]
    %v246 = vld [vmem:[%s1 + $0x700] sm:$0xff]
    %v247 = vld [vmem:[%s1 + $0x708] sm:$0xff]
    %v248 = vld [vmem:[%s1 + $0x710] sm:$0xff]
    %v249 = vld [vmem:[%s1 + $0x718] sm:$0xff]
    %v250 = vld [vmem:[%s1 + $0x720] sm:$0xff]
    %v251 = vld [vmem:[%s1 + $0x728] sm:$0xff]
    %v252 = vld [vmem:[%s1 + $0x730] sm:$0xff]
    %v253 = vld [vmem:[%s1 + $0x738] sm:$0xff]
    %v254 = vld [vmem:[%s1 + $0x740] sm:$0xff]
    %v255 = vld [vmem:[%s1 + $0x748] sm:$0xff]
    %v256 = vld [vmem:[%s1 + $0x750] sm:$0xff]
    %v257 = vld [vmem:[%s1 + $0x758] sm:$0xff]
    %v258 = vld [vmem:[%s1 + $0x760] sm:$0xff]
    %v259 = vld [vmem:[%s1 + $0x768] sm:$0xff]
    %v260 = vld [vmem:[%s1 + $0x770] sm:$0xff]
    %v261 = vld [vmem:[%s1 + $0x778] sm:$0xff]
    %v262 = vld [vmem:[%s1 + $0x780] sm:$0xff]
    %v263 = vld [vmem:[%s1 + $0x788] sm:$0xff]
    %v264 = vld [vmem:[%s1 + $0x790] sm:$0xff]
    %v265 = vld [vmem:[%s1 + $0x798] sm:$0xff]
    %v266 = vld [vmem:[%s1 + $0x7a0] sm:$0xff]
    %v267 = vld [vmem:[%s1 + $0x7a8] sm:$0xff]
    %v268 = vld [vmem:[%s1 + $0x7b0] sm:$0xff]
    %v269 = vld [vmem:[%s1 + $0x7b8] sm:$0xff]
    %v270 = vld [vmem:[%s1 + $0x7c0] sm:$0xff]
    %v271 = vld [vmem:[%s1 + $0x7c8] sm:$0xff]
    %v272 = vld [vmem:[%s1 + $0x7d0] sm:$0xff]
    %v273 = vld [vmem:[%s1 + $0x7d8] sm:$0xff]
    %v274 = vld [vmem:[%s1 + $0x7e0] sm:$0xff]
    %v275 = vld [vmem:[%s1 + $0x7e8] sm:$0xff]
    %v276 = vld [vmem:[%s1 + $0x7f0] sm:$0xff]
    %v277 = vld [vmem:[%s1 + $0x7f8] sm:$0xff]
    %v278 = vld [vmem:[%s1 + $0x800] sm:$0xff]
    %v279 = vld [vmem:[%s1 + $0x808] sm:$0xff]
    %v280 = vld [vmem:[%s1 + $0x810] sm:$0xff]
    %v281 = vld [vmem:[%s1 + $0x818] sm:$0xff]
    %v282 = vld [vmem:[%s1 + $0x820] sm:$0xff]
    %v283 = vld [vmem:[%s1 + $0x828] sm:$0xff]
    %v284 = vld [vmem:[%s1 + $0x830] sm:$0xff]
    %v285 = vld [vmem:[%s1 + $0x838] sm:$0xff]
    %v286 = vld [vmem:[%s1 + $0x840] sm:$0xff]
    %v287 = vld [vmem:[%s1 + $0x848] sm:$0xff]
    %v288 = vld [vmem:[%s1 + $0x850] sm:$0xff]
    %v289 = vld [vmem:[%s1 + $0x858] sm:$0xff]
    %v290 = vld [vmem:[%s1 + $0x860] sm:$0xff]
    %v291 = vld [vmem:[%s1 + $0x868] sm:$0xff]
    %v292 = vld [vmem:[%s1 + $0x870] sm:$0xff]
    %v293 = vld [vmem:[%s1 + $0x878] sm:$0xff]
    %v294 = vld [vmem:[%s1 + $0x880] sm:$0xff]
    %v295 = vld [vmem:[%s1 + $0x888] sm:$0xff]
    %v296 = vld [vmem:[%s1 + $0x890] sm:$0xff]
    %v297 = vld [vmem:[%s1 + $0x898] sm:$0xff]
    %v298 = vld [vmem:[%s1 + $0x8a0] sm:$0xff]
    %v299 = vld [vmem:[%s1 + $0x8a8] sm:$0xff]
    %v300 = vld [vmem:[%s1 + $0x8b0] sm:$0xff]
    %v301 = vld [vmem:[%s1 + $0x8b8] sm:$0xff]
    %v302 = vld [vmem:[%s1 + $0x8c0] sm:$0xff]
    %v303 = vld [vmem:[%s1 + $0x8c8] sm:$0xff]
    %v304 = vld [vmem:[%s1 + $0x8d0] sm:$0xff]
    %v305 = vld [vmem:[%s1 + $0x8d8] sm:$0xff]
    %v306 = vld [vmem:[%s1 + $0x8e0] sm:$0xff]
    %v307 = vld [vmem:[%s1 + $0x8e8] sm:$0xff]
    %v308 = vld [vmem:[%s1 + $0x8f0] sm:$0xff]
    %v309 = vld [vmem:[%s1 + $0x8f8] sm:$0xff]
    %v310 = vld [vmem:[%s1 + $0x900] sm:$0xff]
    %v311 = vld [vmem:[%s1 + $0x908] sm:$0xff]
    %v312 = vld [vmem:[%s1 + $0x910] sm:$0xff]
    %v313 = vld [vmem:[%s1 + $0x918] sm:$0xff]
    %v314 = vld [vmem:[%s1 + $0x920] sm:$0xff]
    %v315 = vld [vmem:[%s1 + $0x928] sm:$0xff]
    %v316 = vld [vmem:[%s1 + $0x930] sm:$0xff]
    %v317 = vld [vmem:[%s1 + $0x938] sm:$0xff]
    %v318 = vld [vmem:[%s1 + $0x940] sm:$0xff]
    %v319 = vld [vmem:[%s1 + $0x948] sm:$0xff]
    %v320 = vld [vmem:[%s1 + $0x950] sm:$0xff]
    %v321 = vld [vmem:[%s1 + $0x958] sm:$0xff]
    %v322 = vld [vmem:[%s1 + $0x960] sm:$0xff]
    %v323 = vld [vmem:[%s1 + $0x968] sm:$0xff]
    %v324 = vld [vmem:[%s1 + $0x970] sm:$0xff]
    %v325 = vld [vmem:[%s1 + $0x978] sm:$0xff]
    %v326 = vld [vmem:[%s1 + $0x980] sm:$0xff]
    %v327 = vld [vmem:[%s1 + $0x988] sm:$0xff]
    %v328 = vld [vmem:[%s1 + $0x990] sm:$0xff]
    %v329 = vld [vmem:[%s1 + $0x998] sm:$0xff]
    %v330 = vld [vmem:[%s1 + $0x9a0] sm:$0xff]
    %v331 = vld [vmem:[%s1 + $0x9a8] sm:$0xff]
    %v332 = vld [vmem:[%s1 + $0x9b0] sm:$0xff]
    %v333 = vld [vmem:[%s1 + $0x9b8] sm:$0xff]
    %v334 = vld [vmem:[%s1 + $0x9c0] sm:$0xff]
    %v335 = vld [vmem:[%s1 + $0x9c8] sm:$0xff]
    %v336 = vld [vmem:[%s1 + $0x9d0] sm:$0xff]
    %v337 = vld [vmem:[%s1 + $0x9d8] sm:$0xff]
    %v338 = vld [vmem:[%s1 + $0x9e0] sm:$0xff]
    %v339 = vld [vmem:[%s1 + $0x9e8] sm:$0xff]
    %v340 = vld [vmem:[%s1 + $0x9f0] sm:$0xff]
    %v341 = vld [vmem:[%s1 + $0x9f8] sm:$0xff]
    %v342 = vld [vmem:[%s1 + $0xa00] sm:$0xff]
    %v343 = vld [vmem:[%s1 + $0xa08] sm:$0xff]
    %v344 = vld [vmem:[%s1 + $0xa10] sm:$0xff]
    %v345 = vld [vmem:[%s1 + $0xa18] sm:$0xff]
    %v346 = vld [vmem:[%s1 + $0xa20] sm:$0xff]
    %v347 = vld [vmem:[%s1 + $0xa28] sm:$0xff]
    %v348 = vld [vmem:[%s1 + $0xa30] sm:$0xff]
    %v349 = vld [vmem:[%s1 + $0xa38] sm:$0xff]
    %v350 = vld [vmem:[%s1 + $0xa40] sm:$0xff]
    %v351 = vld [vmem:[%s1 + $0xa48] sm:$0xff]
    %v352 = vld [vmem:[%s1 + $0xa50] sm:$0xff]
    %v353 = vld [vmem:[%s1 + $0xa58] sm:$0xff]
    %v354 = vld [vmem:[%s1 + $0xa60] sm:$0xff]
    %v355 = vld [vmem:[%s1 + $0xa68] sm:$0xff]
    %v356 = vld [vmem:[%s1 + $0xa70] sm:$0xff]
    %v357 = vld [vmem:[%s1 + $0xa78] sm:$0xff]
    %v358 = vld [vmem:[%s1 + $0xa80] sm:$0xff]
    %v359 = vld [vmem:[%s1 + $0xa88] sm:$0xff]
    %v360 = vld [vmem:[%s1 + $0xa90] sm:$0xff]
    %v361 = vld [vmem:[%s1 + $0xa98] sm:$0xff]
    %v362 = vld [vmem:[%s1 + $0xaa0] sm:$0xff]
    %v363 = vld [vmem:[%s1 + $0xaa8] sm:$0xff]
    %v364 = vld [vmem:[%s1 + $0xab0] sm:$0xff]
    %v365 = vld [vmem:[%s1 + $0xab8] sm:$0xff]
    %v366 = vld [vmem:[%s1 + $0xac0] sm:$0xff]
    %v367 = vld [vmem:[%s1 + $0xac8] sm:$0xff]
    %v368 = vld [vmem:[%s1 + $0xad0] sm:$0xff]
    %v369 = vld [vmem:[%s1 + $0xad8] sm:$0xff]
    %v370 = vld [vmem:[%s1 + $0xae0] sm:$0xff]
    %v371 = vld [vmem:[%s1 + $0xae8] sm:$0xff]
    %v372 = vld [vmem:[%s1 + $0xaf0] sm:$0xff]
    %v373 = vld [vmem:[%s1 + $0xaf8] sm:$0xff]
    %v374 = vld [vmem:[%s1 + $0xb00] sm:$0xff]
    %v375 = vld [vmem:[%s1 + $0xb08] sm:$0xff]
    %v376 = vld [vmem:[%s1 + $0xb10] sm:$0xff]
    %v377 = vld [vmem:[%s1 + $0xb18] sm:$0xff]
    %v378 = vld [vmem:[%s1 + $0xb20] sm:$0xff]
    %v379 = vld [vmem:[%s1 + $0xb28] sm:$0xff]
    %v380 = vld [vmem:[%s1 + $0xb30] sm:$0xff]
    %v381 = vld [vmem:[%s1 + $0xb38] sm:$0xff]
    %v382 = vld [vmem:[%s1 + $0xb40] sm:$0xff]
    %v383 = vld [vmem:[%s1 + $0xb48] sm:$0xff]
    %v384 = vld [vmem:[%s1 + $0xb50] sm:$0xff]
    %v385 = vld [vmem:[%s1 + $0xb58] sm:$0xff]
    %v386 = vld [vmem:[%s1 + $0xb60] sm:$0xff]
    %v387 = vld [vmem:[%s1 + $0xb68] sm:$0xff]
    %v388 = vld [vmem:[%s1 + $0xb70] sm:$0xff]
    %v389 = vld [vmem:[%s1 + $0xb78] sm:$0xff]
    %v390 = vld [vmem:[%s1 + $0xb80] sm:$0xff]
    %v391 = vld [vmem:[%s1 + $0xb88] sm:$0xff]
    %v392 = vld [vmem:[%s1 + $0xb90] sm:$0xff]
    %v393 = vld [vmem:[%s1 + $0xb98] sm:$0xff]
    %v394 = vld [vmem:[%s1 + $0xba0] sm:$0xff]
    %v395 = vld [vmem:[%s1 + $0xba8] sm:$0xff]
    %v396 = vld [vmem:[%s1 + $0xbb0] sm:$0xff]
    %v397 = vld [vmem:[%s1 + $0xbb8] sm:$0xff]
    %v398 = vld [vmem:[%s1 + $0xbc0] sm:$0xff]
    %v399 = vld [vmem:[%s1 + $0xbc8] sm:$0xff]
    %v400 = vld [vmem:[%s1 + $0xbd0] sm:$0xff]
    %v401 = vld [vmem:[%s1 + $0xbd8] sm:$0xff]
    %v402 = vld [vmem:[%s1 + $0xbe0] sm:$0xff]
    %v403 = vld [vmem:[%s1 + $0xbe8] sm:$0xff]
    %v404 = vld [vmem:[%s1 + $0xbf0] sm:$0xff]
    %v405 = vld [vmem:[%s1 + $0xbf8] sm:$0xff]
    %v406 = vld [vmem:[%s1 + $0xc00] sm:$0xff]
    %v407 = vld [vmem:[%s1 + $0xc08] sm:$0xff]
    %v408 = vld [vmem:[%s1 + $0xc10] sm:$0xff]
    %v409 = vld [vmem:[%s1 + $0xc18] sm:$0xff]
    %v410 = vld [vmem:[%s1 + $0xc20] sm:$0xff]
    %v411 = vld [vmem:[%s1 + $0xc28] sm:$0xff]
    %v412 = vld [vmem:[%s1 + $0xc30] sm:$0xff]
    %v413 = vld [vmem:[%s1 + $0xc38] sm:$0xff]
    %v414 = vld [vmem:[%s1 + $0xc40] sm:$0xff]
    %v415 = vld [vmem:[%s1 + $0xc48] sm:$0xff]
    %v416 = vld [vmem:[%s1 + $0xc50] sm:$0xff]
    %v417 = vld [vmem:[%s1 + $0xc58] sm:$0xff]
    %v418 = vld [vmem:[%s1 + $0xc60] sm:$0xff]
    %v419 = vld [vmem:[%s1 + $0xc68] sm:$0xff]
    %v420 = vld [vmem:[%s1 + $0xc70] sm:$0xff]
    %v421 = vld [vmem:[%s1 + $0xc78] sm:$0xff]
    %v422 = vld [vmem:[%s1 + $0xc80] sm:$0xff]
    %v423 = vld [vmem:[%s1 + $0xc88] sm:$0xff]
    %v424 = vld [vmem:[%s1 + $0xc90] sm:$0xff]
    %v425 = vld [vmem:[%s1 + $0xc98] sm:$0xff]
    %v426 = vld [vmem:[%s1 + $0xca0] sm:$0xff]
    %v427 = vld [vmem:[%s1 + $0xca8] sm:$0xff]
    %v428 = vld [vmem:[%s1 + $0xcb0] sm:$0xff]
    %v429 = vld [vmem:[%s1 + $0xcb8] sm:$0xff]
    %v430 = vld [vmem:[%s1 + $0xcc0] sm:$0xff]
    %v431 = vld [vmem:[%s1 + $0xcc8] sm:$0xff]
    %v432 = vld [vmem:[%s1 + $0xcd0] sm:$0xff]
    %v433 = vld [vmem:[%s1 + $0xcd8] sm:$0xff]
    %v434 = vld [vmem:[%s1 + $0xce0] sm:$0xff]
    %v435 = vld [vmem:[%s1 + $0xce8] sm:$0xff]
    %v436 = vld [vmem:[%s1 + $0xcf0] sm:$0xff]
    %v437 = vld [vmem:[%s1 + $0xcf8] sm:$0xff]
    %v438 = vld [vmem:[%s1 + $0xd00] sm:$0xff]
    %v439 = vld [vmem:[%s1 + $0xd08] sm:$0xff]
    %v440 = vld [vmem:[%s1 + $0xd10] sm:$0xff]
    %v441 = vld [vmem:[%s1 + $0xd18] sm:$0xff]
    %v442 = vld [vmem:[%s1 + $0xd20] sm:$0xff]
    %v443 = vld [vmem:[%s1 + $0xd28] sm:$0xff]
    %v444 = vld [vmem:[%s1 + $0xd30] sm:$0xff]
    %v445 = vld [vmem:[%s1 + $0xd38] sm:$0xff]
    %v446 = vld [vmem:[%s1 + $0xd40] sm:$0xff]
    %v447 = vld [vmem:[%s1 + $0xd48] sm:$0xff]
    %v448 = vld [vmem:[%s1 + $0xd50] sm:$0xff]
    %v449 = vld [vmem:[%s1 + $0xd58] sm:$0xff]
    %v450 = vld [vmem:[%s1 + $0xd60] sm:$0xff]
    %v451 = vld [vmem:[%s1 + $0xd68] sm:$0xff]
    %v452 = vld [vmem:[%s1 + $0xd70] sm:$0xff]
    %v453 = vld [vmem:[%s1 + $0xd78] sm:$0xff]
    %v454 = vld [vmem:[%s1 + $0xd80] sm:$0xff]
    %v455 = vld [vmem:[%s1 + $0xd88] sm:$0xff]
    %v456 = vld [vmem:[%s1 + $0xd90] sm:$0xff]
    %v457 = vld [vmem:[%s1 + $0xd98] sm:$0xff]
    %v458 = vld [vmem:[%s1 + $0xda0] sm:$0xff]
    %v459 = vld [vmem:[%s1 + $0xda8] sm:$0xff]
    %v460 = vld [vmem:[%s1 + $0xdb0] sm:$0xff]
    %v461 = vld [vmem:[%s1 + $0xdb8] sm:$0xff]
    %v462 = vld [vmem:[%s1 + $0xdc0] sm:$0xff]
    %v463 = vld [vmem:[%s1 + $0xdc8] sm:$0xff]
    %v464 = vld [vmem:[%s1 + $0xdd0] sm:$0xff]
    %v465 = vld [vmem:[%s1 + $0xdd8] sm:$0xff]
    %v466 = vld [vmem:[%s1 + $0xde0] sm:$0xff]
    %v467 = vld [vmem:[%s1 + $0xde8] sm:$0xff]
    %v468 = vld [vmem:[%s1 + $0xdf0] sm:$0xff]
    %v469 = vld [vmem:[%s1 + $0xdf8] sm:$0xff]
    %v470 = vld [vmem:[%s1 + $0xe00] sm:$0xff]
    %v471 = vld [vmem:[%s1 + $0xe08] sm:$0xff]
    %v472 = vld [vmem:[%s1 + $0xe10] sm:$0xff]
    %v473 = vld [vmem:[%s1 + $0xe18] sm:$0xff]
    %v474 = vld [vmem:[%s1 + $0xe20] sm:$0xff]
    %v475 = vld [vmem:[%s1 + $0xe28] sm:$0xff]
    %v476 = vld [vmem:[%s1 + $0xe30] sm:$0xff]
    %v477 = vld [vmem:[%s1 + $0xe38] sm:$0xff]
    %v478 = vld [vmem:[%s1 + $0xe40] sm:$0xff]
    %v479 = vld [vmem:[%s1 + $0xe48] sm:$0xff]
    %v480 = vld [vmem:[%s1 + $0xe50] sm:$0xff]
    %v481 = vld [vmem:[%s1 + $0xe58] sm:$0xff]
    %v482 = vld [vmem:[%s1 + $0xe60] sm:$0xff]
    %v483 = vld [vmem:[%s1 + $0xe68] sm:$0xff]
    %v484 = vld [vmem:[%s1 + $0xe70] sm:$0xff]
    %v485 = vld [vmem:[%s1 + $0xe78] sm:$0xff]
    %v486 = vld [vmem:[%s1 + $0xe80] sm:$0xff]
    %v487 = vld [vmem:[%s1 + $0xe88] sm:$0xff]
    %v488 = vld [vmem:[%s1 + $0xe90] sm:$0xff]
    %v489 = vld [vmem:[%s1 + $0xe98] sm:$0xff]
    %v490 = vld [vmem:[%s1 + $0xea0] sm:$0xff]
    %v491 = vld [vmem:[%s1 + $0xea8] sm:$0xff]
    %v492 = vld [vmem:[%s1 + $0xeb0] sm:$0xff]
    %v493 = vld [vmem:[%s1 + $0xeb8] sm:$0xff]
    %v494 = vld [vmem:[%s1 + $0xec0] sm:$0xff]
    %v495 = vld [vmem:[%s1 + $0xec8] sm:$0xff]
    %v496 = vld [vmem:[%s1 + $0xed0] sm:$0xff]
    %v497 = vld [vmem:[%s1 + $0xed8] sm:$0xff]
    %v498 = vld [vmem:[%s1 + $0xee0] sm:$0xff]
    %v499 = vld [vmem:[%s1 + $0xee8] sm:$0xff]
    %v500 = vld [vmem:[%s1 + $0xef0] sm:$0xff]
    %v501 = vld [vmem:[%s1 + $0xef8] sm:$0xff]
    %v502 = vld [vmem:[%s1 + $0xf00] sm:$0xff]
    %v503 = vld [vmem:[%s1 + $0xf08] sm:$0xff]
    %v504 = vld [vmem:[%s1 + $0xf10] sm:$0xff]
    %v505 = vld [vmem:[%s1 + $0xf18] sm:$0xff]
    %v506 = vld [vmem:[%s1 + $0xf20] sm:$0xff]
    %v507 = vld [vmem:[%s1 + $0xf28] sm:$0xff]
    %v508 = vld [vmem:[%s1 + $0xf30] sm:$0xff]
    %v509 = vld [vmem:[%s1 + $0xf38] sm:$0xff]
    %v510 = vld [vmem:[%s1 + $0xf40] sm:$0xff]
    %v511 = vld [vmem:[%s1 + $0xf48] sm:$0xff]
    %v512 = vld [vmem:[%s1 + $0xf50] sm:$0xff]
    %v513 = vld [vmem:[%s1 + $0xf58] sm:$0xff]
    %v514 = vld [vmem:[%s1 + $0xf60] sm:$0xff]
    %v515 = vld [vmem:[%s1 + $0xf68] sm:$0xff]
    %v516 = vld [vmem:[%s1 + $0xf70] sm:$0xff]
    %v517 = vld [vmem:[%s1 + $0xf78] sm:$0xff]
    %v518 = vld [vmem:[%s1 + $0xf80] sm:$0xff]
    %v519 = vld [vmem:[%s1 + $0xf88] sm:$0xff]
    %v520 = vld [vmem:[%s1 + $0xf90] sm:$0xff]
    %v521 = vld [vmem:[%s1 + $0xf98] sm:$0xff]
    %v522 = vld [vmem:[%s1 + $0xfa0] sm:$0xff]
    %v523 = vld [vmem:[%s1 + $0xfa8] sm:$0xff]
    %v524 = vld [vmem:[%s1 + $0xfb0] sm:$0xff]
    %v525 = vld [vmem:[%s1 + $0xfb8] sm:$0xff]
    %v526 = vld [vmem:[%s1 + $0xfc0] sm:$0xff]
    %v527 = vld [vmem:[%s1 + $0xfc8] sm:$0xff]
    %v528 = vld [vmem:[%s1 + $0xfd0] sm:$0xff]
    %v529 = vld [vmem:[%s1 + $0xfd8] sm:$0xff]
    %v530 = vld [vmem:[%s1 + $0xfe0] sm:$0xff]
    %v531 = vld [vmem:[%s1 + $0xfe8] sm:$0xff]
    %v532 = vld [vmem:[%s1 + $0xff0] sm:$0xff]
    %v533 = vld [vmem:[%s1 + $0xff8] sm:$0xff]
    %v534 = vld [vmem:[%s1 + $0x1000] sm:$0xff]
    %v535 = vld [vmem:[%s1 + $0x1008] sm:$0xff]
    %v536 = vld [vmem:[%s1 + $0x1010] sm:$0xff]
    %v537 = vld [vmem:[%s1 + $0x1018] sm:$0xff]
    %v538 = vld [vmem:[%s1 + $0x1020] sm:$0xff]
    %v539 = vld [vmem:[%s1 + $0x1028] sm:$0xff]
    %v540 = vld [vmem:[%s1 + $0x1030] sm:$0xff]
    %v541 = vld [vmem:[%s1 + $0x1038] sm:$0xff]
    %v542 = vld [vmem:[%s1 + $0x1040] sm:$0xff]
    %v543 = vld [vmem:[%s1 + $0x1048] sm:$0xff]
    %v544 = vld [vmem:[%s1 + $0x1050] sm:$0xff]
    %v545 = vld [vmem:[%s1 + $0x1058] sm:$0xff]
    %v546 = vld [vmem:[%s1 + $0x1060] sm:$0xff]
    %v547 = vld [vmem:[%s1 + $0x1068] sm:$0xff]
    %v548 = vld [vmem:[%s1 + $0x1070] sm:$0xff]
    %v549 = vld [vmem:[%s1 + $0x1078] sm:$0xff]
    %v550 = vld [vmem:[%s1 + $0x1080] sm:$0xff]
    %v551 = vld [vmem:[%s1 + $0x1088] sm:$0xff]
    %v552 = vld [vmem:[%s1 + $0x1090] sm:$0xff]
    %v553 = vld [vmem:[%s1 + $0x1098] sm:$0xff]
    %v554 = vld [vmem:[%s1 + $0x10a0] sm:$0xff]
    %v555 = vld [vmem:[%s1 + $0x10a8] sm:$0xff]
    %v556 = vld [vmem:[%s1 + $0x10b0] sm:$0xff]
    %v557 = vld [vmem:[%s1 + $0x10b8] sm:$0xff]
    %v558 = vld [vmem:[%s1 + $0x10c0] sm:$0xff]
    %v559 = vld [vmem:[%s1 + $0x10c8] sm:$0xff]
    %v560 = vld [vmem:[%s1 + $0x10d0] sm:$0xff]
    %v561 = vld [vmem:[%s1 + $0x10d8] sm:$0xff]
    %v562 = vld [vmem:[%s1 + $0x10e0] sm:$0xff]
    %v563 = vld [vmem:[%s1 + $0x10e8] sm:$0xff]
    %v564 = vld [vmem:[%s1 + $0x10f0] sm:$0xff]
    %v565 = vld [vmem:[%s1 + $0x10f8] sm:$0xff]
    %v566 = vld [vmem:[%s1 + $0x1100] sm:$0xff]
    %v567 = vld [vmem:[%s1 + $0x1108] sm:$0xff]
    %v568 = vld [vmem:[%s1 + $0x1110] sm:$0xff]
    %v569 = vld [vmem:[%s1 + $0x1118] sm:$0xff]
    %v570 = vld [vmem:[%s1 + $0x1120] sm:$0xff]
    %v571 = vld [vmem:[%s1 + $0x1128] sm:$0xff]
    %v572 = vld [vmem:[%s1 + $0x1130] sm:$0xff]
    %v573 = vld [vmem:[%s1 + $0x1138] sm:$0xff]
    %v574 = vld [vmem:[%s1 + $0x1140] sm:$0xff]
    %v575 = vld [vmem:[%s1 + $0x1148] sm:$0xff]
    %v576 = vld [vmem:[%s1 + $0x1150] sm:$0xff]
    %v577 = vld [vmem:[%s1 + $0x1158] sm:$0xff]
    %v578 = vld [vmem:[%s1 + $0x1160] sm:$0xff]
    %v579 = vld [vmem:[%s1 + $0x1168] sm:$0xff]
    %v580 = vld [vmem:[%s1 + $0x1170] sm:$0xff]
    %v581 = vld [vmem:[%s1 + $0x1178] sm:$0xff]
    %v582 = vld [vmem:[%s1 + $0x1180] sm:$0xff]
    %v583 = vld [vmem:[%s1 + $0x1188] sm:$0xff]
    %v584 = vld [vmem:[%s1 + $0x1190] sm:$0xff]
    %v585 = vld [vmem:[%s1 + $0x1198] sm:$0xff]
    %v586 = vld [vmem:[%s1 + $0x11a0] sm:$0xff]
    %v587 = vld [vmem:[%s1 + $0x11a8] sm:$0xff]
    %v588 = vld [vmem:[%s1 + $0x11b0] sm:$0xff]
    %v589 = vld [vmem:[%s1 + $0x11b8] sm:$0xff]
    %v590 = vld [vmem:[%s1 + $0x11c0] sm:$0xff]
    %v591 = vld [vmem:[%s1 + $0x11c8] sm:$0xff]
    %v592 = vld [vmem:[%s1 + $0x11d0] sm:$0xff]
    %v593 = vld [vmem:[%s1 + $0x11d8] sm:$0xff]
    %v594 = vld [vmem:[%s1 + $0x11e0] sm:$0xff]
    %v595 = vld [vmem:[%s1 + $0x11e8] sm:$0xff]
    %v596 = vld [vmem:[%s1 + $0x11f0] sm:$0xff]
    %v597 = vld [vmem:[%s1 + $0x11f8] sm:$0xff]
    %v598 = vld [vmem:[%s1 + $0x1200] sm:$0xff]
    %v599 = vld [vmem:[%s1 + $0x1208] sm:$0xff]
    %v600 = vld [vmem:[%s1 + $0x1210] sm:$0xff]
    %v601 = vld [vmem:[%s1 + $0x1218] sm:$0xff]
    %v602 = vld [vmem:[%s1 + $0x1220] sm:$0xff]
    %v603 = vld [vmem:[%s1 + $0x1228] sm:$0xff]
    %v604 = vld [vmem:[%s1 + $0x1230] sm:$0xff]
    %v605 = vld [vmem:[%s1 + $0x1238] sm:$0xff]
    %v606 = vld [vmem:[%s1 + $0x1240] sm:$0xff]
    %v607 = vld [vmem:[%s1 + $0x1248] sm:$0xff]
    %v608 = vld [vmem:[%s1 + $0x1250] sm:$0xff]
    %v609 = vld [vmem:[%s1 + $0x1258] sm:$0xff]
    %v610 = vld [vmem:[%s1 + $0x1260] sm:$0xff]
    %v611 = vld [vmem:[%s1 + $0x1268] sm:$0xff]
    %v612 = vld [vmem:[%s1 + $0x1270] sm:$0xff]
    %v613 = vld [vmem:[%s1 + $0x1278] sm:$0xff]
    %v614 = vld [vmem:[%s1 + $0x1280] sm:$0xff]
    %v615 = vld [vmem:[%s1 + $0x1288] sm:$0xff]
    %v616 = vld [vmem:[%s1 + $0x1290] sm:$0xff]
    %v617 = vld [vmem:[%s1 + $0x1298] sm:$0xff]
    %v618 = vld [vmem:[%s1 + $0x12a0] sm:$0xff]
    %v619 = vld [vmem:[%s1 + $0x12a8] sm:$0xff]
    %v620 = vld [vmem:[%s1 + $0x12b0] sm:$0xff]
    %v621 = vld [vmem:[%s1 + $0x12b8] sm:$0xff]
    %v622 = vld [vmem:[%s1 + $0x12c0] sm:$0xff]
    %v623 = vld [vmem:[%s1 + $0x12c8] sm:$0xff]
    %v624 = vld [vmem:[%s1 + $0x12d0] sm:$0xff]
    %v625 = vld [vmem:[%s1 + $0x12d8] sm:$0xff]
    %v626 = vld [vmem:[%s1 + $0x12e0] sm:$0xff]
    %v627 = vld [vmem:[%s1 + $0x12e8] sm:$0xff]
    %v628 = vld [vmem:[%s1 + $0x12f0] sm:$0xff]
    %v629 = vld [vmem:[%s1 + $0x12f8] sm:$0xff]
    %v630 = vld [vmem:[%s1 + $0x1300] sm:$0xff]
    %v631 = vld [vmem:[%s1 + $0x1308] sm:$0xff]
    %v632 = vld [vmem:[%s1 + $0x1310] sm:$0xff]
    %v633 = vld [vmem:[%s1 + $0x1318] sm:$0xff]
    %v634 = vld [vmem:[%s1 + $0x1320] sm:$0xff]
    %v635 = vld [vmem:[%s1 + $0x1328] sm:$0xff]
    %v636 = vld [vmem:[%s1 + $0x1330] sm:$0xff]
    %v637 = vld [vmem:[%s1 + $0x1338] sm:$0xff]
    %v638 = vld [vmem:[%s1 + $0x1340] sm:$0xff]
    %v639 = vld [vmem:[%s1 + $0x1348] sm:$0xff]
    %v640 = vld [vmem:[%s1 + $0x1350] sm:$0xff]
    %v641 = vld [vmem:[%s1 + $0x1358] sm:$0xff]
    %v642 = vld [vmem:[%s1 + $0x1360] sm:$0xff]
    %v643 = vld [vmem:[%s1 + $0x1368] sm:$0xff]
    %v644 = vld [vmem:[%s1 + $0x1370] sm:$0xff]
    %v645 = vld [vmem:[%s1 + $0x1378] sm:$0xff]
    %v646 = vld [vmem:[%s1 + $0x1380] sm:$0xff]
    %v647 = vld [vmem:[%s1 + $0x1388] sm:$0xff]
    %v648 = vld [vmem:[%s1 + $0x1390] sm:$0xff]
    %v649 = vld [vmem:[%s1 + $0x1398] sm:$0xff]
    %v650 = vld [vmem:[%s1 + $0x13a0] sm:$0xff]
    %v651 = vld [vmem:[%s1 + $0x13a8] sm:$0xff]
    %v652 = vld [vmem:[%s1 + $0x13b0] sm:$0xff]
    %v653 = vld [vmem:[%s1 + $0x13b8] sm:$0xff]
    %v654 = vld [vmem:[%s1 + $0x13c0] sm:$0xff]
    %v655 = vld [vmem:[%s1 + $0x13c8] sm:$0xff]
    %v656 = vld [vmem:[%s1 + $0x13d0] sm:$0xff]
    %v657 = vld [vmem:[%s1 + $0x13d8] sm:$0xff]
    %v658 = vld [vmem:[%s1 + $0x13e0] sm:$0xff]
    %v659 = vld [vmem:[%s1 + $0x13e8] sm:$0xff]
    %v660 = vld [vmem:[%s1 + $0x13f0] sm:$0xff]
    %v661 = vld [vmem:[%s1 + $0x13f8] sm:$0xff]
    %v662 = vld [vmem:[%s1 + $0x1400] sm:$0xff]
    %v663 = vld [vmem:[%s1 + $0x1408] sm:$0xff]
    %v664 = vld [vmem:[%s1 + $0x1410] sm:$0xff]
    %v665 = vld [vmem:[%s1 + $0x1418] sm:$0xff]
    %v666 = vld [vmem:[%s1 + $0x1420] sm:$0xff]
    %v667 = vld [vmem:[%s1 + $0x1428] sm:$0xff]
    %v668 = vld [vmem:[%s1 + $0x1430] sm:$0xff]
    %v669 = vld [vmem:[%s1 + $0x1438] sm:$0xff]
    %v670 = vld [vmem:[%s1 + $0x1440] sm:$0xff]
    %v671 = vld [vmem:[%s1 + $0x1448] sm:$0xff]
    %v672 = vld [vmem:[%s1 + $0x1450] sm:$0xff]
    %v673 = vld [vmem:[%s1 + $0x1458] sm:$0xff]
    %v674 = vld [vmem:[%s1 + $0x1460] sm:$0xff]
    %v675 = vld [vmem:[%s1 + $0x1468] sm:$0xff]
    %v676 = vld [vmem:[%s1 + $0x1470] sm:$0xff]
    %v677 = vld [vmem:[%s1 + $0x1478] sm:$0xff]
    %v678 = vld [vmem:[%s1 + $0x1480] sm:$0xff]
    %v679 = vld [vmem:[%s1 + $0x1488] sm:$0xff]
    %v680 = vld [vmem:[%s1 + $0x1490] sm:$0xff]
    %v681 = vld [vmem:[%s1 + $0x1498] sm:$0xff]
    %v682 = vld [vmem:[%s1 + $0x14a0] sm:$0xff]
    %v683 = vld [vmem:[%s1 + $0x14a8] sm:$0xff]
    %v684 = vld [vmem:[%s1 + $0x14b0] sm:$0xff]
    %v685 = vld [vmem:[%s1 + $0x14b8] sm:$0xff]
    %v686 = vld [vmem:[%s1 + $0x14c0] sm:$0xff]
    %v687 = vld [vmem:[%s1 + $0x14c8] sm:$0xff]
    %v688 = vld [vmem:[%s1 + $0x14d0] sm:$0xff]
    %v689 = vld [vmem:[%s1 + $0x14d8] sm:$0xff]
    %v690 = vld [vmem:[%s1 + $0x14e0] sm:$0xff]
    %v691 = vld [vmem:[%s1 + $0x14e8] sm:$0xff]
    %v692 = vld [vmem:[%s1 + $0x14f0] sm:$0xff]
    %v693 = vld [vmem:[%s1 + $0x14f8] sm:$0xff]
    %v694 = vld [vmem:[%s1 + $0x1500] sm:$0xff]
    %v695 = vld [vmem:[%s1 + $0x1508] sm:$0xff]
    %v696 = vld [vmem:[%s1 + $0x1510] sm:$0xff]
    %v697 = vld [vmem:[%s1 + $0x1518] sm:$0xff]
    %v698 = vld [vmem:[%s1 + $0x1520] sm:$0xff]
    %v699 = vld [vmem:[%s1 + $0x1528] sm:$0xff]
    %v700 = vld [vmem:[%s1 + $0x1530] sm:$0xff]
    %v701 = vld [vmem:[%s1 + $0x1538] sm:$0xff]
    %v702 = vld [vmem:[%s1 + $0x1540] sm:$0xff]
    %v703 = vld [vmem:[%s1 + $0x1548] sm:$0xff]
    %v704 = vld [vmem:[%s1 + $0x1550] sm:$0xff]
    %v705 = vld [vmem:[%s1 + $0x1558] sm:$0xff]
    %v706 = vld [vmem:[%s1 + $0x1560] sm:$0xff]
    %v707 = vld [vmem:[%s1 + $0x1568] sm:$0xff]
    %v708 = vld [vmem:[%s1 + $0x1570] sm:$0xff]
    %v709 = vld [vmem:[%s1 + $0x1578] sm:$0xff]
    %v710 = vld [vmem:[%s1 + $0x1580] sm:$0xff]
    %v711 = vld [vmem:[%s1 + $0x1588] sm:$0xff]
    %v712 = vld [vmem:[%s1 + $0x1590] sm:$0xff]
    %v713 = vld [vmem:[%s1 + $0x1598] sm:$0xff]
    %v714 = vld [vmem:[%s1 + $0x15a0] sm:$0xff]
    %v715 = vld [vmem:[%s1 + $0x15a8] sm:$0xff]
    %v716 = vld [vmem:[%s1 + $0x15b0] sm:$0xff]
    %v717 = vld [vmem:[%s1 + $0x15b8] sm:$0xff]
    %v718 = vld [vmem:[%s1 + $0x15c0] sm:$0xff]
    %v719 = vld [vmem:[%s1 + $0x15c8] sm:$0xff]
    %v720 = vld [vmem:[%s1 + $0x15d0] sm:$0xff]
    %v721 = vld [vmem:[%s1 + $0x15d8] sm:$0xff]
    %v722 = vld [vmem:[%s1 + $0x15e0] sm:$0xff]
    %v723 = vld [vmem:[%s1 + $0x15e8] sm:$0xff]
    %v724 = vld [vmem:[%s1 + $0x15f0] sm:$0xff]
    %v725 = vld [vmem:[%s1 + $0x15f8] sm:$0xff]
    %v726 = vld [vmem:[%s1 + $0x1600] sm:$0xff]
    %v727 = vld [vmem:[%s1 + $0x1608] sm:$0xff]
    %v728 = vld [vmem:[%s1 + $0x1610] sm:$0xff]
    %v729 = vld [vmem:[%s1 + $0x1618] sm:$0xff]
    %v730 = vld [vmem:[%s1 + $0x1620] sm:$0xff]
    %v731 = vld [vmem:[%s1 + $0x1628] sm:$0xff]
    %v732 = vld [vmem:[%s1 + $0x1630] sm:$0xff]
    %v733 = vld [vmem:[%s1 + $0x1638] sm:$0xff]
    %v734 = vld [vmem:[%s1 + $0x1640] sm:$0xff]
    %v735 = vld [vmem:[%s1 + $0x1648] sm:$0xff]
    %v736 = vld [vmem:[%s1 + $0x1650] sm:$0xff]
    %v737 = vld [vmem:[%s1 + $0x1658] sm:$0xff]
    %v738 = vld [vmem:[%s1 + $0x1660] sm:$0xff]
    %v739 = vld [vmem:[%s1 + $0x1668] sm:$0xff]
    %v740 = vld [vmem:[%s1 + $0x1670] sm:$0xff]
    %v741 = vld [vmem:[%s1 + $0x1678] sm:$0xff]
    %v742 = vld [vmem:[%s1 + $0x1680] sm:$0xff]
    %v743 = vld [vmem:[%s1 + $0x1688] sm:$0xff]
    %v744 = vld [vmem:[%s1 + $0x1690] sm:$0xff]
    %v745 = vld [vmem:[%s1 + $0x1698] sm:$0xff]
    %v746 = vld [vmem:[%s1 + $0x16a0] sm:$0xff]
    %v747 = vld [vmem:[%s1 + $0x16a8] sm:$0xff]
    %v748 = vld [vmem:[%s1 + $0x16b0] sm:$0xff]
    %v749 = vld [vmem:[%s1 + $0x16b8] sm:$0xff]
    %v750 = vld [vmem:[%s1 + $0x16c0] sm:$0xff]
    %v751 = vld [vmem:[%s1 + $0x16c8] sm:$0xff]
    %v752 = vld [vmem:[%s1 + $0x16d0] sm:$0xff]
    %v753 = vld [vmem:[%s1 + $0x16d8] sm:$0xff]
    %v754 = vld [vmem:[%s1 + $0x16e0] sm:$0xff]
    %v755 = vld [vmem:[%s1 + $0x16e8] sm:$0xff]
    %v756 = vld [vmem:[%s1 + $0x16f0] sm:$0xff]
    %v757 = vld [vmem:[%s1 + $0x16f8] sm:$0xff]
    %v758 = vld [vmem:[%s1 + $0x1700] sm:$0xff]
    %v759 = vld [vmem:[%s1 + $0x1708] sm:$0xff]
    %v760 = vld [vmem:[%s1 + $0x1710] sm:$0xff]
    %v761 = vld [vmem:[%s1 + $0x1718] sm:$0xff]
    %v762 = vld [vmem:[%s1 + $0x1720] sm:$0xff]
    %v763 = vld [vmem:[%s1 + $0x1728] sm:$0xff]
    %v764 = vld [vmem:[%s1 + $0x1730] sm:$0xff]
    %v765 = vld [vmem:[%s1 + $0x1738] sm:$0xff]
    %v766 = vld [vmem:[%s1 + $0x1740] sm:$0xff]
    %v767 = vld [vmem:[%s1 + $0x1748] sm:$0xff]
    %v768 = vld [vmem:[%s1 + $0x1750] sm:$0xff]
    %v769 = vld [vmem:[%s1 + $0x1758] sm:$0xff]
    %v770 = vld [vmem:[%s1 + $0x1760] sm:$0xff]
    %v771 = vld [vmem:[%s1 + $0x1768] sm:$0xff]
    %v772 = vld [vmem:[%s1 + $0x1770] sm:$0xff]
    %v773 = vld [vmem:[%s1 + $0x1778] sm:$0xff]
    %v774 = vld [vmem:[%s1 + $0x1780] sm:$0xff]
    %v775 = vld [vmem:[%s1 + $0x1788] sm:$0xff]
    %v776 = vld [vmem:[%s1 + $0x1790] sm:$0xff]
    %v777 = vld [vmem:[%s1 + $0x1798] sm:$0xff]
    %v778 = vld [vmem:[%s1 + $0x17a0] sm:$0xff]
    %v779 = vld [vmem:[%s1 + $0x17a8] sm:$0xff]
    %v780 = vld [vmem:[%s1 + $0x17b0] sm:$0xff]
    %v781 = vld [vmem:[%s1 + $0x17b8] sm:$0xff]
    %v782 = vld [vmem:[%s1 + $0x17c0] sm:$0xff]
    %v783 = vld [vmem:[%s1 + $0x17c8] sm:$0xff]
    %v784 = vld [vmem:[%s1 + $0x17d0] sm:$0xff]
    %v785 = vld [vmem:[%s1 + $0x17d8] sm:$0xff]
    %v786 = vld [vmem:[%s1 + $0x17e0] sm:$0xff]
    %v787 = vld [vmem:[%s1 + $0x17e8] sm:$0xff]
    %v788 = vld [vmem:[%s1 + $0x17f0] sm:$0xff]
    %v789 = vld [vmem:[%s1 + $0x17f8] sm:$0xff]
    %v790 = vld [vmem:[%s1 + $0x1800] sm:$0xff]
    %v791 = vld [vmem:[%s1 + $0x1808] sm:$0xff]
    %v792 = vld [vmem:[%s1 + $0x1810] sm:$0xff]
    %v793 = vld [vmem:[%s1 + $0x1818] sm:$0xff]
    %v794 = vld [vmem:[%s1 + $0x1820] sm:$0xff]
    %v795 = vld [vmem:[%s1 + $0x1828] sm:$0xff]
    %v796 = vld [vmem:[%s1 + $0x1830] sm:$0xff]
    %v797 = vld [vmem:[%s1 + $0x1838] sm:$0xff]
    %v798 = vld [vmem:[%s1 + $0x1840] sm:$0xff]
    %v799 = vld [vmem:[%s1 + $0x1848] sm:$0xff]
    %v800 = vld [vmem:[%s1 + $0x1850] sm:$0xff]
    %v801 = vld [vmem:[%s1 + $0x1858] sm:$0xff]
    %v802 = vld [vmem:[%s1 + $0x1860] sm:$0xff]
    %v803 = vld [vmem:[%s1 + $0x1868] sm:$0xff]
    %v804 = vld [vmem:[%s1 + $0x1870] sm:$0xff]
    %v805 = vld [vmem:[%s1 + $0x1878] sm:$0xff]
    %v806 = vld [vmem:[%s1 + $0x1880] sm:$0xff]
    %v807 = vld [vmem:[%s1 + $0x1888] sm:$0xff]
    %v808 = vld [vmem:[%s1 + $0x1890] sm:$0xff]
    %v809 = vld [vmem:[%s1 + $0x1898] sm:$0xff]
    %v810 = vld [vmem:[%s1 + $0x18a0] sm:$0xff]
    %v811 = vld [vmem:[%s1 + $0x18a8] sm:$0xff]
    %v812 = vld [vmem:[%s1 + $0x18b0] sm:$0xff]
    %v813 = vld [vmem:[%s1 + $0x18b8] sm:$0xff]
    %v814 = vld [vmem:[%s1 + $0x18c0] sm:$0xff]
    %v815 = vld [vmem:[%s1 + $0x18c8] sm:$0xff]
    %v816 = vld [vmem:[%s1 + $0x18d0] sm:$0xff]
    %v817 = vld [vmem:[%s1 + $0x18d8] sm:$0xff]
    %v818 = vld [vmem:[%s1 + $0x18e0] sm:$0xff]
    %v819 = vld [vmem:[%s1 + $0x18e8] sm:$0xff]
    %v820 = vld [vmem:[%s1 + $0x18f0] sm:$0xff]
    %v821 = vld [vmem:[%s1 + $0x18f8] sm:$0xff]
    %v822 = vld [vmem:[%s1 + $0x1900] sm:$0xff]
    %v823 = vld [vmem:[%s1 + $0x1908] sm:$0xff]
    %v824 = vld [vmem:[%s1 + $0x1910] sm:$0xff]
    %v825 = vld [vmem:[%s1 + $0x1918] sm:$0xff]
    %v826 = vld [vmem:[%s1 + $0x1920] sm:$0xff]
    %v827 = vld [vmem:[%s1 + $0x1928] sm:$0xff]
    %v828 = vld [vmem:[%s1 + $0x1930] sm:$0xff]
    %v829 = vld [vmem:[%s1 + $0x1938] sm:$0xff]
    %v830 = vld [vmem:[%s1 + $0x1940] sm:$0xff]
    %v831 = vld [vmem:[%s1 + $0x1948] sm:$0xff]
    %v832 = vld [vmem:[%s1 + $0x1950] sm:$0xff]
    %v833 = vld [vmem:[%s1 + $0x1958] sm:$0xff]
    %v834 = vld [vmem:[%s1 + $0x1960] sm:$0xff]
    %v835 = vld [vmem:[%s1 + $0x1968] sm:$0xff]
    %v836 = vld [vmem:[%s1 + $0x1970] sm:$0xff]
    %v837 = vld [vmem:[%s1 + $0x1978] sm:$0xff]
    %v838 = vld [vmem:[%s1 + $0x1980] sm:$0xff]
    %v839 = vld [vmem:[%s1 + $0x1988] sm:$0xff]
    %v840 = vld [vmem:[%s1 + $0x1990] sm:$0xff]
    %v841 = vld [vmem:[%s1 + $0x1998] sm:$0xff]
    %v842 = vld [vmem:[%s1 + $0x19a0] sm:$0xff]
    %v843 = vld [vmem:[%s1 + $0x19a8] sm:$0xff]
    %v844 = vld [vmem:[%s1 + $0x19b0] sm:$0xff]
    %v845 = vld [vmem:[%s1 + $0x19b8] sm:$0xff]
    %v846 = vld [vmem:[%s1 + $0x19c0] sm:$0xff]
    %v847 = vld [vmem:[%s1 + $0x19c8] sm:$0xff]
    %v848 = vld [vmem:[%s1 + $0x19d0] sm:$0xff]
    %v849 = vld [vmem:[%s1 + $0x19d8] sm:$0xff]
    %v850 = vld [vmem:[%s1 + $0x19e0] sm:$0xff]
    %v851 = vld [vmem:[%s1 + $0x19e8] sm:$0xff]
    %v852 = vld [vmem:[%s1 + $0x19f0] sm:$0xff]
    %v853 = vld [vmem:[%s1 + $0x19f8] sm:$0xff]
    %v854 = vld [vmem:[%s1 + $0x1a00] sm:$0xff]
    %v855 = vld [vmem:[%s1 + $0x1a08] sm:$0xff]
    %v856 = vld [vmem:[%s1 + $0x1a10] sm:$0xff]
    %v857 = vld [vmem:[%s1 + $0x1a18] sm:$0xff]
    %v858 = vld [vmem:[%s1 + $0x1a20] sm:$0xff]
    %v859 = vld [vmem:[%s1 + $0x1a28] sm:$0xff]
    %v860 = vld [vmem:[%s1 + $0x1a30] sm:$0xff]
    %v861 = vld [vmem:[%s1 + $0x1a38] sm:$0xff]
    %v862 = vld [vmem:[%s1 + $0x1a40] sm:$0xff]
    %v863 = vld [vmem:[%s1 + $0x1a48] sm:$0xff]
    %v864 = vld [vmem:[%s1 + $0x1a50] sm:$0xff]
    %v865 = vld [vmem:[%s1 + $0x1a58] sm:$0xff]
    %v866 = vld [vmem:[%s1 + $0x1a60] sm:$0xff]
    %v867 = vld [vmem:[%s1 + $0x1a68] sm:$0xff]
    %v868 = vld [vmem:[%s1 + $0x1a70] sm:$0xff]
    %v869 = vld [vmem:[%s1 + $0x1a78] sm:$0xff]
    %v870 = vld [vmem:[%s1 + $0x1a80] sm:$0xff]
    %v871 = vld [vmem:[%s1 + $0x1a88] sm:$0xff]
    %v872 = vld [vmem:[%s1 + $0x1a90] sm:$0xff]
    %v873 = vld [vmem:[%s1 + $0x1a98] sm:$0xff]
    %v874 = vld [vmem:[%s1 + $0x1aa0] sm:$0xff]
    %v875 = vld [vmem:[%s1 + $0x1aa8] sm:$0xff]
    %v876 = vld [vmem:[%s1 + $0x1ab0] sm:$0xff]
    %v877 = vld [vmem:[%s1 + $0x1ab8] sm:$0xff]
    %v878 = vld [vmem:[%s1 + $0x1ac0] sm:$0xff]
    %v879 = vld [vmem:[%s1 + $0x1ac8] sm:$0xff]
    %v880 = vld [vmem:[%s1 + $0x1ad0] sm:$0xff]
    %v881 = vld [vmem:[%s1 + $0x1ad8] sm:$0xff]
    %v882 = vld [vmem:[%s1 + $0x1ae0] sm:$0xff]
    %v883 = vld [vmem:[%s1 + $0x1ae8] sm:$0xff]
    %v884 = vld [vmem:[%s1 + $0x1af0] sm:$0xff]
    %v885 = vld [vmem:[%s1 + $0x1af8] sm:$0xff]
    %v892 = vunpack.c.l.b16 %v16
    %v893 = vunpack.c.h.b16 %v16
    %v894 = vunpack.c.l.b16 %v17
    %v895 = vunpack.c.h.b16 %v17
    %v896 = vunpack.c.l.b16 %v18
    %v897 = vunpack.c.l.b16 %v19
    %v898 = vunpack.c.h.b16 %v19
    %v899 = vunpack.c.l.b16 %v20
    %v900 = vunpack.c.h.b16 %v20
    %v901 = vunpack.c.l.b16 %v21
    %v902 = vpack.c.b16 %v897, %v892
    %v903 = vpack.c.b16 %v898, %v893
    %v904 = vpack.c.b16 %v899, %v894
    %v905 = vpack.c.b16 %v900, %v895
    %v906 = vpack.c.b16 %v901, %v896
    %v1775 = vunpack.c.l.b16 %v22
    %v1776 = vunpack.c.h.b16 %v22
    %v1777 = vunpack.c.l.b16 %v23
    %v1778 = vunpack.c.h.b16 %v23
    %v1779 = vunpack.c.l.b16 %v24
    %v1780 = vunpack.c.h.b16 %v24
    %v1781 = vunpack.c.l.b16 %v25
    %v1782 = vunpack.c.h.b16 %v25
    %v1783 = vunpack.c.l.b16 %v26
    %v1784 = vunpack.c.h.b16 %v26
    %v1785 = vunpack.c.l.b16 %v27
    %v1786 = vunpack.c.h.b16 %v27
    %v1787 = vunpack.c.l.b16 %v28
    %v1788 = vunpack.c.h.b16 %v28
    %v1789 = vunpack.c.l.b16 %v29
    %v1790 = vunpack.c.h.b16 %v29
    %v1791 = vunpack.c.l.b16 %v30
    %v1792 = vunpack.c.h.b16 %v30
    %v1793 = vunpack.c.l.b16 %v31
    %v1794 = vunpack.c.h.b16 %v31
    %v1795 = vunpack.c.l.b16 %v32
    %v1796 = vunpack.c.h.b16 %v32
    %v1797 = vunpack.c.l.b16 %v33
    %v1798 = vunpack.c.h.b16 %v33
    %v1799 = vunpack.c.l.b16 %v34
    %v1800 = vunpack.c.h.b16 %v34
    %v1801 = vunpack.c.l.b16 %v35
    %v1802 = vunpack.c.h.b16 %v35
    %v1803 = vunpack.c.l.b16 %v36
    %v1804 = vunpack.c.h.b16 %v36
    %v1805 = vunpack.c.l.b16 %v37
    %v1806 = vunpack.c.h.b16 %v37
    %v1807 = vunpack.c.l.b16 %v38
    %v1808 = vunpack.c.h.b16 %v38
    %v1809 = vunpack.c.l.b16 %v39
    %v1810 = vunpack.c.h.b16 %v39
    %v1811 = vunpack.c.l.b16 %v40
    %v1812 = vunpack.c.h.b16 %v40
    %v1813 = vunpack.c.l.b16 %v41
    %v1814 = vunpack.c.h.b16 %v41
    %v1815 = vunpack.c.l.b16 %v42
    %v1816 = vunpack.c.h.b16 %v42
    %v1817 = vunpack.c.l.b16 %v43
    %v1818 = vunpack.c.h.b16 %v43
    %v1819 = vunpack.c.l.b16 %v44
    %v1820 = vunpack.c.h.b16 %v44
    %v1821 = vunpack.c.l.b16 %v45
    %v1822 = vunpack.c.h.b16 %v45
    %v1823 = vunpack.c.l.b16 %v46
    %v1824 = vunpack.c.h.b16 %v46
    %v1825 = vunpack.c.l.b16 %v47
    %v1826 = vunpack.c.h.b16 %v47
    %v1827 = vunpack.c.l.b16 %v48
    %v1828 = vunpack.c.h.b16 %v48
    %v1829 = vunpack.c.l.b16 %v49
    %v1830 = vunpack.c.h.b16 %v49
    %v1831 = vunpack.c.l.b16 %v50
    %v1832 = vunpack.c.h.b16 %v50
    %v1833 = vunpack.c.l.b16 %v51
    %v1834 = vunpack.c.h.b16 %v51
    %v1835 = vunpack.c.l.b16 %v52
    %v1836 = vunpack.c.h.b16 %v52
    %v1837 = vunpack.c.l.b16 %v53
    %v1838 = vunpack.c.h.b16 %v53
    %v1839 = vunpack.c.l.b16 %v54
    %v1840 = vunpack.c.h.b16 %v54
    %v1841 = vunpack.c.l.b16 %v55
    %v1842 = vunpack.c.h.b16 %v55
    %v1843 = vunpack.c.l.b16 %v56
    %v1844 = vunpack.c.h.b16 %v56
    %v1845 = vunpack.c.l.b16 %v57
    %v1846 = vunpack.c.h.b16 %v57
    %v1847 = vunpack.c.l.b16 %v58
    %v1848 = vunpack.c.h.b16 %v58
    %v1849 = vunpack.c.l.b16 %v59
    %v1850 = vunpack.c.h.b16 %v59
    %v1851 = vunpack.c.l.b16 %v60
    %v1852 = vunpack.c.h.b16 %v60
    %v1853 = vunpack.c.l.b16 %v61
    %v1854 = vunpack.c.h.b16 %v61
    %v1855 = vunpack.c.l.b16 %v62
    %v1856 = vunpack.c.h.b16 %v62
    %v1857 = vunpack.c.l.b16 %v63
    %v1858 = vunpack.c.h.b16 %v63
    %v1859 = vunpack.c.l.b16 %v64
    %v1860 = vunpack.c.h.b16 %v64
    %v1861 = vunpack.c.l.b16 %v65
    %v1862 = vunpack.c.h.b16 %v65
    %v1863 = vunpack.c.l.b16 %v66
    %v1864 = vunpack.c.h.b16 %v66
    %v1865 = vunpack.c.l.b16 %v67
    %v1866 = vunpack.c.h.b16 %v67
    %v1867 = vunpack.c.l.b16 %v68
    %v1868 = vunpack.c.h.b16 %v68
    %v1869 = vunpack.c.l.b16 %v69
    %v1870 = vunpack.c.h.b16 %v69
    %v1871 = vunpack.c.l.b16 %v70
    %v1872 = vunpack.c.h.b16 %v70
    %v1873 = vunpack.c.l.b16 %v71
    %v1874 = vunpack.c.h.b16 %v71
    %v1875 = vunpack.c.l.b16 %v72
    %v1876 = vunpack.c.h.b16 %v72
    %v1877 = vunpack.c.l.b16 %v73
    %v1878 = vunpack.c.h.b16 %v73
    %v1879 = vunpack.c.l.b16 %v74
    %v1880 = vunpack.c.h.b16 %v74
    %v1881 = vunpack.c.l.b16 %v75
    %v1882 = vunpack.c.h.b16 %v75
    %v1883 = vunpack.c.l.b16 %v76
    %v1884 = vunpack.c.h.b16 %v76
    %v1885 = vunpack.c.l.b16 %v77
    %v1886 = vunpack.c.h.b16 %v77
    %v1887 = vunpack.c.l.b16 %v78
    %v1888 = vunpack.c.h.b16 %v78
    %v1889 = vunpack.c.l.b16 %v79
    %v1890 = vunpack.c.h.b16 %v79
    %v1891 = vunpack.c.l.b16 %v80
    %v1892 = vunpack.c.h.b16 %v80
    %v1893 = vunpack.c.l.b16 %v81
    %v1894 = vunpack.c.h.b16 %v81
    %v1895 = vunpack.c.l.b16 %v82
    %v1896 = vunpack.c.h.b16 %v82
    %v1897 = vunpack.c.l.b16 %v83
    %v1898 = vunpack.c.h.b16 %v83
    %v1899 = vunpack.c.l.b16 %v84
    %v1900 = vunpack.c.h.b16 %v84
    %v1901 = vunpack.c.l.b16 %v85
    %v1902 = vunpack.c.h.b16 %v85
    %v1903 = vunpack.c.l.b16 %v86
    %v1904 = vunpack.c.h.b16 %v86
    %v1905 = vunpack.c.l.b16 %v87
    %v1906 = vunpack.c.h.b16 %v87
    %v1907 = vunpack.c.l.b16 %v88
    %v1908 = vunpack.c.h.b16 %v88
    %v1909 = vunpack.c.l.b16 %v89
    %v1910 = vunpack.c.h.b16 %v89
    %v1911 = vunpack.c.l.b16 %v90
    %v1912 = vunpack.c.h.b16 %v90
    %v1913 = vunpack.c.l.b16 %v91
    %v1914 = vunpack.c.h.b16 %v91
    %v1915 = vunpack.c.l.b16 %v92
    %v1916 = vunpack.c.h.b16 %v92
    %v1917 = vunpack.c.l.b16 %v93
    %v1918 = vunpack.c.h.b16 %v93
    %v1919 = vunpack.c.l.b16 %v94
    %v1920 = vunpack.c.h.b16 %v94
    %v1921 = vunpack.c.l.b16 %v95
    %v1922 = vunpack.c.h.b16 %v95
    %v1923 = vunpack.c.l.b16 %v96
    %v1924 = vunpack.c.h.b16 %v96
    %v1925 = vunpack.c.l.b16 %v97
    %v1926 = vunpack.c.h.b16 %v97
    %v1927 = vunpack.c.l.b16 %v98
    %v1928 = vunpack.c.h.b16 %v98
    %v1929 = vunpack.c.l.b16 %v99
    %v1930 = vunpack.c.h.b16 %v99
    %v1931 = vunpack.c.l.b16 %v100
    %v1932 = vunpack.c.h.b16 %v100
    %v1933 = vunpack.c.l.b16 %v101
    %v1934 = vunpack.c.h.b16 %v101
    %v1935 = vunpack.c.l.b16 %v102
    %v1936 = vunpack.c.h.b16 %v102
    %v1937 = vunpack.c.l.b16 %v103
    %v1938 = vunpack.c.h.b16 %v103
    %v1939 = vunpack.c.l.b16 %v104
    %v1940 = vunpack.c.h.b16 %v104
    %v1941 = vunpack.c.l.b16 %v105
    %v1942 = vunpack.c.h.b16 %v105
    %v1943 = vunpack.c.l.b16 %v106
    %v1944 = vunpack.c.h.b16 %v106
    %v1945 = vunpack.c.l.b16 %v107
    %v1946 = vunpack.c.h.b16 %v107
    %v1947 = vunpack.c.l.b16 %v108
    %v1948 = vunpack.c.h.b16 %v108
    %v1949 = vunpack.c.l.b16 %v109
    %v1950 = vunpack.c.h.b16 %v109
    %v1951 = vunpack.c.l.b16 %v110
    %v1952 = vunpack.c.h.b16 %v110
    %v1953 = vunpack.c.l.b16 %v111
    %v1954 = vunpack.c.h.b16 %v111
    %v1955 = vunpack.c.l.b16 %v112
    %v1956 = vunpack.c.h.b16 %v112
    %v1957 = vunpack.c.l.b16 %v113
    %v1958 = vunpack.c.h.b16 %v113
    %v1959 = vunpack.c.l.b16 %v114
    %v1960 = vunpack.c.h.b16 %v114
    %v1961 = vunpack.c.l.b16 %v115
    %v1962 = vunpack.c.h.b16 %v115
    %v1963 = vunpack.c.l.b16 %v116
    %v1964 = vunpack.c.h.b16 %v116
    %v1965 = vunpack.c.l.b16 %v117
    %v1966 = vunpack.c.h.b16 %v117
    %v1967 = vunpack.c.l.b16 %v118
    %v1968 = vunpack.c.h.b16 %v118
    %v1969 = vunpack.c.l.b16 %v119
    %v1970 = vunpack.c.h.b16 %v119
    %v1971 = vunpack.c.l.b16 %v120
    %v1972 = vunpack.c.h.b16 %v120
    %v1973 = vunpack.c.l.b16 %v121
    %v1974 = vunpack.c.h.b16 %v121
    %v1975 = vunpack.c.l.b16 %v122
    %v1976 = vunpack.c.h.b16 %v122
    %v1977 = vunpack.c.l.b16 %v123
    %v1978 = vunpack.c.h.b16 %v123
    %v1979 = vunpack.c.l.b16 %v124
    %v1980 = vunpack.c.h.b16 %v124
    %v1981 = vunpack.c.l.b16 %v125
    %v1982 = vunpack.c.h.b16 %v125
    %v1983 = vunpack.c.l.b16 %v126
    %v1984 = vunpack.c.h.b16 %v126
    %v1985 = vunpack.c.l.b16 %v127
    %v1986 = vunpack.c.h.b16 %v127
    %v1987 = vunpack.c.l.b16 %v128
    %v1988 = vunpack.c.h.b16 %v128
    %v1989 = vunpack.c.l.b16 %v129
    %v1990 = vunpack.c.h.b16 %v129
    %v1991 = vunpack.c.l.b16 %v130
    %v1992 = vunpack.c.h.b16 %v130
    %v1993 = vunpack.c.l.b16 %v131
    %v1994 = vunpack.c.h.b16 %v131
    %v1995 = vunpack.c.l.b16 %v132
    %v1996 = vunpack.c.h.b16 %v132
    %v1997 = vunpack.c.l.b16 %v133
    %v1998 = vunpack.c.h.b16 %v133
    %v1999 = vunpack.c.l.b16 %v134
    %v2000 = vunpack.c.h.b16 %v134
    %v2001 = vunpack.c.l.b16 %v135
    %v2002 = vunpack.c.h.b16 %v135
    %v2003 = vunpack.c.l.b16 %v136
    %v2004 = vunpack.c.h.b16 %v136
    %v2005 = vunpack.c.l.b16 %v137
    %v2006 = vunpack.c.h.b16 %v137
    %v2007 = vunpack.c.l.b16 %v138
    %v2008 = vunpack.c.h.b16 %v138
    %v2009 = vunpack.c.l.b16 %v139
    %v2010 = vunpack.c.h.b16 %v139
    %v2011 = vunpack.c.l.b16 %v140
    %v2012 = vunpack.c.h.b16 %v140
    %v2013 = vunpack.c.l.b16 %v141
    %v2014 = vunpack.c.h.b16 %v141
    %v2015 = vunpack.c.l.b16 %v142
    %v2016 = vunpack.c.h.b16 %v142
    %v2017 = vunpack.c.l.b16 %v143
    %v2018 = vunpack.c.h.b16 %v143
    %v2019 = vunpack.c.l.b16 %v144
    %v2020 = vunpack.c.h.b16 %v144
    %v2021 = vunpack.c.l.b16 %v145
    %v2022 = vunpack.c.h.b16 %v145
    %v2023 = vunpack.c.l.b16 %v146
    %v2024 = vunpack.c.h.b16 %v146
    %v2025 = vunpack.c.l.b16 %v147
    %v2026 = vunpack.c.h.b16 %v147
    %v2027 = vunpack.c.l.b16 %v148
    %v2028 = vunpack.c.h.b16 %v148
    %v2029 = vunpack.c.l.b16 %v149
    %v2030 = vunpack.c.h.b16 %v149
    %v2031 = vunpack.c.l.b16 %v150
    %v2032 = vunpack.c.h.b16 %v150
    %v2033 = vunpack.c.l.b16 %v151
    %v2034 = vunpack.c.h.b16 %v151
    %v2035 = vunpack.c.l.b16 %v152
    %v2036 = vunpack.c.h.b16 %v152
    %v2037 = vunpack.c.l.b16 %v153
    %v2038 = vunpack.c.h.b16 %v153
    %v2039 = vunpack.c.l.b16 %v154
    %v2040 = vunpack.c.h.b16 %v154
    %v2041 = vunpack.c.l.b16 %v155
    %v2042 = vunpack.c.h.b16 %v155
    %v2043 = vunpack.c.l.b16 %v156
    %v2044 = vunpack.c.h.b16 %v156
    %v2045 = vunpack.c.l.b16 %v157
    %v2046 = vunpack.c.h.b16 %v157
    %v2047 = vunpack.c.l.b16 %v158
    %v2048 = vunpack.c.h.b16 %v158
    %v2049 = vunpack.c.l.b16 %v159
    %v2050 = vunpack.c.h.b16 %v159
    %v2051 = vunpack.c.l.b16 %v160
    %v2052 = vunpack.c.h.b16 %v160
    %v2053 = vunpack.c.l.b16 %v161
    %v2054 = vunpack.c.h.b16 %v161
    %v2055 = vunpack.c.l.b16 %v162
    %v2056 = vunpack.c.h.b16 %v162
    %v2057 = vunpack.c.l.b16 %v163
    %v2058 = vunpack.c.h.b16 %v163
    %v2059 = vunpack.c.l.b16 %v164
    %v2060 = vunpack.c.h.b16 %v164
    %v2061 = vunpack.c.l.b16 %v165
    %v2062 = vunpack.c.h.b16 %v165
    %v2063 = vunpack.c.l.b16 %v166
    %v2064 = vunpack.c.h.b16 %v166
    %v2065 = vunpack.c.l.b16 %v167
    %v2066 = vunpack.c.h.b16 %v167
    %v2067 = vunpack.c.l.b16 %v168
    %v2068 = vunpack.c.h.b16 %v168
    %v2069 = vunpack.c.l.b16 %v169
    %v2070 = vunpack.c.h.b16 %v169
    %v2071 = vunpack.c.l.b16 %v170
    %v2072 = vunpack.c.h.b16 %v170
    %v2073 = vunpack.c.l.b16 %v171
    %v2074 = vunpack.c.h.b16 %v171
    %v2075 = vunpack.c.l.b16 %v172
    %v2076 = vunpack.c.h.b16 %v172
    %v2077 = vunpack.c.l.b16 %v173
    %v2078 = vunpack.c.h.b16 %v173
    %v2079 = vunpack.c.l.b16 %v174
    %v2080 = vunpack.c.h.b16 %v174
    %v2081 = vunpack.c.l.b16 %v175
    %v2082 = vunpack.c.h.b16 %v175
    %v2083 = vunpack.c.l.b16 %v176
    %v2084 = vunpack.c.h.b16 %v176
    %v2085 = vunpack.c.l.b16 %v177
    %v2086 = vunpack.c.h.b16 %v177
    %v2087 = vunpack.c.l.b16 %v178
    %v2088 = vunpack.c.h.b16 %v178
    %v2089 = vunpack.c.l.b16 %v179
    %v2090 = vunpack.c.h.b16 %v179
    %v2091 = vunpack.c.l.b16 %v180
    %v2092 = vunpack.c.h.b16 %v180
    %v2093 = vunpack.c.l.b16 %v181
    %v2094 = vunpack.c.h.b16 %v181
    %v2095 = vunpack.c.l.b16 %v182
    %v2096 = vunpack.c.h.b16 %v182
    %v2097 = vunpack.c.l.b16 %v183
    %v2098 = vunpack.c.h.b16 %v183
    %v2099 = vunpack.c.l.b16 %v184
    %v2100 = vunpack.c.h.b16 %v184
    %v2101 = vunpack.c.l.b16 %v185
    %v2102 = vunpack.c.h.b16 %v185
    %v2103 = vunpack.c.l.b16 %v186
    %v2104 = vunpack.c.h.b16 %v186
    %v2105 = vunpack.c.l.b16 %v187
    %v2106 = vunpack.c.h.b16 %v187
    %v2107 = vunpack.c.l.b16 %v188
    %v2108 = vunpack.c.h.b16 %v188
    %v2109 = vunpack.c.l.b16 %v189
    %v2110 = vunpack.c.h.b16 %v189
    %v2111 = vunpack.c.l.b16 %v190
    %v2112 = vunpack.c.h.b16 %v190
    %v2113 = vunpack.c.l.b16 %v191
    %v2114 = vunpack.c.h.b16 %v191
    %v2115 = vunpack.c.l.b16 %v192
    %v2116 = vunpack.c.h.b16 %v192
    %v2117 = vunpack.c.l.b16 %v193
    %v2118 = vunpack.c.h.b16 %v193
    %v2119 = vunpack.c.l.b16 %v194
    %v2120 = vunpack.c.h.b16 %v194
    %v2121 = vunpack.c.l.b16 %v195
    %v2122 = vunpack.c.h.b16 %v195
    %v2123 = vunpack.c.l.b16 %v196
    %v2124 = vunpack.c.h.b16 %v196
    %v2125 = vunpack.c.l.b16 %v197
    %v2126 = vunpack.c.h.b16 %v197
    %v2127 = vunpack.c.l.b16 %v198
    %v2128 = vunpack.c.h.b16 %v198
    %v2129 = vunpack.c.l.b16 %v199
    %v2130 = vunpack.c.h.b16 %v199
    %v2131 = vunpack.c.l.b16 %v200
    %v2132 = vunpack.c.h.b16 %v200
    %v2133 = vunpack.c.l.b16 %v201
    %v2134 = vunpack.c.h.b16 %v201
    %v2135 = vunpack.c.l.b16 %v202
    %v2136 = vunpack.c.h.b16 %v202
    %v2137 = vunpack.c.l.b16 %v203
    %v2138 = vunpack.c.h.b16 %v203
    %v2139 = vunpack.c.l.b16 %v204
    %v2140 = vunpack.c.h.b16 %v204
    %v2141 = vunpack.c.l.b16 %v205
    %v2142 = vunpack.c.h.b16 %v205
    %v2143 = vunpack.c.l.b16 %v206
    %v2144 = vunpack.c.h.b16 %v206
    %v2145 = vunpack.c.l.b16 %v207
    %v2146 = vunpack.c.h.b16 %v207
    %v2147 = vunpack.c.l.b16 %v208
    %v2148 = vunpack.c.h.b16 %v208
    %v2149 = vunpack.c.l.b16 %v209
    %v2150 = vunpack.c.h.b16 %v209
    %v2151 = vunpack.c.l.b16 %v210
    %v2152 = vunpack.c.h.b16 %v210
    %v2153 = vunpack.c.l.b16 %v211
    %v2154 = vunpack.c.h.b16 %v211
    %v2155 = vunpack.c.l.b16 %v212
    %v2156 = vunpack.c.h.b16 %v212
    %v2157 = vunpack.c.l.b16 %v213
    %v2158 = vunpack.c.h.b16 %v213
    %v2159 = vunpack.c.l.b16 %v214
    %v2160 = vunpack.c.h.b16 %v214
    %v2161 = vunpack.c.l.b16 %v215
    %v2162 = vunpack.c.h.b16 %v215
    %v2163 = vunpack.c.l.b16 %v216
    %v2164 = vunpack.c.h.b16 %v216
    %v2165 = vunpack.c.l.b16 %v217
    %v2166 = vunpack.c.h.b16 %v217
    %v2167 = vunpack.c.l.b16 %v218
    %v2168 = vunpack.c.h.b16 %v218
    %v2169 = vunpack.c.l.b16 %v219
    %v2170 = vunpack.c.h.b16 %v219
    %v2171 = vunpack.c.l.b16 %v220
    %v2172 = vunpack.c.h.b16 %v220
    %v2173 = vunpack.c.l.b16 %v221
    %v2174 = vunpack.c.h.b16 %v221
    %v2175 = vunpack.c.l.b16 %v222
    %v2176 = vunpack.c.h.b16 %v222
    %v2177 = vunpack.c.l.b16 %v223
    %v2178 = vunpack.c.h.b16 %v223
    %v2179 = vunpack.c.l.b16 %v224
    %v2180 = vunpack.c.h.b16 %v224
    %v2181 = vunpack.c.l.b16 %v225
    %v2182 = vunpack.c.h.b16 %v225
    %v2183 = vunpack.c.l.b16 %v226
    %v2184 = vunpack.c.h.b16 %v226
    %v2185 = vunpack.c.l.b16 %v227
    %v2186 = vunpack.c.h.b16 %v227
    %v2187 = vunpack.c.l.b16 %v228
    %v2188 = vunpack.c.h.b16 %v228
    %v2189 = vunpack.c.l.b16 %v229
    %v2190 = vunpack.c.h.b16 %v229
    %v2191 = vunpack.c.l.b16 %v230
    %v2192 = vunpack.c.h.b16 %v230
    %v2193 = vunpack.c.l.b16 %v231
    %v2194 = vunpack.c.h.b16 %v231
    %v2195 = vunpack.c.l.b16 %v232
    %v2196 = vunpack.c.h.b16 %v232
    %v2197 = vunpack.c.l.b16 %v233
    %v2198 = vunpack.c.h.b16 %v233
    %v2199 = vunpack.c.l.b16 %v234
    %v2200 = vunpack.c.h.b16 %v234
    %v2201 = vunpack.c.l.b16 %v235
    %v2202 = vunpack.c.h.b16 %v235
    %v2203 = vunpack.c.l.b16 %v236
    %v2204 = vunpack.c.h.b16 %v236
    %v2205 = vunpack.c.l.b16 %v237
    %v2206 = vunpack.c.h.b16 %v237
    %v2207 = vunpack.c.l.b16 %v238
    %v2208 = vunpack.c.h.b16 %v238
    %v2209 = vunpack.c.l.b16 %v239
    %v2210 = vunpack.c.h.b16 %v239
    %v2211 = vunpack.c.l.b16 %v240
    %v2212 = vunpack.c.h.b16 %v240
    %v2213 = vunpack.c.l.b16 %v241
    %v2214 = vunpack.c.h.b16 %v241
    %v2215 = vunpack.c.l.b16 %v242
    %v2216 = vunpack.c.h.b16 %v242
    %v2217 = vunpack.c.l.b16 %v243
    %v2218 = vunpack.c.h.b16 %v243
    %v2219 = vunpack.c.l.b16 %v244
    %v2220 = vunpack.c.h.b16 %v244
    %v2221 = vunpack.c.l.b16 %v245
    %v2222 = vunpack.c.h.b16 %v245
    %v2223 = vunpack.c.l.b16 %v246
    %v2224 = vunpack.c.h.b16 %v246
    %v2225 = vunpack.c.l.b16 %v247
    %v2226 = vunpack.c.h.b16 %v247
    %v2227 = vunpack.c.l.b16 %v248
    %v2228 = vunpack.c.h.b16 %v248
    %v2229 = vunpack.c.l.b16 %v249
    %v2230 = vunpack.c.h.b16 %v249
    %v2231 = vunpack.c.l.b16 %v250
    %v2232 = vunpack.c.h.b16 %v250
    %v2233 = vunpack.c.l.b16 %v251
    %v2234 = vunpack.c.h.b16 %v251
    %v2235 = vunpack.c.l.b16 %v252
    %v2236 = vunpack.c.h.b16 %v252
    %v2237 = vunpack.c.l.b16 %v253
    %v2238 = vunpack.c.h.b16 %v253
    %v2239 = vunpack.c.l.b16 %v254
    %v2240 = vunpack.c.h.b16 %v254
    %v2241 = vunpack.c.l.b16 %v255
    %v2242 = vunpack.c.h.b16 %v255
    %v2243 = vunpack.c.l.b16 %v256
    %v2244 = vunpack.c.h.b16 %v256
    %v2245 = vunpack.c.l.b16 %v257
    %v2246 = vunpack.c.h.b16 %v257
    %v2247 = vunpack.c.l.b16 %v258
    %v2248 = vunpack.c.h.b16 %v258
    %v2249 = vunpack.c.l.b16 %v259
    %v2250 = vunpack.c.h.b16 %v259
    %v2251 = vunpack.c.l.b16 %v260
    %v2252 = vunpack.c.h.b16 %v260
    %v2253 = vunpack.c.l.b16 %v261
    %v2254 = vunpack.c.h.b16 %v261
    %v2255 = vunpack.c.l.b16 %v262
    %v2256 = vunpack.c.h.b16 %v262
    %v2257 = vunpack.c.l.b16 %v263
    %v2258 = vunpack.c.h.b16 %v263
    %v2259 = vunpack.c.l.b16 %v264
    %v2260 = vunpack.c.h.b16 %v264
    %v2261 = vunpack.c.l.b16 %v265
    %v2262 = vunpack.c.h.b16 %v265
    %v2263 = vunpack.c.l.b16 %v266
    %v2264 = vunpack.c.h.b16 %v266
    %v2265 = vunpack.c.l.b16 %v267
    %v2266 = vunpack.c.h.b16 %v267
    %v2267 = vunpack.c.l.b16 %v268
    %v2268 = vunpack.c.h.b16 %v268
    %v2269 = vunpack.c.l.b16 %v269
    %v2270 = vunpack.c.h.b16 %v269
    %v2271 = vunpack.c.l.b16 %v270
    %v2272 = vunpack.c.h.b16 %v270
    %v2273 = vunpack.c.l.b16 %v271
    %v2274 = vunpack.c.h.b16 %v271
    %v2275 = vunpack.c.l.b16 %v272
    %v2276 = vunpack.c.h.b16 %v272
    %v2277 = vunpack.c.l.b16 %v273
    %v2278 = vunpack.c.h.b16 %v273
    %v2279 = vunpack.c.l.b16 %v274
    %v2280 = vunpack.c.h.b16 %v274
    %v2281 = vunpack.c.l.b16 %v275
    %v2282 = vunpack.c.h.b16 %v275
    %v2283 = vunpack.c.l.b16 %v276
    %v2284 = vunpack.c.h.b16 %v276
    %v2285 = vunpack.c.l.b16 %v277
    %v2286 = vunpack.c.h.b16 %v277
    %v2287 = vunpack.c.l.b16 %v278
    %v2288 = vunpack.c.h.b16 %v278
    %v2289 = vunpack.c.l.b16 %v279
    %v2290 = vunpack.c.h.b16 %v279
    %v2291 = vunpack.c.l.b16 %v280
    %v2292 = vunpack.c.h.b16 %v280
    %v2293 = vunpack.c.l.b16 %v281
    %v2294 = vunpack.c.h.b16 %v281
    %v2295 = vunpack.c.l.b16 %v282
    %v2296 = vunpack.c.h.b16 %v282
    %v2297 = vunpack.c.l.b16 %v283
    %v2298 = vunpack.c.h.b16 %v283
    %v2299 = vunpack.c.l.b16 %v284
    %v2300 = vunpack.c.h.b16 %v284
    %v2301 = vunpack.c.l.b16 %v285
    %v2302 = vunpack.c.h.b16 %v285
    %v2303 = vunpack.c.l.b16 %v286
    %v2304 = vunpack.c.h.b16 %v286
    %v2305 = vunpack.c.l.b16 %v287
    %v2306 = vunpack.c.h.b16 %v287
    %v2307 = vunpack.c.l.b16 %v288
    %v2308 = vunpack.c.h.b16 %v288
    %v2309 = vunpack.c.l.b16 %v289
    %v2310 = vunpack.c.h.b16 %v289
    %v2311 = vunpack.c.l.b16 %v290
    %v2312 = vunpack.c.h.b16 %v290
    %v2313 = vunpack.c.l.b16 %v291
    %v2314 = vunpack.c.h.b16 %v291
    %v2315 = vunpack.c.l.b16 %v292
    %v2316 = vunpack.c.h.b16 %v292
    %v2317 = vunpack.c.l.b16 %v293
    %v2318 = vunpack.c.h.b16 %v293
    %v2319 = vunpack.c.l.b16 %v294
    %v2320 = vunpack.c.h.b16 %v294
    %v2321 = vunpack.c.l.b16 %v295
    %v2322 = vunpack.c.h.b16 %v295
    %v2323 = vunpack.c.l.b16 %v296
    %v2324 = vunpack.c.h.b16 %v296
    %v2325 = vunpack.c.l.b16 %v297
    %v2326 = vunpack.c.h.b16 %v297
    %v2327 = vunpack.c.l.b16 %v298
    %v2328 = vunpack.c.h.b16 %v298
    %v2329 = vunpack.c.l.b16 %v299
    %v2330 = vunpack.c.h.b16 %v299
    %v2331 = vunpack.c.l.b16 %v300
    %v2332 = vunpack.c.h.b16 %v300
    %v2333 = vunpack.c.l.b16 %v301
    %v2334 = vunpack.c.h.b16 %v301
    %v2335 = vunpack.c.l.b16 %v302
    %v2336 = vunpack.c.h.b16 %v302
    %v2337 = vunpack.c.l.b16 %v303
    %v2338 = vunpack.c.h.b16 %v303
    %v2339 = vunpack.c.l.b16 %v304
    %v2340 = vunpack.c.h.b16 %v304
    %v2341 = vunpack.c.l.b16 %v305
    %v2342 = vunpack.c.h.b16 %v305
    %v2343 = vunpack.c.l.b16 %v306
    %v2344 = vunpack.c.h.b16 %v306
    %v2345 = vunpack.c.l.b16 %v307
    %v2346 = vunpack.c.h.b16 %v307
    %v2347 = vunpack.c.l.b16 %v308
    %v2348 = vunpack.c.h.b16 %v308
    %v2349 = vunpack.c.l.b16 %v309
    %v2350 = vunpack.c.h.b16 %v309
    %v2351 = vunpack.c.l.b16 %v310
    %v2352 = vunpack.c.h.b16 %v310
    %v2353 = vunpack.c.l.b16 %v311
    %v2354 = vunpack.c.h.b16 %v311
    %v2355 = vunpack.c.l.b16 %v312
    %v2356 = vunpack.c.h.b16 %v312
    %v2357 = vunpack.c.l.b16 %v313
    %v2358 = vunpack.c.h.b16 %v313
    %v2359 = vunpack.c.l.b16 %v314
    %v2360 = vunpack.c.h.b16 %v314
    %v2361 = vunpack.c.l.b16 %v315
    %v2362 = vunpack.c.h.b16 %v315
    %v2363 = vunpack.c.l.b16 %v316
    %v2364 = vunpack.c.h.b16 %v316
    %v2365 = vunpack.c.l.b16 %v317
    %v2366 = vunpack.c.h.b16 %v317
    %v2367 = vunpack.c.l.b16 %v318
    %v2368 = vunpack.c.h.b16 %v318
    %v2369 = vunpack.c.l.b16 %v319
    %v2370 = vunpack.c.h.b16 %v319
    %v2371 = vunpack.c.l.b16 %v320
    %v2372 = vunpack.c.h.b16 %v320
    %v2373 = vunpack.c.l.b16 %v321
    %v2374 = vunpack.c.h.b16 %v321
    %v2375 = vunpack.c.l.b16 %v322
    %v2376 = vunpack.c.h.b16 %v322
    %v2377 = vunpack.c.l.b16 %v323
    %v2378 = vunpack.c.h.b16 %v323
    %v2379 = vunpack.c.l.b16 %v324
    %v2380 = vunpack.c.h.b16 %v324
    %v2381 = vunpack.c.l.b16 %v325
    %v2382 = vunpack.c.h.b16 %v325
    %v2383 = vunpack.c.l.b16 %v326
    %v2384 = vunpack.c.h.b16 %v326
    %v2385 = vunpack.c.l.b16 %v327
    %v2386 = vunpack.c.h.b16 %v327
    %v2387 = vunpack.c.l.b16 %v328
    %v2388 = vunpack.c.h.b16 %v328
    %v2389 = vunpack.c.l.b16 %v329
    %v2390 = vunpack.c.h.b16 %v329
    %v2391 = vunpack.c.l.b16 %v330
    %v2392 = vunpack.c.h.b16 %v330
    %v2393 = vunpack.c.l.b16 %v331
    %v2394 = vunpack.c.h.b16 %v331
    %v2395 = vunpack.c.l.b16 %v332
    %v2396 = vunpack.c.h.b16 %v332
    %v2397 = vunpack.c.l.b16 %v333
    %v2398 = vunpack.c.h.b16 %v333
    %v2399 = vunpack.c.l.b16 %v334
    %v2400 = vunpack.c.h.b16 %v334
    %v2401 = vunpack.c.l.b16 %v335
    %v2402 = vunpack.c.h.b16 %v335
    %v2403 = vunpack.c.l.b16 %v336
    %v2404 = vunpack.c.h.b16 %v336
    %v2405 = vunpack.c.l.b16 %v337
    %v2406 = vunpack.c.h.b16 %v337
    %v2407 = vunpack.c.l.b16 %v338
    %v2408 = vunpack.c.h.b16 %v338
    %v2409 = vunpack.c.l.b16 %v339
    %v2410 = vunpack.c.h.b16 %v339
    %v2411 = vunpack.c.l.b16 %v340
    %v2412 = vunpack.c.h.b16 %v340
    %v2413 = vunpack.c.l.b16 %v341
    %v2414 = vunpack.c.h.b16 %v341
    %v2415 = vunpack.c.l.b16 %v342
    %v2416 = vunpack.c.h.b16 %v342
    %v2417 = vunpack.c.l.b16 %v343
    %v2418 = vunpack.c.h.b16 %v343
    %v2419 = vunpack.c.l.b16 %v344
    %v2420 = vunpack.c.h.b16 %v344
    %v2421 = vunpack.c.l.b16 %v345
    %v2422 = vunpack.c.h.b16 %v345
    %v2423 = vunpack.c.l.b16 %v346
    %v2424 = vunpack.c.h.b16 %v346
    %v2425 = vunpack.c.l.b16 %v347
    %v2426 = vunpack.c.h.b16 %v347
    %v2427 = vunpack.c.l.b16 %v348
    %v2428 = vunpack.c.h.b16 %v348
    %v2429 = vunpack.c.l.b16 %v349
    %v2430 = vunpack.c.h.b16 %v349
    %v2431 = vunpack.c.l.b16 %v350
    %v2432 = vunpack.c.h.b16 %v350
    %v2433 = vunpack.c.l.b16 %v351
    %v2434 = vunpack.c.h.b16 %v351
    %v2435 = vunpack.c.l.b16 %v352
    %v2436 = vunpack.c.h.b16 %v352
    %v2437 = vunpack.c.l.b16 %v353
    %v2438 = vunpack.c.h.b16 %v353
    %v2439 = vunpack.c.l.b16 %v354
    %v2440 = vunpack.c.h.b16 %v354
    %v2441 = vunpack.c.l.b16 %v355
    %v2442 = vunpack.c.h.b16 %v355
    %v2443 = vunpack.c.l.b16 %v356
    %v2444 = vunpack.c.h.b16 %v356
    %v2445 = vunpack.c.l.b16 %v357
    %v2446 = vunpack.c.h.b16 %v357
    %v2447 = vunpack.c.l.b16 %v358
    %v2448 = vunpack.c.h.b16 %v358
    %v2449 = vunpack.c.l.b16 %v359
    %v2450 = vunpack.c.h.b16 %v359
    %v2451 = vunpack.c.l.b16 %v360
    %v2452 = vunpack.c.h.b16 %v360
    %v2453 = vunpack.c.l.b16 %v361
    %v2454 = vunpack.c.h.b16 %v361
    %v2455 = vunpack.c.l.b16 %v362
    %v2456 = vunpack.c.h.b16 %v362
    %v2457 = vunpack.c.l.b16 %v363
    %v2458 = vunpack.c.h.b16 %v363
    %v2459 = vunpack.c.l.b16 %v364
    %v2460 = vunpack.c.h.b16 %v364
    %v2461 = vunpack.c.l.b16 %v365
    %v2462 = vunpack.c.h.b16 %v365
    %v2463 = vunpack.c.l.b16 %v366
    %v2464 = vunpack.c.h.b16 %v366
    %v2465 = vunpack.c.l.b16 %v367
    %v2466 = vunpack.c.h.b16 %v367
    %v2467 = vunpack.c.l.b16 %v368
    %v2468 = vunpack.c.h.b16 %v368
    %v2469 = vunpack.c.l.b16 %v369
    %v2470 = vunpack.c.h.b16 %v369
    %v2471 = vunpack.c.l.b16 %v370
    %v2472 = vunpack.c.h.b16 %v370
    %v2473 = vunpack.c.l.b16 %v371
    %v2474 = vunpack.c.h.b16 %v371
    %v2475 = vunpack.c.l.b16 %v372
    %v2476 = vunpack.c.h.b16 %v372
    %v2477 = vunpack.c.l.b16 %v373
    %v2478 = vunpack.c.h.b16 %v373
    %v2479 = vunpack.c.l.b16 %v374
    %v2480 = vunpack.c.h.b16 %v374
    %v2481 = vunpack.c.l.b16 %v375
    %v2482 = vunpack.c.h.b16 %v375
    %v2483 = vunpack.c.l.b16 %v376
    %v2484 = vunpack.c.h.b16 %v376
    %v2485 = vunpack.c.l.b16 %v377
    %v2486 = vunpack.c.h.b16 %v377
    %v2487 = vunpack.c.l.b16 %v378
    %v2488 = vunpack.c.h.b16 %v378
    %v2489 = vunpack.c.l.b16 %v379
    %v2490 = vunpack.c.h.b16 %v379
    %v2491 = vunpack.c.l.b16 %v380
    %v2492 = vunpack.c.h.b16 %v380
    %v2493 = vunpack.c.l.b16 %v381
    %v2494 = vunpack.c.h.b16 %v381
    %v2495 = vunpack.c.l.b16 %v382
    %v2496 = vunpack.c.h.b16 %v382
    %v2497 = vunpack.c.l.b16 %v383
    %v2498 = vunpack.c.h.b16 %v383
    %v2499 = vunpack.c.l.b16 %v384
    %v2500 = vunpack.c.h.b16 %v384
    %v2501 = vunpack.c.l.b16 %v385
    %v2502 = vunpack.c.h.b16 %v385
    %v2503 = vunpack.c.l.b16 %v386
    %v2504 = vunpack.c.h.b16 %v386
    %v2505 = vunpack.c.l.b16 %v387
    %v2506 = vunpack.c.h.b16 %v387
    %v2507 = vunpack.c.l.b16 %v388
    %v2508 = vunpack.c.h.b16 %v388
    %v2509 = vunpack.c.l.b16 %v389
    %v2510 = vunpack.c.h.b16 %v389
    %v2511 = vunpack.c.l.b16 %v390
    %v2512 = vunpack.c.h.b16 %v390
    %v2513 = vunpack.c.l.b16 %v391
    %v2514 = vunpack.c.h.b16 %v391
    %v2515 = vunpack.c.l.b16 %v392
    %v2516 = vunpack.c.h.b16 %v392
    %v2517 = vunpack.c.l.b16 %v393
    %v2518 = vunpack.c.h.b16 %v393
    %v2519 = vunpack.c.l.b16 %v394
    %v2520 = vunpack.c.h.b16 %v394
    %v2521 = vunpack.c.l.b16 %v395
    %v2522 = vunpack.c.h.b16 %v395
    %v2523 = vunpack.c.l.b16 %v396
    %v2524 = vunpack.c.h.b16 %v396
    %v2525 = vunpack.c.l.b16 %v397
    %v2526 = vunpack.c.h.b16 %v397
    %v2527 = vunpack.c.l.b16 %v398
    %v2528 = vunpack.c.h.b16 %v398
    %v2529 = vunpack.c.l.b16 %v399
    %v2530 = vunpack.c.h.b16 %v399
    %v2531 = vunpack.c.l.b16 %v400
    %v2532 = vunpack.c.h.b16 %v400
    %v2533 = vunpack.c.l.b16 %v401
    %v2534 = vunpack.c.h.b16 %v401
    %v2535 = vunpack.c.l.b16 %v402
    %v2536 = vunpack.c.h.b16 %v402
    %v2537 = vunpack.c.l.b16 %v403
    %v2538 = vunpack.c.h.b16 %v403
    %v2539 = vunpack.c.l.b16 %v404
    %v2540 = vunpack.c.h.b16 %v404
    %v2541 = vunpack.c.l.b16 %v405
    %v2542 = vunpack.c.h.b16 %v405
    %v2543 = vunpack.c.l.b16 %v406
    %v2544 = vunpack.c.h.b16 %v406
    %v2545 = vunpack.c.l.b16 %v407
    %v2546 = vunpack.c.h.b16 %v407
    %v2547 = vunpack.c.l.b16 %v408
    %v2548 = vunpack.c.h.b16 %v408
    %v2549 = vunpack.c.l.b16 %v409
    %v2550 = vunpack.c.h.b16 %v409
    %v2551 = vunpack.c.l.b16 %v410
    %v2552 = vunpack.c.h.b16 %v410
    %v2553 = vunpack.c.l.b16 %v411
    %v2554 = vunpack.c.h.b16 %v411
    %v2555 = vunpack.c.l.b16 %v412
    %v2556 = vunpack.c.h.b16 %v412
    %v2557 = vunpack.c.l.b16 %v413
    %v2558 = vunpack.c.h.b16 %v413
    %v2559 = vunpack.c.l.b16 %v414
    %v2560 = vunpack.c.h.b16 %v414
    %v2561 = vunpack.c.l.b16 %v415
    %v2562 = vunpack.c.h.b16 %v415
    %v2563 = vunpack.c.l.b16 %v416
    %v2564 = vunpack.c.h.b16 %v416
    %v2565 = vunpack.c.l.b16 %v417
    %v2566 = vunpack.c.h.b16 %v417
    %v2567 = vunpack.c.l.b16 %v418
    %v2568 = vunpack.c.h.b16 %v418
    %v2569 = vunpack.c.l.b16 %v419
    %v2570 = vunpack.c.h.b16 %v419
    %v2571 = vunpack.c.l.b16 %v420
    %v2572 = vunpack.c.h.b16 %v420
    %v2573 = vunpack.c.l.b16 %v421
    %v2574 = vunpack.c.h.b16 %v421
    %v2575 = vunpack.c.l.b16 %v422
    %v2576 = vunpack.c.h.b16 %v422
    %v2577 = vunpack.c.l.b16 %v423
    %v2578 = vunpack.c.h.b16 %v423
    %v2579 = vunpack.c.l.b16 %v424
    %v2580 = vunpack.c.h.b16 %v424
    %v2581 = vunpack.c.l.b16 %v425
    %v2582 = vunpack.c.h.b16 %v425
    %v2583 = vunpack.c.l.b16 %v426
    %v2584 = vunpack.c.h.b16 %v426
    %v2585 = vunpack.c.l.b16 %v427
    %v2586 = vunpack.c.h.b16 %v427
    %v2587 = vunpack.c.l.b16 %v428
    %v2588 = vunpack.c.h.b16 %v428
    %v2589 = vunpack.c.l.b16 %v429
    %v2590 = vunpack.c.h.b16 %v429
    %v2591 = vunpack.c.l.b16 %v430
    %v2592 = vunpack.c.h.b16 %v430
    %v2593 = vunpack.c.l.b16 %v431
    %v2594 = vunpack.c.h.b16 %v431
    %v2595 = vunpack.c.l.b16 %v432
    %v2596 = vunpack.c.h.b16 %v432
    %v2597 = vunpack.c.l.b16 %v433
    %v2598 = vunpack.c.h.b16 %v433
    %v2599 = vunpack.c.l.b16 %v434
    %v2600 = vunpack.c.h.b16 %v434
    %v2601 = vunpack.c.l.b16 %v435
    %v2602 = vunpack.c.h.b16 %v435
    %v2603 = vunpack.c.l.b16 %v436
    %v2604 = vunpack.c.h.b16 %v436
    %v2605 = vunpack.c.l.b16 %v437
    %v2606 = vunpack.c.h.b16 %v437
    %v2607 = vunpack.c.l.b16 %v438
    %v2608 = vunpack.c.h.b16 %v438
    %v2609 = vunpack.c.l.b16 %v439
    %v2610 = vunpack.c.h.b16 %v439
    %v2611 = vunpack.c.l.b16 %v440
    %v2612 = vunpack.c.h.b16 %v440
    %v2613 = vunpack.c.l.b16 %v441
    %v2614 = vunpack.c.h.b16 %v441
    %v2615 = vunpack.c.l.b16 %v442
    %v2616 = vunpack.c.h.b16 %v442
    %v2617 = vunpack.c.l.b16 %v443
    %v2618 = vunpack.c.h.b16 %v443
    %v2619 = vunpack.c.l.b16 %v444
    %v2620 = vunpack.c.h.b16 %v444
    %v2621 = vunpack.c.l.b16 %v445
    %v2622 = vunpack.c.h.b16 %v445
    %v2623 = vunpack.c.l.b16 %v446
    %v2624 = vunpack.c.h.b16 %v446
    %v2625 = vunpack.c.l.b16 %v447
    %v2626 = vunpack.c.h.b16 %v447
    %v2627 = vunpack.c.l.b16 %v448
    %v2628 = vunpack.c.h.b16 %v448
    %v2629 = vunpack.c.l.b16 %v449
    %v2630 = vunpack.c.h.b16 %v449
    %v2631 = vunpack.c.l.b16 %v450
    %v2632 = vunpack.c.h.b16 %v450
    %v2633 = vunpack.c.l.b16 %v451
    %v2634 = vunpack.c.h.b16 %v451
    %v2635 = vunpack.c.l.b16 %v452
    %v2636 = vunpack.c.h.b16 %v452
    %v2637 = vunpack.c.l.b16 %v453
    %v2638 = vunpack.c.h.b16 %v453
    %v2639 = vunpack.c.l.b16 %v454
    %v2640 = vunpack.c.h.b16 %v454
    %v2641 = vunpack.c.l.b16 %v455
    %v2642 = vunpack.c.h.b16 %v455
    %v2643 = vunpack.c.l.b16 %v456
    %v2644 = vunpack.c.h.b16 %v456
    %v2645 = vunpack.c.l.b16 %v457
    %v2646 = vunpack.c.h.b16 %v457
    %v2647 = vunpack.c.l.b16 %v458
    %v2648 = vunpack.c.h.b16 %v458
    %v2649 = vunpack.c.l.b16 %v459
    %v2650 = vunpack.c.h.b16 %v459
    %v2651 = vunpack.c.l.b16 %v460
    %v2652 = vunpack.c.h.b16 %v460
    %v2653 = vunpack.c.l.b16 %v461
    %v2654 = vunpack.c.h.b16 %v461
    %v2655 = vunpack.c.l.b16 %v462
    %v2656 = vunpack.c.h.b16 %v462
    %v2657 = vunpack.c.l.b16 %v463
    %v2658 = vunpack.c.h.b16 %v463
    %v2659 = vunpack.c.l.b16 %v464
    %v2660 = vunpack.c.h.b16 %v464
    %v2661 = vunpack.c.l.b16 %v465
    %v2662 = vunpack.c.h.b16 %v465
    %v2663 = vunpack.c.l.b16 %v466
    %v2664 = vunpack.c.h.b16 %v466
    %v2665 = vunpack.c.l.b16 %v467
    %v2666 = vunpack.c.h.b16 %v467
    %v2667 = vunpack.c.l.b16 %v468
    %v2668 = vunpack.c.h.b16 %v468
    %v2669 = vunpack.c.l.b16 %v469
    %v2670 = vunpack.c.h.b16 %v469
    %v2671 = vunpack.c.l.b16 %v470
    %v2672 = vunpack.c.h.b16 %v470
    %v2673 = vunpack.c.l.b16 %v471
    %v2674 = vunpack.c.h.b16 %v471
    %v2675 = vunpack.c.l.b16 %v472
    %v2676 = vunpack.c.h.b16 %v472
    %v2677 = vunpack.c.l.b16 %v473
    %v2678 = vunpack.c.h.b16 %v473
    %v2679 = vunpack.c.l.b16 %v474
    %v2680 = vunpack.c.h.b16 %v474
    %v2681 = vunpack.c.l.b16 %v475
    %v2682 = vunpack.c.h.b16 %v475
    %v2683 = vunpack.c.l.b16 %v476
    %v2684 = vunpack.c.h.b16 %v476
    %v2685 = vunpack.c.l.b16 %v477
    %v2686 = vunpack.c.h.b16 %v477
    %v2687 = vunpack.c.l.b16 %v478
    %v2688 = vunpack.c.h.b16 %v478
    %v2689 = vunpack.c.l.b16 %v479
    %v2690 = vunpack.c.h.b16 %v479
    %v2691 = vunpack.c.l.b16 %v480
    %v2692 = vunpack.c.h.b16 %v480
    %v2693 = vunpack.c.l.b16 %v481
    %v2694 = vunpack.c.h.b16 %v481
    %v2695 = vunpack.c.l.b16 %v482
    %v2696 = vunpack.c.h.b16 %v482
    %v2697 = vunpack.c.l.b16 %v483
    %v2698 = vunpack.c.h.b16 %v483
    %v2699 = vunpack.c.l.b16 %v484
    %v2700 = vunpack.c.h.b16 %v484
    %v2701 = vunpack.c.l.b16 %v485
    %v2702 = vunpack.c.h.b16 %v485
    %v2703 = vunpack.c.l.b16 %v486
    %v2704 = vunpack.c.h.b16 %v486
    %v2705 = vunpack.c.l.b16 %v487
    %v2706 = vunpack.c.h.b16 %v487
    %v2707 = vunpack.c.l.b16 %v488
    %v2708 = vunpack.c.h.b16 %v488
    %v2709 = vunpack.c.l.b16 %v489
    %v2710 = vunpack.c.h.b16 %v489
    %v2711 = vunpack.c.l.b16 %v490
    %v2712 = vunpack.c.h.b16 %v490
    %v2713 = vunpack.c.l.b16 %v491
    %v2714 = vunpack.c.h.b16 %v491
    %v2715 = vunpack.c.l.b16 %v492
    %v2716 = vunpack.c.h.b16 %v492
    %v2717 = vunpack.c.l.b16 %v493
    %v2718 = vunpack.c.h.b16 %v493
    %v2719 = vunpack.c.l.b16 %v494
    %v2720 = vunpack.c.h.b16 %v494
    %v2721 = vunpack.c.l.b16 %v495
    %v2722 = vunpack.c.h.b16 %v495
    %v2723 = vunpack.c.l.b16 %v496
    %v2724 = vunpack.c.h.b16 %v496
    %v2725 = vunpack.c.l.b16 %v497
    %v2726 = vunpack.c.h.b16 %v497
    %v2727 = vunpack.c.l.b16 %v498
    %v2728 = vunpack.c.h.b16 %v498
    %v2729 = vunpack.c.l.b16 %v499
    %v2730 = vunpack.c.h.b16 %v499
    %v2731 = vunpack.c.l.b16 %v500
    %v2732 = vunpack.c.h.b16 %v500
    %v2733 = vunpack.c.l.b16 %v501
    %v2734 = vunpack.c.h.b16 %v501
    %v2735 = vunpack.c.l.b16 %v502
    %v2736 = vunpack.c.h.b16 %v502
    %v2737 = vunpack.c.l.b16 %v503
    %v2738 = vunpack.c.h.b16 %v503
    %v2739 = vunpack.c.l.b16 %v504
    %v2740 = vunpack.c.h.b16 %v504
    %v2741 = vunpack.c.l.b16 %v505
    %v2742 = vunpack.c.h.b16 %v505
    %v2743 = vunpack.c.l.b16 %v506
    %v2744 = vunpack.c.h.b16 %v506
    %v2745 = vunpack.c.l.b16 %v507
    %v2746 = vunpack.c.h.b16 %v507
    %v2747 = vunpack.c.l.b16 %v508
    %v2748 = vunpack.c.h.b16 %v508
    %v2749 = vunpack.c.l.b16 %v509
    %v2750 = vunpack.c.h.b16 %v509
    %v2751 = vunpack.c.l.b16 %v510
    %v2752 = vunpack.c.h.b16 %v510
    %v2753 = vunpack.c.l.b16 %v511
    %v2754 = vunpack.c.h.b16 %v511
    %v2755 = vunpack.c.l.b16 %v512
    %v2756 = vunpack.c.h.b16 %v512
    %v2757 = vunpack.c.l.b16 %v513
    %v2758 = vunpack.c.h.b16 %v513
    %v2759 = vunpack.c.l.b16 %v514
    %v2760 = vunpack.c.h.b16 %v514
    %v2761 = vunpack.c.l.b16 %v515
    %v2762 = vunpack.c.h.b16 %v515
    %v2763 = vunpack.c.l.b16 %v516
    %v2764 = vunpack.c.h.b16 %v516
    %v2765 = vunpack.c.l.b16 %v517
    %v2766 = vunpack.c.h.b16 %v517
    %v2767 = vunpack.c.l.b16 %v518
    %v2768 = vunpack.c.h.b16 %v518
    %v2769 = vunpack.c.l.b16 %v519
    %v2770 = vunpack.c.h.b16 %v519
    %v2771 = vunpack.c.l.b16 %v520
    %v2772 = vunpack.c.h.b16 %v520
    %v2773 = vunpack.c.l.b16 %v521
    %v2774 = vunpack.c.h.b16 %v521
    %v2775 = vunpack.c.l.b16 %v522
    %v2776 = vunpack.c.h.b16 %v522
    %v2777 = vunpack.c.l.b16 %v523
    %v2778 = vunpack.c.h.b16 %v523
    %v2779 = vunpack.c.l.b16 %v524
    %v2780 = vunpack.c.h.b16 %v524
    %v2781 = vunpack.c.l.b16 %v525
    %v2782 = vunpack.c.h.b16 %v525
    %v2783 = vunpack.c.l.b16 %v526
    %v2784 = vunpack.c.h.b16 %v526
    %v2785 = vunpack.c.l.b16 %v527
    %v2786 = vunpack.c.h.b16 %v527
    %v2787 = vunpack.c.l.b16 %v528
    %v2788 = vunpack.c.h.b16 %v528
    %v2789 = vunpack.c.l.b16 %v529
    %v2790 = vunpack.c.h.b16 %v529
    %v2791 = vunpack.c.l.b16 %v530
    %v2792 = vunpack.c.h.b16 %v530
    %v2793 = vunpack.c.l.b16 %v531
    %v2794 = vunpack.c.h.b16 %v531
    %v2795 = vunpack.c.l.b16 %v532
    %v2796 = vunpack.c.h.b16 %v532
    %v2797 = vunpack.c.l.b16 %v533
    %v2798 = vunpack.c.h.b16 %v533
    %v2799 = vunpack.c.l.b16 %v534
    %v2800 = vunpack.c.h.b16 %v534
    %v2801 = vunpack.c.l.b16 %v535
    %v2802 = vunpack.c.h.b16 %v535
    %v2803 = vunpack.c.l.b16 %v536
    %v2804 = vunpack.c.h.b16 %v536
    %v2805 = vunpack.c.l.b16 %v537
    %v2806 = vunpack.c.h.b16 %v537
    %v2807 = vunpack.c.l.b16 %v538
    %v2808 = vunpack.c.h.b16 %v538
    %v2809 = vunpack.c.l.b16 %v539
    %v2810 = vunpack.c.h.b16 %v539
    %v2811 = vunpack.c.l.b16 %v540
    %v2812 = vunpack.c.h.b16 %v540
    %v2813 = vunpack.c.l.b16 %v541
    %v2814 = vunpack.c.h.b16 %v541
    %v2815 = vunpack.c.l.b16 %v542
    %v2816 = vunpack.c.h.b16 %v542
    %v2817 = vunpack.c.l.b16 %v543
    %v2818 = vunpack.c.h.b16 %v543
    %v2819 = vunpack.c.l.b16 %v544
    %v2820 = vunpack.c.h.b16 %v544
    %v2821 = vunpack.c.l.b16 %v545
    %v2822 = vunpack.c.h.b16 %v545
    %v2823 = vunpack.c.l.b16 %v546
    %v2824 = vunpack.c.h.b16 %v546
    %v2825 = vunpack.c.l.b16 %v547
    %v2826 = vunpack.c.h.b16 %v547
    %v2827 = vunpack.c.l.b16 %v548
    %v2828 = vunpack.c.h.b16 %v548
    %v2829 = vunpack.c.l.b16 %v549
    %v2830 = vunpack.c.h.b16 %v549
    %v2831 = vunpack.c.l.b16 %v550
    %v2832 = vunpack.c.h.b16 %v550
    %v2833 = vunpack.c.l.b16 %v551
    %v2834 = vunpack.c.h.b16 %v551
    %v2835 = vunpack.c.l.b16 %v552
    %v2836 = vunpack.c.h.b16 %v552
    %v2837 = vunpack.c.l.b16 %v553
    %v2838 = vunpack.c.h.b16 %v553
    %v2839 = vunpack.c.l.b16 %v554
    %v2840 = vunpack.c.h.b16 %v554
    %v2841 = vunpack.c.l.b16 %v555
    %v2842 = vunpack.c.h.b16 %v555
    %v2843 = vunpack.c.l.b16 %v556
    %v2844 = vunpack.c.h.b16 %v556
    %v2845 = vunpack.c.l.b16 %v557
    %v2846 = vunpack.c.h.b16 %v557
    %v2847 = vunpack.c.l.b16 %v558
    %v2848 = vunpack.c.h.b16 %v558
    %v2849 = vunpack.c.l.b16 %v559
    %v2850 = vunpack.c.h.b16 %v559
    %v2851 = vunpack.c.l.b16 %v560
    %v2852 = vunpack.c.h.b16 %v560
    %v2853 = vunpack.c.l.b16 %v561
    %v2854 = vunpack.c.h.b16 %v561
    %v2855 = vunpack.c.l.b16 %v562
    %v2856 = vunpack.c.h.b16 %v562
    %v2857 = vunpack.c.l.b16 %v563
    %v2858 = vunpack.c.h.b16 %v563
    %v2859 = vunpack.c.l.b16 %v564
    %v2860 = vunpack.c.h.b16 %v564
    %v2861 = vunpack.c.l.b16 %v565
    %v2862 = vunpack.c.h.b16 %v565
    %v2863 = vunpack.c.l.b16 %v566
    %v2864 = vunpack.c.h.b16 %v566
    %v2865 = vunpack.c.l.b16 %v567
    %v2866 = vunpack.c.h.b16 %v567
    %v2867 = vunpack.c.l.b16 %v568
    %v2868 = vunpack.c.h.b16 %v568
    %v2869 = vunpack.c.l.b16 %v569
    %v2870 = vunpack.c.h.b16 %v569
    %v2871 = vunpack.c.l.b16 %v570
    %v2872 = vunpack.c.h.b16 %v570
    %v2873 = vunpack.c.l.b16 %v571
    %v2874 = vunpack.c.h.b16 %v571
    %v2875 = vunpack.c.l.b16 %v572
    %v2876 = vunpack.c.h.b16 %v572
    %v2877 = vunpack.c.l.b16 %v573
    %v2878 = vunpack.c.h.b16 %v573
    %v2879 = vunpack.c.l.b16 %v574
    %v2880 = vunpack.c.h.b16 %v574
    %v2881 = vunpack.c.l.b16 %v575
    %v2882 = vunpack.c.h.b16 %v575
    %v2883 = vunpack.c.l.b16 %v576
    %v2884 = vunpack.c.h.b16 %v576
    %v2885 = vunpack.c.l.b16 %v577
    %v2886 = vunpack.c.h.b16 %v577
    %v2887 = vunpack.c.l.b16 %v578
    %v2888 = vunpack.c.h.b16 %v578
    %v2889 = vunpack.c.l.b16 %v579
    %v2890 = vunpack.c.h.b16 %v579
    %v2891 = vunpack.c.l.b16 %v580
    %v2892 = vunpack.c.h.b16 %v580
    %v2893 = vunpack.c.l.b16 %v581
    %v2894 = vunpack.c.h.b16 %v581
    %v2895 = vunpack.c.l.b16 %v582
    %v2896 = vunpack.c.h.b16 %v582
    %v2897 = vunpack.c.l.b16 %v583
    %v2898 = vunpack.c.h.b16 %v583
    %v2899 = vunpack.c.l.b16 %v584
    %v2900 = vunpack.c.h.b16 %v584
    %v2901 = vunpack.c.l.b16 %v585
    %v2902 = vunpack.c.h.b16 %v585
    %v2903 = vunpack.c.l.b16 %v586
    %v2904 = vunpack.c.h.b16 %v586
    %v2905 = vunpack.c.l.b16 %v587
    %v2906 = vunpack.c.h.b16 %v587
    %v2907 = vunpack.c.l.b16 %v588
    %v2908 = vunpack.c.h.b16 %v588
    %v2909 = vunpack.c.l.b16 %v589
    %v2910 = vunpack.c.h.b16 %v589
    %v2911 = vunpack.c.l.b16 %v590
    %v2912 = vunpack.c.h.b16 %v590
    %v2913 = vunpack.c.l.b16 %v591
    %v2914 = vunpack.c.h.b16 %v591
    %v2915 = vunpack.c.l.b16 %v592
    %v2916 = vunpack.c.h.b16 %v592
    %v2917 = vunpack.c.l.b16 %v593
    %v2918 = vunpack.c.h.b16 %v593
    %v2919 = vunpack.c.l.b16 %v594
    %v2920 = vunpack.c.h.b16 %v594
    %v2921 = vunpack.c.l.b16 %v595
    %v2922 = vunpack.c.h.b16 %v595
    %v2923 = vunpack.c.l.b16 %v596
    %v2924 = vunpack.c.h.b16 %v596
    %v2925 = vunpack.c.l.b16 %v597
    %v2926 = vunpack.c.h.b16 %v597
    %v2927 = vunpack.c.l.b16 %v598
    %v2928 = vunpack.c.h.b16 %v598
    %v2929 = vunpack.c.l.b16 %v599
    %v2930 = vunpack.c.h.b16 %v599
    %v2931 = vunpack.c.l.b16 %v600
    %v2932 = vunpack.c.h.b16 %v600
    %v2933 = vunpack.c.l.b16 %v601
    %v2934 = vunpack.c.h.b16 %v601
    %v2935 = vunpack.c.l.b16 %v602
    %v2936 = vunpack.c.h.b16 %v602
    %v2937 = vunpack.c.l.b16 %v603
    %v2938 = vunpack.c.h.b16 %v603
    %v2939 = vunpack.c.l.b16 %v604
    %v2940 = vunpack.c.h.b16 %v604
    %v2941 = vunpack.c.l.b16 %v605
    %v2942 = vunpack.c.h.b16 %v605
    %v2943 = vunpack.c.l.b16 %v606
    %v2944 = vunpack.c.h.b16 %v606
    %v2945 = vunpack.c.l.b16 %v607
    %v2946 = vunpack.c.h.b16 %v607
    %v2947 = vunpack.c.l.b16 %v608
    %v2948 = vunpack.c.h.b16 %v608
    %v2949 = vunpack.c.l.b16 %v609
    %v2950 = vunpack.c.h.b16 %v609
    %v2951 = vunpack.c.l.b16 %v610
    %v2952 = vunpack.c.h.b16 %v610
    %v2953 = vunpack.c.l.b16 %v611
    %v2954 = vunpack.c.h.b16 %v611
    %v2955 = vunpack.c.l.b16 %v612
    %v2956 = vunpack.c.h.b16 %v612
    %v2957 = vunpack.c.l.b16 %v613
    %v2958 = vunpack.c.h.b16 %v613
    %v2959 = vunpack.c.l.b16 %v614
    %v2960 = vunpack.c.h.b16 %v614
    %v2961 = vunpack.c.l.b16 %v615
    %v2962 = vunpack.c.h.b16 %v615
    %v2963 = vunpack.c.l.b16 %v616
    %v2964 = vunpack.c.h.b16 %v616
    %v2965 = vunpack.c.l.b16 %v617
    %v2966 = vunpack.c.h.b16 %v617
    %v2967 = vunpack.c.l.b16 %v618
    %v2968 = vunpack.c.h.b16 %v618
    %v2969 = vunpack.c.l.b16 %v619
    %v2970 = vunpack.c.h.b16 %v619
    %v2971 = vunpack.c.l.b16 %v620
    %v2972 = vunpack.c.h.b16 %v620
    %v2973 = vunpack.c.l.b16 %v621
    %v2974 = vunpack.c.h.b16 %v621
    %v2975 = vunpack.c.l.b16 %v622
    %v2976 = vunpack.c.h.b16 %v622
    %v2977 = vunpack.c.l.b16 %v623
    %v2978 = vunpack.c.h.b16 %v623
    %v2979 = vunpack.c.l.b16 %v624
    %v2980 = vunpack.c.h.b16 %v624
    %v2981 = vunpack.c.l.b16 %v625
    %v2982 = vunpack.c.h.b16 %v625
    %v2983 = vunpack.c.l.b16 %v626
    %v2984 = vunpack.c.h.b16 %v626
    %v2985 = vunpack.c.l.b16 %v627
    %v2986 = vunpack.c.h.b16 %v627
    %v2987 = vunpack.c.l.b16 %v628
    %v2988 = vunpack.c.h.b16 %v628
    %v2989 = vunpack.c.l.b16 %v629
    %v2990 = vunpack.c.h.b16 %v629
    %v2991 = vunpack.c.l.b16 %v630
    %v2992 = vunpack.c.h.b16 %v630
    %v2993 = vunpack.c.l.b16 %v631
    %v2994 = vunpack.c.h.b16 %v631
    %v2995 = vunpack.c.l.b16 %v632
    %v2996 = vunpack.c.h.b16 %v632
    %v2997 = vunpack.c.l.b16 %v633
    %v2998 = vunpack.c.h.b16 %v633
    %v2999 = vunpack.c.l.b16 %v634
    %v3000 = vunpack.c.h.b16 %v634
    %v3001 = vunpack.c.l.b16 %v635
    %v3002 = vunpack.c.h.b16 %v635
    %v3003 = vunpack.c.l.b16 %v636
    %v3004 = vunpack.c.h.b16 %v636
    %v3005 = vunpack.c.l.b16 %v637
    %v3006 = vunpack.c.h.b16 %v637
    %v3007 = vunpack.c.l.b16 %v638
    %v3008 = vunpack.c.h.b16 %v638
    %v3009 = vunpack.c.l.b16 %v639
    %v3010 = vunpack.c.h.b16 %v639
    %v3011 = vunpack.c.l.b16 %v640
    %v3012 = vunpack.c.h.b16 %v640
    %v3013 = vunpack.c.l.b16 %v641
    %v3014 = vunpack.c.h.b16 %v641
    %v3015 = vunpack.c.l.b16 %v642
    %v3016 = vunpack.c.h.b16 %v642
    %v3017 = vunpack.c.l.b16 %v643
    %v3018 = vunpack.c.h.b16 %v643
    %v3019 = vunpack.c.l.b16 %v644
    %v3020 = vunpack.c.h.b16 %v644
    %v3021 = vunpack.c.l.b16 %v645
    %v3022 = vunpack.c.h.b16 %v645
    %v3023 = vunpack.c.l.b16 %v646
    %v3024 = vunpack.c.h.b16 %v646
    %v3025 = vunpack.c.l.b16 %v647
    %v3026 = vunpack.c.h.b16 %v647
    %v3027 = vunpack.c.l.b16 %v648
    %v3028 = vunpack.c.h.b16 %v648
    %v3029 = vunpack.c.l.b16 %v649
    %v3030 = vunpack.c.h.b16 %v649
    %v3031 = vunpack.c.l.b16 %v650
    %v3032 = vunpack.c.h.b16 %v650
    %v3033 = vunpack.c.l.b16 %v651
    %v3034 = vunpack.c.h.b16 %v651
    %v3035 = vunpack.c.l.b16 %v652
    %v3036 = vunpack.c.h.b16 %v652
    %v3037 = vunpack.c.l.b16 %v653
    %v3038 = vunpack.c.h.b16 %v653
    %v3039 = vunpack.c.l.b16 %v654
    %v3040 = vunpack.c.h.b16 %v654
    %v3041 = vunpack.c.l.b16 %v655
    %v3042 = vunpack.c.h.b16 %v655
    %v3043 = vunpack.c.l.b16 %v656
    %v3044 = vunpack.c.h.b16 %v656
    %v3045 = vunpack.c.l.b16 %v657
    %v3046 = vunpack.c.h.b16 %v657
    %v3047 = vunpack.c.l.b16 %v658
    %v3048 = vunpack.c.h.b16 %v658
    %v3049 = vunpack.c.l.b16 %v659
    %v3050 = vunpack.c.h.b16 %v659
    %v3051 = vunpack.c.l.b16 %v660
    %v3052 = vunpack.c.h.b16 %v660
    %v3053 = vunpack.c.l.b16 %v661
    %v3054 = vunpack.c.h.b16 %v661
    %v3055 = vunpack.c.l.b16 %v662
    %v3056 = vunpack.c.h.b16 %v662
    %v3057 = vunpack.c.l.b16 %v663
    %v3058 = vunpack.c.h.b16 %v663
    %v3059 = vunpack.c.l.b16 %v664
    %v3060 = vunpack.c.h.b16 %v664
    %v3061 = vunpack.c.l.b16 %v665
    %v3062 = vunpack.c.h.b16 %v665
    %v3063 = vunpack.c.l.b16 %v666
    %v3064 = vunpack.c.h.b16 %v666
    %v3065 = vunpack.c.l.b16 %v667
    %v3066 = vunpack.c.h.b16 %v667
    %v3067 = vunpack.c.l.b16 %v668
    %v3068 = vunpack.c.h.b16 %v668
    %v3069 = vunpack.c.l.b16 %v669
    %v3070 = vunpack.c.h.b16 %v669
    %v3071 = vunpack.c.l.b16 %v670
    %v3072 = vunpack.c.h.b16 %v670
    %v3073 = vunpack.c.l.b16 %v671
    %v3074 = vunpack.c.h.b16 %v671
    %v3075 = vunpack.c.l.b16 %v672
    %v3076 = vunpack.c.h.b16 %v672
    %v3077 = vunpack.c.l.b16 %v673
    %v3078 = vunpack.c.h.b16 %v673
    %v3079 = vunpack.c.l.b16 %v674
    %v3080 = vunpack.c.h.b16 %v674
    %v3081 = vunpack.c.l.b16 %v675
    %v3082 = vunpack.c.h.b16 %v675
    %v3083 = vunpack.c.l.b16 %v676
    %v3084 = vunpack.c.h.b16 %v676
    %v3085 = vunpack.c.l.b16 %v677
    %v3086 = vunpack.c.h.b16 %v677
    %v3087 = vunpack.c.l.b16 %v678
    %v3088 = vunpack.c.h.b16 %v678
    %v3089 = vunpack.c.l.b16 %v679
    %v3090 = vunpack.c.h.b16 %v679
    %v3091 = vunpack.c.l.b16 %v680
    %v3092 = vunpack.c.h.b16 %v680
    %v3093 = vunpack.c.l.b16 %v681
    %v3094 = vunpack.c.h.b16 %v681
    %v3095 = vunpack.c.l.b16 %v682
    %v3096 = vunpack.c.h.b16 %v682
    %v3097 = vunpack.c.l.b16 %v683
    %v3098 = vunpack.c.h.b16 %v683
    %v3099 = vunpack.c.l.b16 %v684
    %v3100 = vunpack.c.h.b16 %v684
    %v3101 = vunpack.c.l.b16 %v685
    %v3102 = vunpack.c.h.b16 %v685
    %v3103 = vunpack.c.l.b16 %v686
    %v3104 = vunpack.c.h.b16 %v686
    %v3105 = vunpack.c.l.b16 %v687
    %v3106 = vunpack.c.h.b16 %v687
    %v3107 = vunpack.c.l.b16 %v688
    %v3108 = vunpack.c.h.b16 %v688
    %v3109 = vunpack.c.l.b16 %v689
    %v3110 = vunpack.c.h.b16 %v689
    %v3111 = vunpack.c.l.b16 %v690
    %v3112 = vunpack.c.h.b16 %v690
    %v3113 = vunpack.c.l.b16 %v691
    %v3114 = vunpack.c.h.b16 %v691
    %v3115 = vunpack.c.l.b16 %v692
    %v3116 = vunpack.c.h.b16 %v692
    %v3117 = vunpack.c.l.b16 %v693
    %v3118 = vunpack.c.h.b16 %v693
    %v3119 = vunpack.c.l.b16 %v694
    %v3120 = vunpack.c.h.b16 %v694
    %v3121 = vunpack.c.l.b16 %v695
    %v3122 = vunpack.c.h.b16 %v695
    %v3123 = vunpack.c.l.b16 %v696
    %v3124 = vunpack.c.h.b16 %v696
    %v3125 = vunpack.c.l.b16 %v697
    %v3126 = vunpack.c.h.b16 %v697
    %v3127 = vunpack.c.l.b16 %v698
    %v3128 = vunpack.c.h.b16 %v698
    %v3129 = vunpack.c.l.b16 %v699
    %v3130 = vunpack.c.h.b16 %v699
    %v3131 = vunpack.c.l.b16 %v700
    %v3132 = vunpack.c.h.b16 %v700
    %v3133 = vunpack.c.l.b16 %v701
    %v3134 = vunpack.c.h.b16 %v701
    %v3135 = vunpack.c.l.b16 %v702
    %v3136 = vunpack.c.h.b16 %v702
    %v3137 = vunpack.c.l.b16 %v703
    %v3138 = vunpack.c.h.b16 %v703
    %v3139 = vunpack.c.l.b16 %v704
    %v3140 = vunpack.c.h.b16 %v704
    %v3141 = vunpack.c.l.b16 %v705
    %v3142 = vunpack.c.h.b16 %v705
    %v3143 = vunpack.c.l.b16 %v706
    %v3144 = vunpack.c.h.b16 %v706
    %v3145 = vunpack.c.l.b16 %v707
    %v3146 = vunpack.c.h.b16 %v707
    %v3147 = vunpack.c.l.b16 %v708
    %v3148 = vunpack.c.h.b16 %v708
    %v3149 = vunpack.c.l.b16 %v709
    %v3150 = vunpack.c.h.b16 %v709
    %v3151 = vunpack.c.l.b16 %v710
    %v3152 = vunpack.c.h.b16 %v710
    %v3153 = vunpack.c.l.b16 %v711
    %v3154 = vunpack.c.h.b16 %v711
    %v3155 = vunpack.c.l.b16 %v712
    %v3156 = vunpack.c.h.b16 %v712
    %v3157 = vunpack.c.l.b16 %v713
    %v3158 = vunpack.c.h.b16 %v713
    %v3159 = vunpack.c.l.b16 %v714
    %v3160 = vunpack.c.h.b16 %v714
    %v3161 = vunpack.c.l.b16 %v715
    %v3162 = vunpack.c.h.b16 %v715
    %v3163 = vunpack.c.l.b16 %v716
    %v3164 = vunpack.c.h.b16 %v716
    %v3165 = vunpack.c.l.b16 %v717
    %v3166 = vunpack.c.h.b16 %v717
    %v3167 = vunpack.c.l.b16 %v718
    %v3168 = vunpack.c.h.b16 %v718
    %v3169 = vunpack.c.l.b16 %v719
    %v3170 = vunpack.c.h.b16 %v719
    %v3171 = vunpack.c.l.b16 %v720
    %v3172 = vunpack.c.h.b16 %v720
    %v3173 = vunpack.c.l.b16 %v721
    %v3174 = vunpack.c.h.b16 %v721
    %v3175 = vunpack.c.l.b16 %v722
    %v3176 = vunpack.c.h.b16 %v722
    %v3177 = vunpack.c.l.b16 %v723
    %v3178 = vunpack.c.h.b16 %v723
    %v3179 = vunpack.c.l.b16 %v724
    %v3180 = vunpack.c.h.b16 %v724
    %v3181 = vunpack.c.l.b16 %v725
    %v3182 = vunpack.c.h.b16 %v725
    %v3183 = vunpack.c.l.b16 %v726
    %v3184 = vunpack.c.h.b16 %v726
    %v3185 = vunpack.c.l.b16 %v727
    %v3186 = vunpack.c.h.b16 %v727
    %v3187 = vunpack.c.l.b16 %v728
    %v3188 = vunpack.c.h.b16 %v728
    %v3189 = vunpack.c.l.b16 %v729
    %v3190 = vunpack.c.h.b16 %v729
    %v3191 = vunpack.c.l.b16 %v730
    %v3192 = vunpack.c.h.b16 %v730
    %v3193 = vunpack.c.l.b16 %v731
    %v3194 = vunpack.c.h.b16 %v731
    %v3195 = vunpack.c.l.b16 %v732
    %v3196 = vunpack.c.h.b16 %v732
    %v3197 = vunpack.c.l.b16 %v733
    %v3198 = vunpack.c.h.b16 %v733
    %v3199 = vunpack.c.l.b16 %v734
    %v3200 = vunpack.c.h.b16 %v734
    %v3201 = vunpack.c.l.b16 %v735
    %v3202 = vunpack.c.h.b16 %v735
    %v3203 = vunpack.c.l.b16 %v736
    %v3204 = vunpack.c.h.b16 %v736
    %v3205 = vunpack.c.l.b16 %v737
    %v3206 = vunpack.c.h.b16 %v737
    %v3207 = vunpack.c.l.b16 %v738
    %v3208 = vunpack.c.h.b16 %v738
    %v3209 = vunpack.c.l.b16 %v739
    %v3210 = vunpack.c.h.b16 %v739
    %v3211 = vunpack.c.l.b16 %v740
    %v3212 = vunpack.c.h.b16 %v740
    %v3213 = vunpack.c.l.b16 %v741
    %v3214 = vunpack.c.h.b16 %v741
    %v3215 = vunpack.c.l.b16 %v742
    %v3216 = vunpack.c.h.b16 %v742
    %v3217 = vunpack.c.l.b16 %v743
    %v3218 = vunpack.c.h.b16 %v743
    %v3219 = vunpack.c.l.b16 %v744
    %v3220 = vunpack.c.h.b16 %v744
    %v3221 = vunpack.c.l.b16 %v745
    %v3222 = vunpack.c.h.b16 %v745
    %v3223 = vunpack.c.l.b16 %v746
    %v3224 = vunpack.c.h.b16 %v746
    %v3225 = vunpack.c.l.b16 %v747
    %v3226 = vunpack.c.h.b16 %v747
    %v3227 = vunpack.c.l.b16 %v748
    %v3228 = vunpack.c.h.b16 %v748
    %v3229 = vunpack.c.l.b16 %v749
    %v3230 = vunpack.c.h.b16 %v749
    %v3231 = vunpack.c.l.b16 %v750
    %v3232 = vunpack.c.h.b16 %v750
    %v3233 = vunpack.c.l.b16 %v751
    %v3234 = vunpack.c.h.b16 %v751
    %v3235 = vunpack.c.l.b16 %v752
    %v3236 = vunpack.c.h.b16 %v752
    %v3237 = vunpack.c.l.b16 %v753
    %v3238 = vunpack.c.h.b16 %v753
    %v3239 = vunpack.c.l.b16 %v754
    %v3240 = vunpack.c.h.b16 %v754
    %v3241 = vunpack.c.l.b16 %v755
    %v3242 = vunpack.c.h.b16 %v755
    %v3243 = vunpack.c.l.b16 %v756
    %v3244 = vunpack.c.h.b16 %v756
    %v3245 = vunpack.c.l.b16 %v757
    %v3246 = vunpack.c.h.b16 %v757
    %v3247 = vunpack.c.l.b16 %v758
    %v3248 = vunpack.c.h.b16 %v758
    %v3249 = vunpack.c.l.b16 %v759
    %v3250 = vunpack.c.h.b16 %v759
    %v3251 = vunpack.c.l.b16 %v760
    %v3252 = vunpack.c.h.b16 %v760
    %v3253 = vunpack.c.l.b16 %v761
    %v3254 = vunpack.c.h.b16 %v761
    %v3255 = vunpack.c.l.b16 %v762
    %v3256 = vunpack.c.h.b16 %v762
    %v3257 = vunpack.c.l.b16 %v763
    %v3258 = vunpack.c.h.b16 %v763
    %v3259 = vunpack.c.l.b16 %v764
    %v3260 = vunpack.c.h.b16 %v764
    %v3261 = vunpack.c.l.b16 %v765
    %v3262 = vunpack.c.h.b16 %v765
    %v3263 = vunpack.c.l.b16 %v766
    %v3264 = vunpack.c.h.b16 %v766
    %v3265 = vunpack.c.l.b16 %v767
    %v3266 = vunpack.c.h.b16 %v767
    %v3267 = vunpack.c.l.b16 %v768
    %v3268 = vunpack.c.h.b16 %v768
    %v3269 = vunpack.c.l.b16 %v769
    %v3270 = vunpack.c.h.b16 %v769
    %v3271 = vunpack.c.l.b16 %v770
    %v3272 = vunpack.c.h.b16 %v770
    %v3273 = vunpack.c.l.b16 %v771
    %v3274 = vunpack.c.h.b16 %v771
    %v3275 = vunpack.c.l.b16 %v772
    %v3276 = vunpack.c.h.b16 %v772
    %v3277 = vunpack.c.l.b16 %v773
    %v3278 = vunpack.c.h.b16 %v773
    %v3279 = vunpack.c.l.b16 %v774
    %v3280 = vunpack.c.h.b16 %v774
    %v3281 = vunpack.c.l.b16 %v775
    %v3282 = vunpack.c.h.b16 %v775
    %v3283 = vunpack.c.l.b16 %v776
    %v3284 = vunpack.c.h.b16 %v776
    %v3285 = vunpack.c.l.b16 %v777
    %v3286 = vunpack.c.h.b16 %v777
    %v3287 = vunpack.c.l.b16 %v778
    %v3288 = vunpack.c.h.b16 %v778
    %v3289 = vunpack.c.l.b16 %v779
    %v3290 = vunpack.c.h.b16 %v779
    %v3291 = vunpack.c.l.b16 %v780
    %v3292 = vunpack.c.h.b16 %v780
    %v3293 = vunpack.c.l.b16 %v781
    %v3294 = vunpack.c.h.b16 %v781
    %v3295 = vunpack.c.l.b16 %v782
    %v3296 = vunpack.c.h.b16 %v782
    %v3297 = vunpack.c.l.b16 %v783
    %v3298 = vunpack.c.h.b16 %v783
    %v3299 = vunpack.c.l.b16 %v784
    %v3300 = vunpack.c.h.b16 %v784
    %v3301 = vunpack.c.l.b16 %v785
    %v3302 = vunpack.c.h.b16 %v785
    %v3303 = vunpack.c.l.b16 %v786
    %v3304 = vunpack.c.h.b16 %v786
    %v3305 = vunpack.c.l.b16 %v787
    %v3306 = vunpack.c.h.b16 %v787
    %v3307 = vunpack.c.l.b16 %v788
    %v3308 = vunpack.c.h.b16 %v788
    %v3309 = vunpack.c.l.b16 %v789
    %v3310 = vunpack.c.h.b16 %v789
    %v3311 = vunpack.c.l.b16 %v790
    %v3312 = vunpack.c.h.b16 %v790
    %v3313 = vunpack.c.l.b16 %v791
    %v3314 = vunpack.c.h.b16 %v791
    %v3315 = vunpack.c.l.b16 %v792
    %v3316 = vunpack.c.h.b16 %v792
    %v3317 = vunpack.c.l.b16 %v793
    %v3318 = vunpack.c.h.b16 %v793
    %v3319 = vunpack.c.l.b16 %v794
    %v3320 = vunpack.c.h.b16 %v794
    %v3321 = vunpack.c.l.b16 %v795
    %v3322 = vunpack.c.h.b16 %v795
    %v3323 = vunpack.c.l.b16 %v796
    %v3324 = vunpack.c.h.b16 %v796
    %v3325 = vunpack.c.l.b16 %v797
    %v3326 = vunpack.c.h.b16 %v797
    %v3327 = vunpack.c.l.b16 %v798
    %v3328 = vunpack.c.h.b16 %v798
    %v3329 = vunpack.c.l.b16 %v799
    %v3330 = vunpack.c.h.b16 %v799
    %v3331 = vunpack.c.l.b16 %v800
    %v3332 = vunpack.c.h.b16 %v800
    %v3333 = vunpack.c.l.b16 %v801
    %v3334 = vunpack.c.h.b16 %v801
    %v3335 = vunpack.c.l.b16 %v802
    %v3336 = vunpack.c.h.b16 %v802
    %v3337 = vunpack.c.l.b16 %v803
    %v3338 = vunpack.c.h.b16 %v803
    %v3339 = vunpack.c.l.b16 %v804
    %v3340 = vunpack.c.h.b16 %v804
    %v3341 = vunpack.c.l.b16 %v805
    %v3342 = vunpack.c.h.b16 %v805
    %v3343 = vunpack.c.l.b16 %v806
    %v3344 = vunpack.c.h.b16 %v806
    %v3345 = vunpack.c.l.b16 %v807
    %v3346 = vunpack.c.h.b16 %v807
    %v3347 = vunpack.c.l.b16 %v808
    %v3348 = vunpack.c.h.b16 %v808
    %v3349 = vunpack.c.l.b16 %v809
    %v3350 = vunpack.c.h.b16 %v809
    %v3351 = vunpack.c.l.b16 %v810
    %v3352 = vunpack.c.h.b16 %v810
    %v3353 = vunpack.c.l.b16 %v811
    %v3354 = vunpack.c.h.b16 %v811
    %v3355 = vunpack.c.l.b16 %v812
    %v3356 = vunpack.c.h.b16 %v812
    %v3357 = vunpack.c.l.b16 %v813
    %v3358 = vunpack.c.h.b16 %v813
    %v3359 = vunpack.c.l.b16 %v814
    %v3360 = vunpack.c.h.b16 %v814
    %v3361 = vunpack.c.l.b16 %v815
    %v3362 = vunpack.c.h.b16 %v815
    %v3363 = vunpack.c.l.b16 %v816
    %v3364 = vunpack.c.h.b16 %v816
    %v3365 = vunpack.c.l.b16 %v817
    %v3366 = vunpack.c.h.b16 %v817
    %v3367 = vunpack.c.l.b16 %v818
    %v3368 = vunpack.c.h.b16 %v818
    %v3369 = vunpack.c.l.b16 %v819
    %v3370 = vunpack.c.h.b16 %v819
    %v3371 = vunpack.c.l.b16 %v820
    %v3372 = vunpack.c.h.b16 %v820
    %v3373 = vunpack.c.l.b16 %v821
    %v3374 = vunpack.c.h.b16 %v821
    %v3375 = vunpack.c.l.b16 %v822
    %v3376 = vunpack.c.h.b16 %v822
    %v3377 = vunpack.c.l.b16 %v823
    %v3378 = vunpack.c.h.b16 %v823
    %v3379 = vunpack.c.l.b16 %v824
    %v3380 = vunpack.c.h.b16 %v824
    %v3381 = vunpack.c.l.b16 %v825
    %v3382 = vunpack.c.h.b16 %v825
    %v3383 = vunpack.c.l.b16 %v826
    %v3384 = vunpack.c.h.b16 %v826
    %v3385 = vunpack.c.l.b16 %v827
    %v3386 = vunpack.c.h.b16 %v827
    %v3387 = vunpack.c.l.b16 %v828
    %v3388 = vunpack.c.h.b16 %v828
    %v3389 = vunpack.c.l.b16 %v829
    %v3390 = vunpack.c.h.b16 %v829
    %v3391 = vunpack.c.l.b16 %v830
    %v3392 = vunpack.c.h.b16 %v830
    %v3393 = vunpack.c.l.b16 %v831
    %v3394 = vunpack.c.h.b16 %v831
    %v3395 = vunpack.c.l.b16 %v832
    %v3396 = vunpack.c.h.b16 %v832
    %v3397 = vunpack.c.l.b16 %v833
    %v3398 = vunpack.c.h.b16 %v833
    %v3399 = vunpack.c.l.b16 %v834
    %v3400 = vunpack.c.h.b16 %v834
    %v3401 = vunpack.c.l.b16 %v835
    %v3402 = vunpack.c.h.b16 %v835
    %v3403 = vunpack.c.l.b16 %v836
    %v3404 = vunpack.c.h.b16 %v836
    %v3405 = vunpack.c.l.b16 %v837
    %v3406 = vunpack.c.h.b16 %v837
    %v3407 = vunpack.c.l.b16 %v838
    %v3408 = vunpack.c.h.b16 %v838
    %v3409 = vunpack.c.l.b16 %v839
    %v3410 = vunpack.c.h.b16 %v839
    %v3411 = vunpack.c.l.b16 %v840
    %v3412 = vunpack.c.h.b16 %v840
    %v3413 = vunpack.c.l.b16 %v841
    %v3414 = vunpack.c.h.b16 %v841
    %v3415 = vunpack.c.l.b16 %v842
    %v3416 = vunpack.c.h.b16 %v842
    %v3417 = vunpack.c.l.b16 %v843
    %v3418 = vunpack.c.h.b16 %v843
    %v3419 = vunpack.c.l.b16 %v844
    %v3420 = vunpack.c.h.b16 %v844
    %v3421 = vunpack.c.l.b16 %v845
    %v3422 = vunpack.c.h.b16 %v845
    %v3423 = vunpack.c.l.b16 %v846
    %v3424 = vunpack.c.h.b16 %v846
    %v3425 = vunpack.c.l.b16 %v847
    %v3426 = vunpack.c.h.b16 %v847
    %v3427 = vunpack.c.l.b16 %v848
    %v3428 = vunpack.c.h.b16 %v848
    %v3429 = vunpack.c.l.b16 %v849
    %v3430 = vunpack.c.h.b16 %v849
    %v3431 = vunpack.c.l.b16 %v850
    %v3432 = vunpack.c.h.b16 %v850
    %v3433 = vunpack.c.l.b16 %v851
    %v3434 = vunpack.c.h.b16 %v851
    %v3435 = vunpack.c.l.b16 %v852
    %v3436 = vunpack.c.h.b16 %v852
    %v3437 = vunpack.c.l.b16 %v853
    %v3438 = vunpack.c.h.b16 %v853
    %v3439 = vunpack.c.l.b16 %v854
    %v3440 = vunpack.c.h.b16 %v854
    %v3441 = vunpack.c.l.b16 %v855
    %v3442 = vunpack.c.h.b16 %v855
    %v3443 = vunpack.c.l.b16 %v856
    %v3444 = vunpack.c.h.b16 %v856
    %v3445 = vunpack.c.l.b16 %v857
    %v3446 = vunpack.c.h.b16 %v857
    %v3447 = vunpack.c.l.b16 %v858
    %v3448 = vunpack.c.h.b16 %v858
    %v3449 = vunpack.c.l.b16 %v859
    %v3450 = vunpack.c.h.b16 %v859
    %v3451 = vunpack.c.l.b16 %v860
    %v3452 = vunpack.c.h.b16 %v860
    %v3453 = vunpack.c.l.b16 %v861
    %v3454 = vunpack.c.h.b16 %v861
    %v3455 = vunpack.c.l.b16 %v862
    %v3456 = vunpack.c.h.b16 %v862
    %v3457 = vunpack.c.l.b16 %v863
    %v3458 = vunpack.c.h.b16 %v863
    %v3459 = vunpack.c.l.b16 %v864
    %v3460 = vunpack.c.h.b16 %v864
    %v3461 = vunpack.c.l.b16 %v865
    %v3462 = vunpack.c.h.b16 %v865
    %v3463 = vunpack.c.l.b16 %v866
    %v3464 = vunpack.c.h.b16 %v866
    %v3465 = vunpack.c.l.b16 %v867
    %v3466 = vunpack.c.h.b16 %v867
    %v3467 = vunpack.c.l.b16 %v868
    %v3468 = vunpack.c.h.b16 %v868
    %v3469 = vunpack.c.l.b16 %v869
    %v3470 = vunpack.c.h.b16 %v869
    %v3471 = vunpack.c.l.b16 %v870
    %v3472 = vunpack.c.h.b16 %v870
    %v3473 = vunpack.c.l.b16 %v871
    %v3474 = vunpack.c.h.b16 %v871
    %v3475 = vunpack.c.l.b16 %v872
    %v3476 = vunpack.c.h.b16 %v872
    %v3477 = vunpack.c.l.b16 %v873
    %v3478 = vunpack.c.h.b16 %v873
    %v3479 = vunpack.c.l.b16 %v874
    %v3480 = vunpack.c.h.b16 %v874
    %v3481 = vunpack.c.l.b16 %v875
    %v3482 = vunpack.c.h.b16 %v875
    %v3483 = vunpack.c.l.b16 %v876
    %v3484 = vunpack.c.h.b16 %v876
    %v3485 = vunpack.c.l.b16 %v877
    %v3486 = vunpack.c.h.b16 %v877
    %v3487 = vunpack.c.l.b16 %v878
    %v3488 = vunpack.c.h.b16 %v878
    %v3489 = vunpack.c.l.b16 %v879
    %v3490 = vunpack.c.h.b16 %v879
    %v3491 = vunpack.c.l.b16 %v880
    %v3492 = vunpack.c.h.b16 %v880
    %v3493 = vunpack.c.l.b16 %v881
    %v3494 = vunpack.c.h.b16 %v881
    %v3495 = vunpack.c.l.b16 %v882
    %v3496 = vunpack.c.h.b16 %v882
    %v3497 = vunpack.c.l.b16 %v883
    %v3498 = vunpack.c.h.b16 %v883
    %v3499 = vunpack.c.l.b16 %v884
    %v3500 = vunpack.c.h.b16 %v884
    %v3501 = vunpack.c.l.b16 %v885
    %v3502 = vunpack.c.h.b16 %v885
    %v3503 = vpack.c.b16 %v1799, %v1775
    %v3504 = vpack.c.b16 %v1800, %v1776
    %v3505 = vpack.c.b16 %v1801, %v1777
    %v3506 = vpack.c.b16 %v1802, %v1778
    %v3507 = vpack.c.b16 %v1803, %v1779
    %v3508 = vpack.c.b16 %v1804, %v1780
    %v3509 = vpack.c.b16 %v1805, %v1781
    %v3510 = vpack.c.b16 %v1806, %v1782
    %v3511 = vpack.c.b16 %v1807, %v1783
    %v3512 = vpack.c.b16 %v1808, %v1784
    %v3513 = vpack.c.b16 %v1809, %v1785
    %v3514 = vpack.c.b16 %v1810, %v1786
    %v3515 = vpack.c.b16 %v1811, %v1787
    %v3516 = vpack.c.b16 %v1812, %v1788
    %v3517 = vpack.c.b16 %v1813, %v1789
    %v3518 = vpack.c.b16 %v1814, %v1790
    %v3519 = vpack.c.b16 %v1815, %v1791
    %v3520 = vpack.c.b16 %v1816, %v1792
    %v3521 = vpack.c.b16 %v1817, %v1793
    %v3522 = vpack.c.b16 %v1818, %v1794
    %v3523 = vpack.c.b16 %v1819, %v1795
    %v3524 = vpack.c.b16 %v1820, %v1796
    %v3525 = vpack.c.b16 %v1821, %v1797
    %v3526 = vpack.c.b16 %v1822, %v1798
    %v3527 = vpack.c.b16 %v1847, %v1823
    %v3528 = vpack.c.b16 %v1848, %v1824
    %v3529 = vpack.c.b16 %v1849, %v1825
    %v3530 = vpack.c.b16 %v1850, %v1826
    %v3531 = vpack.c.b16 %v1851, %v1827
    %v3532 = vpack.c.b16 %v1852, %v1828
    %v3533 = vpack.c.b16 %v1853, %v1829
    %v3534 = vpack.c.b16 %v1854, %v1830
    %v3535 = vpack.c.b16 %v1855, %v1831
    %v3536 = vpack.c.b16 %v1856, %v1832
    %v3537 = vpack.c.b16 %v1857, %v1833
    %v3538 = vpack.c.b16 %v1858, %v1834
    %v3539 = vpack.c.b16 %v1859, %v1835
    %v3540 = vpack.c.b16 %v1860, %v1836
    %v3541 = vpack.c.b16 %v1861, %v1837
    %v3542 = vpack.c.b16 %v1862, %v1838
    %v3543 = vpack.c.b16 %v1863, %v1839
    %v3544 = vpack.c.b16 %v1864, %v1840
    %v3545 = vpack.c.b16 %v1865, %v1841
    %v3546 = vpack.c.b16 %v1866, %v1842
    %v3547 = vpack.c.b16 %v1867, %v1843
    %v3548 = vpack.c.b16 %v1868, %v1844
    %v3549 = vpack.c.b16 %v1869, %v1845
    %v3550 = vpack.c.b16 %v1870, %v1846
    %v3551 = vpack.c.b16 %v1895, %v1871
    %v3552 = vpack.c.b16 %v1896, %v1872
    %v3553 = vpack.c.b16 %v1897, %v1873
    %v3554 = vpack.c.b16 %v1898, %v1874
    %v3555 = vpack.c.b16 %v1899, %v1875
    %v3556 = vpack.c.b16 %v1900, %v1876
    %v3557 = vpack.c.b16 %v1901, %v1877
    %v3558 = vpack.c.b16 %v1902, %v1878
    %v3559 = vpack.c.b16 %v1903, %v1879
    %v3560 = vpack.c.b16 %v1904, %v1880
    %v3561 = vpack.c.b16 %v1905, %v1881
    %v3562 = vpack.c.b16 %v1906, %v1882
    %v3563 = vpack.c.b16 %v1907, %v1883
    %v3564 = vpack.c.b16 %v1908, %v1884
    %v3565 = vpack.c.b16 %v1909, %v1885
    %v3566 = vpack.c.b16 %v1910, %v1886
    %v3567 = vpack.c.b16 %v1911, %v1887
    %v3568 = vpack.c.b16 %v1912, %v1888
    %v3569 = vpack.c.b16 %v1913, %v1889
    %v3570 = vpack.c.b16 %v1914, %v1890
    %v3571 = vpack.c.b16 %v1915, %v1891
    %v3572 = vpack.c.b16 %v1916, %v1892
    %v3573 = vpack.c.b16 %v1917, %v1893
    %v3574 = vpack.c.b16 %v1918, %v1894
    %v3575 = vpack.c.b16 %v1943, %v1919
    %v3576 = vpack.c.b16 %v1944, %v1920
    %v3577 = vpack.c.b16 %v1945, %v1921
    %v3578 = vpack.c.b16 %v1946, %v1922
    %v3579 = vpack.c.b16 %v1947, %v1923
    %v3580 = vpack.c.b16 %v1948, %v1924
    %v3581 = vpack.c.b16 %v1949, %v1925
    %v3582 = vpack.c.b16 %v1950, %v1926
    %v3583 = vpack.c.b16 %v1951, %v1927
    %v3584 = vpack.c.b16 %v1952, %v1928
    %v3585 = vpack.c.b16 %v1953, %v1929
    %v3586 = vpack.c.b16 %v1954, %v1930
    %v3587 = vpack.c.b16 %v1955, %v1931
    %v3588 = vpack.c.b16 %v1956, %v1932
    %v3589 = vpack.c.b16 %v1957, %v1933
    %v3590 = vpack.c.b16 %v1958, %v1934
    %v3591 = vpack.c.b16 %v1959, %v1935
    %v3592 = vpack.c.b16 %v1960, %v1936
    %v3593 = vpack.c.b16 %v1961, %v1937
    %v3594 = vpack.c.b16 %v1962, %v1938
    %v3595 = vpack.c.b16 %v1963, %v1939
    %v3596 = vpack.c.b16 %v1964, %v1940
    %v3597 = vpack.c.b16 %v1965, %v1941
    %v3598 = vpack.c.b16 %v1966, %v1942
    %v3599 = vpack.c.b16 %v1991, %v1967
    %v3600 = vpack.c.b16 %v1992, %v1968
    %v3601 = vpack.c.b16 %v1993, %v1969
    %v3602 = vpack.c.b16 %v1994, %v1970
    %v3603 = vpack.c.b16 %v1995, %v1971
    %v3604 = vpack.c.b16 %v1996, %v1972
    %v3605 = vpack.c.b16 %v1997, %v1973
    %v3606 = vpack.c.b16 %v1998, %v1974
    %v3607 = vpack.c.b16 %v1999, %v1975
    %v3608 = vpack.c.b16 %v2000, %v1976
    %v3609 = vpack.c.b16 %v2001, %v1977
    %v3610 = vpack.c.b16 %v2002, %v1978
    %v3611 = vpack.c.b16 %v2003, %v1979
    %v3612 = vpack.c.b16 %v2004, %v1980
    %v3613 = vpack.c.b16 %v2005, %v1981
    %v3614 = vpack.c.b16 %v2006, %v1982
    %v3615 = vpack.c.b16 %v2007, %v1983
    %v3616 = vpack.c.b16 %v2008, %v1984
    %v3617 = vpack.c.b16 %v2009, %v1985
    %v3618 = vpack.c.b16 %v2010, %v1986
    %v3619 = vpack.c.b16 %v2011, %v1987
    %v3620 = vpack.c.b16 %v2012, %v1988
    %v3621 = vpack.c.b16 %v2013, %v1989
    %v3622 = vpack.c.b16 %v2014, %v1990
    %v3623 = vpack.c.b16 %v2039, %v2015
    %v3624 = vpack.c.b16 %v2040, %v2016
    %v3625 = vpack.c.b16 %v2041, %v2017
    %v3626 = vpack.c.b16 %v2042, %v2018
    %v3627 = vpack.c.b16 %v2043, %v2019
    %v3628 = vpack.c.b16 %v2044, %v2020
    %v3629 = vpack.c.b16 %v2045, %v2021
    %v3630 = vpack.c.b16 %v2046, %v2022
    %v3631 = vpack.c.b16 %v2047, %v2023
    %v3632 = vpack.c.b16 %v2048, %v2024
    %v3633 = vpack.c.b16 %v2049, %v2025
    %v3634 = vpack.c.b16 %v2050, %v2026
    %v3635 = vpack.c.b16 %v2051, %v2027
    %v3636 = vpack.c.b16 %v2052, %v2028
    %v3637 = vpack.c.b16 %v2053, %v2029
    %v3638 = vpack.c.b16 %v2054, %v2030
    %v3639 = vpack.c.b16 %v2055, %v2031
    %v3640 = vpack.c.b16 %v2056, %v2032
    %v3641 = vpack.c.b16 %v2057, %v2033
    %v3642 = vpack.c.b16 %v2058, %v2034
    %v3643 = vpack.c.b16 %v2059, %v2035
    %v3644 = vpack.c.b16 %v2060, %v2036
    %v3645 = vpack.c.b16 %v2061, %v2037
    %v3646 = vpack.c.b16 %v2062, %v2038
    %v3647 = vpack.c.b16 %v2087, %v2063
    %v3648 = vpack.c.b16 %v2088, %v2064
    %v3649 = vpack.c.b16 %v2089, %v2065
    %v3650 = vpack.c.b16 %v2090, %v2066
    %v3651 = vpack.c.b16 %v2091, %v2067
    %v3652 = vpack.c.b16 %v2092, %v2068
    %v3653 = vpack.c.b16 %v2093, %v2069
    %v3654 = vpack.c.b16 %v2094, %v2070
    %v3655 = vpack.c.b16 %v2095, %v2071
    %v3656 = vpack.c.b16 %v2096, %v2072
    %v3657 = vpack.c.b16 %v2097, %v2073
    %v3658 = vpack.c.b16 %v2098, %v2074
    %v3659 = vpack.c.b16 %v2099, %v2075
    %v3660 = vpack.c.b16 %v2100, %v2076
    %v3661 = vpack.c.b16 %v2101, %v2077
    %v3662 = vpack.c.b16 %v2102, %v2078
    %v3663 = vpack.c.b16 %v2103, %v2079
    %v3664 = vpack.c.b16 %v2104, %v2080
    %v3665 = vpack.c.b16 %v2105, %v2081
    %v3666 = vpack.c.b16 %v2106, %v2082
    %v3667 = vpack.c.b16 %v2107, %v2083
    %v3668 = vpack.c.b16 %v2108, %v2084
    %v3669 = vpack.c.b16 %v2109, %v2085
    %v3670 = vpack.c.b16 %v2110, %v2086
    %v3671 = vpack.c.b16 %v2135, %v2111
    %v3672 = vpack.c.b16 %v2136, %v2112
    %v3673 = vpack.c.b16 %v2137, %v2113
    %v3674 = vpack.c.b16 %v2138, %v2114
    %v3675 = vpack.c.b16 %v2139, %v2115
    %v3676 = vpack.c.b16 %v2140, %v2116
    %v3677 = vpack.c.b16 %v2141, %v2117
    %v3678 = vpack.c.b16 %v2142, %v2118
    %v3679 = vpack.c.b16 %v2143, %v2119
    %v3680 = vpack.c.b16 %v2144, %v2120
    %v3681 = vpack.c.b16 %v2145, %v2121
    %v3682 = vpack.c.b16 %v2146, %v2122
    %v3683 = vpack.c.b16 %v2147, %v2123
    %v3684 = vpack.c.b16 %v2148, %v2124
    %v3685 = vpack.c.b16 %v2149, %v2125
    %v3686 = vpack.c.b16 %v2150, %v2126
    %v3687 = vpack.c.b16 %v2151, %v2127
    %v3688 = vpack.c.b16 %v2152, %v2128
    %v3689 = vpack.c.b16 %v2153, %v2129
    %v3690 = vpack.c.b16 %v2154, %v2130
    %v3691 = vpack.c.b16 %v2155, %v2131
    %v3692 = vpack.c.b16 %v2156, %v2132
    %v3693 = vpack.c.b16 %v2157, %v2133
    %v3694 = vpack.c.b16 %v2158, %v2134
    %v3695 = vpack.c.b16 %v2183, %v2159
    %v3696 = vpack.c.b16 %v2184, %v2160
    %v3697 = vpack.c.b16 %v2185, %v2161
    %v3698 = vpack.c.b16 %v2186, %v2162
    %v3699 = vpack.c.b16 %v2187, %v2163
    %v3700 = vpack.c.b16 %v2188, %v2164
    %v3701 = vpack.c.b16 %v2189, %v2165
    %v3702 = vpack.c.b16 %v2190, %v2166
    %v3703 = vpack.c.b16 %v2191, %v2167
    %v3704 = vpack.c.b16 %v2192, %v2168
    %v3705 = vpack.c.b16 %v2193, %v2169
    %v3706 = vpack.c.b16 %v2194, %v2170
    %v3707 = vpack.c.b16 %v2195, %v2171
    %v3708 = vpack.c.b16 %v2196, %v2172
    %v3709 = vpack.c.b16 %v2197, %v2173
    %v3710 = vpack.c.b16 %v2198, %v2174
    %v3711 = vpack.c.b16 %v2199, %v2175
    %v3712 = vpack.c.b16 %v2200, %v2176
    %v3713 = vpack.c.b16 %v2201, %v2177
    %v3714 = vpack.c.b16 %v2202, %v2178
    %v3715 = vpack.c.b16 %v2203, %v2179
    %v3716 = vpack.c.b16 %v2204, %v2180
    %v3717 = vpack.c.b16 %v2205, %v2181
    %v3718 = vpack.c.b16 %v2206, %v2182
    %v3719 = vpack.c.b16 %v2231, %v2207
    %v3720 = vpack.c.b16 %v2232, %v2208
    %v3721 = vpack.c.b16 %v2233, %v2209
    %v3722 = vpack.c.b16 %v2234, %v2210
    %v3723 = vpack.c.b16 %v2235, %v2211
    %v3724 = vpack.c.b16 %v2236, %v2212
    %v3725 = vpack.c.b16 %v2237, %v2213
    %v3726 = vpack.c.b16 %v2238, %v2214
    %v3727 = vpack.c.b16 %v2239, %v2215
    %v3728 = vpack.c.b16 %v2240, %v2216
    %v3729 = vpack.c.b16 %v2241, %v2217
    %v3730 = vpack.c.b16 %v2242, %v2218
    %v3731 = vpack.c.b16 %v2243, %v2219
    %v3732 = vpack.c.b16 %v2244, %v2220
    %v3733 = vpack.c.b16 %v2245, %v2221
    %v3734 = vpack.c.b16 %v2246, %v2222
    %v3735 = vpack.c.b16 %v2247, %v2223
    %v3736 = vpack.c.b16 %v2248, %v2224
    %v3737 = vpack.c.b16 %v2249, %v2225
    %v3738 = vpack.c.b16 %v2250, %v2226
    %v3739 = vpack.c.b16 %v2251, %v2227
    %v3740 = vpack.c.b16 %v2252, %v2228
    %v3741 = vpack.c.b16 %v2253, %v2229
    %v3742 = vpack.c.b16 %v2254, %v2230
    %v3743 = vpack.c.b16 %v2279, %v2255
    %v3744 = vpack.c.b16 %v2280, %v2256
    %v3745 = vpack.c.b16 %v2281, %v2257
    %v3746 = vpack.c.b16 %v2282, %v2258
    %v3747 = vpack.c.b16 %v2283, %v2259
    %v3748 = vpack.c.b16 %v2284, %v2260
    %v3749 = vpack.c.b16 %v2285, %v2261
    %v3750 = vpack.c.b16 %v2286, %v2262
    %v3751 = vpack.c.b16 %v2287, %v2263
    %v3752 = vpack.c.b16 %v2288, %v2264
    %v3753 = vpack.c.b16 %v2289, %v2265
    %v3754 = vpack.c.b16 %v2290, %v2266
    %v3755 = vpack.c.b16 %v2291, %v2267
    %v3756 = vpack.c.b16 %v2292, %v2268
    %v3757 = vpack.c.b16 %v2293, %v2269
    %v3758 = vpack.c.b16 %v2294, %v2270
    %v3759 = vpack.c.b16 %v2295, %v2271
    %v3760 = vpack.c.b16 %v2296, %v2272
    %v3761 = vpack.c.b16 %v2297, %v2273
    %v3762 = vpack.c.b16 %v2298, %v2274
    %v3763 = vpack.c.b16 %v2299, %v2275
    %v3764 = vpack.c.b16 %v2300, %v2276
    %v3765 = vpack.c.b16 %v2301, %v2277
    %v3766 = vpack.c.b16 %v2302, %v2278
    %v3767 = vpack.c.b16 %v2327, %v2303
    %v3768 = vpack.c.b16 %v2328, %v2304
    %v3769 = vpack.c.b16 %v2329, %v2305
    %v3770 = vpack.c.b16 %v2330, %v2306
    %v3771 = vpack.c.b16 %v2331, %v2307
    %v3772 = vpack.c.b16 %v2332, %v2308
    %v3773 = vpack.c.b16 %v2333, %v2309
    %v3774 = vpack.c.b16 %v2334, %v2310
    %v3775 = vpack.c.b16 %v2335, %v2311
    %v3776 = vpack.c.b16 %v2336, %v2312
    %v3777 = vpack.c.b16 %v2337, %v2313
    %v3778 = vpack.c.b16 %v2338, %v2314
    %v3779 = vpack.c.b16 %v2339, %v2315
    %v3780 = vpack.c.b16 %v2340, %v2316
    %v3781 = vpack.c.b16 %v2341, %v2317
    %v3782 = vpack.c.b16 %v2342, %v2318
    %v3783 = vpack.c.b16 %v2343, %v2319
    %v3784 = vpack.c.b16 %v2344, %v2320
    %v3785 = vpack.c.b16 %v2345, %v2321
    %v3786 = vpack.c.b16 %v2346, %v2322
    %v3787 = vpack.c.b16 %v2347, %v2323
    %v3788 = vpack.c.b16 %v2348, %v2324
    %v3789 = vpack.c.b16 %v2349, %v2325
    %v3790 = vpack.c.b16 %v2350, %v2326
    %v3791 = vpack.c.b16 %v2375, %v2351
    %v3792 = vpack.c.b16 %v2376, %v2352
    %v3793 = vpack.c.b16 %v2377, %v2353
    %v3794 = vpack.c.b16 %v2378, %v2354
    %v3795 = vpack.c.b16 %v2379, %v2355
    %v3796 = vpack.c.b16 %v2380, %v2356
    %v3797 = vpack.c.b16 %v2381, %v2357
    %v3798 = vpack.c.b16 %v2382, %v2358
    %v3799 = vpack.c.b16 %v2383, %v2359
    %v3800 = vpack.c.b16 %v2384, %v2360
    %v3801 = vpack.c.b16 %v2385, %v2361
    %v3802 = vpack.c.b16 %v2386, %v2362
    %v3803 = vpack.c.b16 %v2387, %v2363
    %v3804 = vpack.c.b16 %v2388, %v2364
    %v3805 = vpack.c.b16 %v2389, %v2365
    %v3806 = vpack.c.b16 %v2390, %v2366
    %v3807 = vpack.c.b16 %v2391, %v2367
    %v3808 = vpack.c.b16 %v2392, %v2368
    %v3809 = vpack.c.b16 %v2393, %v2369
    %v3810 = vpack.c.b16 %v2394, %v2370
    %v3811 = vpack.c.b16 %v2395, %v2371
    %v3812 = vpack.c.b16 %v2396, %v2372
    %v3813 = vpack.c.b16 %v2397, %v2373
    %v3814 = vpack.c.b16 %v2398, %v2374
    %v3815 = vpack.c.b16 %v2423, %v2399
    %v3816 = vpack.c.b16 %v2424, %v2400
    %v3817 = vpack.c.b16 %v2425, %v2401
    %v3818 = vpack.c.b16 %v2426, %v2402
    %v3819 = vpack.c.b16 %v2427, %v2403
    %v3820 = vpack.c.b16 %v2428, %v2404
    %v3821 = vpack.c.b16 %v2429, %v2405
    %v3822 = vpack.c.b16 %v2430, %v2406
    %v3823 = vpack.c.b16 %v2431, %v2407
    %v3824 = vpack.c.b16 %v2432, %v2408
    %v3825 = vpack.c.b16 %v2433, %v2409
    %v3826 = vpack.c.b16 %v2434, %v2410
    %v3827 = vpack.c.b16 %v2435, %v2411
    %v3828 = vpack.c.b16 %v2436, %v2412
    %v3829 = vpack.c.b16 %v2437, %v2413
    %v3830 = vpack.c.b16 %v2438, %v2414
    %v3831 = vpack.c.b16 %v2439, %v2415
    %v3832 = vpack.c.b16 %v2440, %v2416
    %v3833 = vpack.c.b16 %v2441, %v2417
    %v3834 = vpack.c.b16 %v2442, %v2418
    %v3835 = vpack.c.b16 %v2443, %v2419
    %v3836 = vpack.c.b16 %v2444, %v2420
    %v3837 = vpack.c.b16 %v2445, %v2421
    %v3838 = vpack.c.b16 %v2446, %v2422
    %v3839 = vpack.c.b16 %v2471, %v2447
    %v3840 = vpack.c.b16 %v2472, %v2448
    %v3841 = vpack.c.b16 %v2473, %v2449
    %v3842 = vpack.c.b16 %v2474, %v2450
    %v3843 = vpack.c.b16 %v2475, %v2451
    %v3844 = vpack.c.b16 %v2476, %v2452
    %v3845 = vpack.c.b16 %v2477, %v2453
    %v3846 = vpack.c.b16 %v2478, %v2454
    %v3847 = vpack.c.b16 %v2479, %v2455
    %v3848 = vpack.c.b16 %v2480, %v2456
    %v3849 = vpack.c.b16 %v2481, %v2457
    %v3850 = vpack.c.b16 %v2482, %v2458
    %v3851 = vpack.c.b16 %v2483, %v2459
    %v3852 = vpack.c.b16 %v2484, %v2460
    %v3853 = vpack.c.b16 %v2485, %v2461
    %v3854 = vpack.c.b16 %v2486, %v2462
    %v3855 = vpack.c.b16 %v2487, %v2463
    %v3856 = vpack.c.b16 %v2488, %v2464
    %v3857 = vpack.c.b16 %v2489, %v2465
    %v3858 = vpack.c.b16 %v2490, %v2466
    %v3859 = vpack.c.b16 %v2491, %v2467
    %v3860 = vpack.c.b16 %v2492, %v2468
    %v3861 = vpack.c.b16 %v2493, %v2469
    %v3862 = vpack.c.b16 %v2494, %v2470
    %v3863 = vpack.c.b16 %v2519, %v2495
    %v3864 = vpack.c.b16 %v2520, %v2496
    %v3865 = vpack.c.b16 %v2521, %v2497
    %v3866 = vpack.c.b16 %v2522, %v2498
    %v3867 = vpack.c.b16 %v2523, %v2499
    %v3868 = vpack.c.b16 %v2524, %v2500
    %v3869 = vpack.c.b16 %v2525, %v2501
    %v3870 = vpack.c.b16 %v2526, %v2502
    %v3871 = vpack.c.b16 %v2527, %v2503
    %v3872 = vpack.c.b16 %v2528, %v2504
    %v3873 = vpack.c.b16 %v2529, %v2505
    %v3874 = vpack.c.b16 %v2530, %v2506
    %v3875 = vpack.c.b16 %v2531, %v2507
    %v3876 = vpack.c.b16 %v2532, %v2508
    %v3877 = vpack.c.b16 %v2533, %v2509
    %v3878 = vpack.c.b16 %v2534, %v2510
    %v3879 = vpack.c.b16 %v2535, %v2511
    %v3880 = vpack.c.b16 %v2536, %v2512
    %v3881 = vpack.c.b16 %v2537, %v2513
    %v3882 = vpack.c.b16 %v2538, %v2514
    %v3883 = vpack.c.b16 %v2539, %v2515
    %v3884 = vpack.c.b16 %v2540, %v2516
    %v3885 = vpack.c.b16 %v2541, %v2517
    %v3886 = vpack.c.b16 %v2542, %v2518
    %v3887 = vpack.c.b16 %v2567, %v2543
    %v3888 = vpack.c.b16 %v2568, %v2544
    %v3889 = vpack.c.b16 %v2569, %v2545
    %v3890 = vpack.c.b16 %v2570, %v2546
    %v3891 = vpack.c.b16 %v2571, %v2547
    %v3892 = vpack.c.b16 %v2572, %v2548
    %v3893 = vpack.c.b16 %v2573, %v2549
    %v3894 = vpack.c.b16 %v2574, %v2550
    %v3895 = vpack.c.b16 %v2575, %v2551
    %v3896 = vpack.c.b16 %v2576, %v2552
    %v3897 = vpack.c.b16 %v2577, %v2553
    %v3898 = vpack.c.b16 %v2578, %v2554
    %v3899 = vpack.c.b16 %v2579, %v2555
    %v3900 = vpack.c.b16 %v2580, %v2556
    %v3901 = vpack.c.b16 %v2581, %v2557
    %v3902 = vpack.c.b16 %v2582, %v2558
    %v3903 = vpack.c.b16 %v2583, %v2559
    %v3904 = vpack.c.b16 %v2584, %v2560
    %v3905 = vpack.c.b16 %v2585, %v2561
    %v3906 = vpack.c.b16 %v2586, %v2562
    %v3907 = vpack.c.b16 %v2587, %v2563
    %v3908 = vpack.c.b16 %v2588, %v2564
    %v3909 = vpack.c.b16 %v2589, %v2565
    %v3910 = vpack.c.b16 %v2590, %v2566
    %v3911 = vpack.c.b16 %v2615, %v2591
    %v3912 = vpack.c.b16 %v2616, %v2592
    %v3913 = vpack.c.b16 %v2617, %v2593
    %v3914 = vpack.c.b16 %v2618, %v2594
    %v3915 = vpack.c.b16 %v2619, %v2595
    %v3916 = vpack.c.b16 %v2620, %v2596
    %v3917 = vpack.c.b16 %v2621, %v2597
    %v3918 = vpack.c.b16 %v2622, %v2598
    %v3919 = vpack.c.b16 %v2623, %v2599
    %v3920 = vpack.c.b16 %v2624, %v2600
    %v3921 = vpack.c.b16 %v2625, %v2601
    %v3922 = vpack.c.b16 %v2626, %v2602
    %v3923 = vpack.c.b16 %v2627, %v2603
    %v3924 = vpack.c.b16 %v2628, %v2604
    %v3925 = vpack.c.b16 %v2629, %v2605
    %v3926 = vpack.c.b16 %v2630, %v2606
    %v3927 = vpack.c.b16 %v2631, %v2607
    %v3928 = vpack.c.b16 %v2632, %v2608
    %v3929 = vpack.c.b16 %v2633, %v2609
    %v3930 = vpack.c.b16 %v2634, %v2610
    %v3931 = vpack.c.b16 %v2635, %v2611
    %v3932 = vpack.c.b16 %v2636, %v2612
    %v3933 = vpack.c.b16 %v2637, %v2613
    %v3934 = vpack.c.b16 %v2638, %v2614
    %v3935 = vpack.c.b16 %v2663, %v2639
    %v3936 = vpack.c.b16 %v2664, %v2640
    %v3937 = vpack.c.b16 %v2665, %v2641
    %v3938 = vpack.c.b16 %v2666, %v2642
    %v3939 = vpack.c.b16 %v2667, %v2643
    %v3940 = vpack.c.b16 %v2668, %v2644
    %v3941 = vpack.c.b16 %v2669, %v2645
    %v3942 = vpack.c.b16 %v2670, %v2646
    %v3943 = vpack.c.b16 %v2671, %v2647
    %v3944 = vpack.c.b16 %v2672, %v2648
    %v3945 = vpack.c.b16 %v2673, %v2649
    %v3946 = vpack.c.b16 %v2674, %v2650
    %v3947 = vpack.c.b16 %v2675, %v2651
    %v3948 = vpack.c.b16 %v2676, %v2652
    %v3949 = vpack.c.b16 %v2677, %v2653
    %v3950 = vpack.c.b16 %v2678, %v2654
    %v3951 = vpack.c.b16 %v2679, %v2655
    %v3952 = vpack.c.b16 %v2680, %v2656
    %v3953 = vpack.c.b16 %v2681, %v2657
    %v3954 = vpack.c.b16 %v2682, %v2658
    %v3955 = vpack.c.b16 %v2683, %v2659
    %v3956 = vpack.c.b16 %v2684, %v2660
    %v3957 = vpack.c.b16 %v2685, %v2661
    %v3958 = vpack.c.b16 %v2686, %v2662
    %v3959 = vpack.c.b16 %v2711, %v2687
    %v3960 = vpack.c.b16 %v2712, %v2688
    %v3961 = vpack.c.b16 %v2713, %v2689
    %v3962 = vpack.c.b16 %v2714, %v2690
    %v3963 = vpack.c.b16 %v2715, %v2691
    %v3964 = vpack.c.b16 %v2716, %v2692
    %v3965 = vpack.c.b16 %v2717, %v2693
    %v3966 = vpack.c.b16 %v2718, %v2694
    %v3967 = vpack.c.b16 %v2719, %v2695
    %v3968 = vpack.c.b16 %v2720, %v2696
    %v3969 = vpack.c.b16 %v2721, %v2697
    %v3970 = vpack.c.b16 %v2722, %v2698
    %v3971 = vpack.c.b16 %v2723, %v2699
    %v3972 = vpack.c.b16 %v2724, %v2700
    %v3973 = vpack.c.b16 %v2725, %v2701
    %v3974 = vpack.c.b16 %v2726, %v2702
    %v3975 = vpack.c.b16 %v2727, %v2703
    %v3976 = vpack.c.b16 %v2728, %v2704
    %v3977 = vpack.c.b16 %v2729, %v2705
    %v3978 = vpack.c.b16 %v2730, %v2706
    %v3979 = vpack.c.b16 %v2731, %v2707
    %v3980 = vpack.c.b16 %v2732, %v2708
    %v3981 = vpack.c.b16 %v2733, %v2709
    %v3982 = vpack.c.b16 %v2734, %v2710
    %v3983 = vpack.c.b16 %v2759, %v2735
    %v3984 = vpack.c.b16 %v2760, %v2736
    %v3985 = vpack.c.b16 %v2761, %v2737
    %v3986 = vpack.c.b16 %v2762, %v2738
    %v3987 = vpack.c.b16 %v2763, %v2739
    %v3988 = vpack.c.b16 %v2764, %v2740
    %v3989 = vpack.c.b16 %v2765, %v2741
    %v3990 = vpack.c.b16 %v2766, %v2742
    %v3991 = vpack.c.b16 %v2767, %v2743
    %v3992 = vpack.c.b16 %v2768, %v2744
    %v3993 = vpack.c.b16 %v2769, %v2745
    %v3994 = vpack.c.b16 %v2770, %v2746
    %v3995 = vpack.c.b16 %v2771, %v2747
    %v3996 = vpack.c.b16 %v2772, %v2748
    %v3997 = vpack.c.b16 %v2773, %v2749
    %v3998 = vpack.c.b16 %v2774, %v2750
    %v3999 = vpack.c.b16 %v2775, %v2751
    %v4000 = vpack.c.b16 %v2776, %v2752
    %v4001 = vpack.c.b16 %v2777, %v2753
    %v4002 = vpack.c.b16 %v2778, %v2754
    %v4003 = vpack.c.b16 %v2779, %v2755
    %v4004 = vpack.c.b16 %v2780, %v2756
    %v4005 = vpack.c.b16 %v2781, %v2757
    %v4006 = vpack.c.b16 %v2782, %v2758
    %v4007 = vpack.c.b16 %v2807, %v2783
    %v4008 = vpack.c.b16 %v2808, %v2784
    %v4009 = vpack.c.b16 %v2809, %v2785
    %v4010 = vpack.c.b16 %v2810, %v2786
    %v4011 = vpack.c.b16 %v2811, %v2787
    %v4012 = vpack.c.b16 %v2812, %v2788
    %v4013 = vpack.c.b16 %v2813, %v2789
    %v4014 = vpack.c.b16 %v2814, %v2790
    %v4015 = vpack.c.b16 %v2815, %v2791
    %v4016 = vpack.c.b16 %v2816, %v2792
    %v4017 = vpack.c.b16 %v2817, %v2793
    %v4018 = vpack.c.b16 %v2818, %v2794
    %v4019 = vpack.c.b16 %v2819, %v2795
    %v4020 = vpack.c.b16 %v2820, %v2796
    %v4021 = vpack.c.b16 %v2821, %v2797
    %v4022 = vpack.c.b16 %v2822, %v2798
    %v4023 = vpack.c.b16 %v2823, %v2799
    %v4024 = vpack.c.b16 %v2824, %v2800
    %v4025 = vpack.c.b16 %v2825, %v2801
    %v4026 = vpack.c.b16 %v2826, %v2802
    %v4027 = vpack.c.b16 %v2827, %v2803
    %v4028 = vpack.c.b16 %v2828, %v2804
    %v4029 = vpack.c.b16 %v2829, %v2805
    %v4030 = vpack.c.b16 %v2830, %v2806
    %v4031 = vpack.c.b16 %v2855, %v2831
    %v4032 = vpack.c.b16 %v2856, %v2832
    %v4033 = vpack.c.b16 %v2857, %v2833
    %v4034 = vpack.c.b16 %v2858, %v2834
    %v4035 = vpack.c.b16 %v2859, %v2835
    %v4036 = vpack.c.b16 %v2860, %v2836
    %v4037 = vpack.c.b16 %v2861, %v2837
    %v4038 = vpack.c.b16 %v2862, %v2838
    %v4039 = vpack.c.b16 %v2863, %v2839
    %v4040 = vpack.c.b16 %v2864, %v2840
    %v4041 = vpack.c.b16 %v2865, %v2841
    %v4042 = vpack.c.b16 %v2866, %v2842
    %v4043 = vpack.c.b16 %v2867, %v2843
    %v4044 = vpack.c.b16 %v2868, %v2844
    %v4045 = vpack.c.b16 %v2869, %v2845
    %v4046 = vpack.c.b16 %v2870, %v2846
    %v4047 = vpack.c.b16 %v2871, %v2847
    %v4048 = vpack.c.b16 %v2872, %v2848
    %v4049 = vpack.c.b16 %v2873, %v2849
    %v4050 = vpack.c.b16 %v2874, %v2850
    %v4051 = vpack.c.b16 %v2875, %v2851
    %v4052 = vpack.c.b16 %v2876, %v2852
    %v4053 = vpack.c.b16 %v2877, %v2853
    %v4054 = vpack.c.b16 %v2878, %v2854
    %v4055 = vpack.c.b16 %v2903, %v2879
    %v4056 = vpack.c.b16 %v2904, %v2880
    %v4057 = vpack.c.b16 %v2905, %v2881
    %v4058 = vpack.c.b16 %v2906, %v2882
    %v4059 = vpack.c.b16 %v2907, %v2883
    %v4060 = vpack.c.b16 %v2908, %v2884
    %v4061 = vpack.c.b16 %v2909, %v2885
    %v4062 = vpack.c.b16 %v2910, %v2886
    %v4063 = vpack.c.b16 %v2911, %v2887
    %v4064 = vpack.c.b16 %v2912, %v2888
    %v4065 = vpack.c.b16 %v2913, %v2889
    %v4066 = vpack.c.b16 %v2914, %v2890
    %v4067 = vpack.c.b16 %v2915, %v2891
    %v4068 = vpack.c.b16 %v2916, %v2892
    %v4069 = vpack.c.b16 %v2917, %v2893
    %v4070 = vpack.c.b16 %v2918, %v2894
    %v4071 = vpack.c.b16 %v2919, %v2895
    %v4072 = vpack.c.b16 %v2920, %v2896
    %v4073 = vpack.c.b16 %v2921, %v2897
    %v4074 = vpack.c.b16 %v2922, %v2898
    %v4075 = vpack.c.b16 %v2923, %v2899
    %v4076 = vpack.c.b16 %v2924, %v2900
    %v4077 = vpack.c.b16 %v2925, %v2901
    %v4078 = vpack.c.b16 %v2926, %v2902
    %v4079 = vpack.c.b16 %v2951, %v2927
    %v4080 = vpack.c.b16 %v2952, %v2928
    %v4081 = vpack.c.b16 %v2953, %v2929
    %v4082 = vpack.c.b16 %v2954, %v2930
    %v4083 = vpack.c.b16 %v2955, %v2931
    %v4084 = vpack.c.b16 %v2956, %v2932
    %v4085 = vpack.c.b16 %v2957, %v2933
    %v4086 = vpack.c.b16 %v2958, %v2934
    %v4087 = vpack.c.b16 %v2959, %v2935
    %v4088 = vpack.c.b16 %v2960, %v2936
    %v4089 = vpack.c.b16 %v2961, %v2937
    %v4090 = vpack.c.b16 %v2962, %v2938
    %v4091 = vpack.c.b16 %v2963, %v2939
    %v4092 = vpack.c.b16 %v2964, %v2940
    %v4093 = vpack.c.b16 %v2965, %v2941
    %v4094 = vpack.c.b16 %v2966, %v2942
    %v4095 = vpack.c.b16 %v2967, %v2943
    %v4096 = vpack.c.b16 %v2968, %v2944
    %v4097 = vpack.c.b16 %v2969, %v2945
    %v4098 = vpack.c.b16 %v2970, %v2946
    %v4099 = vpack.c.b16 %v2971, %v2947
    %v4100 = vpack.c.b16 %v2972, %v2948
    %v4101 = vpack.c.b16 %v2973, %v2949
    %v4102 = vpack.c.b16 %v2974, %v2950
    %v4103 = vpack.c.b16 %v2999, %v2975
    %v4104 = vpack.c.b16 %v3000, %v2976
    %v4105 = vpack.c.b16 %v3001, %v2977
    %v4106 = vpack.c.b16 %v3002, %v2978
    %v4107 = vpack.c.b16 %v3003, %v2979
    %v4108 = vpack.c.b16 %v3004, %v2980
    %v4109 = vpack.c.b16 %v3005, %v2981
    %v4110 = vpack.c.b16 %v3006, %v2982
    %v4111 = vpack.c.b16 %v3007, %v2983
    %v4112 = vpack.c.b16 %v3008, %v2984
    %v4113 = vpack.c.b16 %v3009, %v2985
    %v4114 = vpack.c.b16 %v3010, %v2986
    %v4115 = vpack.c.b16 %v3011, %v2987
    %v4116 = vpack.c.b16 %v3012, %v2988
    %v4117 = vpack.c.b16 %v3013, %v2989
    %v4118 = vpack.c.b16 %v3014, %v2990
    %v4119 = vpack.c.b16 %v3015, %v2991
    %v4120 = vpack.c.b16 %v3016, %v2992
    %v4121 = vpack.c.b16 %v3017, %v2993
    %v4122 = vpack.c.b16 %v3018, %v2994
    %v4123 = vpack.c.b16 %v3019, %v2995
    %v4124 = vpack.c.b16 %v3020, %v2996
    %v4125 = vpack.c.b16 %v3021, %v2997
    %v4126 = vpack.c.b16 %v3022, %v2998
    %v4127 = vpack.c.b16 %v3047, %v3023
    %v4128 = vpack.c.b16 %v3048, %v3024
    %v4129 = vpack.c.b16 %v3049, %v3025
    %v4130 = vpack.c.b16 %v3050, %v3026
    %v4131 = vpack.c.b16 %v3051, %v3027
    %v4132 = vpack.c.b16 %v3052, %v3028
    %v4133 = vpack.c.b16 %v3053, %v3029
    %v4134 = vpack.c.b16 %v3054, %v3030
    %v4135 = vpack.c.b16 %v3055, %v3031
    %v4136 = vpack.c.b16 %v3056, %v3032
    %v4137 = vpack.c.b16 %v3057, %v3033
    %v4138 = vpack.c.b16 %v3058, %v3034
    %v4139 = vpack.c.b16 %v3059, %v3035
    %v4140 = vpack.c.b16 %v3060, %v3036
    %v4141 = vpack.c.b16 %v3061, %v3037
    %v4142 = vpack.c.b16 %v3062, %v3038
    %v4143 = vpack.c.b16 %v3063, %v3039
    %v4144 = vpack.c.b16 %v3064, %v3040
    %v4145 = vpack.c.b16 %v3065, %v3041
    %v4146 = vpack.c.b16 %v3066, %v3042
    %v4147 = vpack.c.b16 %v3067, %v3043
    %v4148 = vpack.c.b16 %v3068, %v3044
    %v4149 = vpack.c.b16 %v3069, %v3045
    %v4150 = vpack.c.b16 %v3070, %v3046
    %v4151 = vpack.c.b16 %v3095, %v3071
    %v4152 = vpack.c.b16 %v3096, %v3072
    %v4153 = vpack.c.b16 %v3097, %v3073
    %v4154 = vpack.c.b16 %v3098, %v3074
    %v4155 = vpack.c.b16 %v3099, %v3075
    %v4156 = vpack.c.b16 %v3100, %v3076
    %v4157 = vpack.c.b16 %v3101, %v3077
    %v4158 = vpack.c.b16 %v3102, %v3078
    %v4159 = vpack.c.b16 %v3103, %v3079
    %v4160 = vpack.c.b16 %v3104, %v3080
    %v4161 = vpack.c.b16 %v3105, %v3081
    %v4162 = vpack.c.b16 %v3106, %v3082
    %v4163 = vpack.c.b16 %v3107, %v3083
    %v4164 = vpack.c.b16 %v3108, %v3084
    %v4165 = vpack.c.b16 %v3109, %v3085
    %v4166 = vpack.c.b16 %v3110, %v3086
    %v4167 = vpack.c.b16 %v3111, %v3087
    %v4168 = vpack.c.b16 %v3112, %v3088
    %v4169 = vpack.c.b16 %v3113, %v3089
    %v4170 = vpack.c.b16 %v3114, %v3090
    %v4171 = vpack.c.b16 %v3115, %v3091
    %v4172 = vpack.c.b16 %v3116, %v3092
    %v4173 = vpack.c.b16 %v3117, %v3093
    %v4174 = vpack.c.b16 %v3118, %v3094
    %v4175 = vpack.c.b16 %v3143, %v3119
    %v4176 = vpack.c.b16 %v3144, %v3120
    %v4177 = vpack.c.b16 %v3145, %v3121
    %v4178 = vpack.c.b16 %v3146, %v3122
    %v4179 = vpack.c.b16 %v3147, %v3123
    %v4180 = vpack.c.b16 %v3148, %v3124
    %v4181 = vpack.c.b16 %v3149, %v3125
    %v4182 = vpack.c.b16 %v3150, %v3126
    %v4183 = vpack.c.b16 %v3151, %v3127
    %v4184 = vpack.c.b16 %v3152, %v3128
    %v4185 = vpack.c.b16 %v3153, %v3129
    %v4186 = vpack.c.b16 %v3154, %v3130
    %v4187 = vpack.c.b16 %v3155, %v3131
    %v4188 = vpack.c.b16 %v3156, %v3132
    %v4189 = vpack.c.b16 %v3157, %v3133
    %v4190 = vpack.c.b16 %v3158, %v3134
    %v4191 = vpack.c.b16 %v3159, %v3135
    %v4192 = vpack.c.b16 %v3160, %v3136
    %v4193 = vpack.c.b16 %v3161, %v3137
    %v4194 = vpack.c.b16 %v3162, %v3138
    %v4195 = vpack.c.b16 %v3163, %v3139
    %v4196 = vpack.c.b16 %v3164, %v3140
    %v4197 = vpack.c.b16 %v3165, %v3141
    %v4198 = vpack.c.b16 %v3166, %v3142
    %v4199 = vpack.c.b16 %v3191, %v3167
    %v4200 = vpack.c.b16 %v3192, %v3168
    %v4201 = vpack.c.b16 %v3193, %v3169
    %v4202 = vpack.c.b16 %v3194, %v3170
    %v4203 = vpack.c.b16 %v3195, %v3171
    %v4204 = vpack.c.b16 %v3196, %v3172
    %v4205 = vpack.c.b16 %v3197, %v3173
    %v4206 = vpack.c.b16 %v3198, %v3174
    %v4207 = vpack.c.b16 %v3199, %v3175
    %v4208 = vpack.c.b16 %v3200, %v3176
    %v4209 = vpack.c.b16 %v3201, %v3177
    %v4210 = vpack.c.b16 %v3202, %v3178
    %v4211 = vpack.c.b16 %v3203, %v3179
    %v4212 = vpack.c.b16 %v3204, %v3180
    %v4213 = vpack.c.b16 %v3205, %v3181
    %v4214 = vpack.c.b16 %v3206, %v3182
    %v4215 = vpack.c.b16 %v3207, %v3183
    %v4216 = vpack.c.b16 %v3208, %v3184
    %v4217 = vpack.c.b16 %v3209, %v3185
    %v4218 = vpack.c.b16 %v3210, %v3186
    %v4219 = vpack.c.b16 %v3211, %v3187
    %v4220 = vpack.c.b16 %v3212, %v3188
    %v4221 = vpack.c.b16 %v3213, %v3189
    %v4222 = vpack.c.b16 %v3214, %v3190
    %v4223 = vpack.c.b16 %v3239, %v3215
    %v4224 = vpack.c.b16 %v3240, %v3216
    %v4225 = vpack.c.b16 %v3241, %v3217
    %v4226 = vpack.c.b16 %v3242, %v3218
    %v4227 = vpack.c.b16 %v3243, %v3219
    %v4228 = vpack.c.b16 %v3244, %v3220
    %v4229 = vpack.c.b16 %v3245, %v3221
    %v4230 = vpack.c.b16 %v3246, %v3222
    %v4231 = vpack.c.b16 %v3247, %v3223
    %v4232 = vpack.c.b16 %v3248, %v3224
    %v4233 = vpack.c.b16 %v3249, %v3225
    %v4234 = vpack.c.b16 %v3250, %v3226
    %v4235 = vpack.c.b16 %v3251, %v3227
    %v4236 = vpack.c.b16 %v3252, %v3228
    %v4237 = vpack.c.b16 %v3253, %v3229
    %v4238 = vpack.c.b16 %v3254, %v3230
    %v4239 = vpack.c.b16 %v3255, %v3231
    %v4240 = vpack.c.b16 %v3256, %v3232
    %v4241 = vpack.c.b16 %v3257, %v3233
    %v4242 = vpack.c.b16 %v3258, %v3234
    %v4243 = vpack.c.b16 %v3259, %v3235
    %v4244 = vpack.c.b16 %v3260, %v3236
    %v4245 = vpack.c.b16 %v3261, %v3237
    %v4246 = vpack.c.b16 %v3262, %v3238
    %v4247 = vpack.c.b16 %v3287, %v3263
    %v4248 = vpack.c.b16 %v3288, %v3264
    %v4249 = vpack.c.b16 %v3289, %v3265
    %v4250 = vpack.c.b16 %v3290, %v3266
    %v4251 = vpack.c.b16 %v3291, %v3267
    %v4252 = vpack.c.b16 %v3292, %v3268
    %v4253 = vpack.c.b16 %v3293, %v3269
    %v4254 = vpack.c.b16 %v3294, %v3270
    %v4255 = vpack.c.b16 %v3295, %v3271
    %v4256 = vpack.c.b16 %v3296, %v3272
    %v4257 = vpack.c.b16 %v3297, %v3273
    %v4258 = vpack.c.b16 %v3298, %v3274
    %v4259 = vpack.c.b16 %v3299, %v3275
    %v4260 = vpack.c.b16 %v3300, %v3276
    %v4261 = vpack.c.b16 %v3301, %v3277
    %v4262 = vpack.c.b16 %v3302, %v3278
    %v4263 = vpack.c.b16 %v3303, %v3279
    %v4264 = vpack.c.b16 %v3304, %v3280
    %v4265 = vpack.c.b16 %v3305, %v3281
    %v4266 = vpack.c.b16 %v3306, %v3282
    %v4267 = vpack.c.b16 %v3307, %v3283
    %v4268 = vpack.c.b16 %v3308, %v3284
    %v4269 = vpack.c.b16 %v3309, %v3285
    %v4270 = vpack.c.b16 %v3310, %v3286
    %v4271 = vpack.c.b16 %v3335, %v3311
    %v4272 = vpack.c.b16 %v3336, %v3312
    %v4273 = vpack.c.b16 %v3337, %v3313
    %v4274 = vpack.c.b16 %v3338, %v3314
    %v4275 = vpack.c.b16 %v3339, %v3315
    %v4276 = vpack.c.b16 %v3340, %v3316
    %v4277 = vpack.c.b16 %v3341, %v3317
    %v4278 = vpack.c.b16 %v3342, %v3318
    %v4279 = vpack.c.b16 %v3343, %v3319
    %v4280 = vpack.c.b16 %v3344, %v3320
    %v4281 = vpack.c.b16 %v3345, %v3321
    %v4282 = vpack.c.b16 %v3346, %v3322
    %v4283 = vpack.c.b16 %v3347, %v3323
    %v4284 = vpack.c.b16 %v3348, %v3324
    %v4285 = vpack.c.b16 %v3349, %v3325
    %v4286 = vpack.c.b16 %v3350, %v3326
    %v4287 = vpack.c.b16 %v3351, %v3327
    %v4288 = vpack.c.b16 %v3352, %v3328
    %v4289 = vpack.c.b16 %v3353, %v3329
    %v4290 = vpack.c.b16 %v3354, %v3330
    %v4291 = vpack.c.b16 %v3355, %v3331
    %v4292 = vpack.c.b16 %v3356, %v3332
    %v4293 = vpack.c.b16 %v3357, %v3333
    %v4294 = vpack.c.b16 %v3358, %v3334
    %v4295 = vpack.c.b16 %v3383, %v3359
    %v4296 = vpack.c.b16 %v3384, %v3360
    %v4297 = vpack.c.b16 %v3385, %v3361
    %v4298 = vpack.c.b16 %v3386, %v3362
    %v4299 = vpack.c.b16 %v3387, %v3363
    %v4300 = vpack.c.b16 %v3388, %v3364
    %v4301 = vpack.c.b16 %v3389, %v3365
    %v4302 = vpack.c.b16 %v3390, %v3366
    %v4303 = vpack.c.b16 %v3391, %v3367
    %v4304 = vpack.c.b16 %v3392, %v3368
    %v4305 = vpack.c.b16 %v3393, %v3369
    %v4306 = vpack.c.b16 %v3394, %v3370
    %v4307 = vpack.c.b16 %v3395, %v3371
    %v4308 = vpack.c.b16 %v3396, %v3372
    %v4309 = vpack.c.b16 %v3397, %v3373
    %v4310 = vpack.c.b16 %v3398, %v3374
    %v4311 = vpack.c.b16 %v3399, %v3375
    %v4312 = vpack.c.b16 %v3400, %v3376
    %v4313 = vpack.c.b16 %v3401, %v3377
    %v4314 = vpack.c.b16 %v3402, %v3378
    %v4315 = vpack.c.b16 %v3403, %v3379
    %v4316 = vpack.c.b16 %v3404, %v3380
    %v4317 = vpack.c.b16 %v3405, %v3381
    %v4318 = vpack.c.b16 %v3406, %v3382
    %v4319 = vpack.c.b16 %v3431, %v3407
    %v4320 = vpack.c.b16 %v3432, %v3408
    %v4321 = vpack.c.b16 %v3433, %v3409
    %v4322 = vpack.c.b16 %v3434, %v3410
    %v4323 = vpack.c.b16 %v3435, %v3411
    %v4324 = vpack.c.b16 %v3436, %v3412
    %v4325 = vpack.c.b16 %v3437, %v3413
    %v4326 = vpack.c.b16 %v3438, %v3414
    %v4327 = vpack.c.b16 %v3439, %v3415
    %v4328 = vpack.c.b16 %v3440, %v3416
    %v4329 = vpack.c.b16 %v3441, %v3417
    %v4330 = vpack.c.b16 %v3442, %v3418
    %v4331 = vpack.c.b16 %v3443, %v3419
    %v4332 = vpack.c.b16 %v3444, %v3420
    %v4333 = vpack.c.b16 %v3445, %v3421
    %v4334 = vpack.c.b16 %v3446, %v3422
    %v4335 = vpack.c.b16 %v3447, %v3423
    %v4336 = vpack.c.b16 %v3448, %v3424
    %v4337 = vpack.c.b16 %v3449, %v3425
    %v4338 = vpack.c.b16 %v3450, %v3426
    %v4339 = vpack.c.b16 %v3451, %v3427
    %v4340 = vpack.c.b16 %v3452, %v3428
    %v4341 = vpack.c.b16 %v3453, %v3429
    %v4342 = vpack.c.b16 %v3454, %v3430
    %v4343 = vpack.c.b16 %v3479, %v3455
    %v4344 = vpack.c.b16 %v3480, %v3456
    %v4345 = vpack.c.b16 %v3481, %v3457
    %v4346 = vpack.c.b16 %v3482, %v3458
    %v4347 = vpack.c.b16 %v3483, %v3459
    %v4348 = vpack.c.b16 %v3484, %v3460
    %v4349 = vpack.c.b16 %v3485, %v3461
    %v4350 = vpack.c.b16 %v3486, %v3462
    %v4351 = vpack.c.b16 %v3487, %v3463
    %v4352 = vpack.c.b16 %v3488, %v3464
    %v4353 = vpack.c.b16 %v3489, %v3465
    %v4354 = vpack.c.b16 %v3490, %v3466
    %v4355 = vpack.c.b16 %v3491, %v3467
    %v4356 = vpack.c.b16 %v3492, %v3468
    %v4357 = vpack.c.b16 %v3493, %v3469
    %v4358 = vpack.c.b16 %v3494, %v3470
    %v4359 = vpack.c.b16 %v3495, %v3471
    %v4360 = vpack.c.b16 %v3496, %v3472
    %v4361 = vpack.c.b16 %v3497, %v3473
    %v4362 = vpack.c.b16 %v3498, %v3474
    %v4363 = vpack.c.b16 %v3499, %v3475
    %v4364 = vpack.c.b16 %v3500, %v3476
    %v4365 = vpack.c.b16 %v3501, %v3477
    %v4366 = vpack.c.b16 %v3502, %v3478
    %vm5231 = vcmask 523264
    %v5233 = vsel %vm5231, %v906, 0
    %5235 = vmatpush.bf16.msra.mxu0 %v3671
    %5236 = vmatpush.bf16.msra.mxu0 %v3647
    %5237 = vmatpush.bf16.msra.mxu0 %v3623
    %5238 = vmatpush.bf16.msra.mxu0 %v3599
    %5239 = vmatpush.bf16.msra.mxu0 %v3575
    %5240 = vmatpush.bf16.msra.mxu0 %v3551
    %5241 = vmatpush.bf16.msra.mxu0 %v3527
    %5242 = vmatpush.bf16.msra.mxu0 %v3503
    %5243 = vmatmul.bf16.gmra.mxu0 %v902
    %v5244 = vpop.f32.mrf.mxu0
    %v5245 = vadd.f32 0.0, %v5244
    %v5246 = vpop.f32.mrf.mxu0
    %v5247 = vadd.f32 0.0, %v5246
    %5248 = vdwg.mxu0
    %5249 = vmatpush.bf16.msra.mxu0 %v3863
    %5250 = vmatpush.bf16.msra.mxu0 %v3839
    %5251 = vmatpush.bf16.msra.mxu0 %v3815
    %5252 = vmatpush.bf16.msra.mxu0 %v3791
    %5253 = vmatpush.bf16.msra.mxu0 %v3767
    %5254 = vmatpush.bf16.msra.mxu0 %v3743
    %5255 = vmatpush.bf16.msra.mxu0 %v3719
    %5256 = vmatpush.bf16.msra.mxu0 %v3695
    %5257 = vmatmul.bf16.gmra.mxu0 %v903
    %v5258 = vpop.f32.mrf.mxu0
    %v5259 = vadd.f32 %v5245, %v5258
    %v5260 = vpop.f32.mrf.mxu0
    %v5261 = vadd.f32 %v5247, %v5260
    %5262 = vdwg.mxu0
    %5263 = vmatpush.bf16.msra.mxu0 %v4055
    %5264 = vmatpush.bf16.msra.mxu0 %v4031
    %5265 = vmatpush.bf16.msra.mxu0 %v4007
    %5266 = vmatpush.bf16.msra.mxu0 %v3983
    %5267 = vmatpush.bf16.msra.mxu0 %v3959
    %5268 = vmatpush.bf16.msra.mxu0 %v3935
    %5269 = vmatpush.bf16.msra.mxu0 %v3911
    %5270 = vmatpush.bf16.msra.mxu0 %v3887
    %5271 = vmatmul.bf16.gmra.mxu0 %v904
    %v5272 = vpop.f32.mrf.mxu0
    %v5273 = vadd.f32 %v5259, %v5272
    %v5274 = vpop.f32.mrf.mxu0
    %v5275 = vadd.f32 %v5261, %v5274
    %5276 = vdwg.mxu0
    %5277 = vmatpush.bf16.msra.mxu0 %v4247
    %5278 = vmatpush.bf16.msra.mxu0 %v4223
    %5279 = vmatpush.bf16.msra.mxu0 %v4199
    %5280 = vmatpush.bf16.msra.mxu0 %v4175
    %5281 = vmatpush.bf16.msra.mxu0 %v4151
    %5282 = vmatpush.bf16.msra.mxu0 %v4127
    %5283 = vmatpush.bf16.msra.mxu0 %v4103
    %5284 = vmatpush.bf16.msra.mxu0 %v4079
    %5285 = vmatmul.bf16.gmra.mxu0 %v905
    %v5286 = vpop.f32.mrf.mxu0
    %v5287 = vadd.f32 %v5273, %v5286
    %v5288 = vpop.f32.mrf.mxu0
    %v5289 = vadd.f32 %v5275, %v5288
    %5290 = vdwg.mxu0
    %5291 = vmatpush.bf16.msra.mxu0 0
    %5292 = vmatpush.bf16.msra.mxu0 0
    %5293 = vmatpush.bf16.msra.mxu0 0
    %5294 = vmatpush.bf16.msra.mxu0 0
    %5295 = vmatpush.bf16.msra.mxu0 %v4343
    %5296 = vmatpush.bf16.msra.mxu0 %v4319
    %5297 = vmatpush.bf16.msra.mxu0 %v4295
    %5298 = vmatpush.bf16.msra.mxu0 %v4271
    %5299 = vmatmul.bf16.gmra.mxu0 %v5233
    %v5300 = vpop.f32.mrf.mxu0
    %v5301 = vadd.f32 %v5287, %v5300
    %v5302 = vpop.f32.mrf.mxu0
    %v5303 = vadd.f32 %v5289, %v5302
    %5304 = vdwg.mxu0
    %5305 = vmatpush.bf16.msra.mxu0 %v3672
    %5306 = vmatpush.bf16.msra.mxu0 %v3648
    %5307 = vmatpush.bf16.msra.mxu0 %v3624
    %5308 = vmatpush.bf16.msra.mxu0 %v3600
    %5309 = vmatpush.bf16.msra.mxu0 %v3576
    %5310 = vmatpush.bf16.msra.mxu0 %v3552
    %5311 = vmatpush.bf16.msra.mxu0 %v3528
    %5312 = vmatpush.bf16.msra.mxu0 %v3504
    %5313 = vmatmul.bf16.gmra.mxu0 %v902
    %v5314 = vpop.f32.mrf.mxu0
    %v5315 = vadd.f32 0.0, %v5314
    %v5316 = vpop.f32.mrf.mxu0
    %v5317 = vadd.f32 0.0, %v5316
    %5318 = vdwg.mxu0
    %5319 = vmatpush.bf16.msra.mxu0 %v3864
    %5320 = vmatpush.bf16.msra.mxu0 %v3840
    %5321 = vmatpush.bf16.msra.mxu0 %v3816
    %5322 = vmatpush.bf16.msra.mxu0 %v3792
    %5323 = vmatpush.bf16.msra.mxu0 %v3768
    %5324 = vmatpush.bf16.msra.mxu0 %v3744
    %5325 = vmatpush.bf16.msra.mxu0 %v3720
    %5326 = vmatpush.bf16.msra.mxu0 %v3696
    %5327 = vmatmul.bf16.gmra.mxu0 %v903
    %v5328 = vpop.f32.mrf.mxu0
    %v5329 = vadd.f32 %v5315, %v5328
    %v5330 = vpop.f32.mrf.mxu0
    %v5331 = vadd.f32 %v5317, %v5330
    %5332 = vdwg.mxu0
    %5333 = vmatpush.bf16.msra.mxu0 %v4056
    %5334 = vmatpush.bf16.msra.mxu0 %v4032
    %5335 = vmatpush.bf16.msra.mxu0 %v4008
    %5336 = vmatpush.bf16.msra.mxu0 %v3984
    %5337 = vmatpush.bf16.msra.mxu0 %v3960
    %5338 = vmatpush.bf16.msra.mxu0 %v3936
    %5339 = vmatpush.bf16.msra.mxu0 %v3912
    %5340 = vmatpush.bf16.msra.mxu0 %v3888
    %5341 = vmatmul.bf16.gmra.mxu0 %v904
    %v5342 = vpop.f32.mrf.mxu0
    %v5343 = vadd.f32 %v5329, %v5342
    %v5344 = vpop.f32.mrf.mxu0
    %v5345 = vadd.f32 %v5331, %v5344
    %5346 = vdwg.mxu0
    %5347 = vmatpush.bf16.msra.mxu0 %v4248
    %5348 = vmatpush.bf16.msra.mxu0 %v4224
    %5349 = vmatpush.bf16.msra.mxu0 %v4200
    %5350 = vmatpush.bf16.msra.mxu0 %v4176
    %5351 = vmatpush.bf16.msra.mxu0 %v4152
    %5352 = vmatpush.bf16.msra.mxu0 %v4128
    %5353 = vmatpush.bf16.msra.mxu0 %v4104
    %5354 = vmatpush.bf16.msra.mxu0 %v4080
    %5355 = vmatmul.bf16.gmra.mxu0 %v905
    %v5356 = vpop.f32.mrf.mxu0
    %v5357 = vadd.f32 %v5343, %v5356
    %v5358 = vpop.f32.mrf.mxu0
    %v5359 = vadd.f32 %v5345, %v5358
    %5360 = vdwg.mxu0
    %5361 = vmatpush.bf16.msra.mxu0 0
    %5362 = vmatpush.bf16.msra.mxu0 0
    %5363 = vmatpush.bf16.msra.mxu0 0
    %5364 = vmatpush.bf16.msra.mxu0 0
    %5365 = vmatpush.bf16.msra.mxu0 %v4344
    %5366 = vmatpush.bf16.msra.mxu0 %v4320
    %5367 = vmatpush.bf16.msra.mxu0 %v4296
    %5368 = vmatpush.bf16.msra.mxu0 %v4272
    %5369 = vmatmul.bf16.gmra.mxu0 %v5233
    %v5370 = vpop.f32.mrf.mxu0
    %v5371 = vadd.f32 %v5357, %v5370
    %v5372 = vpop.f32.mrf.mxu0
    %v5373 = vadd.f32 %v5359, %v5372
    %5374 = vdwg.mxu0
    %5375 = vmatpush.bf16.msra.mxu0 %v3673
    %5376 = vmatpush.bf16.msra.mxu0 %v3649
    %5377 = vmatpush.bf16.msra.mxu0 %v3625
    %5378 = vmatpush.bf16.msra.mxu0 %v3601
    %5379 = vmatpush.bf16.msra.mxu0 %v3577
    %5380 = vmatpush.bf16.msra.mxu0 %v3553
    %5381 = vmatpush.bf16.msra.mxu0 %v3529
    %5382 = vmatpush.bf16.msra.mxu0 %v3505
    %5383 = vmatmul.bf16.gmra.mxu0 %v902
    %v5384 = vpop.f32.mrf.mxu0
    %v5385 = vadd.f32 0.0, %v5384
    %v5386 = vpop.f32.mrf.mxu0
    %v5387 = vadd.f32 0.0, %v5386
    %5388 = vdwg.mxu0
    %5389 = vmatpush.bf16.msra.mxu0 %v3865
    %5390 = vmatpush.bf16.msra.mxu0 %v3841
    %5391 = vmatpush.bf16.msra.mxu0 %v3817
    %5392 = vmatpush.bf16.msra.mxu0 %v3793
    %5393 = vmatpush.bf16.msra.mxu0 %v3769
    %5394 = vmatpush.bf16.msra.mxu0 %v3745
    %5395 = vmatpush.bf16.msra.mxu0 %v3721
    %5396 = vmatpush.bf16.msra.mxu0 %v3697
    %5397 = vmatmul.bf16.gmra.mxu0 %v903
    %v5398 = vpop.f32.mrf.mxu0
    %v5399 = vadd.f32 %v5385, %v5398
    %v5400 = vpop.f32.mrf.mxu0
    %v5401 = vadd.f32 %v5387, %v5400
    %5402 = vdwg.mxu0
    %5403 = vmatpush.bf16.msra.mxu0 %v4057
    %5404 = vmatpush.bf16.msra.mxu0 %v4033
    %5405 = vmatpush.bf16.msra.mxu0 %v4009
    %5406 = vmatpush.bf16.msra.mxu0 %v3985
    %5407 = vmatpush.bf16.msra.mxu0 %v3961
    %5408 = vmatpush.bf16.msra.mxu0 %v3937
    %5409 = vmatpush.bf16.msra.mxu0 %v3913
    %5410 = vmatpush.bf16.msra.mxu0 %v3889
    %5411 = vmatmul.bf16.gmra.mxu0 %v904
    %v5412 = vpop.f32.mrf.mxu0
    %v5413 = vadd.f32 %v5399, %v5412
    %v5414 = vpop.f32.mrf.mxu0
    %v5415 = vadd.f32 %v5401, %v5414
    %5416 = vdwg.mxu0
    %5417 = vmatpush.bf16.msra.mxu0 %v4249
    %5418 = vmatpush.bf16.msra.mxu0 %v4225
    %5419 = vmatpush.bf16.msra.mxu0 %v4201
    %5420 = vmatpush.bf16.msra.mxu0 %v4177
    %5421 = vmatpush.bf16.msra.mxu0 %v4153
    %5422 = vmatpush.bf16.msra.mxu0 %v4129
    %5423 = vmatpush.bf16.msra.mxu0 %v4105
    %5424 = vmatpush.bf16.msra.mxu0 %v4081
    %5425 = vmatmul.bf16.gmra.mxu0 %v905
    %v5426 = vpop.f32.mrf.mxu0
    %v5427 = vadd.f32 %v5413, %v5426
    %v5428 = vpop.f32.mrf.mxu0
    %v5429 = vadd.f32 %v5415, %v5428
    %5430 = vdwg.mxu0
    %5431 = vmatpush.bf16.msra.mxu0 0
    %5432 = vmatpush.bf16.msra.mxu0 0
    %5433 = vmatpush.bf16.msra.mxu0 0
    %5434 = vmatpush.bf16.msra.mxu0 0
    %5435 = vmatpush.bf16.msra.mxu0 %v4345
    %5436 = vmatpush.bf16.msra.mxu0 %v4321
    %5437 = vmatpush.bf16.msra.mxu0 %v4297
    %5438 = vmatpush.bf16.msra.mxu0 %v4273
    %5439 = vmatmul.bf16.gmra.mxu0 %v5233
    %v5440 = vpop.f32.mrf.mxu0
    %v5441 = vadd.f32 %v5427, %v5440
    %v5442 = vpop.f32.mrf.mxu0
    %v5443 = vadd.f32 %v5429, %v5442
    %5444 = vdwg.mxu0
    %5445 = vmatpush.bf16.msra.mxu0 %v3674
    %5446 = vmatpush.bf16.msra.mxu0 %v3650
    %5447 = vmatpush.bf16.msra.mxu0 %v3626
    %5448 = vmatpush.bf16.msra.mxu0 %v3602
    %5449 = vmatpush.bf16.msra.mxu0 %v3578
    %5450 = vmatpush.bf16.msra.mxu0 %v3554
    %5451 = vmatpush.bf16.msra.mxu0 %v3530
    %5452 = vmatpush.bf16.msra.mxu0 %v3506
    %5453 = vmatmul.bf16.gmra.mxu0 %v902
    %v5454 = vpop.f32.mrf.mxu0
    %v5455 = vadd.f32 0.0, %v5454
    %v5456 = vpop.f32.mrf.mxu0
    %v5457 = vadd.f32 0.0, %v5456
    %5458 = vdwg.mxu0
    %5459 = vmatpush.bf16.msra.mxu0 %v3866
    %5460 = vmatpush.bf16.msra.mxu0 %v3842
    %5461 = vmatpush.bf16.msra.mxu0 %v3818
    %5462 = vmatpush.bf16.msra.mxu0 %v3794
    %5463 = vmatpush.bf16.msra.mxu0 %v3770
    %5464 = vmatpush.bf16.msra.mxu0 %v3746
    %5465 = vmatpush.bf16.msra.mxu0 %v3722
    %5466 = vmatpush.bf16.msra.mxu0 %v3698
    %5467 = vmatmul.bf16.gmra.mxu0 %v903
    %v5468 = vpop.f32.mrf.mxu0
    %v5469 = vadd.f32 %v5455, %v5468
    %v5470 = vpop.f32.mrf.mxu0
    %v5471 = vadd.f32 %v5457, %v5470
    %5472 = vdwg.mxu0
    %5473 = vmatpush.bf16.msra.mxu0 %v4058
    %5474 = vmatpush.bf16.msra.mxu0 %v4034
    %5475 = vmatpush.bf16.msra.mxu0 %v4010
    %5476 = vmatpush.bf16.msra.mxu0 %v3986
    %5477 = vmatpush.bf16.msra.mxu0 %v3962
    %5478 = vmatpush.bf16.msra.mxu0 %v3938
    %5479 = vmatpush.bf16.msra.mxu0 %v3914
    %5480 = vmatpush.bf16.msra.mxu0 %v3890
    %5481 = vmatmul.bf16.gmra.mxu0 %v904
    %v5482 = vpop.f32.mrf.mxu0
    %v5483 = vadd.f32 %v5469, %v5482
    %v5484 = vpop.f32.mrf.mxu0
    %v5485 = vadd.f32 %v5471, %v5484
    %5486 = vdwg.mxu0
    %5487 = vmatpush.bf16.msra.mxu0 %v4250
    %5488 = vmatpush.bf16.msra.mxu0 %v4226
    %5489 = vmatpush.bf16.msra.mxu0 %v4202
    %5490 = vmatpush.bf16.msra.mxu0 %v4178
    %5491 = vmatpush.bf16.msra.mxu0 %v4154
    %5492 = vmatpush.bf16.msra.mxu0 %v4130
    %5493 = vmatpush.bf16.msra.mxu0 %v4106
    %5494 = vmatpush.bf16.msra.mxu0 %v4082
    %5495 = vmatmul.bf16.gmra.mxu0 %v905
    %v5496 = vpop.f32.mrf.mxu0
    %v5497 = vadd.f32 %v5483, %v5496
    %v5498 = vpop.f32.mrf.mxu0
    %v5499 = vadd.f32 %v5485, %v5498
    %5500 = vdwg.mxu0
    %5501 = vmatpush.bf16.msra.mxu0 0
    %5502 = vmatpush.bf16.msra.mxu0 0
    %5503 = vmatpush.bf16.msra.mxu0 0
    %5504 = vmatpush.bf16.msra.mxu0 0
    %5505 = vmatpush.bf16.msra.mxu0 %v4346
    %5506 = vmatpush.bf16.msra.mxu0 %v4322
    %5507 = vmatpush.bf16.msra.mxu0 %v4298
    %5508 = vmatpush.bf16.msra.mxu0 %v4274
    %5509 = vmatmul.bf16.gmra.mxu0 %v5233
    %v5510 = vpop.f32.mrf.mxu0
    %v5511 = vadd.f32 %v5497, %v5510
    %v5512 = vpop.f32.mrf.mxu0
    %v5513 = vadd.f32 %v5499, %v5512
    %5514 = vdwg.mxu0
    %5515 = vmatpush.bf16.msra.mxu0 %v3675
    %5516 = vmatpush.bf16.msra.mxu0 %v3651
    %5517 = vmatpush.bf16.msra.mxu0 %v3627
    %5518 = vmatpush.bf16.msra.mxu0 %v3603
    %5519 = vmatpush.bf16.msra.mxu0 %v3579
    %5520 = vmatpush.bf16.msra.mxu0 %v3555
    %5521 = vmatpush.bf16.msra.mxu0 %v3531
    %5522 = vmatpush.bf16.msra.mxu0 %v3507
    %5523 = vmatmul.bf16.gmra.mxu0 %v902
    %v5524 = vpop.f32.mrf.mxu0
    %v5525 = vadd.f32 0.0, %v5524
    %v5526 = vpop.f32.mrf.mxu0
    %v5527 = vadd.f32 0.0, %v5526
    %5528 = vdwg.mxu0
    %5529 = vmatpush.bf16.msra.mxu0 %v3867
    %5530 = vmatpush.bf16.msra.mxu0 %v3843
    %5531 = vmatpush.bf16.msra.mxu0 %v3819
    %5532 = vmatpush.bf16.msra.mxu0 %v3795
    %5533 = vmatpush.bf16.msra.mxu0 %v3771
    %5534 = vmatpush.bf16.msra.mxu0 %v3747
    %5535 = vmatpush.bf16.msra.mxu0 %v3723
    %5536 = vmatpush.bf16.msra.mxu0 %v3699
    %5537 = vmatmul.bf16.gmra.mxu0 %v903
    %v5538 = vpop.f32.mrf.mxu0
    %v5539 = vadd.f32 %v5525, %v5538
    %v5540 = vpop.f32.mrf.mxu0
    %v5541 = vadd.f32 %v5527, %v5540
    %5542 = vdwg.mxu0
    %5543 = vmatpush.bf16.msra.mxu0 %v4059
    %5544 = vmatpush.bf16.msra.mxu0 %v4035
    %5545 = vmatpush.bf16.msra.mxu0 %v4011
    %5546 = vmatpush.bf16.msra.mxu0 %v3987
    %5547 = vmatpush.bf16.msra.mxu0 %v3963
    %5548 = vmatpush.bf16.msra.mxu0 %v3939
    %5549 = vmatpush.bf16.msra.mxu0 %v3915
    %5550 = vmatpush.bf16.msra.mxu0 %v3891
    %5551 = vmatmul.bf16.gmra.mxu0 %v904
    %v5552 = vpop.f32.mrf.mxu0
    %v5553 = vadd.f32 %v5539, %v5552
    %v5554 = vpop.f32.mrf.mxu0
    %v5555 = vadd.f32 %v5541, %v5554
    %5556 = vdwg.mxu0
    %5557 = vmatpush.bf16.msra.mxu0 %v4251
    %5558 = vmatpush.bf16.msra.mxu0 %v4227
    %5559 = vmatpush.bf16.msra.mxu0 %v4203
    %5560 = vmatpush.bf16.msra.mxu0 %v4179
    %5561 = vmatpush.bf16.msra.mxu0 %v4155
    %5562 = vmatpush.bf16.msra.mxu0 %v4131
    %5563 = vmatpush.bf16.msra.mxu0 %v4107
    %5564 = vmatpush.bf16.msra.mxu0 %v4083
    %5565 = vmatmul.bf16.gmra.mxu0 %v905
    %v5566 = vpop.f32.mrf.mxu0
    %v5567 = vadd.f32 %v5553, %v5566
    %v5568 = vpop.f32.mrf.mxu0
    %v5569 = vadd.f32 %v5555, %v5568
    %5570 = vdwg.mxu0
    %5571 = vmatpush.bf16.msra.mxu0 0
    %5572 = vmatpush.bf16.msra.mxu0 0
    %5573 = vmatpush.bf16.msra.mxu0 0
    %5574 = vmatpush.bf16.msra.mxu0 0
    %5575 = vmatpush.bf16.msra.mxu0 %v4347
    %5576 = vmatpush.bf16.msra.mxu0 %v4323
    %5577 = vmatpush.bf16.msra.mxu0 %v4299
    %5578 = vmatpush.bf16.msra.mxu0 %v4275
    %5579 = vmatmul.bf16.gmra.mxu0 %v5233
    %v5580 = vpop.f32.mrf.mxu0
    %v5581 = vadd.f32 %v5567, %v5580
    %v5582 = vpop.f32.mrf.mxu0
    %v5583 = vadd.f32 %v5569, %v5582
    %5584 = vdwg.mxu0
    %5585 = vmatpush.bf16.msra.mxu0 %v3676
    %5586 = vmatpush.bf16.msra.mxu0 %v3652
    %5587 = vmatpush.bf16.msra.mxu0 %v3628
    %5588 = vmatpush.bf16.msra.mxu0 %v3604
    %5589 = vmatpush.bf16.msra.mxu0 %v3580
    %5590 = vmatpush.bf16.msra.mxu0 %v3556
    %5591 = vmatpush.bf16.msra.mxu0 %v3532
    %5592 = vmatpush.bf16.msra.mxu0 %v3508
    %5593 = vmatmul.bf16.gmra.mxu0 %v902
    %v5594 = vpop.f32.mrf.mxu0
    %v5595 = vadd.f32 0.0, %v5594
    %v5596 = vpop.f32.mrf.mxu0
    %v5597 = vadd.f32 0.0, %v5596
    %5598 = vdwg.mxu0
    %5599 = vmatpush.bf16.msra.mxu0 %v3868
    %5600 = vmatpush.bf16.msra.mxu0 %v3844
    %5601 = vmatpush.bf16.msra.mxu0 %v3820
    %5602 = vmatpush.bf16.msra.mxu0 %v3796
    %5603 = vmatpush.bf16.msra.mxu0 %v3772
    %5604 = vmatpush.bf16.msra.mxu0 %v3748
    %5605 = vmatpush.bf16.msra.mxu0 %v3724
    %5606 = vmatpush.bf16.msra.mxu0 %v3700
    %5607 = vmatmul.bf16.gmra.mxu0 %v903
    %v5608 = vpop.f32.mrf.mxu0
    %v5609 = vadd.f32 %v5595, %v5608
    %v5610 = vpop.f32.mrf.mxu0
    %v5611 = vadd.f32 %v5597, %v5610
    %5612 = vdwg.mxu0
    %5613 = vmatpush.bf16.msra.mxu0 %v4060
    %5614 = vmatpush.bf16.msra.mxu0 %v4036
    %5615 = vmatpush.bf16.msra.mxu0 %v4012
    %5616 = vmatpush.bf16.msra.mxu0 %v3988
    %5617 = vmatpush.bf16.msra.mxu0 %v3964
    %5618 = vmatpush.bf16.msra.mxu0 %v3940
    %5619 = vmatpush.bf16.msra.mxu0 %v3916
    %5620 = vmatpush.bf16.msra.mxu0 %v3892
    %5621 = vmatmul.bf16.gmra.mxu0 %v904
    %v5622 = vpop.f32.mrf.mxu0
    %v5623 = vadd.f32 %v5609, %v5622
    %v5624 = vpop.f32.mrf.mxu0
    %v5625 = vadd.f32 %v5611, %v5624
    %5626 = vdwg.mxu0
    %5627 = vmatpush.bf16.msra.mxu0 %v4252
    %5628 = vmatpush.bf16.msra.mxu0 %v4228
    %5629 = vmatpush.bf16.msra.mxu0 %v4204
    %5630 = vmatpush.bf16.msra.mxu0 %v4180
    %5631 = vmatpush.bf16.msra.mxu0 %v4156
    %5632 = vmatpush.bf16.msra.mxu0 %v4132
    %5633 = vmatpush.bf16.msra.mxu0 %v4108
    %5634 = vmatpush.bf16.msra.mxu0 %v4084
    %5635 = vmatmul.bf16.gmra.mxu0 %v905
    %v5636 = vpop.f32.mrf.mxu0
    %v5637 = vadd.f32 %v5623, %v5636
    %v5638 = vpop.f32.mrf.mxu0
    %v5639 = vadd.f32 %v5625, %v5638
    %5640 = vdwg.mxu0
    %5641 = vmatpush.bf16.msra.mxu0 0
    %5642 = vmatpush.bf16.msra.mxu0 0
    %5643 = vmatpush.bf16.msra.mxu0 0
    %5644 = vmatpush.bf16.msra.mxu0 0
    %5645 = vmatpush.bf16.msra.mxu0 %v4348
    %5646 = vmatpush.bf16.msra.mxu0 %v4324
    %5647 = vmatpush.bf16.msra.mxu0 %v4300
    %5648 = vmatpush.bf16.msra.mxu0 %v4276
    %5649 = vmatmul.bf16.gmra.mxu0 %v5233
    %v5650 = vpop.f32.mrf.mxu0
    %v5651 = vadd.f32 %v5637, %v5650
    %v5652 = vpop.f32.mrf.mxu0
    %v5653 = vadd.f32 %v5639, %v5652
    %5654 = vdwg.mxu0
    %5655 = vmatpush.bf16.msra.mxu0 %v3677
    %5656 = vmatpush.bf16.msra.mxu0 %v3653
    %5657 = vmatpush.bf16.msra.mxu0 %v3629
    %5658 = vmatpush.bf16.msra.mxu0 %v3605
    %5659 = vmatpush.bf16.msra.mxu0 %v3581
    %5660 = vmatpush.bf16.msra.mxu0 %v3557
    %5661 = vmatpush.bf16.msra.mxu0 %v3533
    %5662 = vmatpush.bf16.msra.mxu0 %v3509
    %5663 = vmatmul.bf16.gmra.mxu0 %v902
    %v5664 = vpop.f32.mrf.mxu0
    %v5665 = vadd.f32 0.0, %v5664
    %v5666 = vpop.f32.mrf.mxu0
    %v5667 = vadd.f32 0.0, %v5666
    %5668 = vdwg.mxu0
    %5669 = vmatpush.bf16.msra.mxu0 %v3869
    %5670 = vmatpush.bf16.msra.mxu0 %v3845
    %5671 = vmatpush.bf16.msra.mxu0 %v3821
    %5672 = vmatpush.bf16.msra.mxu0 %v3797
    %5673 = vmatpush.bf16.msra.mxu0 %v3773
    %5674 = vmatpush.bf16.msra.mxu0 %v3749
    %5675 = vmatpush.bf16.msra.mxu0 %v3725
    %5676 = vmatpush.bf16.msra.mxu0 %v3701
    %5677 = vmatmul.bf16.gmra.mxu0 %v903
    %v5678 = vpop.f32.mrf.mxu0
    %v5679 = vadd.f32 %v5665, %v5678
    %v5680 = vpop.f32.mrf.mxu0
    %v5681 = vadd.f32 %v5667, %v5680
    %5682 = vdwg.mxu0
    %5683 = vmatpush.bf16.msra.mxu0 %v4061
    %5684 = vmatpush.bf16.msra.mxu0 %v4037
    %5685 = vmatpush.bf16.msra.mxu0 %v4013
    %5686 = vmatpush.bf16.msra.mxu0 %v3989
    %5687 = vmatpush.bf16.msra.mxu0 %v3965
    %5688 = vmatpush.bf16.msra.mxu0 %v3941
    %5689 = vmatpush.bf16.msra.mxu0 %v3917
    %5690 = vmatpush.bf16.msra.mxu0 %v3893
    %5691 = vmatmul.bf16.gmra.mxu0 %v904
    %v5692 = vpop.f32.mrf.mxu0
    %v5693 = vadd.f32 %v5679, %v5692
    %v5694 = vpop.f32.mrf.mxu0
    %v5695 = vadd.f32 %v5681, %v5694
    %5696 = vdwg.mxu0
    %5697 = vmatpush.bf16.msra.mxu0 %v4253
    %5698 = vmatpush.bf16.msra.mxu0 %v4229
    %5699 = vmatpush.bf16.msra.mxu0 %v4205
    %5700 = vmatpush.bf16.msra.mxu0 %v4181
    %5701 = vmatpush.bf16.msra.mxu0 %v4157
    %5702 = vmatpush.bf16.msra.mxu0 %v4133
    %5703 = vmatpush.bf16.msra.mxu0 %v4109
    %5704 = vmatpush.bf16.msra.mxu0 %v4085
    %5705 = vmatmul.bf16.gmra.mxu0 %v905
    %v5706 = vpop.f32.mrf.mxu0
    %v5707 = vadd.f32 %v5693, %v5706
    %v5708 = vpop.f32.mrf.mxu0
    %v5709 = vadd.f32 %v5695, %v5708
    %5710 = vdwg.mxu0
    %5711 = vmatpush.bf16.msra.mxu0 0
    %5712 = vmatpush.bf16.msra.mxu0 0
    %5713 = vmatpush.bf16.msra.mxu0 0
    %5714 = vmatpush.bf16.msra.mxu0 0
    %5715 = vmatpush.bf16.msra.mxu0 %v4349
    %5716 = vmatpush.bf16.msra.mxu0 %v4325
    %5717 = vmatpush.bf16.msra.mxu0 %v4301
    %5718 = vmatpush.bf16.msra.mxu0 %v4277
    %5719 = vmatmul.bf16.gmra.mxu0 %v5233
    %v5720 = vpop.f32.mrf.mxu0
    %v5721 = vadd.f32 %v5707, %v5720
    %v5722 = vpop.f32.mrf.mxu0
    %v5723 = vadd.f32 %v5709, %v5722
    %5724 = vdwg.mxu0
    %5725 = vmatpush.bf16.msra.mxu0 %v3678
    %5726 = vmatpush.bf16.msra.mxu0 %v3654
    %5727 = vmatpush.bf16.msra.mxu0 %v3630
    %5728 = vmatpush.bf16.msra.mxu0 %v3606
    %5729 = vmatpush.bf16.msra.mxu0 %v3582
    %5730 = vmatpush.bf16.msra.mxu0 %v3558
    %5731 = vmatpush.bf16.msra.mxu0 %v3534
    %5732 = vmatpush.bf16.msra.mxu0 %v3510
    %5733 = vmatmul.bf16.gmra.mxu0 %v902
    %v5734 = vpop.f32.mrf.mxu0
    %v5735 = vadd.f32 0.0, %v5734
    %v5736 = vpop.f32.mrf.mxu0
    %v5737 = vadd.f32 0.0, %v5736
    %5738 = vdwg.mxu0
    %5739 = vmatpush.bf16.msra.mxu0 %v3870
    %5740 = vmatpush.bf16.msra.mxu0 %v3846
    %5741 = vmatpush.bf16.msra.mxu0 %v3822
    %5742 = vmatpush.bf16.msra.mxu0 %v3798
    %5743 = vmatpush.bf16.msra.mxu0 %v3774
    %5744 = vmatpush.bf16.msra.mxu0 %v3750
    %5745 = vmatpush.bf16.msra.mxu0 %v3726
    %5746 = vmatpush.bf16.msra.mxu0 %v3702
    %5747 = vmatmul.bf16.gmra.mxu0 %v903
    %v5748 = vpop.f32.mrf.mxu0
    %v5749 = vadd.f32 %v5735, %v5748
    %v5750 = vpop.f32.mrf.mxu0
    %v5751 = vadd.f32 %v5737, %v5750
    %5752 = vdwg.mxu0
    %5753 = vmatpush.bf16.msra.mxu0 %v4062
    %5754 = vmatpush.bf16.msra.mxu0 %v4038
    %5755 = vmatpush.bf16.msra.mxu0 %v4014
    %5756 = vmatpush.bf16.msra.mxu0 %v3990
    %5757 = vmatpush.bf16.msra.mxu0 %v3966
    %5758 = vmatpush.bf16.msra.mxu0 %v3942
    %5759 = vmatpush.bf16.msra.mxu0 %v3918
    %5760 = vmatpush.bf16.msra.mxu0 %v3894
    %5761 = vmatmul.bf16.gmra.mxu0 %v904
    %v5762 = vpop.f32.mrf.mxu0
    %v5763 = vadd.f32 %v5749, %v5762
    %v5764 = vpop.f32.mrf.mxu0
    %v5765 = vadd.f32 %v5751, %v5764
    %5766 = vdwg.mxu0
    %5767 = vmatpush.bf16.msra.mxu0 %v4254
    %5768 = vmatpush.bf16.msra.mxu0 %v4230
    %5769 = vmatpush.bf16.msra.mxu0 %v4206
    %5770 = vmatpush.bf16.msra.mxu0 %v4182
    %5771 = vmatpush.bf16.msra.mxu0 %v4158
    %5772 = vmatpush.bf16.msra.mxu0 %v4134
    %5773 = vmatpush.bf16.msra.mxu0 %v4110
    %5774 = vmatpush.bf16.msra.mxu0 %v4086
    %5775 = vmatmul.bf16.gmra.mxu0 %v905
    %v5776 = vpop.f32.mrf.mxu0
    %v5777 = vadd.f32 %v5763, %v5776
    %v5778 = vpop.f32.mrf.mxu0
    %v5779 = vadd.f32 %v5765, %v5778
    %5780 = vdwg.mxu0
    %5781 = vmatpush.bf16.msra.mxu0 0
    %5782 = vmatpush.bf16.msra.mxu0 0
    %5783 = vmatpush.bf16.msra.mxu0 0
    %5784 = vmatpush.bf16.msra.mxu0 0
    %5785 = vmatpush.bf16.msra.mxu0 %v4350
    %5786 = vmatpush.bf16.msra.mxu0 %v4326
    %5787 = vmatpush.bf16.msra.mxu0 %v4302
    %5788 = vmatpush.bf16.msra.mxu0 %v4278
    %5789 = vmatmul.bf16.gmra.mxu0 %v5233
    %v5790 = vpop.f32.mrf.mxu0
    %v5791 = vadd.f32 %v5777, %v5790
    %v5792 = vpop.f32.mrf.mxu0
    %v5793 = vadd.f32 %v5779, %v5792
    %5794 = vdwg.mxu0
    %5795 = vmatpush.bf16.msra.mxu0 %v3679
    %5796 = vmatpush.bf16.msra.mxu0 %v3655
    %5797 = vmatpush.bf16.msra.mxu0 %v3631
    %5798 = vmatpush.bf16.msra.mxu0 %v3607
    %5799 = vmatpush.bf16.msra.mxu0 %v3583
    %5800 = vmatpush.bf16.msra.mxu0 %v3559
    %5801 = vmatpush.bf16.msra.mxu0 %v3535
    %5802 = vmatpush.bf16.msra.mxu0 %v3511
    %5803 = vmatmul.bf16.gmra.mxu0 %v902
    %v5804 = vpop.f32.mrf.mxu0
    %v5805 = vadd.f32 0.0, %v5804
    %v5806 = vpop.f32.mrf.mxu0
    %v5807 = vadd.f32 0.0, %v5806
    %5808 = vdwg.mxu0
    %5809 = vmatpush.bf16.msra.mxu0 %v3871
    %5810 = vmatpush.bf16.msra.mxu0 %v3847
    %5811 = vmatpush.bf16.msra.mxu0 %v3823
    %5812 = vmatpush.bf16.msra.mxu0 %v3799
    %5813 = vmatpush.bf16.msra.mxu0 %v3775
    %5814 = vmatpush.bf16.msra.mxu0 %v3751
    %5815 = vmatpush.bf16.msra.mxu0 %v3727
    %5816 = vmatpush.bf16.msra.mxu0 %v3703
    %5817 = vmatmul.bf16.gmra.mxu0 %v903
    %v5818 = vpop.f32.mrf.mxu0
    %v5819 = vadd.f32 %v5805, %v5818
    %v5820 = vpop.f32.mrf.mxu0
    %v5821 = vadd.f32 %v5807, %v5820
    %5822 = vdwg.mxu0
    %5823 = vmatpush.bf16.msra.mxu0 %v4063
    %5824 = vmatpush.bf16.msra.mxu0 %v4039
    %5825 = vmatpush.bf16.msra.mxu0 %v4015
    %5826 = vmatpush.bf16.msra.mxu0 %v3991
    %5827 = vmatpush.bf16.msra.mxu0 %v3967
    %5828 = vmatpush.bf16.msra.mxu0 %v3943
    %5829 = vmatpush.bf16.msra.mxu0 %v3919
    %5830 = vmatpush.bf16.msra.mxu0 %v3895
    %5831 = vmatmul.bf16.gmra.mxu0 %v904
    %v5832 = vpop.f32.mrf.mxu0
    %v5833 = vadd.f32 %v5819, %v5832
    %v5834 = vpop.f32.mrf.mxu0
    %v5835 = vadd.f32 %v5821, %v5834
    %5836 = vdwg.mxu0
    %5837 = vmatpush.bf16.msra.mxu0 %v4255
    %5838 = vmatpush.bf16.msra.mxu0 %v4231
    %5839 = vmatpush.bf16.msra.mxu0 %v4207
    %5840 = vmatpush.bf16.msra.mxu0 %v4183
    %5841 = vmatpush.bf16.msra.mxu0 %v4159
    %5842 = vmatpush.bf16.msra.mxu0 %v4135
    %5843 = vmatpush.bf16.msra.mxu0 %v4111
    %5844 = vmatpush.bf16.msra.mxu0 %v4087
    %5845 = vmatmul.bf16.gmra.mxu0 %v905
    %v5846 = vpop.f32.mrf.mxu0
    %v5847 = vadd.f32 %v5833, %v5846
    %v5848 = vpop.f32.mrf.mxu0
    %v5849 = vadd.f32 %v5835, %v5848
    %5850 = vdwg.mxu0
    %5851 = vmatpush.bf16.msra.mxu0 0
    %5852 = vmatpush.bf16.msra.mxu0 0
    %5853 = vmatpush.bf16.msra.mxu0 0
    %5854 = vmatpush.bf16.msra.mxu0 0
    %5855 = vmatpush.bf16.msra.mxu0 %v4351
    %5856 = vmatpush.bf16.msra.mxu0 %v4327
    %5857 = vmatpush.bf16.msra.mxu0 %v4303
    %5858 = vmatpush.bf16.msra.mxu0 %v4279
    %5859 = vmatmul.bf16.gmra.mxu0 %v5233
    %v5860 = vpop.f32.mrf.mxu0
    %v5861 = vadd.f32 %v5847, %v5860
    %v5862 = vpop.f32.mrf.mxu0
    %v5863 = vadd.f32 %v5849, %v5862
    %5864 = vdwg.mxu0
    %5865 = vmatpush.bf16.msra.mxu0 %v3680
    %5866 = vmatpush.bf16.msra.mxu0 %v3656
    %5867 = vmatpush.bf16.msra.mxu0 %v3632
    %5868 = vmatpush.bf16.msra.mxu0 %v3608
    %5869 = vmatpush.bf16.msra.mxu0 %v3584
    %5870 = vmatpush.bf16.msra.mxu0 %v3560
    %5871 = vmatpush.bf16.msra.mxu0 %v3536
    %5872 = vmatpush.bf16.msra.mxu0 %v3512
    %5873 = vmatmul.bf16.gmra.mxu0 %v902
    %v5874 = vpop.f32.mrf.mxu0
    %v5875 = vadd.f32 0.0, %v5874
    %v5876 = vpop.f32.mrf.mxu0
    %v5877 = vadd.f32 0.0, %v5876
    %5878 = vdwg.mxu0
    %5879 = vmatpush.bf16.msra.mxu0 %v3872
    %5880 = vmatpush.bf16.msra.mxu0 %v3848
    %5881 = vmatpush.bf16.msra.mxu0 %v3824
    %5882 = vmatpush.bf16.msra.mxu0 %v3800
    %5883 = vmatpush.bf16.msra.mxu0 %v3776
    %5884 = vmatpush.bf16.msra.mxu0 %v3752
    %5885 = vmatpush.bf16.msra.mxu0 %v3728
    %5886 = vmatpush.bf16.msra.mxu0 %v3704
    %5887 = vmatmul.bf16.gmra.mxu0 %v903
    %v5888 = vpop.f32.mrf.mxu0
    %v5889 = vadd.f32 %v5875, %v5888
    %v5890 = vpop.f32.mrf.mxu0
    %v5891 = vadd.f32 %v5877, %v5890
    %5892 = vdwg.mxu0
    %5893 = vmatpush.bf16.msra.mxu0 %v4064
    %5894 = vmatpush.bf16.msra.mxu0 %v4040
    %5895 = vmatpush.bf16.msra.mxu0 %v4016
    %5896 = vmatpush.bf16.msra.mxu0 %v3992
    %5897 = vmatpush.bf16.msra.mxu0 %v3968
    %5898 = vmatpush.bf16.msra.mxu0 %v3944
    %5899 = vmatpush.bf16.msra.mxu0 %v3920
    %5900 = vmatpush.bf16.msra.mxu0 %v3896
    %5901 = vmatmul.bf16.gmra.mxu0 %v904
    %v5902 = vpop.f32.mrf.mxu0
    %v5903 = vadd.f32 %v5889, %v5902
    %v5904 = vpop.f32.mrf.mxu0
    %v5905 = vadd.f32 %v5891, %v5904
    %5906 = vdwg.mxu0
    %5907 = vmatpush.bf16.msra.mxu0 %v4256
    %5908 = vmatpush.bf16.msra.mxu0 %v4232
    %5909 = vmatpush.bf16.msra.mxu0 %v4208
    %5910 = vmatpush.bf16.msra.mxu0 %v4184
    %5911 = vmatpush.bf16.msra.mxu0 %v4160
    %5912 = vmatpush.bf16.msra.mxu0 %v4136
    %5913 = vmatpush.bf16.msra.mxu0 %v4112
    %5914 = vmatpush.bf16.msra.mxu0 %v4088
    %5915 = vmatmul.bf16.gmra.mxu0 %v905
    %v5916 = vpop.f32.mrf.mxu0
    %v5917 = vadd.f32 %v5903, %v5916
    %v5918 = vpop.f32.mrf.mxu0
    %v5919 = vadd.f32 %v5905, %v5918
    %5920 = vdwg.mxu0
    %5921 = vmatpush.bf16.msra.mxu0 0
    %5922 = vmatpush.bf16.msra.mxu0 0
    %5923 = vmatpush.bf16.msra.mxu0 0
    %5924 = vmatpush.bf16.msra.mxu0 0
    %5925 = vmatpush.bf16.msra.mxu0 %v4352
    %5926 = vmatpush.bf16.msra.mxu0 %v4328
    %5927 = vmatpush.bf16.msra.mxu0 %v4304
    %5928 = vmatpush.bf16.msra.mxu0 %v4280
    %5929 = vmatmul.bf16.gmra.mxu0 %v5233
    %v5930 = vpop.f32.mrf.mxu0
    %v5931 = vadd.f32 %v5917, %v5930
    %v5932 = vpop.f32.mrf.mxu0
    %v5933 = vadd.f32 %v5919, %v5932
    %5934 = vdwg.mxu0
    %5935 = vmatpush.bf16.msra.mxu0 %v3681
    %5936 = vmatpush.bf16.msra.mxu0 %v3657
    %5937 = vmatpush.bf16.msra.mxu0 %v3633
    %5938 = vmatpush.bf16.msra.mxu0 %v3609
    %5939 = vmatpush.bf16.msra.mxu0 %v3585
    %5940 = vmatpush.bf16.msra.mxu0 %v3561
    %5941 = vmatpush.bf16.msra.mxu0 %v3537
    %5942 = vmatpush.bf16.msra.mxu0 %v3513
    %5943 = vmatmul.bf16.gmra.mxu0 %v902
    %v5944 = vpop.f32.mrf.mxu0
    %v5945 = vadd.f32 0.0, %v5944
    %v5946 = vpop.f32.mrf.mxu0
    %v5947 = vadd.f32 0.0, %v5946
    %5948 = vdwg.mxu0
    %5949 = vmatpush.bf16.msra.mxu0 %v3873
    %5950 = vmatpush.bf16.msra.mxu0 %v3849
    %5951 = vmatpush.bf16.msra.mxu0 %v3825
    %5952 = vmatpush.bf16.msra.mxu0 %v3801
    %5953 = vmatpush.bf16.msra.mxu0 %v3777
    %5954 = vmatpush.bf16.msra.mxu0 %v3753
    %5955 = vmatpush.bf16.msra.mxu0 %v3729
    %5956 = vmatpush.bf16.msra.mxu0 %v3705
    %5957 = vmatmul.bf16.gmra.mxu0 %v903
    %v5958 = vpop.f32.mrf.mxu0
    %v5959 = vadd.f32 %v5945, %v5958
    %v5960 = vpop.f32.mrf.mxu0
    %v5961 = vadd.f32 %v5947, %v5960
    %5962 = vdwg.mxu0
    %5963 = vmatpush.bf16.msra.mxu0 %v4065
    %5964 = vmatpush.bf16.msra.mxu0 %v4041
    %5965 = vmatpush.bf16.msra.mxu0 %v4017
    %5966 = vmatpush.bf16.msra.mxu0 %v3993
    %5967 = vmatpush.bf16.msra.mxu0 %v3969
    %5968 = vmatpush.bf16.msra.mxu0 %v3945
    %5969 = vmatpush.bf16.msra.mxu0 %v3921
    %5970 = vmatpush.bf16.msra.mxu0 %v3897
    %5971 = vmatmul.bf16.gmra.mxu0 %v904
    %v5972 = vpop.f32.mrf.mxu0
    %v5973 = vadd.f32 %v5959, %v5972
    %v5974 = vpop.f32.mrf.mxu0
    %v5975 = vadd.f32 %v5961, %v5974
    %5976 = vdwg.mxu0
    %5977 = vmatpush.bf16.msra.mxu0 %v4257
    %5978 = vmatpush.bf16.msra.mxu0 %v4233
    %5979 = vmatpush.bf16.msra.mxu0 %v4209
    %5980 = vmatpush.bf16.msra.mxu0 %v4185
    %5981 = vmatpush.bf16.msra.mxu0 %v4161
    %5982 = vmatpush.bf16.msra.mxu0 %v4137
    %5983 = vmatpush.bf16.msra.mxu0 %v4113
    %5984 = vmatpush.bf16.msra.mxu0 %v4089
    %5985 = vmatmul.bf16.gmra.mxu0 %v905
    %v5986 = vpop.f32.mrf.mxu0
    %v5987 = vadd.f32 %v5973, %v5986
    %v5988 = vpop.f32.mrf.mxu0
    %v5989 = vadd.f32 %v5975, %v5988
    %5990 = vdwg.mxu0
    %5991 = vmatpush.bf16.msra.mxu0 0
    %5992 = vmatpush.bf16.msra.mxu0 0
    %5993 = vmatpush.bf16.msra.mxu0 0
    %5994 = vmatpush.bf16.msra.mxu0 0
    %5995 = vmatpush.bf16.msra.mxu0 %v4353
    %5996 = vmatpush.bf16.msra.mxu0 %v4329
    %5997 = vmatpush.bf16.msra.mxu0 %v4305
    %5998 = vmatpush.bf16.msra.mxu0 %v4281
    %5999 = vmatmul.bf16.gmra.mxu0 %v5233
    %v6000 = vpop.f32.mrf.mxu0
    %v6001 = vadd.f32 %v5987, %v6000
    %v6002 = vpop.f32.mrf.mxu0
    %v6003 = vadd.f32 %v5989, %v6002
    %6004 = vdwg.mxu0
    %6005 = vmatpush.bf16.msra.mxu0 %v3682
    %6006 = vmatpush.bf16.msra.mxu0 %v3658
    %6007 = vmatpush.bf16.msra.mxu0 %v3634
    %6008 = vmatpush.bf16.msra.mxu0 %v3610
    %6009 = vmatpush.bf16.msra.mxu0 %v3586
    %6010 = vmatpush.bf16.msra.mxu0 %v3562
    %6011 = vmatpush.bf16.msra.mxu0 %v3538
    %6012 = vmatpush.bf16.msra.mxu0 %v3514
    %6013 = vmatmul.bf16.gmra.mxu0 %v902
    %v6014 = vpop.f32.mrf.mxu0
    %v6015 = vadd.f32 0.0, %v6014
    %v6016 = vpop.f32.mrf.mxu0
    %v6017 = vadd.f32 0.0, %v6016
    %6018 = vdwg.mxu0
    %6019 = vmatpush.bf16.msra.mxu0 %v3874
    %6020 = vmatpush.bf16.msra.mxu0 %v3850
    %6021 = vmatpush.bf16.msra.mxu0 %v3826
    %6022 = vmatpush.bf16.msra.mxu0 %v3802
    %6023 = vmatpush.bf16.msra.mxu0 %v3778
    %6024 = vmatpush.bf16.msra.mxu0 %v3754
    %6025 = vmatpush.bf16.msra.mxu0 %v3730
    %6026 = vmatpush.bf16.msra.mxu0 %v3706
    %6027 = vmatmul.bf16.gmra.mxu0 %v903
    %v6028 = vpop.f32.mrf.mxu0
    %v6029 = vadd.f32 %v6015, %v6028
    %v6030 = vpop.f32.mrf.mxu0
    %v6031 = vadd.f32 %v6017, %v6030
    %6032 = vdwg.mxu0
    %6033 = vmatpush.bf16.msra.mxu0 %v4066
    %6034 = vmatpush.bf16.msra.mxu0 %v4042
    %6035 = vmatpush.bf16.msra.mxu0 %v4018
    %6036 = vmatpush.bf16.msra.mxu0 %v3994
    %6037 = vmatpush.bf16.msra.mxu0 %v3970
    %6038 = vmatpush.bf16.msra.mxu0 %v3946
    %6039 = vmatpush.bf16.msra.mxu0 %v3922
    %6040 = vmatpush.bf16.msra.mxu0 %v3898
    %6041 = vmatmul.bf16.gmra.mxu0 %v904
    %v6042 = vpop.f32.mrf.mxu0
    %v6043 = vadd.f32 %v6029, %v6042
    %v6044 = vpop.f32.mrf.mxu0
    %v6045 = vadd.f32 %v6031, %v6044
    %6046 = vdwg.mxu0
    %6047 = vmatpush.bf16.msra.mxu0 %v4258
    %6048 = vmatpush.bf16.msra.mxu0 %v4234
    %6049 = vmatpush.bf16.msra.mxu0 %v4210
    %6050 = vmatpush.bf16.msra.mxu0 %v4186
    %6051 = vmatpush.bf16.msra.mxu0 %v4162
    %6052 = vmatpush.bf16.msra.mxu0 %v4138
    %6053 = vmatpush.bf16.msra.mxu0 %v4114
    %6054 = vmatpush.bf16.msra.mxu0 %v4090
    %6055 = vmatmul.bf16.gmra.mxu0 %v905
    %v6056 = vpop.f32.mrf.mxu0
    %v6057 = vadd.f32 %v6043, %v6056
    %v6058 = vpop.f32.mrf.mxu0
    %v6059 = vadd.f32 %v6045, %v6058
    %6060 = vdwg.mxu0
    %6061 = vmatpush.bf16.msra.mxu0 0
    %6062 = vmatpush.bf16.msra.mxu0 0
    %6063 = vmatpush.bf16.msra.mxu0 0
    %6064 = vmatpush.bf16.msra.mxu0 0
    %6065 = vmatpush.bf16.msra.mxu0 %v4354
    %6066 = vmatpush.bf16.msra.mxu0 %v4330
    %6067 = vmatpush.bf16.msra.mxu0 %v4306
    %6068 = vmatpush.bf16.msra.mxu0 %v4282
    %6069 = vmatmul.bf16.gmra.mxu0 %v5233
    %v6070 = vpop.f32.mrf.mxu0
    %v6071 = vadd.f32 %v6057, %v6070
    %v6072 = vpop.f32.mrf.mxu0
    %v6073 = vadd.f32 %v6059, %v6072
    %6074 = vdwg.mxu0
    %6075 = vmatpush.bf16.msra.mxu0 %v3683
    %6076 = vmatpush.bf16.msra.mxu0 %v3659
    %6077 = vmatpush.bf16.msra.mxu0 %v3635
    %6078 = vmatpush.bf16.msra.mxu0 %v3611
    %6079 = vmatpush.bf16.msra.mxu0 %v3587
    %6080 = vmatpush.bf16.msra.mxu0 %v3563
    %6081 = vmatpush.bf16.msra.mxu0 %v3539
    %6082 = vmatpush.bf16.msra.mxu0 %v3515
    %6083 = vmatmul.bf16.gmra.mxu0 %v902
    %v6084 = vpop.f32.mrf.mxu0
    %v6085 = vadd.f32 0.0, %v6084
    %v6086 = vpop.f32.mrf.mxu0
    %v6087 = vadd.f32 0.0, %v6086
    %6088 = vdwg.mxu0
    %6089 = vmatpush.bf16.msra.mxu0 %v3875
    %6090 = vmatpush.bf16.msra.mxu0 %v3851
    %6091 = vmatpush.bf16.msra.mxu0 %v3827
    %6092 = vmatpush.bf16.msra.mxu0 %v3803
    %6093 = vmatpush.bf16.msra.mxu0 %v3779
    %6094 = vmatpush.bf16.msra.mxu0 %v3755
    %6095 = vmatpush.bf16.msra.mxu0 %v3731
    %6096 = vmatpush.bf16.msra.mxu0 %v3707
    %6097 = vmatmul.bf16.gmra.mxu0 %v903
    %v6098 = vpop.f32.mrf.mxu0
    %v6099 = vadd.f32 %v6085, %v6098
    %v6100 = vpop.f32.mrf.mxu0
    %v6101 = vadd.f32 %v6087, %v6100
    %6102 = vdwg.mxu0
    %6103 = vmatpush.bf16.msra.mxu0 %v4067
    %6104 = vmatpush.bf16.msra.mxu0 %v4043
    %6105 = vmatpush.bf16.msra.mxu0 %v4019
    %6106 = vmatpush.bf16.msra.mxu0 %v3995
    %6107 = vmatpush.bf16.msra.mxu0 %v3971
    %6108 = vmatpush.bf16.msra.mxu0 %v3947
    %6109 = vmatpush.bf16.msra.mxu0 %v3923
    %6110 = vmatpush.bf16.msra.mxu0 %v3899
    %6111 = vmatmul.bf16.gmra.mxu0 %v904
    %v6112 = vpop.f32.mrf.mxu0
    %v6113 = vadd.f32 %v6099, %v6112
    %v6114 = vpop.f32.mrf.mxu0
    %v6115 = vadd.f32 %v6101, %v6114
    %6116 = vdwg.mxu0
    %6117 = vmatpush.bf16.msra.mxu0 %v4259
    %6118 = vmatpush.bf16.msra.mxu0 %v4235
    %6119 = vmatpush.bf16.msra.mxu0 %v4211
    %6120 = vmatpush.bf16.msra.mxu0 %v4187
    %6121 = vmatpush.bf16.msra.mxu0 %v4163
    %6122 = vmatpush.bf16.msra.mxu0 %v4139
    %6123 = vmatpush.bf16.msra.mxu0 %v4115
    %6124 = vmatpush.bf16.msra.mxu0 %v4091
    %6125 = vmatmul.bf16.gmra.mxu0 %v905
    %v6126 = vpop.f32.mrf.mxu0
    %v6127 = vadd.f32 %v6113, %v6126
    %v6128 = vpop.f32.mrf.mxu0
    %v6129 = vadd.f32 %v6115, %v6128
    %6130 = vdwg.mxu0
    %6131 = vmatpush.bf16.msra.mxu0 0
    %6132 = vmatpush.bf16.msra.mxu0 0
    %6133 = vmatpush.bf16.msra.mxu0 0
    %6134 = vmatpush.bf16.msra.mxu0 0
    %6135 = vmatpush.bf16.msra.mxu0 %v4355
    %6136 = vmatpush.bf16.msra.mxu0 %v4331
    %6137 = vmatpush.bf16.msra.mxu0 %v4307
    %6138 = vmatpush.bf16.msra.mxu0 %v4283
    %6139 = vmatmul.bf16.gmra.mxu0 %v5233
    %v6140 = vpop.f32.mrf.mxu0
    %v6141 = vadd.f32 %v6127, %v6140
    %v6142 = vpop.f32.mrf.mxu0
    %v6143 = vadd.f32 %v6129, %v6142
    %6144 = vdwg.mxu0
    %6145 = vmatpush.bf16.msra.mxu0 %v3684
    %6146 = vmatpush.bf16.msra.mxu0 %v3660
    %6147 = vmatpush.bf16.msra.mxu0 %v3636
    %6148 = vmatpush.bf16.msra.mxu0 %v3612
    %6149 = vmatpush.bf16.msra.mxu0 %v3588
    %6150 = vmatpush.bf16.msra.mxu0 %v3564
    %6151 = vmatpush.bf16.msra.mxu0 %v3540
    %6152 = vmatpush.bf16.msra.mxu0 %v3516
    %6153 = vmatmul.bf16.gmra.mxu0 %v902
    %v6154 = vpop.f32.mrf.mxu0
    %v6155 = vadd.f32 0.0, %v6154
    %v6156 = vpop.f32.mrf.mxu0
    %v6157 = vadd.f32 0.0, %v6156
    %6158 = vdwg.mxu0
    %6159 = vmatpush.bf16.msra.mxu0 %v3876
    %6160 = vmatpush.bf16.msra.mxu0 %v3852
    %6161 = vmatpush.bf16.msra.mxu0 %v3828
    %6162 = vmatpush.bf16.msra.mxu0 %v3804
    %6163 = vmatpush.bf16.msra.mxu0 %v3780
    %6164 = vmatpush.bf16.msra.mxu0 %v3756
    %6165 = vmatpush.bf16.msra.mxu0 %v3732
    %6166 = vmatpush.bf16.msra.mxu0 %v3708
    %6167 = vmatmul.bf16.gmra.mxu0 %v903
    %v6168 = vpop.f32.mrf.mxu0
    %v6169 = vadd.f32 %v6155, %v6168
    %v6170 = vpop.f32.mrf.mxu0
    %v6171 = vadd.f32 %v6157, %v6170
    %6172 = vdwg.mxu0
    %6173 = vmatpush.bf16.msra.mxu0 %v4068
    %6174 = vmatpush.bf16.msra.mxu0 %v4044
    %6175 = vmatpush.bf16.msra.mxu0 %v4020
    %6176 = vmatpush.bf16.msra.mxu0 %v3996
    %6177 = vmatpush.bf16.msra.mxu0 %v3972
    %6178 = vmatpush.bf16.msra.mxu0 %v3948
    %6179 = vmatpush.bf16.msra.mxu0 %v3924
    %6180 = vmatpush.bf16.msra.mxu0 %v3900
    %6181 = vmatmul.bf16.gmra.mxu0 %v904
    %v6182 = vpop.f32.mrf.mxu0
    %v6183 = vadd.f32 %v6169, %v6182
    %v6184 = vpop.f32.mrf.mxu0
    %v6185 = vadd.f32 %v6171, %v6184
    %6186 = vdwg.mxu0
    %6187 = vmatpush.bf16.msra.mxu0 %v4260
    %6188 = vmatpush.bf16.msra.mxu0 %v4236
    %6189 = vmatpush.bf16.msra.mxu0 %v4212
    %6190 = vmatpush.bf16.msra.mxu0 %v4188
    %6191 = vmatpush.bf16.msra.mxu0 %v4164
    %6192 = vmatpush.bf16.msra.mxu0 %v4140
    %6193 = vmatpush.bf16.msra.mxu0 %v4116
    %6194 = vmatpush.bf16.msra.mxu0 %v4092
    %6195 = vmatmul.bf16.gmra.mxu0 %v905
    %v6196 = vpop.f32.mrf.mxu0
    %v6197 = vadd.f32 %v6183, %v6196
    %v6198 = vpop.f32.mrf.mxu0
    %v6199 = vadd.f32 %v6185, %v6198
    %6200 = vdwg.mxu0
    %6201 = vmatpush.bf16.msra.mxu0 0
    %6202 = vmatpush.bf16.msra.mxu0 0
    %6203 = vmatpush.bf16.msra.mxu0 0
    %6204 = vmatpush.bf16.msra.mxu0 0
    %6205 = vmatpush.bf16.msra.mxu0 %v4356
    %6206 = vmatpush.bf16.msra.mxu0 %v4332
    %6207 = vmatpush.bf16.msra.mxu0 %v4308
    %6208 = vmatpush.bf16.msra.mxu0 %v4284
    %6209 = vmatmul.bf16.gmra.mxu0 %v5233
    %v6210 = vpop.f32.mrf.mxu0
    %v6211 = vadd.f32 %v6197, %v6210
    %v6212 = vpop.f32.mrf.mxu0
    %v6213 = vadd.f32 %v6199, %v6212
    %6214 = vdwg.mxu0
    %6215 = vmatpush.bf16.msra.mxu0 %v3685
    %6216 = vmatpush.bf16.msra.mxu0 %v3661
    %6217 = vmatpush.bf16.msra.mxu0 %v3637
    %6218 = vmatpush.bf16.msra.mxu0 %v3613
    %6219 = vmatpush.bf16.msra.mxu0 %v3589
    %6220 = vmatpush.bf16.msra.mxu0 %v3565
    %6221 = vmatpush.bf16.msra.mxu0 %v3541
    %6222 = vmatpush.bf16.msra.mxu0 %v3517
    %6223 = vmatmul.bf16.gmra.mxu0 %v902
    %v6224 = vpop.f32.mrf.mxu0
    %v6225 = vadd.f32 0.0, %v6224
    %v6226 = vpop.f32.mrf.mxu0
    %v6227 = vadd.f32 0.0, %v6226
    %6228 = vdwg.mxu0
    %6229 = vmatpush.bf16.msra.mxu0 %v3877
    %6230 = vmatpush.bf16.msra.mxu0 %v3853
    %6231 = vmatpush.bf16.msra.mxu0 %v3829
    %6232 = vmatpush.bf16.msra.mxu0 %v3805
    %6233 = vmatpush.bf16.msra.mxu0 %v3781
    %6234 = vmatpush.bf16.msra.mxu0 %v3757
    %6235 = vmatpush.bf16.msra.mxu0 %v3733
    %6236 = vmatpush.bf16.msra.mxu0 %v3709
    %6237 = vmatmul.bf16.gmra.mxu0 %v903
    %v6238 = vpop.f32.mrf.mxu0
    %v6239 = vadd.f32 %v6225, %v6238
    %v6240 = vpop.f32.mrf.mxu0
    %v6241 = vadd.f32 %v6227, %v6240
    %6242 = vdwg.mxu0
    %6243 = vmatpush.bf16.msra.mxu0 %v4069
    %6244 = vmatpush.bf16.msra.mxu0 %v4045
    %6245 = vmatpush.bf16.msra.mxu0 %v4021
    %6246 = vmatpush.bf16.msra.mxu0 %v3997
    %6247 = vmatpush.bf16.msra.mxu0 %v3973
    %6248 = vmatpush.bf16.msra.mxu0 %v3949
    %6249 = vmatpush.bf16.msra.mxu0 %v3925
    %6250 = vmatpush.bf16.msra.mxu0 %v3901
    %6251 = vmatmul.bf16.gmra.mxu0 %v904
    %v6252 = vpop.f32.mrf.mxu0
    %v6253 = vadd.f32 %v6239, %v6252
    %v6254 = vpop.f32.mrf.mxu0
    %v6255 = vadd.f32 %v6241, %v6254
    %6256 = vdwg.mxu0
    %6257 = vmatpush.bf16.msra.mxu0 %v4261
    %6258 = vmatpush.bf16.msra.mxu0 %v4237
    %6259 = vmatpush.bf16.msra.mxu0 %v4213
    %6260 = vmatpush.bf16.msra.mxu0 %v4189
    %6261 = vmatpush.bf16.msra.mxu0 %v4165
    %6262 = vmatpush.bf16.msra.mxu0 %v4141
    %6263 = vmatpush.bf16.msra.mxu0 %v4117
    %6264 = vmatpush.bf16.msra.mxu0 %v4093
    %6265 = vmatmul.bf16.gmra.mxu0 %v905
    %v6266 = vpop.f32.mrf.mxu0
    %v6267 = vadd.f32 %v6253, %v6266
    %v6268 = vpop.f32.mrf.mxu0
    %v6269 = vadd.f32 %v6255, %v6268
    %6270 = vdwg.mxu0
    %6271 = vmatpush.bf16.msra.mxu0 0
    %6272 = vmatpush.bf16.msra.mxu0 0
    %6273 = vmatpush.bf16.msra.mxu0 0
    %6274 = vmatpush.bf16.msra.mxu0 0
    %6275 = vmatpush.bf16.msra.mxu0 %v4357
    %6276 = vmatpush.bf16.msra.mxu0 %v4333
    %6277 = vmatpush.bf16.msra.mxu0 %v4309
    %6278 = vmatpush.bf16.msra.mxu0 %v4285
    %6279 = vmatmul.bf16.gmra.mxu0 %v5233
    %v6280 = vpop.f32.mrf.mxu0
    %v6281 = vadd.f32 %v6267, %v6280
    %v6282 = vpop.f32.mrf.mxu0
    %v6283 = vadd.f32 %v6269, %v6282
    %6284 = vdwg.mxu0
    %6285 = vmatpush.bf16.msra.mxu0 %v3686
    %6286 = vmatpush.bf16.msra.mxu0 %v3662
    %6287 = vmatpush.bf16.msra.mxu0 %v3638
    %6288 = vmatpush.bf16.msra.mxu0 %v3614
    %6289 = vmatpush.bf16.msra.mxu0 %v3590
    %6290 = vmatpush.bf16.msra.mxu0 %v3566
    %6291 = vmatpush.bf16.msra.mxu0 %v3542
    %6292 = vmatpush.bf16.msra.mxu0 %v3518
    %6293 = vmatmul.bf16.gmra.mxu0 %v902
    %v6294 = vpop.f32.mrf.mxu0
    %v6295 = vadd.f32 0.0, %v6294
    %v6296 = vpop.f32.mrf.mxu0
    %v6297 = vadd.f32 0.0, %v6296
    %6298 = vdwg.mxu0
    %6299 = vmatpush.bf16.msra.mxu0 %v3878
    %6300 = vmatpush.bf16.msra.mxu0 %v3854
    %6301 = vmatpush.bf16.msra.mxu0 %v3830
    %6302 = vmatpush.bf16.msra.mxu0 %v3806
    %6303 = vmatpush.bf16.msra.mxu0 %v3782
    %6304 = vmatpush.bf16.msra.mxu0 %v3758
    %6305 = vmatpush.bf16.msra.mxu0 %v3734
    %6306 = vmatpush.bf16.msra.mxu0 %v3710
    %6307 = vmatmul.bf16.gmra.mxu0 %v903
    %v6308 = vpop.f32.mrf.mxu0
    %v6309 = vadd.f32 %v6295, %v6308
    %v6310 = vpop.f32.mrf.mxu0
    %v6311 = vadd.f32 %v6297, %v6310
    %6312 = vdwg.mxu0
    %6313 = vmatpush.bf16.msra.mxu0 %v4070
    %6314 = vmatpush.bf16.msra.mxu0 %v4046
    %6315 = vmatpush.bf16.msra.mxu0 %v4022
    %6316 = vmatpush.bf16.msra.mxu0 %v3998
    %6317 = vmatpush.bf16.msra.mxu0 %v3974
    %6318 = vmatpush.bf16.msra.mxu0 %v3950
    %6319 = vmatpush.bf16.msra.mxu0 %v3926
    %6320 = vmatpush.bf16.msra.mxu0 %v3902
    %6321 = vmatmul.bf16.gmra.mxu0 %v904
    %v6322 = vpop.f32.mrf.mxu0
    %v6323 = vadd.f32 %v6309, %v6322
    %v6324 = vpop.f32.mrf.mxu0
    %v6325 = vadd.f32 %v6311, %v6324
    %6326 = vdwg.mxu0
    %6327 = vmatpush.bf16.msra.mxu0 %v4262
    %6328 = vmatpush.bf16.msra.mxu0 %v4238
    %6329 = vmatpush.bf16.msra.mxu0 %v4214
    %6330 = vmatpush.bf16.msra.mxu0 %v4190
    %6331 = vmatpush.bf16.msra.mxu0 %v4166
    %6332 = vmatpush.bf16.msra.mxu0 %v4142
    %6333 = vmatpush.bf16.msra.mxu0 %v4118
    %6334 = vmatpush.bf16.msra.mxu0 %v4094
    %6335 = vmatmul.bf16.gmra.mxu0 %v905
    %v6336 = vpop.f32.mrf.mxu0
    %v6337 = vadd.f32 %v6323, %v6336
    %v6338 = vpop.f32.mrf.mxu0
    %v6339 = vadd.f32 %v6325, %v6338
    %6340 = vdwg.mxu0
    %6341 = vmatpush.bf16.msra.mxu0 0
    %6342 = vmatpush.bf16.msra.mxu0 0
    %6343 = vmatpush.bf16.msra.mxu0 0
    %6344 = vmatpush.bf16.msra.mxu0 0
    %6345 = vmatpush.bf16.msra.mxu0 %v4358
    %6346 = vmatpush.bf16.msra.mxu0 %v4334
    %6347 = vmatpush.bf16.msra.mxu0 %v4310
    %6348 = vmatpush.bf16.msra.mxu0 %v4286
    %6349 = vmatmul.bf16.gmra.mxu0 %v5233
    %v6350 = vpop.f32.mrf.mxu0
    %v6351 = vadd.f32 %v6337, %v6350
    %v6352 = vpop.f32.mrf.mxu0
    %v6353 = vadd.f32 %v6339, %v6352
    %6354 = vdwg.mxu0
    %6355 = vmatpush.bf16.msra.mxu0 %v3687
    %6356 = vmatpush.bf16.msra.mxu0 %v3663
    %6357 = vmatpush.bf16.msra.mxu0 %v3639
    %6358 = vmatpush.bf16.msra.mxu0 %v3615
    %6359 = vmatpush.bf16.msra.mxu0 %v3591
    %6360 = vmatpush.bf16.msra.mxu0 %v3567
    %6361 = vmatpush.bf16.msra.mxu0 %v3543
    %6362 = vmatpush.bf16.msra.mxu0 %v3519
    %6363 = vmatmul.bf16.gmra.mxu0 %v902
    %v6364 = vpop.f32.mrf.mxu0
    %v6365 = vadd.f32 0.0, %v6364
    %v6366 = vpop.f32.mrf.mxu0
    %v6367 = vadd.f32 0.0, %v6366
    %6368 = vdwg.mxu0
    %6369 = vmatpush.bf16.msra.mxu0 %v3879
    %6370 = vmatpush.bf16.msra.mxu0 %v3855
    %6371 = vmatpush.bf16.msra.mxu0 %v3831
    %6372 = vmatpush.bf16.msra.mxu0 %v3807
    %6373 = vmatpush.bf16.msra.mxu0 %v3783
    %6374 = vmatpush.bf16.msra.mxu0 %v3759
    %6375 = vmatpush.bf16.msra.mxu0 %v3735
    %6376 = vmatpush.bf16.msra.mxu0 %v3711
    %6377 = vmatmul.bf16.gmra.mxu0 %v903
    %v6378 = vpop.f32.mrf.mxu0
    %v6379 = vadd.f32 %v6365, %v6378
    %v6380 = vpop.f32.mrf.mxu0
    %v6381 = vadd.f32 %v6367, %v6380
    %6382 = vdwg.mxu0
    %6383 = vmatpush.bf16.msra.mxu0 %v4071
    %6384 = vmatpush.bf16.msra.mxu0 %v4047
    %6385 = vmatpush.bf16.msra.mxu0 %v4023
    %6386 = vmatpush.bf16.msra.mxu0 %v3999
    %6387 = vmatpush.bf16.msra.mxu0 %v3975
    %6388 = vmatpush.bf16.msra.mxu0 %v3951
    %6389 = vmatpush.bf16.msra.mxu0 %v3927
    %6390 = vmatpush.bf16.msra.mxu0 %v3903
    %6391 = vmatmul.bf16.gmra.mxu0 %v904
    %v6392 = vpop.f32.mrf.mxu0
    %v6393 = vadd.f32 %v6379, %v6392
    %v6394 = vpop.f32.mrf.mxu0
    %v6395 = vadd.f32 %v6381, %v6394
    %6396 = vdwg.mxu0
    %6397 = vmatpush.bf16.msra.mxu0 %v4263
    %6398 = vmatpush.bf16.msra.mxu0 %v4239
    %6399 = vmatpush.bf16.msra.mxu0 %v4215
    %6400 = vmatpush.bf16.msra.mxu0 %v4191
    %6401 = vmatpush.bf16.msra.mxu0 %v4167
    %6402 = vmatpush.bf16.msra.mxu0 %v4143
    %6403 = vmatpush.bf16.msra.mxu0 %v4119
    %6404 = vmatpush.bf16.msra.mxu0 %v4095
    %6405 = vmatmul.bf16.gmra.mxu0 %v905
    %v6406 = vpop.f32.mrf.mxu0
    %v6407 = vadd.f32 %v6393, %v6406
    %v6408 = vpop.f32.mrf.mxu0
    %v6409 = vadd.f32 %v6395, %v6408
    %6410 = vdwg.mxu0
    %6411 = vmatpush.bf16.msra.mxu0 0
    %6412 = vmatpush.bf16.msra.mxu0 0
    %6413 = vmatpush.bf16.msra.mxu0 0
    %6414 = vmatpush.bf16.msra.mxu0 0
    %6415 = vmatpush.bf16.msra.mxu0 %v4359
    %6416 = vmatpush.bf16.msra.mxu0 %v4335
    %6417 = vmatpush.bf16.msra.mxu0 %v4311
    %6418 = vmatpush.bf16.msra.mxu0 %v4287
    %6419 = vmatmul.bf16.gmra.mxu0 %v5233
    %v6420 = vpop.f32.mrf.mxu0
    %v6421 = vadd.f32 %v6407, %v6420
    %v6422 = vpop.f32.mrf.mxu0
    %v6423 = vadd.f32 %v6409, %v6422
    %6424 = vdwg.mxu0
    %6425 = vmatpush.bf16.msra.mxu0 %v3688
    %6426 = vmatpush.bf16.msra.mxu0 %v3664
    %6427 = vmatpush.bf16.msra.mxu0 %v3640
    %6428 = vmatpush.bf16.msra.mxu0 %v3616
    %6429 = vmatpush.bf16.msra.mxu0 %v3592
    %6430 = vmatpush.bf16.msra.mxu0 %v3568
    %6431 = vmatpush.bf16.msra.mxu0 %v3544
    %6432 = vmatpush.bf16.msra.mxu0 %v3520
    %6433 = vmatmul.bf16.gmra.mxu0 %v902
    %v6434 = vpop.f32.mrf.mxu0
    %v6435 = vadd.f32 0.0, %v6434
    %v6436 = vpop.f32.mrf.mxu0
    %v6437 = vadd.f32 0.0, %v6436
    %6438 = vdwg.mxu0
    %6439 = vmatpush.bf16.msra.mxu0 %v3880
    %6440 = vmatpush.bf16.msra.mxu0 %v3856
    %6441 = vmatpush.bf16.msra.mxu0 %v3832
    %6442 = vmatpush.bf16.msra.mxu0 %v3808
    %6443 = vmatpush.bf16.msra.mxu0 %v3784
    %6444 = vmatpush.bf16.msra.mxu0 %v3760
    %6445 = vmatpush.bf16.msra.mxu0 %v3736
    %6446 = vmatpush.bf16.msra.mxu0 %v3712
    %6447 = vmatmul.bf16.gmra.mxu0 %v903
    %v6448 = vpop.f32.mrf.mxu0
    %v6449 = vadd.f32 %v6435, %v6448
    %v6450 = vpop.f32.mrf.mxu0
    %v6451 = vadd.f32 %v6437, %v6450
    %6452 = vdwg.mxu0
    %6453 = vmatpush.bf16.msra.mxu0 %v4072
    %6454 = vmatpush.bf16.msra.mxu0 %v4048
    %6455 = vmatpush.bf16.msra.mxu0 %v4024
    %6456 = vmatpush.bf16.msra.mxu0 %v4000
    %6457 = vmatpush.bf16.msra.mxu0 %v3976
    %6458 = vmatpush.bf16.msra.mxu0 %v3952
    %6459 = vmatpush.bf16.msra.mxu0 %v3928
    %6460 = vmatpush.bf16.msra.mxu0 %v3904
    %6461 = vmatmul.bf16.gmra.mxu0 %v904
    %v6462 = vpop.f32.mrf.mxu0
    %v6463 = vadd.f32 %v6449, %v6462
    %v6464 = vpop.f32.mrf.mxu0
    %v6465 = vadd.f32 %v6451, %v6464
    %6466 = vdwg.mxu0
    %6467 = vmatpush.bf16.msra.mxu0 %v4264
    %6468 = vmatpush.bf16.msra.mxu0 %v4240
    %6469 = vmatpush.bf16.msra.mxu0 %v4216
    %6470 = vmatpush.bf16.msra.mxu0 %v4192
    %6471 = vmatpush.bf16.msra.mxu0 %v4168
    %6472 = vmatpush.bf16.msra.mxu0 %v4144
    %6473 = vmatpush.bf16.msra.mxu0 %v4120
    %6474 = vmatpush.bf16.msra.mxu0 %v4096
    %6475 = vmatmul.bf16.gmra.mxu0 %v905
    %v6476 = vpop.f32.mrf.mxu0
    %v6477 = vadd.f32 %v6463, %v6476
    %v6478 = vpop.f32.mrf.mxu0
    %v6479 = vadd.f32 %v6465, %v6478
    %6480 = vdwg.mxu0
    %6481 = vmatpush.bf16.msra.mxu0 0
    %6482 = vmatpush.bf16.msra.mxu0 0
    %6483 = vmatpush.bf16.msra.mxu0 0
    %6484 = vmatpush.bf16.msra.mxu0 0
    %6485 = vmatpush.bf16.msra.mxu0 %v4360
    %6486 = vmatpush.bf16.msra.mxu0 %v4336
    %6487 = vmatpush.bf16.msra.mxu0 %v4312
    %6488 = vmatpush.bf16.msra.mxu0 %v4288
    %6489 = vmatmul.bf16.gmra.mxu0 %v5233
    %v6490 = vpop.f32.mrf.mxu0
    %v6491 = vadd.f32 %v6477, %v6490
    %v6492 = vpop.f32.mrf.mxu0
    %v6493 = vadd.f32 %v6479, %v6492
    %6494 = vdwg.mxu0
    %6495 = vmatpush.bf16.msra.mxu0 %v3689
    %6496 = vmatpush.bf16.msra.mxu0 %v3665
    %6497 = vmatpush.bf16.msra.mxu0 %v3641
    %6498 = vmatpush.bf16.msra.mxu0 %v3617
    %6499 = vmatpush.bf16.msra.mxu0 %v3593
    %6500 = vmatpush.bf16.msra.mxu0 %v3569
    %6501 = vmatpush.bf16.msra.mxu0 %v3545
    %6502 = vmatpush.bf16.msra.mxu0 %v3521
    %6503 = vmatmul.bf16.gmra.mxu0 %v902
    %v6504 = vpop.f32.mrf.mxu0
    %v6505 = vadd.f32 0.0, %v6504
    %v6506 = vpop.f32.mrf.mxu0
    %v6507 = vadd.f32 0.0, %v6506
    %6508 = vdwg.mxu0
    %6509 = vmatpush.bf16.msra.mxu0 %v3881
    %6510 = vmatpush.bf16.msra.mxu0 %v3857
    %6511 = vmatpush.bf16.msra.mxu0 %v3833
    %6512 = vmatpush.bf16.msra.mxu0 %v3809
    %6513 = vmatpush.bf16.msra.mxu0 %v3785
    %6514 = vmatpush.bf16.msra.mxu0 %v3761
    %6515 = vmatpush.bf16.msra.mxu0 %v3737
    %6516 = vmatpush.bf16.msra.mxu0 %v3713
    %6517 = vmatmul.bf16.gmra.mxu0 %v903
    %v6518 = vpop.f32.mrf.mxu0
    %v6519 = vadd.f32 %v6505, %v6518
    %v6520 = vpop.f32.mrf.mxu0
    %v6521 = vadd.f32 %v6507, %v6520
    %6522 = vdwg.mxu0
    %6523 = vmatpush.bf16.msra.mxu0 %v4073
    %6524 = vmatpush.bf16.msra.mxu0 %v4049
    %6525 = vmatpush.bf16.msra.mxu0 %v4025
    %6526 = vmatpush.bf16.msra.mxu0 %v4001
    %6527 = vmatpush.bf16.msra.mxu0 %v3977
    %6528 = vmatpush.bf16.msra.mxu0 %v3953
    %6529 = vmatpush.bf16.msra.mxu0 %v3929
    %6530 = vmatpush.bf16.msra.mxu0 %v3905
    %6531 = vmatmul.bf16.gmra.mxu0 %v904
    %v6532 = vpop.f32.mrf.mxu0
    %v6533 = vadd.f32 %v6519, %v6532
    %v6534 = vpop.f32.mrf.mxu0
    %v6535 = vadd.f32 %v6521, %v6534
    %6536 = vdwg.mxu0
    %6537 = vmatpush.bf16.msra.mxu0 %v4265
    %6538 = vmatpush.bf16.msra.mxu0 %v4241
    %6539 = vmatpush.bf16.msra.mxu0 %v4217
    %6540 = vmatpush.bf16.msra.mxu0 %v4193
    %6541 = vmatpush.bf16.msra.mxu0 %v4169
    %6542 = vmatpush.bf16.msra.mxu0 %v4145
    %6543 = vmatpush.bf16.msra.mxu0 %v4121
    %6544 = vmatpush.bf16.msra.mxu0 %v4097
    %6545 = vmatmul.bf16.gmra.mxu0 %v905
    %v6546 = vpop.f32.mrf.mxu0
    %v6547 = vadd.f32 %v6533, %v6546
    %v6548 = vpop.f32.mrf.mxu0
    %v6549 = vadd.f32 %v6535, %v6548
    %6550 = vdwg.mxu0
    %6551 = vmatpush.bf16.msra.mxu0 0
    %6552 = vmatpush.bf16.msra.mxu0 0
    %6553 = vmatpush.bf16.msra.mxu0 0
    %6554 = vmatpush.bf16.msra.mxu0 0
    %6555 = vmatpush.bf16.msra.mxu0 %v4361
    %6556 = vmatpush.bf16.msra.mxu0 %v4337
    %6557 = vmatpush.bf16.msra.mxu0 %v4313
    %6558 = vmatpush.bf16.msra.mxu0 %v4289
    %6559 = vmatmul.bf16.gmra.mxu0 %v5233
    %v6560 = vpop.f32.mrf.mxu0
    %v6561 = vadd.f32 %v6547, %v6560
    %v6562 = vpop.f32.mrf.mxu0
    %v6563 = vadd.f32 %v6549, %v6562
    %6564 = vdwg.mxu0
    %6565 = vmatpush.bf16.msra.mxu0 %v3690
    %6566 = vmatpush.bf16.msra.mxu0 %v3666
    %6567 = vmatpush.bf16.msra.mxu0 %v3642
    %6568 = vmatpush.bf16.msra.mxu0 %v3618
    %6569 = vmatpush.bf16.msra.mxu0 %v3594
    %6570 = vmatpush.bf16.msra.mxu0 %v3570
    %6571 = vmatpush.bf16.msra.mxu0 %v3546
    %6572 = vmatpush.bf16.msra.mxu0 %v3522
    %6573 = vmatmul.bf16.gmra.mxu0 %v902
    %v6574 = vpop.f32.mrf.mxu0
    %v6575 = vadd.f32 0.0, %v6574
    %v6576 = vpop.f32.mrf.mxu0
    %v6577 = vadd.f32 0.0, %v6576
    %6578 = vdwg.mxu0
    %6579 = vmatpush.bf16.msra.mxu0 %v3882
    %6580 = vmatpush.bf16.msra.mxu0 %v3858
    %6581 = vmatpush.bf16.msra.mxu0 %v3834
    %6582 = vmatpush.bf16.msra.mxu0 %v3810
    %6583 = vmatpush.bf16.msra.mxu0 %v3786
    %6584 = vmatpush.bf16.msra.mxu0 %v3762
    %6585 = vmatpush.bf16.msra.mxu0 %v3738
    %6586 = vmatpush.bf16.msra.mxu0 %v3714
    %6587 = vmatmul.bf16.gmra.mxu0 %v903
    %v6588 = vpop.f32.mrf.mxu0
    %v6589 = vadd.f32 %v6575, %v6588
    %v6590 = vpop.f32.mrf.mxu0
    %v6591 = vadd.f32 %v6577, %v6590
    %6592 = vdwg.mxu0
    %6593 = vmatpush.bf16.msra.mxu0 %v4074
    %6594 = vmatpush.bf16.msra.mxu0 %v4050
    %6595 = vmatpush.bf16.msra.mxu0 %v4026
    %6596 = vmatpush.bf16.msra.mxu0 %v4002
    %6597 = vmatpush.bf16.msra.mxu0 %v3978
    %6598 = vmatpush.bf16.msra.mxu0 %v3954
    %6599 = vmatpush.bf16.msra.mxu0 %v3930
    %6600 = vmatpush.bf16.msra.mxu0 %v3906
    %6601 = vmatmul.bf16.gmra.mxu0 %v904
    %v6602 = vpop.f32.mrf.mxu0
    %v6603 = vadd.f32 %v6589, %v6602
    %v6604 = vpop.f32.mrf.mxu0
    %v6605 = vadd.f32 %v6591, %v6604
    %6606 = vdwg.mxu0
    %6607 = vmatpush.bf16.msra.mxu0 %v4266
    %6608 = vmatpush.bf16.msra.mxu0 %v4242
    %6609 = vmatpush.bf16.msra.mxu0 %v4218
    %6610 = vmatpush.bf16.msra.mxu0 %v4194
    %6611 = vmatpush.bf16.msra.mxu0 %v4170
    %6612 = vmatpush.bf16.msra.mxu0 %v4146
    %6613 = vmatpush.bf16.msra.mxu0 %v4122
    %6614 = vmatpush.bf16.msra.mxu0 %v4098
    %6615 = vmatmul.bf16.gmra.mxu0 %v905
    %v6616 = vpop.f32.mrf.mxu0
    %v6617 = vadd.f32 %v6603, %v6616
    %v6618 = vpop.f32.mrf.mxu0
    %v6619 = vadd.f32 %v6605, %v6618
    %6620 = vdwg.mxu0
    %6621 = vmatpush.bf16.msra.mxu0 0
    %6622 = vmatpush.bf16.msra.mxu0 0
    %6623 = vmatpush.bf16.msra.mxu0 0
    %6624 = vmatpush.bf16.msra.mxu0 0
    %6625 = vmatpush.bf16.msra.mxu0 %v4362
    %6626 = vmatpush.bf16.msra.mxu0 %v4338
    %6627 = vmatpush.bf16.msra.mxu0 %v4314
    %6628 = vmatpush.bf16.msra.mxu0 %v4290
    %6629 = vmatmul.bf16.gmra.mxu0 %v5233
    %v6630 = vpop.f32.mrf.mxu0
    %v6631 = vadd.f32 %v6617, %v6630
    %v6632 = vpop.f32.mrf.mxu0
    %v6633 = vadd.f32 %v6619, %v6632
    %6634 = vdwg.mxu0
    %6635 = vmatpush.bf16.msra.mxu0 %v3691
    %6636 = vmatpush.bf16.msra.mxu0 %v3667
    %6637 = vmatpush.bf16.msra.mxu0 %v3643
    %6638 = vmatpush.bf16.msra.mxu0 %v3619
    %6639 = vmatpush.bf16.msra.mxu0 %v3595
    %6640 = vmatpush.bf16.msra.mxu0 %v3571
    %6641 = vmatpush.bf16.msra.mxu0 %v3547
    %6642 = vmatpush.bf16.msra.mxu0 %v3523
    %6643 = vmatmul.bf16.gmra.mxu0 %v902
    %v6644 = vpop.f32.mrf.mxu0
    %v6645 = vadd.f32 0.0, %v6644
    %v6646 = vpop.f32.mrf.mxu0
    %v6647 = vadd.f32 0.0, %v6646
    %6648 = vdwg.mxu0
    %6649 = vmatpush.bf16.msra.mxu0 %v3883
    %6650 = vmatpush.bf16.msra.mxu0 %v3859
    %6651 = vmatpush.bf16.msra.mxu0 %v3835
    %6652 = vmatpush.bf16.msra.mxu0 %v3811
    %6653 = vmatpush.bf16.msra.mxu0 %v3787
    %6654 = vmatpush.bf16.msra.mxu0 %v3763
    %6655 = vmatpush.bf16.msra.mxu0 %v3739
    %6656 = vmatpush.bf16.msra.mxu0 %v3715
    %6657 = vmatmul.bf16.gmra.mxu0 %v903
    %v6658 = vpop.f32.mrf.mxu0
    %v6659 = vadd.f32 %v6645, %v6658
    %v6660 = vpop.f32.mrf.mxu0
    %v6661 = vadd.f32 %v6647, %v6660
    %6662 = vdwg.mxu0
    %6663 = vmatpush.bf16.msra.mxu0 %v4075
    %6664 = vmatpush.bf16.msra.mxu0 %v4051
    %6665 = vmatpush.bf16.msra.mxu0 %v4027
    %6666 = vmatpush.bf16.msra.mxu0 %v4003
    %6667 = vmatpush.bf16.msra.mxu0 %v3979
    %6668 = vmatpush.bf16.msra.mxu0 %v3955
    %6669 = vmatpush.bf16.msra.mxu0 %v3931
    %6670 = vmatpush.bf16.msra.mxu0 %v3907
    %6671 = vmatmul.bf16.gmra.mxu0 %v904
    %v6672 = vpop.f32.mrf.mxu0
    %v6673 = vadd.f32 %v6659, %v6672
    %v6674 = vpop.f32.mrf.mxu0
    %v6675 = vadd.f32 %v6661, %v6674
    %6676 = vdwg.mxu0
    %6677 = vmatpush.bf16.msra.mxu0 %v4267
    %6678 = vmatpush.bf16.msra.mxu0 %v4243
    %6679 = vmatpush.bf16.msra.mxu0 %v4219
    %6680 = vmatpush.bf16.msra.mxu0 %v4195
    %6681 = vmatpush.bf16.msra.mxu0 %v4171
    %6682 = vmatpush.bf16.msra.mxu0 %v4147
    %6683 = vmatpush.bf16.msra.mxu0 %v4123
    %6684 = vmatpush.bf16.msra.mxu0 %v4099
    %6685 = vmatmul.bf16.gmra.mxu0 %v905
    %v6686 = vpop.f32.mrf.mxu0
    %v6687 = vadd.f32 %v6673, %v6686
    %v6688 = vpop.f32.mrf.mxu0
    %v6689 = vadd.f32 %v6675, %v6688
    %6690 = vdwg.mxu0
    %6691 = vmatpush.bf16.msra.mxu0 0
    %6692 = vmatpush.bf16.msra.mxu0 0
    %6693 = vmatpush.bf16.msra.mxu0 0
    %6694 = vmatpush.bf16.msra.mxu0 0
    %6695 = vmatpush.bf16.msra.mxu0 %v4363
    %6696 = vmatpush.bf16.msra.mxu0 %v4339
    %6697 = vmatpush.bf16.msra.mxu0 %v4315
    %6698 = vmatpush.bf16.msra.mxu0 %v4291
    %6699 = vmatmul.bf16.gmra.mxu0 %v5233
    %v6700 = vpop.f32.mrf.mxu0
    %v6701 = vadd.f32 %v6687, %v6700
    %v6702 = vpop.f32.mrf.mxu0
    %v6703 = vadd.f32 %v6689, %v6702
    %6704 = vdwg.mxu0
    %6705 = vmatpush.bf16.msra.mxu0 %v3692
    %6706 = vmatpush.bf16.msra.mxu0 %v3668
    %6707 = vmatpush.bf16.msra.mxu0 %v3644
    %6708 = vmatpush.bf16.msra.mxu0 %v3620
    %6709 = vmatpush.bf16.msra.mxu0 %v3596
    %6710 = vmatpush.bf16.msra.mxu0 %v3572
    %6711 = vmatpush.bf16.msra.mxu0 %v3548
    %6712 = vmatpush.bf16.msra.mxu0 %v3524
    %6713 = vmatmul.bf16.gmra.mxu0 %v902
    %v6714 = vpop.f32.mrf.mxu0
    %v6715 = vadd.f32 0.0, %v6714
    %v6716 = vpop.f32.mrf.mxu0
    %v6717 = vadd.f32 0.0, %v6716
    %6718 = vdwg.mxu0
    %6719 = vmatpush.bf16.msra.mxu0 %v3884
    %6720 = vmatpush.bf16.msra.mxu0 %v3860
    %6721 = vmatpush.bf16.msra.mxu0 %v3836
    %6722 = vmatpush.bf16.msra.mxu0 %v3812
    %6723 = vmatpush.bf16.msra.mxu0 %v3788
    %6724 = vmatpush.bf16.msra.mxu0 %v3764
    %6725 = vmatpush.bf16.msra.mxu0 %v3740
    %6726 = vmatpush.bf16.msra.mxu0 %v3716
    %6727 = vmatmul.bf16.gmra.mxu0 %v903
    %v6728 = vpop.f32.mrf.mxu0
    %v6729 = vadd.f32 %v6715, %v6728
    %v6730 = vpop.f32.mrf.mxu0
    %v6731 = vadd.f32 %v6717, %v6730
    %6732 = vdwg.mxu0
    %6733 = vmatpush.bf16.msra.mxu0 %v4076
    %6734 = vmatpush.bf16.msra.mxu0 %v4052
    %6735 = vmatpush.bf16.msra.mxu0 %v4028
    %6736 = vmatpush.bf16.msra.mxu0 %v4004
    %6737 = vmatpush.bf16.msra.mxu0 %v3980
    %6738 = vmatpush.bf16.msra.mxu0 %v3956
    %6739 = vmatpush.bf16.msra.mxu0 %v3932
    %6740 = vmatpush.bf16.msra.mxu0 %v3908
    %6741 = vmatmul.bf16.gmra.mxu0 %v904
    %v6742 = vpop.f32.mrf.mxu0
    %v6743 = vadd.f32 %v6729, %v6742
    %v6744 = vpop.f32.mrf.mxu0
    %v6745 = vadd.f32 %v6731, %v6744
    %6746 = vdwg.mxu0
    %6747 = vmatpush.bf16.msra.mxu0 %v4268
    %6748 = vmatpush.bf16.msra.mxu0 %v4244
    %6749 = vmatpush.bf16.msra.mxu0 %v4220
    %6750 = vmatpush.bf16.msra.mxu0 %v4196
    %6751 = vmatpush.bf16.msra.mxu0 %v4172
    %6752 = vmatpush.bf16.msra.mxu0 %v4148
    %6753 = vmatpush.bf16.msra.mxu0 %v4124
    %6754 = vmatpush.bf16.msra.mxu0 %v4100
    %6755 = vmatmul.bf16.gmra.mxu0 %v905
    %v6756 = vpop.f32.mrf.mxu0
    %v6757 = vadd.f32 %v6743, %v6756
    %v6758 = vpop.f32.mrf.mxu0
    %v6759 = vadd.f32 %v6745, %v6758
    %6760 = vdwg.mxu0
    %6761 = vmatpush.bf16.msra.mxu0 0
    %6762 = vmatpush.bf16.msra.mxu0 0
    %6763 = vmatpush.bf16.msra.mxu0 0
    %6764 = vmatpush.bf16.msra.mxu0 0
    %6765 = vmatpush.bf16.msra.mxu0 %v4364
    %6766 = vmatpush.bf16.msra.mxu0 %v4340
    %6767 = vmatpush.bf16.msra.mxu0 %v4316
    %6768 = vmatpush.bf16.msra.mxu0 %v4292
    %6769 = vmatmul.bf16.gmra.mxu0 %v5233
    %v6770 = vpop.f32.mrf.mxu0
    %v6771 = vadd.f32 %v6757, %v6770
    %v6772 = vpop.f32.mrf.mxu0
    %v6773 = vadd.f32 %v6759, %v6772
    %6774 = vdwg.mxu0
    %6775 = vmatpush.bf16.msra.mxu0 %v3693
    %6776 = vmatpush.bf16.msra.mxu0 %v3669
    %6777 = vmatpush.bf16.msra.mxu0 %v3645
    %6778 = vmatpush.bf16.msra.mxu0 %v3621
    %6779 = vmatpush.bf16.msra.mxu0 %v3597
    %6780 = vmatpush.bf16.msra.mxu0 %v3573
    %6781 = vmatpush.bf16.msra.mxu0 %v3549
    %6782 = vmatpush.bf16.msra.mxu0 %v3525
    %6783 = vmatmul.bf16.gmra.mxu0 %v902
    %v6784 = vpop.f32.mrf.mxu0
    %v6785 = vadd.f32 0.0, %v6784
    %v6786 = vpop.f32.mrf.mxu0
    %v6787 = vadd.f32 0.0, %v6786
    %6788 = vdwg.mxu0
    %6789 = vmatpush.bf16.msra.mxu0 %v3885
    %6790 = vmatpush.bf16.msra.mxu0 %v3861
    %6791 = vmatpush.bf16.msra.mxu0 %v3837
    %6792 = vmatpush.bf16.msra.mxu0 %v3813
    %6793 = vmatpush.bf16.msra.mxu0 %v3789
    %6794 = vmatpush.bf16.msra.mxu0 %v3765
    %6795 = vmatpush.bf16.msra.mxu0 %v3741
    %6796 = vmatpush.bf16.msra.mxu0 %v3717
    %6797 = vmatmul.bf16.gmra.mxu0 %v903
    %v6798 = vpop.f32.mrf.mxu0
    %v6799 = vadd.f32 %v6785, %v6798
    %v6800 = vpop.f32.mrf.mxu0
    %v6801 = vadd.f32 %v6787, %v6800
    %6802 = vdwg.mxu0
    %6803 = vmatpush.bf16.msra.mxu0 %v4077
    %6804 = vmatpush.bf16.msra.mxu0 %v4053
    %6805 = vmatpush.bf16.msra.mxu0 %v4029
    %6806 = vmatpush.bf16.msra.mxu0 %v4005
    %6807 = vmatpush.bf16.msra.mxu0 %v3981
    %6808 = vmatpush.bf16.msra.mxu0 %v3957
    %6809 = vmatpush.bf16.msra.mxu0 %v3933
    %6810 = vmatpush.bf16.msra.mxu0 %v3909
    %6811 = vmatmul.bf16.gmra.mxu0 %v904
    %v6812 = vpop.f32.mrf.mxu0
    %v6813 = vadd.f32 %v6799, %v6812
    %v6814 = vpop.f32.mrf.mxu0
    %v6815 = vadd.f32 %v6801, %v6814
    %6816 = vdwg.mxu0
    %6817 = vmatpush.bf16.msra.mxu0 %v4269
    %6818 = vmatpush.bf16.msra.mxu0 %v4245
    %6819 = vmatpush.bf16.msra.mxu0 %v4221
    %6820 = vmatpush.bf16.msra.mxu0 %v4197
    %6821 = vmatpush.bf16.msra.mxu0 %v4173
    %6822 = vmatpush.bf16.msra.mxu0 %v4149
    %6823 = vmatpush.bf16.msra.mxu0 %v4125
    %6824 = vmatpush.bf16.msra.mxu0 %v4101
    %6825 = vmatmul.bf16.gmra.mxu0 %v905
    %v6826 = vpop.f32.mrf.mxu0
    %v6827 = vadd.f32 %v6813, %v6826
    %v6828 = vpop.f32.mrf.mxu0
    %v6829 = vadd.f32 %v6815, %v6828
    %6830 = vdwg.mxu0
    %6831 = vmatpush.bf16.msra.mxu0 0
    %6832 = vmatpush.bf16.msra.mxu0 0
    %6833 = vmatpush.bf16.msra.mxu0 0
    %6834 = vmatpush.bf16.msra.mxu0 0
    %6835 = vmatpush.bf16.msra.mxu0 %v4365
    %6836 = vmatpush.bf16.msra.mxu0 %v4341
    %6837 = vmatpush.bf16.msra.mxu0 %v4317
    %6838 = vmatpush.bf16.msra.mxu0 %v4293
    %6839 = vmatmul.bf16.gmra.mxu0 %v5233
    %v6840 = vpop.f32.mrf.mxu0
    %v6841 = vadd.f32 %v6827, %v6840
    %v6842 = vpop.f32.mrf.mxu0
    %v6843 = vadd.f32 %v6829, %v6842
    %6844 = vdwg.mxu0
    %6845 = vmatpush.bf16.msra.mxu0 %v3694
    %6846 = vmatpush.bf16.msra.mxu0 %v3670
    %6847 = vmatpush.bf16.msra.mxu0 %v3646
    %6848 = vmatpush.bf16.msra.mxu0 %v3622
    %6849 = vmatpush.bf16.msra.mxu0 %v3598
    %6850 = vmatpush.bf16.msra.mxu0 %v3574
    %6851 = vmatpush.bf16.msra.mxu0 %v3550
    %6852 = vmatpush.bf16.msra.mxu0 %v3526
    %6853 = vmatmul.bf16.gmra.mxu0 %v902
    %v6854 = vpop.f32.mrf.mxu0
    %v6855 = vadd.f32 0.0, %v6854
    %v6856 = vpop.f32.mrf.mxu0
    %v6857 = vadd.f32 0.0, %v6856
    %6858 = vdwg.mxu0
    %6859 = vmatpush.bf16.msra.mxu0 %v3886
    %6860 = vmatpush.bf16.msra.mxu0 %v3862
    %6861 = vmatpush.bf16.msra.mxu0 %v3838
    %6862 = vmatpush.bf16.msra.mxu0 %v3814
    %6863 = vmatpush.bf16.msra.mxu0 %v3790
    %6864 = vmatpush.bf16.msra.mxu0 %v3766
    %6865 = vmatpush.bf16.msra.mxu0 %v3742
    %6866 = vmatpush.bf16.msra.mxu0 %v3718
    %6867 = vmatmul.bf16.gmra.mxu0 %v903
    %v6868 = vpop.f32.mrf.mxu0
    %v6869 = vadd.f32 %v6855, %v6868
    %v6870 = vpop.f32.mrf.mxu0
    %v6871 = vadd.f32 %v6857, %v6870
    %6872 = vdwg.mxu0
    %6873 = vmatpush.bf16.msra.mxu0 %v4078
    %6874 = vmatpush.bf16.msra.mxu0 %v4054
    %6875 = vmatpush.bf16.msra.mxu0 %v4030
    %6876 = vmatpush.bf16.msra.mxu0 %v4006
    %6877 = vmatpush.bf16.msra.mxu0 %v3982
    %6878 = vmatpush.bf16.msra.mxu0 %v3958
    %6879 = vmatpush.bf16.msra.mxu0 %v3934
    %6880 = vmatpush.bf16.msra.mxu0 %v3910
    %6881 = vmatmul.bf16.gmra.mxu0 %v904
    %v6882 = vpop.f32.mrf.mxu0
    %v6883 = vadd.f32 %v6869, %v6882
    %v6884 = vpop.f32.mrf.mxu0
    %v6885 = vadd.f32 %v6871, %v6884
    %6886 = vdwg.mxu0
    %6887 = vmatpush.bf16.msra.mxu0 %v4270
    %6888 = vmatpush.bf16.msra.mxu0 %v4246
    %6889 = vmatpush.bf16.msra.mxu0 %v4222
    %6890 = vmatpush.bf16.msra.mxu0 %v4198
    %6891 = vmatpush.bf16.msra.mxu0 %v4174
    %6892 = vmatpush.bf16.msra.mxu0 %v4150
    %6893 = vmatpush.bf16.msra.mxu0 %v4126
    %6894 = vmatpush.bf16.msra.mxu0 %v4102
    %6895 = vmatmul.bf16.gmra.mxu0 %v905
    %v6896 = vpop.f32.mrf.mxu0
    %v6897 = vadd.f32 %v6883, %v6896
    %v6898 = vpop.f32.mrf.mxu0
    %v6899 = vadd.f32 %v6885, %v6898
    %6900 = vdwg.mxu0
    %6901 = vmatpush.bf16.msra.mxu0 0
    %6902 = vmatpush.bf16.msra.mxu0 0
    %6903 = vmatpush.bf16.msra.mxu0 0
    %6904 = vmatpush.bf16.msra.mxu0 0
    %6905 = vmatpush.bf16.msra.mxu0 %v4366
    %6906 = vmatpush.bf16.msra.mxu0 %v4342
    %6907 = vmatpush.bf16.msra.mxu0 %v4318
    %6908 = vmatpush.bf16.msra.mxu0 %v4294
    %6909 = vmatmul.bf16.gmra.mxu0 %v5233
    %v6910 = vpop.f32.mrf.mxu0
    %v6911 = vadd.f32 %v6897, %v6910
    %v6912 = vpop.f32.mrf.mxu0
    %v6913 = vadd.f32 %v6899, %v6912
    %6914 = vdwg.mxu0
    %v6915 = vxor.u32 %v5301, 2147483648
    %v6916 = vxor.u32 %v5371, 2147483648
    %v6917 = vxor.u32 %v5441, 2147483648
    %v6918 = vxor.u32 %v5511, 2147483648
    %v6919 = vxor.u32 %v5581, 2147483648
    %v6920 = vxor.u32 %v5651, 2147483648
    %v6921 = vxor.u32 %v5721, 2147483648
    %v6922 = vxor.u32 %v5791, 2147483648
    %v6923 = vxor.u32 %v5861, 2147483648
    %v6924 = vxor.u32 %v5931, 2147483648
    %v6925 = vxor.u32 %v6001, 2147483648
    %v6926 = vxor.u32 %v6071, 2147483648
    %v6927 = vxor.u32 %v5303, 2147483648
    %v6928 = vxor.u32 %v5373, 2147483648
    %v6929 = vxor.u32 %v5443, 2147483648
    %v6930 = vxor.u32 %v5513, 2147483648
    %v6931 = vxor.u32 %v5583, 2147483648
    %v6932 = vxor.u32 %v5653, 2147483648
    %v6933 = vxor.u32 %v5723, 2147483648
    %v6934 = vxor.u32 %v5793, 2147483648
    %v6935 = vxor.u32 %v5863, 2147483648
    %v6936 = vxor.u32 %v5933, 2147483648
    %v6937 = vxor.u32 %v6003, 2147483648
    %v6938 = vxor.u32 %v6073, 2147483648
    %v6939 = vmul.f32 %v6915, 1.442695
    %v6940 = vpow.pop %v6939
    %v6941 = vmul.f32 %v6916, 1.442695
    %v6942 = vpow.pop %v6941
    %v6943 = vmul.f32 %v6917, 1.442695
    %v6944 = vpow.pop %v6943
    %v6945 = vmul.f32 %v6918, 1.442695
    %v6946 = vpow.pop %v6945
    %v6947 = vmul.f32 %v6919, 1.442695
    %v6948 = vpow.pop %v6947
    %v6949 = vmul.f32 %v6920, 1.442695
    %v6950 = vpow.pop %v6949
    %v6951 = vmul.f32 %v6921, 1.442695
    %v6952 = vpow.pop %v6951
    %v6953 = vmul.f32 %v6922, 1.442695
    %v6954 = vpow.pop %v6953
    %v6955 = vmul.f32 %v6923, 1.442695
    %v6956 = vpow.pop %v6955
    %v6957 = vmul.f32 %v6924, 1.442695
    %v6958 = vpow.pop %v6957
    %v6959 = vmul.f32 %v6925, 1.442695
    %v6960 = vpow.pop %v6959
    %v6961 = vmul.f32 %v6926, 1.442695
    %v6962 = vpow.pop %v6961
    %v6963 = vmul.f32 %v6927, 1.442695
    %v6964 = vpow.pop %v6963
    %v6965 = vmul.f32 %v6928, 1.442695
    %v6966 = vpow.pop %v6965
    %v6967 = vmul.f32 %v6929, 1.442695
    %v6968 = vpow.pop %v6967
    %v6969 = vmul.f32 %v6930, 1.442695
    %v6970 = vpow.pop %v6969
    %v6971 = vmul.f32 %v6931, 1.442695
    %v6972 = vpow.pop %v6971
    %v6973 = vmul.f32 %v6932, 1.442695
    %v6974 = vpow.pop %v6973
    %v6975 = vmul.f32 %v6933, 1.442695
    %v6976 = vpow.pop %v6975
    %v6977 = vmul.f32 %v6934, 1.442695
    %v6978 = vpow.pop %v6977
    %v6979 = vmul.f32 %v6935, 1.442695
    %v6980 = vpow.pop %v6979
    %v6981 = vmul.f32 %v6936, 1.442695
    %v6982 = vpow.pop %v6981
    %v6983 = vmul.f32 %v6937, 1.442695
    %v6984 = vpow.pop %v6983
    %v6985 = vmul.f32 %v6938, 1.442695
    %v6986 = vpow.pop %v6985
    %v6987 = vadd.f32 %v6940, 1.0
    %v6988 = vadd.f32 %v6942, 1.0
    %v6989 = vadd.f32 %v6944, 1.0
    %v6990 = vadd.f32 %v6946, 1.0
    %v6991 = vadd.f32 %v6948, 1.0
    %v6992 = vadd.f32 %v6950, 1.0
    %v6993 = vadd.f32 %v6952, 1.0
    %v6994 = vadd.f32 %v6954, 1.0
    %v6995 = vadd.f32 %v6956, 1.0
    %v6996 = vadd.f32 %v6958, 1.0
    %v6997 = vadd.f32 %v6960, 1.0
    %v6998 = vadd.f32 %v6962, 1.0
    %v6999 = vadd.f32 %v6964, 1.0
    %v7000 = vadd.f32 %v6966, 1.0
    %v7001 = vadd.f32 %v6968, 1.0
    %v7002 = vadd.f32 %v6970, 1.0
    %v7003 = vadd.f32 %v6972, 1.0
    %v7004 = vadd.f32 %v6974, 1.0
    %v7005 = vadd.f32 %v6976, 1.0
    %v7006 = vadd.f32 %v6978, 1.0
    %v7007 = vadd.f32 %v6980, 1.0
    %v7008 = vadd.f32 %v6982, 1.0
    %v7009 = vadd.f32 %v6984, 1.0
    %v7010 = vadd.f32 %v6986, 1.0
    %v7011 = vrcp.pop %v6987
    %v7012 = vmul.f32 %v6987, %v7011
    %v7013 = vsub.f32 1.0, %v7012
    %v7014 = vmul.f32 %v7011, %v7013
    %v7015 = vadd.f32 %v7011, %v7014
    %vm7016 = vweird.f32 %v6987
    %vm7017 = vweird.f32 %v7011
    %vm7018 = vmor %vm7016, %vm7017
    %v7019 = vsel %vm7018, %v7011, %v7015
    %v7020 = vand.u32 2147483647, %v6987
    %vm7021 = vcmp.eq.f32.partialorder %v7020, 8.507059e+37
    %v7022 = vand.u32 %v6987, 2147483648
    %v7023 = vor.u32 1.1754944e-38, %v7022
    %v7024 = vsel %vm7021, %v7023, %v7019
    %v7025 = vmul.f32 1.0, %v7024
    %v7026 = vrcp.pop %v6988
    %v7027 = vmul.f32 %v6988, %v7026
    %v7028 = vsub.f32 1.0, %v7027
    %v7029 = vmul.f32 %v7026, %v7028
    %v7030 = vadd.f32 %v7026, %v7029
    %vm7031 = vweird.f32 %v6988
    %vm7032 = vweird.f32 %v7026
    %vm7033 = vmor %vm7031, %vm7032
    %v7034 = vsel %vm7033, %v7026, %v7030
    %v7035 = vand.u32 2147483647, %v6988
    %vm7036 = vcmp.eq.f32.partialorder %v7035, 8.507059e+37
    %v7037 = vand.u32 %v6988, 2147483648
    %v7038 = vor.u32 1.1754944e-38, %v7037
    %v7039 = vsel %vm7036, %v7038, %v7034
    %v7040 = vmul.f32 1.0, %v7039
    %v7041 = vrcp.pop %v6989
    %v7042 = vmul.f32 %v6989, %v7041
    %v7043 = vsub.f32 1.0, %v7042
    %v7044 = vmul.f32 %v7041, %v7043
    %v7045 = vadd.f32 %v7041, %v7044
    %vm7046 = vweird.f32 %v6989
    %vm7047 = vweird.f32 %v7041
    %vm7048 = vmor %vm7046, %vm7047
    %v7049 = vsel %vm7048, %v7041, %v7045
    %v7050 = vand.u32 2147483647, %v6989
    %vm7051 = vcmp.eq.f32.partialorder %v7050, 8.507059e+37
    %v7052 = vand.u32 %v6989, 2147483648
    %v7053 = vor.u32 1.1754944e-38, %v7052
    %v7054 = vsel %vm7051, %v7053, %v7049
    %v7055 = vmul.f32 1.0, %v7054
    %v7056 = vrcp.pop %v6990
    %v7057 = vmul.f32 %v6990, %v7056
    %v7058 = vsub.f32 1.0, %v7057
    %v7059 = vmul.f32 %v7056, %v7058
    %v7060 = vadd.f32 %v7056, %v7059
    %vm7061 = vweird.f32 %v6990
    %vm7062 = vweird.f32 %v7056
    %vm7063 = vmor %vm7061, %vm7062
    %v7064 = vsel %vm7063, %v7056, %v7060
    %v7065 = vand.u32 2147483647, %v6990
    %vm7066 = vcmp.eq.f32.partialorder %v7065, 8.507059e+37
    %v7067 = vand.u32 %v6990, 2147483648
    %v7068 = vor.u32 1.1754944e-38, %v7067
    %v7069 = vsel %vm7066, %v7068, %v7064
    %v7070 = vmul.f32 1.0, %v7069
    %v7071 = vrcp.pop %v6991
    %v7072 = vmul.f32 %v6991, %v7071
    %v7073 = vsub.f32 1.0, %v7072
    %v7074 = vmul.f32 %v7071, %v7073
    %v7075 = vadd.f32 %v7071, %v7074
    %vm7076 = vweird.f32 %v6991
    %vm7077 = vweird.f32 %v7071
    %vm7078 = vmor %vm7076, %vm7077
    %v7079 = vsel %vm7078, %v7071, %v7075
    %v7080 = vand.u32 2147483647, %v6991
    %vm7081 = vcmp.eq.f32.partialorder %v7080, 8.507059e+37
    %v7082 = vand.u32 %v6991, 2147483648
    %v7083 = vor.u32 1.1754944e-38, %v7082
    %v7084 = vsel %vm7081, %v7083, %v7079
    %v7085 = vmul.f32 1.0, %v7084
    %v7086 = vrcp.pop %v6992
    %v7087 = vmul.f32 %v6992, %v7086
    %v7088 = vsub.f32 1.0, %v7087
    %v7089 = vmul.f32 %v7086, %v7088
    %v7090 = vadd.f32 %v7086, %v7089
    %vm7091 = vweird.f32 %v6992
    %vm7092 = vweird.f32 %v7086
    %vm7093 = vmor %vm7091, %vm7092
    %v7094 = vsel %vm7093, %v7086, %v7090
    %v7095 = vand.u32 2147483647, %v6992
    %vm7096 = vcmp.eq.f32.partialorder %v7095, 8.507059e+37
    %v7097 = vand.u32 %v6992, 2147483648
    %v7098 = vor.u32 1.1754944e-38, %v7097
    %v7099 = vsel %vm7096, %v7098, %v7094
    %v7100 = vmul.f32 1.0, %v7099
    %v7101 = vrcp.pop %v6993
    %v7102 = vmul.f32 %v6993, %v7101
    %v7103 = vsub.f32 1.0, %v7102
    %v7104 = vmul.f32 %v7101, %v7103
    %v7105 = vadd.f32 %v7101, %v7104
    %vm7106 = vweird.f32 %v6993
    %vm7107 = vweird.f32 %v7101
    %vm7108 = vmor %vm7106, %vm7107
    %v7109 = vsel %vm7108, %v7101, %v7105
    %v7110 = vand.u32 2147483647, %v6993
    %vm7111 = vcmp.eq.f32.partialorder %v7110, 8.507059e+37
    %v7112 = vand.u32 %v6993, 2147483648
    %v7113 = vor.u32 1.1754944e-38, %v7112
    %v7114 = vsel %vm7111, %v7113, %v7109
    %v7115 = vmul.f32 1.0, %v7114
    %v7116 = vrcp.pop %v6994
    %v7117 = vmul.f32 %v6994, %v7116
    %v7118 = vsub.f32 1.0, %v7117
    %v7119 = vmul.f32 %v7116, %v7118
    %v7120 = vadd.f32 %v7116, %v7119
    %vm7121 = vweird.f32 %v6994
    %vm7122 = vweird.f32 %v7116
    %vm7123 = vmor %vm7121, %vm7122
    %v7124 = vsel %vm7123, %v7116, %v7120
    %v7125 = vand.u32 2147483647, %v6994
    %vm7126 = vcmp.eq.f32.partialorder %v7125, 8.507059e+37
    %v7127 = vand.u32 %v6994, 2147483648
    %v7128 = vor.u32 1.1754944e-38, %v7127
    %v7129 = vsel %vm7126, %v7128, %v7124
    %v7130 = vmul.f32 1.0, %v7129
    %v7131 = vrcp.pop %v6995
    %v7132 = vmul.f32 %v6995, %v7131
    %v7133 = vsub.f32 1.0, %v7132
    %v7134 = vmul.f32 %v7131, %v7133
    %v7135 = vadd.f32 %v7131, %v7134
    %vm7136 = vweird.f32 %v6995
    %vm7137 = vweird.f32 %v7131
    %vm7138 = vmor %vm7136, %vm7137
    %v7139 = vsel %vm7138, %v7131, %v7135
    %v7140 = vand.u32 2147483647, %v6995
    %vm7141 = vcmp.eq.f32.partialorder %v7140, 8.507059e+37
    %v7142 = vand.u32 %v6995, 2147483648
    %v7143 = vor.u32 1.1754944e-38, %v7142
    %v7144 = vsel %vm7141, %v7143, %v7139
    %v7145 = vmul.f32 1.0, %v7144
    %v7146 = vrcp.pop %v6996
    %v7147 = vmul.f32 %v6996, %v7146
    %v7148 = vsub.f32 1.0, %v7147
    %v7149 = vmul.f32 %v7146, %v7148
    %v7150 = vadd.f32 %v7146, %v7149
    %vm7151 = vweird.f32 %v6996
    %vm7152 = vweird.f32 %v7146
    %vm7153 = vmor %vm7151, %vm7152
    %v7154 = vsel %vm7153, %v7146, %v7150
    %v7155 = vand.u32 2147483647, %v6996
    %vm7156 = vcmp.eq.f32.partialorder %v7155, 8.507059e+37
    %v7157 = vand.u32 %v6996, 2147483648
    %v7158 = vor.u32 1.1754944e-38, %v7157
    %v7159 = vsel %vm7156, %v7158, %v7154
    %v7160 = vmul.f32 1.0, %v7159
    %v7161 = vrcp.pop %v6997
    %v7162 = vmul.f32 %v6997, %v7161
    %v7163 = vsub.f32 1.0, %v7162
    %v7164 = vmul.f32 %v7161, %v7163
    %v7165 = vadd.f32 %v7161, %v7164
    %vm7166 = vweird.f32 %v6997
    %vm7167 = vweird.f32 %v7161
    %vm7168 = vmor %vm7166, %vm7167
    %v7169 = vsel %vm7168, %v7161, %v7165
    %v7170 = vand.u32 2147483647, %v6997
    %vm7171 = vcmp.eq.f32.partialorder %v7170, 8.507059e+37
    %v7172 = vand.u32 %v6997, 2147483648
    %v7173 = vor.u32 1.1754944e-38, %v7172
    %v7174 = vsel %vm7171, %v7173, %v7169
    %v7175 = vmul.f32 1.0, %v7174
    %v7176 = vrcp.pop %v6998
    %v7177 = vmul.f32 %v6998, %v7176
    %v7178 = vsub.f32 1.0, %v7177
    %v7179 = vmul.f32 %v7176, %v7178
    %v7180 = vadd.f32 %v7176, %v7179
    %vm7181 = vweird.f32 %v6998
    %vm7182 = vweird.f32 %v7176
    %vm7183 = vmor %vm7181, %vm7182
    %v7184 = vsel %vm7183, %v7176, %v7180
    %v7185 = vand.u32 2147483647, %v6998
    %vm7186 = vcmp.eq.f32.partialorder %v7185, 8.507059e+37
    %v7187 = vand.u32 %v6998, 2147483648
    %v7188 = vor.u32 1.1754944e-38, %v7187
    %v7189 = vsel %vm7186, %v7188, %v7184
    %v7190 = vmul.f32 1.0, %v7189
    %v7191 = vrcp.pop %v6999
    %v7192 = vmul.f32 %v6999, %v7191
    %v7193 = vsub.f32 1.0, %v7192
    %v7194 = vmul.f32 %v7191, %v7193
    %v7195 = vadd.f32 %v7191, %v7194
    %vm7196 = vweird.f32 %v6999
    %vm7197 = vweird.f32 %v7191
    %vm7198 = vmor %vm7196, %vm7197
    %v7199 = vsel %vm7198, %v7191, %v7195
    %v7200 = vand.u32 2147483647, %v6999
    %vm7201 = vcmp.eq.f32.partialorder %v7200, 8.507059e+37
    %v7202 = vand.u32 %v6999, 2147483648
    %v7203 = vor.u32 1.1754944e-38, %v7202
    %v7204 = vsel %vm7201, %v7203, %v7199
    %v7205 = vmul.f32 1.0, %v7204
    %v7206 = vrcp.pop %v7000
    %v7207 = vmul.f32 %v7000, %v7206
    %v7208 = vsub.f32 1.0, %v7207
    %v7209 = vmul.f32 %v7206, %v7208
    %v7210 = vadd.f32 %v7206, %v7209
    %vm7211 = vweird.f32 %v7000
    %vm7212 = vweird.f32 %v7206
    %vm7213 = vmor %vm7211, %vm7212
    %v7214 = vsel %vm7213, %v7206, %v7210
    %v7215 = vand.u32 2147483647, %v7000
    %vm7216 = vcmp.eq.f32.partialorder %v7215, 8.507059e+37
    %v7217 = vand.u32 %v7000, 2147483648
    %v7218 = vor.u32 1.1754944e-38, %v7217
    %v7219 = vsel %vm7216, %v7218, %v7214
    %v7220 = vmul.f32 1.0, %v7219
    %v7221 = vrcp.pop %v7001
    %v7222 = vmul.f32 %v7001, %v7221
    %v7223 = vsub.f32 1.0, %v7222
    %v7224 = vmul.f32 %v7221, %v7223
    %v7225 = vadd.f32 %v7221, %v7224
    %vm7226 = vweird.f32 %v7001
    %vm7227 = vweird.f32 %v7221
    %vm7228 = vmor %vm7226, %vm7227
    %v7229 = vsel %vm7228, %v7221, %v7225
    %v7230 = vand.u32 2147483647, %v7001
    %vm7231 = vcmp.eq.f32.partialorder %v7230, 8.507059e+37
    %v7232 = vand.u32 %v7001, 2147483648
    %v7233 = vor.u32 1.1754944e-38, %v7232
    %v7234 = vsel %vm7231, %v7233, %v7229
    %v7235 = vmul.f32 1.0, %v7234
    %v7236 = vrcp.pop %v7002
    %v7237 = vmul.f32 %v7002, %v7236
    %v7238 = vsub.f32 1.0, %v7237
    %v7239 = vmul.f32 %v7236, %v7238
    %v7240 = vadd.f32 %v7236, %v7239
    %vm7241 = vweird.f32 %v7002
    %vm7242 = vweird.f32 %v7236
    %vm7243 = vmor %vm7241, %vm7242
    %v7244 = vsel %vm7243, %v7236, %v7240
    %v7245 = vand.u32 2147483647, %v7002
    %vm7246 = vcmp.eq.f32.partialorder %v7245, 8.507059e+37
    %v7247 = vand.u32 %v7002, 2147483648
    %v7248 = vor.u32 1.1754944e-38, %v7247
    %v7249 = vsel %vm7246, %v7248, %v7244
    %v7250 = vmul.f32 1.0, %v7249
    %v7251 = vrcp.pop %v7003
    %v7252 = vmul.f32 %v7003, %v7251
    %v7253 = vsub.f32 1.0, %v7252
    %v7254 = vmul.f32 %v7251, %v7253
    %v7255 = vadd.f32 %v7251, %v7254
    %vm7256 = vweird.f32 %v7003
    %vm7257 = vweird.f32 %v7251
    %vm7258 = vmor %vm7256, %vm7257
    %v7259 = vsel %vm7258, %v7251, %v7255
    %v7260 = vand.u32 2147483647, %v7003
    %vm7261 = vcmp.eq.f32.partialorder %v7260, 8.507059e+37
    %v7262 = vand.u32 %v7003, 2147483648
    %v7263 = vor.u32 1.1754944e-38, %v7262
    %v7264 = vsel %vm7261, %v7263, %v7259
    %v7265 = vmul.f32 1.0, %v7264
    %v7266 = vrcp.pop %v7004
    %v7267 = vmul.f32 %v7004, %v7266
    %v7268 = vsub.f32 1.0, %v7267
    %v7269 = vmul.f32 %v7266, %v7268
    %v7270 = vadd.f32 %v7266, %v7269
    %vm7271 = vweird.f32 %v7004
    %vm7272 = vweird.f32 %v7266
    %vm7273 = vmor %vm7271, %vm7272
    %v7274 = vsel %vm7273, %v7266, %v7270
    %v7275 = vand.u32 2147483647, %v7004
    %vm7276 = vcmp.eq.f32.partialorder %v7275, 8.507059e+37
    %v7277 = vand.u32 %v7004, 2147483648
    %v7278 = vor.u32 1.1754944e-38, %v7277
    %v7279 = vsel %vm7276, %v7278, %v7274
    %v7280 = vmul.f32 1.0, %v7279
    %v7281 = vrcp.pop %v7005
    %v7282 = vmul.f32 %v7005, %v7281
    %v7283 = vsub.f32 1.0, %v7282
    %v7284 = vmul.f32 %v7281, %v7283
    %v7285 = vadd.f32 %v7281, %v7284
    %vm7286 = vweird.f32 %v7005
    %vm7287 = vweird.f32 %v7281
    %vm7288 = vmor %vm7286, %vm7287
    %v7289 = vsel %vm7288, %v7281, %v7285
    %v7290 = vand.u32 2147483647, %v7005
    %vm7291 = vcmp.eq.f32.partialorder %v7290, 8.507059e+37
    %v7292 = vand.u32 %v7005, 2147483648
    %v7293 = vor.u32 1.1754944e-38, %v7292
    %v7294 = vsel %vm7291, %v7293, %v7289
    %v7295 = vmul.f32 1.0, %v7294
    %v7296 = vrcp.pop %v7006
    %v7297 = vmul.f32 %v7006, %v7296
    %v7298 = vsub.f32 1.0, %v7297
    %v7299 = vmul.f32 %v7296, %v7298
    %v7300 = vadd.f32 %v7296, %v7299
    %vm7301 = vweird.f32 %v7006
    %vm7302 = vweird.f32 %v7296
    %vm7303 = vmor %vm7301, %vm7302
    %v7304 = vsel %vm7303, %v7296, %v7300
    %v7305 = vand.u32 2147483647, %v7006
    %vm7306 = vcmp.eq.f32.partialorder %v7305, 8.507059e+37
    %v7307 = vand.u32 %v7006, 2147483648
    %v7308 = vor.u32 1.1754944e-38, %v7307
    %v7309 = vsel %vm7306, %v7308, %v7304
    %v7310 = vmul.f32 1.0, %v7309
    %v7311 = vrcp.pop %v7007
    %v7312 = vmul.f32 %v7007, %v7311
    %v7313 = vsub.f32 1.0, %v7312
    %v7314 = vmul.f32 %v7311, %v7313
    %v7315 = vadd.f32 %v7311, %v7314
    %vm7316 = vweird.f32 %v7007
    %vm7317 = vweird.f32 %v7311
    %vm7318 = vmor %vm7316, %vm7317
    %v7319 = vsel %vm7318, %v7311, %v7315
    %v7320 = vand.u32 2147483647, %v7007
    %vm7321 = vcmp.eq.f32.partialorder %v7320, 8.507059e+37
    %v7322 = vand.u32 %v7007, 2147483648
    %v7323 = vor.u32 1.1754944e-38, %v7322
    %v7324 = vsel %vm7321, %v7323, %v7319
    %v7325 = vmul.f32 1.0, %v7324
    %v7326 = vrcp.pop %v7008
    %v7327 = vmul.f32 %v7008, %v7326
    %v7328 = vsub.f32 1.0, %v7327
    %v7329 = vmul.f32 %v7326, %v7328
    %v7330 = vadd.f32 %v7326, %v7329
    %vm7331 = vweird.f32 %v7008
    %vm7332 = vweird.f32 %v7326
    %vm7333 = vmor %vm7331, %vm7332
    %v7334 = vsel %vm7333, %v7326, %v7330
    %v7335 = vand.u32 2147483647, %v7008
    %vm7336 = vcmp.eq.f32.partialorder %v7335, 8.507059e+37
    %v7337 = vand.u32 %v7008, 2147483648
    %v7338 = vor.u32 1.1754944e-38, %v7337
    %v7339 = vsel %vm7336, %v7338, %v7334
    %v7340 = vmul.f32 1.0, %v7339
    %v7341 = vrcp.pop %v7009
    %v7342 = vmul.f32 %v7009, %v7341
    %v7343 = vsub.f32 1.0, %v7342
    %v7344 = vmul.f32 %v7341, %v7343
    %v7345 = vadd.f32 %v7341, %v7344
    %vm7346 = vweird.f32 %v7009
    %vm7347 = vweird.f32 %v7341
    %vm7348 = vmor %vm7346, %vm7347
    %v7349 = vsel %vm7348, %v7341, %v7345
    %v7350 = vand.u32 2147483647, %v7009
    %vm7351 = vcmp.eq.f32.partialorder %v7350, 8.507059e+37
    %v7352 = vand.u32 %v7009, 2147483648
    %v7353 = vor.u32 1.1754944e-38, %v7352
    %v7354 = vsel %vm7351, %v7353, %v7349
    %v7355 = vmul.f32 1.0, %v7354
    %v7356 = vrcp.pop %v7010
    %v7357 = vmul.f32 %v7010, %v7356
    %v7358 = vsub.f32 1.0, %v7357
    %v7359 = vmul.f32 %v7356, %v7358
    %v7360 = vadd.f32 %v7356, %v7359
    %vm7361 = vweird.f32 %v7010
    %vm7362 = vweird.f32 %v7356
    %vm7363 = vmor %vm7361, %vm7362
    %v7364 = vsel %vm7363, %v7356, %v7360
    %v7365 = vand.u32 2147483647, %v7010
    %vm7366 = vcmp.eq.f32.partialorder %v7365, 8.507059e+37
    %v7367 = vand.u32 %v7010, 2147483648
    %v7368 = vor.u32 1.1754944e-38, %v7367
    %v7369 = vsel %vm7366, %v7368, %v7364
    %v7370 = vmul.f32 1.0, %v7369
    %v7371 = vmul.f32 %v5301, %v7025
    %v7372 = vmul.f32 %v5371, %v7040
    %v7373 = vmul.f32 %v5441, %v7055
    %v7374 = vmul.f32 %v5511, %v7070
    %v7375 = vmul.f32 %v5581, %v7085
    %v7376 = vmul.f32 %v5651, %v7100
    %v7377 = vmul.f32 %v5721, %v7115
    %v7378 = vmul.f32 %v5791, %v7130
    %v7379 = vmul.f32 %v5861, %v7145
    %v7380 = vmul.f32 %v5931, %v7160
    %v7381 = vmul.f32 %v6001, %v7175
    %v7382 = vmul.f32 %v6071, %v7190
    %v7383 = vmul.f32 %v5303, %v7205
    %v7384 = vmul.f32 %v5373, %v7220
    %v7385 = vmul.f32 %v5443, %v7235
    %v7386 = vmul.f32 %v5513, %v7250
    %v7387 = vmul.f32 %v5583, %v7265
    %v7388 = vmul.f32 %v5653, %v7280
    %v7389 = vmul.f32 %v5723, %v7295
    %v7390 = vmul.f32 %v5793, %v7310
    %v7391 = vmul.f32 %v5863, %v7325
    %v7392 = vmul.f32 %v5933, %v7340
    %v7393 = vmul.f32 %v6003, %v7355
    %v7394 = vmul.f32 %v6073, %v7370
    %v7395 = vmul.f32 %v7371, %v6141
    %v7396 = vmul.f32 %v7372, %v6211
    %v7397 = vmul.f32 %v7373, %v6281
    %v7398 = vmul.f32 %v7374, %v6351
    %v7399 = vmul.f32 %v7375, %v6421
    %v7400 = vmul.f32 %v7376, %v6491
    %v7401 = vmul.f32 %v7377, %v6561
    %v7402 = vmul.f32 %v7378, %v6631
    %v7403 = vmul.f32 %v7379, %v6701
    %v7404 = vmul.f32 %v7380, %v6771
    %v7405 = vmul.f32 %v7381, %v6841
    %v7406 = vmul.f32 %v7382, %v6911
    %v7407 = vmul.f32 %v7383, %v6143
    %v7408 = vmul.f32 %v7384, %v6213
    %v7409 = vmul.f32 %v7385, %v6283
    %v7410 = vmul.f32 %v7386, %v6353
    %v7411 = vmul.f32 %v7387, %v6423
    %v7412 = vmul.f32 %v7388, %v6493
    %v7413 = vmul.f32 %v7389, %v6563
    %v7414 = vmul.f32 %v7390, %v6633
    %v7415 = vmul.f32 %v7391, %v6703
    %v7416 = vmul.f32 %v7392, %v6773
    %v7417 = vmul.f32 %v7393, %v6843
    %v7418 = vmul.f32 %v7394, %v6913
    %v7419 = vpack.c.bf16 %v7407, %v7395
    %v7420 = vpack.c.bf16 %v7408, %v7396
    %v7421 = vpack.c.bf16 %v7409, %v7397
    %v7422 = vpack.c.bf16 %v7410, %v7398
    %v7423 = vpack.c.bf16 %v7411, %v7399
    %v7424 = vpack.c.bf16 %v7412, %v7400
    %v7425 = vpack.c.bf16 %v7413, %v7401
    %v7426 = vpack.c.bf16 %v7414, %v7402
    %v7427 = vpack.c.bf16 %v7415, %v7403
    %v7428 = vpack.c.bf16 %v7416, %v7404
    %v7429 = vpack.c.bf16 %v7417, %v7405
    %v7430 = vpack.c.bf16 %v7418, %v7406
    %v7431 = vld [vmem:[%s2] sm:$0xff]
    %v7432 = vld [vmem:[%s2 + $0x8] sm:$0xff]
    %v7433 = vld [vmem:[%s2 + $0x10] sm:$0xf]
    %v7434 = vld [vmem:[%s2 + $0x14] sm:$0xff]
    %v7435 = vld [vmem:[%s2 + $0x1c] sm:$0xff]
    %v7436 = vld [vmem:[%s2 + $0x24] sm:$0xf]
    %v7437 = vld [vmem:[%s2 + $0x28] sm:$0xff]
    %v7438 = vld [vmem:[%s2 + $0x30] sm:$0xff]
    %v7439 = vld [vmem:[%s2 + $0x38] sm:$0xf]
    %v7440 = vld [vmem:[%s2 + $0x3c] sm:$0xff]
    %v7441 = vld [vmem:[%s2 + $0x44] sm:$0xff]
    %v7442 = vld [vmem:[%s2 + $0x4c] sm:$0xf]
    %v7443 = vld [vmem:[%s2 + $0x50] sm:$0xff]
    %v7444 = vld [vmem:[%s2 + $0x58] sm:$0xff]
    %v7445 = vld [vmem:[%s2 + $0x60] sm:$0xf]
    %v7446 = vld [vmem:[%s2 + $0x64] sm:$0xff]
    %v7447 = vld [vmem:[%s2 + $0x6c] sm:$0xff]
    %v7448 = vld [vmem:[%s2 + $0x74] sm:$0xf]
    %v7449 = vld [vmem:[%s2 + $0x78] sm:$0xff]
    %v7450 = vld [vmem:[%s2 + $0x80] sm:$0xff]
    %v7451 = vld [vmem:[%s2 + $0x88] sm:$0xf]
    %v7452 = vld [vmem:[%s2 + $0x8c] sm:$0xff]
    %v7453 = vld [vmem:[%s2 + $0x94] sm:$0xff]
    %v7454 = vld [vmem:[%s2 + $0x9c] sm:$0xf]
    %v7455 = vld [vmem:[%s2 + $0xa0] sm:$0xff]
    %v7456 = vld [vmem:[%s2 + $0xa8] sm:$0xff]
    %v7457 = vld [vmem:[%s2 + $0xb0] sm:$0xf]
    %v7458 = vld [vmem:[%s2 + $0xb4] sm:$0xff]
    %v7459 = vld [vmem:[%s2 + $0xbc] sm:$0xff]
    %v7460 = vld [vmem:[%s2 + $0xc4] sm:$0xf]
    %v7461 = vld [vmem:[%s2 + $0xc8] sm:$0xff]
    %v7462 = vld [vmem:[%s2 + $0xd0] sm:$0xff]
    %v7463 = vld [vmem:[%s2 + $0xd8] sm:$0xf]
    %v7464 = vld [vmem:[%s2 + $0xdc] sm:$0xff]
    %v7465 = vld [vmem:[%s2 + $0xe4] sm:$0xff]
    %v7466 = vld [vmem:[%s2 + $0xec] sm:$0xf]
    %v7467 = vld [vmem:[%s2 + $0xf0] sm:$0xff]
    %v7468 = vld [vmem:[%s2 + $0xf8] sm:$0xff]
    %v7469 = vld [vmem:[%s2 + $0x100] sm:$0xf]
    %v7470 = vld [vmem:[%s2 + $0x104] sm:$0xff]
    %v7471 = vld [vmem:[%s2 + $0x10c] sm:$0xff]
    %v7472 = vld [vmem:[%s2 + $0x114] sm:$0xf]
    %v7473 = vld [vmem:[%s2 + $0x118] sm:$0xff]
    %v7474 = vld [vmem:[%s2 + $0x120] sm:$0xff]
    %v7475 = vld [vmem:[%s2 + $0x128] sm:$0xf]
    %v7476 = vld [vmem:[%s2 + $0x12c] sm:$0xff]
    %v7477 = vld [vmem:[%s2 + $0x134] sm:$0xff]
    %v7478 = vld [vmem:[%s2 + $0x13c] sm:$0xf]
    %v7479 = vld [vmem:[%s2 + $0x140] sm:$0xff]
    %v7480 = vld [vmem:[%s2 + $0x148] sm:$0xff]
    %v7481 = vld [vmem:[%s2 + $0x150] sm:$0xf]
    %v7482 = vld [vmem:[%s2 + $0x154] sm:$0xff]
    %v7483 = vld [vmem:[%s2 + $0x15c] sm:$0xff]
    %v7484 = vld [vmem:[%s2 + $0x164] sm:$0xf]
    %v7485 = vld [vmem:[%s2 + $0x168] sm:$0xff]
    %v7486 = vld [vmem:[%s2 + $0x170] sm:$0xff]
    %v7487 = vld [vmem:[%s2 + $0x178] sm:$0xf]
    %v7488 = vld [vmem:[%s2 + $0x17c] sm:$0xff]
    %v7489 = vld [vmem:[%s2 + $0x184] sm:$0xff]
    %v7490 = vld [vmem:[%s2 + $0x18c] sm:$0xf]
    %v7491 = vld [vmem:[%s2 + $0x190] sm:$0xff]
    %v7492 = vld [vmem:[%s2 + $0x198] sm:$0xff]
    %v7493 = vld [vmem:[%s2 + $0x1a0] sm:$0xf]
    %v7494 = vld [vmem:[%s2 + $0x1a4] sm:$0xff]
    %v7495 = vld [vmem:[%s2 + $0x1ac] sm:$0xff]
    %v7496 = vld [vmem:[%s2 + $0x1b4] sm:$0xf]
    %v7497 = vld [vmem:[%s2 + $0x1b8] sm:$0xff]
    %v7498 = vld [vmem:[%s2 + $0x1c0] sm:$0xff]
    %v7499 = vld [vmem:[%s2 + $0x1c8] sm:$0xf]
    %v7500 = vld [vmem:[%s2 + $0x1cc] sm:$0xff]
    %v7501 = vld [vmem:[%s2 + $0x1d4] sm:$0xff]
    %v7502 = vld [vmem:[%s2 + $0x1dc] sm:$0xf]
    %v7503 = vld [vmem:[%s2 + $0x1e0] sm:$0xff]
    %v7504 = vld [vmem:[%s2 + $0x1e8] sm:$0xff]
    %v7505 = vld [vmem:[%s2 + $0x1f0] sm:$0xf]
    %v7506 = vld [vmem:[%s2 + $0x1f4] sm:$0xff]
    %v7507 = vld [vmem:[%s2 + $0x1fc] sm:$0xff]
    %v7508 = vld [vmem:[%s2 + $0x204] sm:$0xf]
    %v7509 = vld [vmem:[%s2 + $0x208] sm:$0xff]
    %v7510 = vld [vmem:[%s2 + $0x210] sm:$0xff]
    %v7511 = vld [vmem:[%s2 + $0x218] sm:$0xf]
    %v7512 = vld [vmem:[%s2 + $0x21c] sm:$0xff]
    %v7513 = vld [vmem:[%s2 + $0x224] sm:$0xff]
    %v7514 = vld [vmem:[%s2 + $0x22c] sm:$0xf]
    %v7515 = vld [vmem:[%s2 + $0x230] sm:$0xff]
    %v7516 = vld [vmem:[%s2 + $0x238] sm:$0xff]
    %v7517 = vld [vmem:[%s2 + $0x240] sm:$0xf]
    %v7518 = vld [vmem:[%s2 + $0x244] sm:$0xff]
    %v7519 = vld [vmem:[%s2 + $0x24c] sm:$0xff]
    %v7520 = vld [vmem:[%s2 + $0x254] sm:$0xf]
    %v7521 = vld [vmem:[%s2 + $0x258] sm:$0xff]
    %v7522 = vld [vmem:[%s2 + $0x260] sm:$0xff]
    %v7523 = vld [vmem:[%s2 + $0x268] sm:$0xf]
    %v7524 = vld [vmem:[%s2 + $0x26c] sm:$0xff]
    %v7525 = vld [vmem:[%s2 + $0x274] sm:$0xff]
    %v7526 = vld [vmem:[%s2 + $0x27c] sm:$0xf]
    %v7527 = vld [vmem:[%s2 + $0x280] sm:$0xff]
    %v7528 = vld [vmem:[%s2 + $0x288] sm:$0xff]
    %v7529 = vld [vmem:[%s2 + $0x290] sm:$0xf]
    %v7530 = vld [vmem:[%s2 + $0x294] sm:$0xff]
    %v7531 = vld [vmem:[%s2 + $0x29c] sm:$0xff]
    %v7532 = vld [vmem:[%s2 + $0x2a4] sm:$0xf]
    %v7533 = vld [vmem:[%s2 + $0x2a8] sm:$0xff]
    %v7534 = vld [vmem:[%s2 + $0x2b0] sm:$0xff]
    %v7535 = vld [vmem:[%s2 + $0x2b8] sm:$0xf]
    %v7536 = vld [vmem:[%s2 + $0x2bc] sm:$0xff]
    %v7537 = vld [vmem:[%s2 + $0x2c4] sm:$0xff]
    %v7538 = vld [vmem:[%s2 + $0x2cc] sm:$0xf]
    %v7539 = vld [vmem:[%s2 + $0x2d0] sm:$0xff]
    %v7540 = vld [vmem:[%s2 + $0x2d8] sm:$0xff]
    %v7541 = vld [vmem:[%s2 + $0x2e0] sm:$0xf]
    %v7542 = vld [vmem:[%s2 + $0x2e4] sm:$0xff]
    %v7543 = vld [vmem:[%s2 + $0x2ec] sm:$0xff]
    %v7544 = vld [vmem:[%s2 + $0x2f4] sm:$0xf]
    %v7545 = vld [vmem:[%s2 + $0x2f8] sm:$0xff]
    %v7546 = vld [vmem:[%s2 + $0x300] sm:$0xff]
    %v7547 = vld [vmem:[%s2 + $0x308] sm:$0xf]
    %v7548 = vld [vmem:[%s2 + $0x30c] sm:$0xff]
    %v7549 = vld [vmem:[%s2 + $0x314] sm:$0xff]
    %v7550 = vld [vmem:[%s2 + $0x31c] sm:$0xf]
    %v7551 = vld [vmem:[%s2 + $0x320] sm:$0xff]
    %v7552 = vld [vmem:[%s2 + $0x328] sm:$0xff]
    %v7553 = vld [vmem:[%s2 + $0x330] sm:$0xf]
    %v7554 = vld [vmem:[%s2 + $0x334] sm:$0xff]
    %v7555 = vld [vmem:[%s2 + $0x33c] sm:$0xff]
    %v7556 = vld [vmem:[%s2 + $0x344] sm:$0xf]
    %v7557 = vld [vmem:[%s2 + $0x348] sm:$0xff]
    %v7558 = vld [vmem:[%s2 + $0x350] sm:$0xff]
    %v7559 = vld [vmem:[%s2 + $0x358] sm:$0xf]
    %v7560 = vld [vmem:[%s2 + $0x35c] sm:$0xff]
    %v7561 = vld [vmem:[%s2 + $0x364] sm:$0xff]
    %v7562 = vld [vmem:[%s2 + $0x36c] sm:$0xf]
    %v7563 = vld [vmem:[%s2 + $0x370] sm:$0xff]
    %v7564 = vld [vmem:[%s2 + $0x378] sm:$0xff]
    %v7565 = vld [vmem:[%s2 + $0x380] sm:$0xf]
    %v7566 = vld [vmem:[%s2 + $0x384] sm:$0xff]
    %v7567 = vld [vmem:[%s2 + $0x38c] sm:$0xff]
    %v7568 = vld [vmem:[%s2 + $0x394] sm:$0xf]
    %v7569 = vld [vmem:[%s2 + $0x398] sm:$0xff]
    %v7570 = vld [vmem:[%s2 + $0x3a0] sm:$0xff]
    %v7571 = vld [vmem:[%s2 + $0x3a8] sm:$0xf]
    %v7572 = vld [vmem:[%s2 + $0x3ac] sm:$0xff]
    %v7573 = vld [vmem:[%s2 + $0x3b4] sm:$0xff]
    %v7574 = vld [vmem:[%s2 + $0x3bc] sm:$0xf]
    %v7575 = vld [vmem:[%s2 + $0x3c0] sm:$0xff]
    %v7576 = vld [vmem:[%s2 + $0x3c8] sm:$0xff]
    %v7577 = vld [vmem:[%s2 + $0x3d0] sm:$0xf]
    %v7578 = vld [vmem:[%s2 + $0x3d4] sm:$0xff]
    %v7579 = vld [vmem:[%s2 + $0x3dc] sm:$0xff]
    %v7580 = vld [vmem:[%s2 + $0x3e4] sm:$0xf]
    %v7581 = vld [vmem:[%s2 + $0x3e8] sm:$0xff]
    %v7582 = vld [vmem:[%s2 + $0x3f0] sm:$0xff]
    %v7583 = vld [vmem:[%s2 + $0x3f8] sm:$0xf]
    %v7584 = vld [vmem:[%s2 + $0x3fc] sm:$0xff]
    %v7585 = vld [vmem:[%s2 + $0x404] sm:$0xff]
    %v7586 = vld [vmem:[%s2 + $0x40c] sm:$0xf]
    %v7587 = vld [vmem:[%s2 + $0x410] sm:$0xff]
    %v7588 = vld [vmem:[%s2 + $0x418] sm:$0xff]
    %v7589 = vld [vmem:[%s2 + $0x420] sm:$0xf]
    %v7590 = vld [vmem:[%s2 + $0x424] sm:$0xff]
    %v7591 = vld [vmem:[%s2 + $0x42c] sm:$0xff]
    %v7592 = vld [vmem:[%s2 + $0x434] sm:$0xf]
    %v7593 = vld [vmem:[%s2 + $0x438] sm:$0xff]
    %v7594 = vld [vmem:[%s2 + $0x440] sm:$0xff]
    %v7595 = vld [vmem:[%s2 + $0x448] sm:$0xf]
    %v7596 = vld [vmem:[%s2 + $0x44c] sm:$0xff]
    %v7597 = vld [vmem:[%s2 + $0x454] sm:$0xff]
    %v7598 = vld [vmem:[%s2 + $0x45c] sm:$0xf]
    %v7599 = vld [vmem:[%s2 + $0x460] sm:$0xff]
    %v7600 = vld [vmem:[%s2 + $0x468] sm:$0xff]
    %v7601 = vld [vmem:[%s2 + $0x470] sm:$0xf]
    %v7602 = vld [vmem:[%s2 + $0x474] sm:$0xff]
    %v7603 = vld [vmem:[%s2 + $0x47c] sm:$0xff]
    %v7604 = vld [vmem:[%s2 + $0x484] sm:$0xf]
    %v7605 = vld [vmem:[%s2 + $0x488] sm:$0xff]
    %v7606 = vld [vmem:[%s2 + $0x490] sm:$0xff]
    %v7607 = vld [vmem:[%s2 + $0x498] sm:$0xf]
    %v7608 = vld [vmem:[%s2 + $0x49c] sm:$0xff]
    %v7609 = vld [vmem:[%s2 + $0x4a4] sm:$0xff]
    %v7610 = vld [vmem:[%s2 + $0x4ac] sm:$0xf]
    %v7611 = vld [vmem:[%s2 + $0x4b0] sm:$0xff]
    %v7612 = vld [vmem:[%s2 + $0x4b8] sm:$0xff]
    %v7613 = vld [vmem:[%s2 + $0x4c0] sm:$0xf]
    %v7614 = vld [vmem:[%s2 + $0x4c4] sm:$0xff]
    %v7615 = vld [vmem:[%s2 + $0x4cc] sm:$0xff]
    %v7616 = vld [vmem:[%s2 + $0x4d4] sm:$0xf]
    %v7617 = vld [vmem:[%s2 + $0x4d8] sm:$0xff]
    %v7618 = vld [vmem:[%s2 + $0x4e0] sm:$0xff]
    %v7619 = vld [vmem:[%s2 + $0x4e8] sm:$0xf]
    %v7620 = vld [vmem:[%s2 + $0x4ec] sm:$0xff]
    %v7621 = vld [vmem:[%s2 + $0x4f4] sm:$0xff]
    %v7622 = vld [vmem:[%s2 + $0x4fc] sm:$0xf]
    %v7623 = vld [vmem:[%s2 + $0x500] sm:$0xff]
    %v7624 = vld [vmem:[%s2 + $0x508] sm:$0xff]
    %v7625 = vld [vmem:[%s2 + $0x510] sm:$0xf]
    %v7626 = vld [vmem:[%s2 + $0x514] sm:$0xff]
    %v7627 = vld [vmem:[%s2 + $0x51c] sm:$0xff]
    %v7628 = vld [vmem:[%s2 + $0x524] sm:$0xf]
    %v7629 = vld [vmem:[%s2 + $0x528] sm:$0xff]
    %v7630 = vld [vmem:[%s2 + $0x530] sm:$0xff]
    %v7631 = vld [vmem:[%s2 + $0x538] sm:$0xf]
    %v7632 = vld [vmem:[%s2 + $0x53c] sm:$0xff]
    %v7633 = vld [vmem:[%s2 + $0x544] sm:$0xff]
    %v7634 = vld [vmem:[%s2 + $0x54c] sm:$0xf]
    %v7635 = vld [vmem:[%s2 + $0x550] sm:$0xff]
    %v7636 = vld [vmem:[%s2 + $0x558] sm:$0xff]
    %v7637 = vld [vmem:[%s2 + $0x560] sm:$0xf]
    %v7638 = vld [vmem:[%s2 + $0x564] sm:$0xff]
    %v7639 = vld [vmem:[%s2 + $0x56c] sm:$0xff]
    %v7640 = vld [vmem:[%s2 + $0x574] sm:$0xf]
    %v7641 = vld [vmem:[%s2 + $0x578] sm:$0xff]
    %v7642 = vld [vmem:[%s2 + $0x580] sm:$0xff]
    %v7643 = vld [vmem:[%s2 + $0x588] sm:$0xf]
    %v7644 = vld [vmem:[%s2 + $0x58c] sm:$0xff]
    %v7645 = vld [vmem:[%s2 + $0x594] sm:$0xff]
    %v7646 = vld [vmem:[%s2 + $0x59c] sm:$0xf]
    %v7647 = vld [vmem:[%s2 + $0x5a0] sm:$0xff]
    %v7648 = vld [vmem:[%s2 + $0x5a8] sm:$0xff]
    %v7649 = vld [vmem:[%s2 + $0x5b0] sm:$0xf]
    %v7650 = vld [vmem:[%s2 + $0x5b4] sm:$0xff]
    %v7651 = vld [vmem:[%s2 + $0x5bc] sm:$0xff]
    %v7652 = vld [vmem:[%s2 + $0x5c4] sm:$0xf]
    %v7653 = vld [vmem:[%s2 + $0x5c8] sm:$0xff]
    %v7654 = vld [vmem:[%s2 + $0x5d0] sm:$0xff]
    %v7655 = vld [vmem:[%s2 + $0x5d8] sm:$0xf]
    %v7656 = vld [vmem:[%s2 + $0x5dc] sm:$0xff]
    %v7657 = vld [vmem:[%s2 + $0x5e4] sm:$0xff]
    %v7658 = vld [vmem:[%s2 + $0x5ec] sm:$0xf]
    %v7659 = vld [vmem:[%s2 + $0x5f0] sm:$0xff]
    %v7660 = vld [vmem:[%s2 + $0x5f8] sm:$0xff]
    %v7661 = vld [vmem:[%s2 + $0x600] sm:$0xf]
    %v7662 = vld [vmem:[%s2 + $0x604] sm:$0xff]
    %v7663 = vld [vmem:[%s2 + $0x60c] sm:$0xff]
    %v7664 = vld [vmem:[%s2 + $0x614] sm:$0xf]
    %v7665 = vld [vmem:[%s2 + $0x618] sm:$0xff]
    %v7666 = vld [vmem:[%s2 + $0x620] sm:$0xff]
    %v7667 = vld [vmem:[%s2 + $0x628] sm:$0xf]
    %v7668 = vld [vmem:[%s2 + $0x62c] sm:$0xff]
    %v7669 = vld [vmem:[%s2 + $0x634] sm:$0xff]
    %v7670 = vld [vmem:[%s2 + $0x63c] sm:$0xf]
    %v7671 = vld [vmem:[%s2 + $0x640] sm:$0xff]
    %v7672 = vld [vmem:[%s2 + $0x648] sm:$0xff]
    %v7673 = vld [vmem:[%s2 + $0x650] sm:$0xf]
    %v7674 = vld [vmem:[%s2 + $0x654] sm:$0xff]
    %v7675 = vld [vmem:[%s2 + $0x65c] sm:$0xff]
    %v7676 = vld [vmem:[%s2 + $0x664] sm:$0xf]
    %v7677 = vld [vmem:[%s2 + $0x668] sm:$0xff]
    %v7678 = vld [vmem:[%s2 + $0x670] sm:$0xff]
    %v7679 = vld [vmem:[%s2 + $0x678] sm:$0xf]
    %v7680 = vld [vmem:[%s2 + $0x67c] sm:$0xff]
    %v7681 = vld [vmem:[%s2 + $0x684] sm:$0xff]
    %v7682 = vld [vmem:[%s2 + $0x68c] sm:$0xf]
    %v7683 = vld [vmem:[%s2 + $0x690] sm:$0xff]
    %v7684 = vld [vmem:[%s2 + $0x698] sm:$0xff]
    %v7685 = vld [vmem:[%s2 + $0x6a0] sm:$0xf]
    %v7686 = vld [vmem:[%s2 + $0x6a4] sm:$0xff]
    %v7687 = vld [vmem:[%s2 + $0x6ac] sm:$0xff]
    %v7688 = vld [vmem:[%s2 + $0x6b4] sm:$0xf]
    %v7689 = vld [vmem:[%s2 + $0x6b8] sm:$0xff]
    %v7690 = vld [vmem:[%s2 + $0x6c0] sm:$0xff]
    %v7691 = vld [vmem:[%s2 + $0x6c8] sm:$0xf]
    %v7692 = vld [vmem:[%s2 + $0x6cc] sm:$0xff]
    %v7693 = vld [vmem:[%s2 + $0x6d4] sm:$0xff]
    %v7694 = vld [vmem:[%s2 + $0x6dc] sm:$0xf]
    %v7695 = vld [vmem:[%s2 + $0x6e0] sm:$0xff]
    %v7696 = vld [vmem:[%s2 + $0x6e8] sm:$0xff]
    %v7697 = vld [vmem:[%s2 + $0x6f0] sm:$0xf]
    %v7698 = vld [vmem:[%s2 + $0x6f4] sm:$0xff]
    %v7699 = vld [vmem:[%s2 + $0x6fc] sm:$0xff]
    %v7700 = vld [vmem:[%s2 + $0x704] sm:$0xf]
    %v7701 = vld [vmem:[%s2 + $0x708] sm:$0xff]
    %v7702 = vld [vmem:[%s2 + $0x710] sm:$0xff]
    %v7703 = vld [vmem:[%s2 + $0x718] sm:$0xf]
    %v7704 = vld [vmem:[%s2 + $0x71c] sm:$0xff]
    %v7705 = vld [vmem:[%s2 + $0x724] sm:$0xff]
    %v7706 = vld [vmem:[%s2 + $0x72c] sm:$0xf]
    %v7707 = vld [vmem:[%s2 + $0x730] sm:$0xff]
    %v7708 = vld [vmem:[%s2 + $0x738] sm:$0xff]
    %v7709 = vld [vmem:[%s2 + $0x740] sm:$0xf]
    %v7710 = vld [vmem:[%s2 + $0x744] sm:$0xff]
    %v7711 = vld [vmem:[%s2 + $0x74c] sm:$0xff]
    %v7712 = vld [vmem:[%s2 + $0x754] sm:$0xf]
    %v7713 = vld [vmem:[%s2 + $0x758] sm:$0xff]
    %v7714 = vld [vmem:[%s2 + $0x760] sm:$0xff]
    %v7715 = vld [vmem:[%s2 + $0x768] sm:$0xf]
    %v7716 = vld [vmem:[%s2 + $0x76c] sm:$0xff]
    %v7717 = vld [vmem:[%s2 + $0x774] sm:$0xff]
    %v7718 = vld [vmem:[%s2 + $0x77c] sm:$0xf]
    %v7719 = vld [vmem:[%s2 + $0x780] sm:$0xff]
    %v7720 = vld [vmem:[%s2 + $0x788] sm:$0xff]
    %v7721 = vld [vmem:[%s2 + $0x790] sm:$0xf]
    %v7722 = vld [vmem:[%s2 + $0x794] sm:$0xff]
    %v7723 = vld [vmem:[%s2 + $0x79c] sm:$0xff]
    %v7724 = vld [vmem:[%s2 + $0x7a4] sm:$0xf]
    %v7725 = vld [vmem:[%s2 + $0x7a8] sm:$0xff]
    %v7726 = vld [vmem:[%s2 + $0x7b0] sm:$0xff]
    %v7727 = vld [vmem:[%s2 + $0x7b8] sm:$0xf]
    %v7728 = vld [vmem:[%s2 + $0x7bc] sm:$0xff]
    %v7729 = vld [vmem:[%s2 + $0x7c4] sm:$0xff]
    %v7730 = vld [vmem:[%s2 + $0x7cc] sm:$0xf]
    %v7731 = vld [vmem:[%s2 + $0x7d0] sm:$0xff]
    %v7732 = vld [vmem:[%s2 + $0x7d8] sm:$0xff]
    %v7733 = vld [vmem:[%s2 + $0x7e0] sm:$0xf]
    %v7734 = vld [vmem:[%s2 + $0x7e4] sm:$0xff]
    %v7735 = vld [vmem:[%s2 + $0x7ec] sm:$0xff]
    %v7736 = vld [vmem:[%s2 + $0x7f4] sm:$0xf]
    %v7737 = vld [vmem:[%s2 + $0x7f8] sm:$0xff]
    %v7738 = vld [vmem:[%s2 + $0x800] sm:$0xff]
    %v7739 = vld [vmem:[%s2 + $0x808] sm:$0xf]
    %v7740 = vld [vmem:[%s2 + $0x80c] sm:$0xff]
    %v7741 = vld [vmem:[%s2 + $0x814] sm:$0xff]
    %v7742 = vld [vmem:[%s2 + $0x81c] sm:$0xf]
    %v7743 = vld [vmem:[%s2 + $0x820] sm:$0xff]
    %v7744 = vld [vmem:[%s2 + $0x828] sm:$0xff]
    %v7745 = vld [vmem:[%s2 + $0x830] sm:$0xf]
    %v7746 = vld [vmem:[%s2 + $0x834] sm:$0xff]
    %v7747 = vld [vmem:[%s2 + $0x83c] sm:$0xff]
    %v7748 = vld [vmem:[%s2 + $0x844] sm:$0xf]
    %v7749 = vld [vmem:[%s2 + $0x848] sm:$0xff]
    %v7750 = vld [vmem:[%s2 + $0x850] sm:$0xff]
    %v7751 = vld [vmem:[%s2 + $0x858] sm:$0xf]
    %v7752 = vld [vmem:[%s2 + $0x85c] sm:$0xff]
    %v7753 = vld [vmem:[%s2 + $0x864] sm:$0xff]
    %v7754 = vld [vmem:[%s2 + $0x86c] sm:$0xf]
    %v7755 = vld [vmem:[%s2 + $0x870] sm:$0xff]
    %v7756 = vld [vmem:[%s2 + $0x878] sm:$0xff]
    %v7757 = vld [vmem:[%s2 + $0x880] sm:$0xf]
    %v7758 = vld [vmem:[%s2 + $0x884] sm:$0xff]
    %v7759 = vld [vmem:[%s2 + $0x88c] sm:$0xff]
    %v7760 = vld [vmem:[%s2 + $0x894] sm:$0xf]
    %v7761 = vld [vmem:[%s2 + $0x898] sm:$0xff]
    %v7762 = vld [vmem:[%s2 + $0x8a0] sm:$0xff]
    %v7763 = vld [vmem:[%s2 + $0x8a8] sm:$0xf]
    %v7764 = vld [vmem:[%s2 + $0x8ac] sm:$0xff]
    %v7765 = vld [vmem:[%s2 + $0x8b4] sm:$0xff]
    %v7766 = vld [vmem:[%s2 + $0x8bc] sm:$0xf]
    %v7767 = vld [vmem:[%s2 + $0x8c0] sm:$0xff]
    %v7768 = vld [vmem:[%s2 + $0x8c8] sm:$0xff]
    %v7769 = vld [vmem:[%s2 + $0x8d0] sm:$0xf]
    %v7770 = vld [vmem:[%s2 + $0x8d4] sm:$0xff]
    %v7771 = vld [vmem:[%s2 + $0x8dc] sm:$0xff]
    %v7772 = vld [vmem:[%s2 + $0x8e4] sm:$0xf]
    %v7773 = vld [vmem:[%s2 + $0x8e8] sm:$0xff]
    %v7774 = vld [vmem:[%s2 + $0x8f0] sm:$0xff]
    %v7775 = vld [vmem:[%s2 + $0x8f8] sm:$0xf]
    %v7776 = vld [vmem:[%s2 + $0x8fc] sm:$0xff]
    %v7777 = vld [vmem:[%s2 + $0x904] sm:$0xff]
    %v7778 = vld [vmem:[%s2 + $0x90c] sm:$0xf]
    %v7779 = vld [vmem:[%s2 + $0x910] sm:$0xff]
    %v7780 = vld [vmem:[%s2 + $0x918] sm:$0xff]
    %v7781 = vld [vmem:[%s2 + $0x920] sm:$0xf]
    %v7782 = vld [vmem:[%s2 + $0x924] sm:$0xff]
    %v7783 = vld [vmem:[%s2 + $0x92c] sm:$0xff]
    %v7784 = vld [vmem:[%s2 + $0x934] sm:$0xf]
    %v7785 = vld [vmem:[%s2 + $0x938] sm:$0xff]
    %v7786 = vld [vmem:[%s2 + $0x940] sm:$0xff]
    %v7787 = vld [vmem:[%s2 + $0x948] sm:$0xf]
    %v7788 = vld [vmem:[%s2 + $0x94c] sm:$0xff]
    %v7789 = vld [vmem:[%s2 + $0x954] sm:$0xff]
    %v7790 = vld [vmem:[%s2 + $0x95c] sm:$0xf]
    %v7791 = vld [vmem:[%s2 + $0x960] sm:$0xff]
    %v7792 = vld [vmem:[%s2 + $0x968] sm:$0xff]
    %v7793 = vld [vmem:[%s2 + $0x970] sm:$0xf]
    %v7794 = vld [vmem:[%s2 + $0x974] sm:$0xff]
    %v7795 = vld [vmem:[%s2 + $0x97c] sm:$0xff]
    %v7796 = vld [vmem:[%s2 + $0x984] sm:$0xf]
    %v7797 = vld [vmem:[%s2 + $0x988] sm:$0xff]
    %v7798 = vld [vmem:[%s2 + $0x990] sm:$0xff]
    %v7799 = vld [vmem:[%s2 + $0x998] sm:$0xf]
    %v7800 = vld [vmem:[%s2 + $0x99c] sm:$0xff]
    %v7801 = vld [vmem:[%s2 + $0x9a4] sm:$0xff]
    %v7802 = vld [vmem:[%s2 + $0x9ac] sm:$0xf]
    %v7803 = vld [vmem:[%s2 + $0x9b0] sm:$0xff]
    %v7804 = vld [vmem:[%s2 + $0x9b8] sm:$0xff]
    %v7805 = vld [vmem:[%s2 + $0x9c0] sm:$0xf]
    %v7806 = vld [vmem:[%s2 + $0x9c4] sm:$0xff]
    %v7807 = vld [vmem:[%s2 + $0x9cc] sm:$0xff]
    %v7808 = vld [vmem:[%s2 + $0x9d4] sm:$0xf]
    %v7809 = vld [vmem:[%s2 + $0x9d8] sm:$0xff]
    %v7810 = vld [vmem:[%s2 + $0x9e0] sm:$0xff]
    %v7811 = vld [vmem:[%s2 + $0x9e8] sm:$0xf]
    %v7812 = vld [vmem:[%s2 + $0x9ec] sm:$0xff]
    %v7813 = vld [vmem:[%s2 + $0x9f4] sm:$0xff]
    %v7814 = vld [vmem:[%s2 + $0x9fc] sm:$0xf]
    %v7815 = vld [vmem:[%s2 + $0xa00] sm:$0xff]
    %v7816 = vld [vmem:[%s2 + $0xa08] sm:$0xff]
    %v7817 = vld [vmem:[%s2 + $0xa10] sm:$0xf]
    %v7818 = vld [vmem:[%s2 + $0xa14] sm:$0xff]
    %v7819 = vld [vmem:[%s2 + $0xa1c] sm:$0xff]
    %v7820 = vld [vmem:[%s2 + $0xa24] sm:$0xf]
    %v7821 = vld [vmem:[%s2 + $0xa28] sm:$0xff]
    %v7822 = vld [vmem:[%s2 + $0xa30] sm:$0xff]
    %v7823 = vld [vmem:[%s2 + $0xa38] sm:$0xf]
    %v7824 = vld [vmem:[%s2 + $0xa3c] sm:$0xff]
    %v7825 = vld [vmem:[%s2 + $0xa44] sm:$0xff]
    %v7826 = vld [vmem:[%s2 + $0xa4c] sm:$0xf]
    %v7827 = vld [vmem:[%s2 + $0xa50] sm:$0xff]
    %v7828 = vld [vmem:[%s2 + $0xa58] sm:$0xff]
    %v7829 = vld [vmem:[%s2 + $0xa60] sm:$0xf]
    %v7830 = vld [vmem:[%s2 + $0xa64] sm:$0xff]
    %v7831 = vld [vmem:[%s2 + $0xa6c] sm:$0xff]
    %v7832 = vld [vmem:[%s2 + $0xa74] sm:$0xf]
    %v7833 = vld [vmem:[%s2 + $0xa78] sm:$0xff]
    %v7834 = vld [vmem:[%s2 + $0xa80] sm:$0xff]
    %v7835 = vld [vmem:[%s2 + $0xa88] sm:$0xf]
    %v7836 = vld [vmem:[%s2 + $0xa8c] sm:$0xff]
    %v7837 = vld [vmem:[%s2 + $0xa94] sm:$0xff]
    %v7838 = vld [vmem:[%s2 + $0xa9c] sm:$0xf]
    %v7839 = vld [vmem:[%s2 + $0xaa0] sm:$0xff]
    %v7840 = vld [vmem:[%s2 + $0xaa8] sm:$0xff]
    %v7841 = vld [vmem:[%s2 + $0xab0] sm:$0xf]
    %v7842 = vld [vmem:[%s2 + $0xab4] sm:$0xff]
    %v7843 = vld [vmem:[%s2 + $0xabc] sm:$0xff]
    %v7844 = vld [vmem:[%s2 + $0xac4] sm:$0xf]
    %v7845 = vld [vmem:[%s2 + $0xac8] sm:$0xff]
    %v7846 = vld [vmem:[%s2 + $0xad0] sm:$0xff]
    %v7847 = vld [vmem:[%s2 + $0xad8] sm:$0xf]
    %v7848 = vld [vmem:[%s2 + $0xadc] sm:$0xff]
    %v7849 = vld [vmem:[%s2 + $0xae4] sm:$0xff]
    %v7850 = vld [vmem:[%s2 + $0xaec] sm:$0xf]
    %v7851 = vld [vmem:[%s2 + $0xaf0] sm:$0xff]
    %v7852 = vld [vmem:[%s2 + $0xaf8] sm:$0xff]
    %v7853 = vld [vmem:[%s2 + $0xb00] sm:$0xf]
    %v7854 = vld [vmem:[%s2 + $0xb04] sm:$0xff]
    %v7855 = vld [vmem:[%s2 + $0xb0c] sm:$0xff]
    %v7856 = vld [vmem:[%s2 + $0xb14] sm:$0xf]
    %v7857 = vld [vmem:[%s2 + $0xb18] sm:$0xff]
    %v7858 = vld [vmem:[%s2 + $0xb20] sm:$0xff]
    %v7859 = vld [vmem:[%s2 + $0xb28] sm:$0xf]
    %v7860 = vld [vmem:[%s2 + $0xb2c] sm:$0xff]
    %v7861 = vld [vmem:[%s2 + $0xb34] sm:$0xff]
    %v7862 = vld [vmem:[%s2 + $0xb3c] sm:$0xf]
    %v7863 = vld [vmem:[%s2 + $0xb40] sm:$0xff]
    %v7864 = vld [vmem:[%s2 + $0xb48] sm:$0xff]
    %v7865 = vld [vmem:[%s2 + $0xb50] sm:$0xf]
    %v7866 = vld [vmem:[%s2 + $0xb54] sm:$0xff]
    %v7867 = vld [vmem:[%s2 + $0xb5c] sm:$0xff]
    %v7868 = vld [vmem:[%s2 + $0xb64] sm:$0xf]
    %v7869 = vld [vmem:[%s2 + $0xb68] sm:$0xff]
    %v7870 = vld [vmem:[%s2 + $0xb70] sm:$0xff]
    %v7871 = vld [vmem:[%s2 + $0xb78] sm:$0xf]
    %v7872 = vld [vmem:[%s2 + $0xb7c] sm:$0xff]
    %v7873 = vld [vmem:[%s2 + $0xb84] sm:$0xff]
    %v7874 = vld [vmem:[%s2 + $0xb8c] sm:$0xf]
    %v7875 = vld [vmem:[%s2 + $0xb90] sm:$0xff]
    %v7876 = vld [vmem:[%s2 + $0xb98] sm:$0xff]
    %v7877 = vld [vmem:[%s2 + $0xba0] sm:$0xf]
    %v7878 = vld [vmem:[%s2 + $0xba4] sm:$0xff]
    %v7879 = vld [vmem:[%s2 + $0xbac] sm:$0xff]
    %v7880 = vld [vmem:[%s2 + $0xbb4] sm:$0xf]
    %v7881 = vld [vmem:[%s2 + $0xbb8] sm:$0xff]
    %v7882 = vld [vmem:[%s2 + $0xbc0] sm:$0xff]
    %v7883 = vld [vmem:[%s2 + $0xbc8] sm:$0xf]
    %v7884 = vld [vmem:[%s2 + $0xbcc] sm:$0xff]
    %v7885 = vld [vmem:[%s2 + $0xbd4] sm:$0xff]
    %v7886 = vld [vmem:[%s2 + $0xbdc] sm:$0xf]
    %v7887 = vld [vmem:[%s2 + $0xbe0] sm:$0xff]
    %v7888 = vld [vmem:[%s2 + $0xbe8] sm:$0xff]
    %v7889 = vld [vmem:[%s2 + $0xbf0] sm:$0xf]
    %v7890 = vld [vmem:[%s2 + $0xbf4] sm:$0xff]
    %v7891 = vld [vmem:[%s2 + $0xbfc] sm:$0xff]
    %v7892 = vld [vmem:[%s2 + $0xc04] sm:$0xf]
    %v7893 = vld [vmem:[%s2 + $0xc08] sm:$0xff]
    %v7894 = vld [vmem:[%s2 + $0xc10] sm:$0xff]
    %v7895 = vld [vmem:[%s2 + $0xc18] sm:$0xf]
    %v7896 = vld [vmem:[%s2 + $0xc1c] sm:$0xff]
    %v7897 = vld [vmem:[%s2 + $0xc24] sm:$0xff]
    %v7898 = vld [vmem:[%s2 + $0xc2c] sm:$0xf]
    %v7899 = vld [vmem:[%s2 + $0xc30] sm:$0xff]
    %v7900 = vld [vmem:[%s2 + $0xc38] sm:$0xff]
    %v7901 = vld [vmem:[%s2 + $0xc40] sm:$0xf]
    %v7902 = vld [vmem:[%s2 + $0xc44] sm:$0xff]
    %v7903 = vld [vmem:[%s2 + $0xc4c] sm:$0xff]
    %v7904 = vld [vmem:[%s2 + $0xc54] sm:$0xf]
    %v7905 = vld [vmem:[%s2 + $0xc58] sm:$0xff]
    %v7906 = vld [vmem:[%s2 + $0xc60] sm:$0xff]
    %v7907 = vld [vmem:[%s2 + $0xc68] sm:$0xf]
    %v7908 = vld [vmem:[%s2 + $0xc6c] sm:$0xff]
    %v7909 = vld [vmem:[%s2 + $0xc74] sm:$0xff]
    %v7910 = vld [vmem:[%s2 + $0xc7c] sm:$0xf]
    %v7911 = vld [vmem:[%s2 + $0xc80] sm:$0xff]
    %v7912 = vld [vmem:[%s2 + $0xc88] sm:$0xff]
    %v7913 = vld [vmem:[%s2 + $0xc90] sm:$0xf]
    %v7914 = vld [vmem:[%s2 + $0xc94] sm:$0xff]
    %v7915 = vld [vmem:[%s2 + $0xc9c] sm:$0xff]
    %v7916 = vld [vmem:[%s2 + $0xca4] sm:$0xf]
    %v7917 = vld [vmem:[%s2 + $0xca8] sm:$0xff]
    %v7918 = vld [vmem:[%s2 + $0xcb0] sm:$0xff]
    %v7919 = vld [vmem:[%s2 + $0xcb8] sm:$0xf]
    %v7920 = vld [vmem:[%s2 + $0xcbc] sm:$0xff]
    %v7921 = vld [vmem:[%s2 + $0xcc4] sm:$0xff]
    %v7922 = vld [vmem:[%s2 + $0xccc] sm:$0xf]
    %v7923 = vld [vmem:[%s2 + $0xcd0] sm:$0xff]
    %v7924 = vld [vmem:[%s2 + $0xcd8] sm:$0xff]
    %v7925 = vld [vmem:[%s2 + $0xce0] sm:$0xf]
    %v7926 = vld [vmem:[%s2 + $0xce4] sm:$0xff]
    %v7927 = vld [vmem:[%s2 + $0xcec] sm:$0xff]
    %v7928 = vld [vmem:[%s2 + $0xcf4] sm:$0xf]
    %v7929 = vld [vmem:[%s2 + $0xcf8] sm:$0xff]
    %v7930 = vld [vmem:[%s2 + $0xd00] sm:$0xff]
    %v7931 = vld [vmem:[%s2 + $0xd08] sm:$0xf]
    %v7932 = vld [vmem:[%s2 + $0xd0c] sm:$0xff]
    %v7933 = vld [vmem:[%s2 + $0xd14] sm:$0xff]
    %v7934 = vld [vmem:[%s2 + $0xd1c] sm:$0xf]
    %v7935 = vld [vmem:[%s2 + $0xd20] sm:$0xff]
    %v7936 = vld [vmem:[%s2 + $0xd28] sm:$0xff]
    %v7937 = vld [vmem:[%s2 + $0xd30] sm:$0xf]
    %v7938 = vld [vmem:[%s2 + $0xd34] sm:$0xff]
    %v7939 = vld [vmem:[%s2 + $0xd3c] sm:$0xff]
    %v7940 = vld [vmem:[%s2 + $0xd44] sm:$0xf]
    %v7941 = vld [vmem:[%s2 + $0xd48] sm:$0xff]
    %v7942 = vld [vmem:[%s2 + $0xd50] sm:$0xff]
    %v7943 = vld [vmem:[%s2 + $0xd58] sm:$0xf]
    %v7944 = vld [vmem:[%s2 + $0xd5c] sm:$0xff]
    %v7945 = vld [vmem:[%s2 + $0xd64] sm:$0xff]
    %v7946 = vld [vmem:[%s2 + $0xd6c] sm:$0xf]
    %v7947 = vld [vmem:[%s2 + $0xd70] sm:$0xff]
    %v7948 = vld [vmem:[%s2 + $0xd78] sm:$0xff]
    %v7949 = vld [vmem:[%s2 + $0xd80] sm:$0xf]
    %v7950 = vld [vmem:[%s2 + $0xd84] sm:$0xff]
    %v7951 = vld [vmem:[%s2 + $0xd8c] sm:$0xff]
    %v7952 = vld [vmem:[%s2 + $0xd94] sm:$0xf]
    %v7953 = vld [vmem:[%s2 + $0xd98] sm:$0xff]
    %v7954 = vld [vmem:[%s2 + $0xda0] sm:$0xff]
    %v7955 = vld [vmem:[%s2 + $0xda8] sm:$0xf]
    %v7956 = vld [vmem:[%s2 + $0xdac] sm:$0xff]
    %v7957 = vld [vmem:[%s2 + $0xdb4] sm:$0xff]
    %v7958 = vld [vmem:[%s2 + $0xdbc] sm:$0xf]
    %v7959 = vld [vmem:[%s2 + $0xdc0] sm:$0xff]
    %v7960 = vld [vmem:[%s2 + $0xdc8] sm:$0xff]
    %v7961 = vld [vmem:[%s2 + $0xdd0] sm:$0xf]
    %v7962 = vld [vmem:[%s2 + $0xdd4] sm:$0xff]
    %v7963 = vld [vmem:[%s2 + $0xddc] sm:$0xff]
    %v7964 = vld [vmem:[%s2 + $0xde4] sm:$0xf]
    %v7965 = vld [vmem:[%s2 + $0xde8] sm:$0xff]
    %v7966 = vld [vmem:[%s2 + $0xdf0] sm:$0xff]
    %v7967 = vld [vmem:[%s2 + $0xdf8] sm:$0xf]
    %v7968 = vld [vmem:[%s2 + $0xdfc] sm:$0xff]
    %v7969 = vld [vmem:[%s2 + $0xe04] sm:$0xff]
    %v7970 = vld [vmem:[%s2 + $0xe0c] sm:$0xf]
    %v7971 = vld [vmem:[%s2 + $0xe10] sm:$0xff]
    %v7972 = vld [vmem:[%s2 + $0xe18] sm:$0xff]
    %v7973 = vld [vmem:[%s2 + $0xe20] sm:$0xf]
    %v7974 = vld [vmem:[%s2 + $0xe24] sm:$0xff]
    %v7975 = vld [vmem:[%s2 + $0xe2c] sm:$0xff]
    %v7976 = vld [vmem:[%s2 + $0xe34] sm:$0xf]
    %v7977 = vld [vmem:[%s2 + $0xe38] sm:$0xff]
    %v7978 = vld [vmem:[%s2 + $0xe40] sm:$0xff]
    %v7979 = vld [vmem:[%s2 + $0xe48] sm:$0xf]
    %v7980 = vld [vmem:[%s2 + $0xe4c] sm:$0xff]
    %v7981 = vld [vmem:[%s2 + $0xe54] sm:$0xff]
    %v7982 = vld [vmem:[%s2 + $0xe5c] sm:$0xf]
    %v7983 = vld [vmem:[%s2 + $0xe60] sm:$0xff]
    %v7984 = vld [vmem:[%s2 + $0xe68] sm:$0xff]
    %v7985 = vld [vmem:[%s2 + $0xe70] sm:$0xf]
    %v7986 = vld [vmem:[%s2 + $0xe74] sm:$0xff]
    %v7987 = vld [vmem:[%s2 + $0xe7c] sm:$0xff]
    %v7988 = vld [vmem:[%s2 + $0xe84] sm:$0xf]
    %v7989 = vld [vmem:[%s2 + $0xe88] sm:$0xff]
    %v7990 = vld [vmem:[%s2 + $0xe90] sm:$0xff]
    %v7991 = vld [vmem:[%s2 + $0xe98] sm:$0xf]
    %v7992 = vld [vmem:[%s2 + $0xe9c] sm:$0xff]
    %v7993 = vld [vmem:[%s2 + $0xea4] sm:$0xff]
    %v7994 = vld [vmem:[%s2 + $0xeac] sm:$0xf]
    %v7995 = vld [vmem:[%s2 + $0xeb0] sm:$0xff]
    %v7996 = vld [vmem:[%s2 + $0xeb8] sm:$0xff]
    %v7997 = vld [vmem:[%s2 + $0xec0] sm:$0xf]
    %v7998 = vld [vmem:[%s2 + $0xec4] sm:$0xff]
    %v7999 = vld [vmem:[%s2 + $0xecc] sm:$0xff]
    %v8000 = vld [vmem:[%s2 + $0xed4] sm:$0xf]
    %v8001 = vld [vmem:[%s2 + $0xed8] sm:$0xff]
    %v8002 = vld [vmem:[%s2 + $0xee0] sm:$0xff]
    %v8003 = vld [vmem:[%s2 + $0xee8] sm:$0xf]
    %v8004 = vld [vmem:[%s2 + $0xeec] sm:$0xff]
    %v8005 = vld [vmem:[%s2 + $0xef4] sm:$0xff]
    %v8006 = vld [vmem:[%s2 + $0xefc] sm:$0xf]
    %v8583 = vunpack.c.l.b16 %v7431
    %v8584 = vunpack.c.h.b16 %v7431
    %v8585 = vunpack.c.l.b16 %v7432
    %v8586 = vunpack.c.h.b16 %v7432
    %v8587 = vunpack.c.l.b16 %v7433
    %v8588 = vunpack.c.l.b16 %v7434
    %v8589 = vunpack.c.h.b16 %v7434
    %v8590 = vunpack.c.l.b16 %v7435
    %v8591 = vunpack.c.h.b16 %v7435
    %v8592 = vunpack.c.l.b16 %v7436
    %v8593 = vunpack.c.l.b16 %v7437
    %v8594 = vunpack.c.h.b16 %v7437
    %v8595 = vunpack.c.l.b16 %v7438
    %v8596 = vunpack.c.h.b16 %v7438
    %v8597 = vunpack.c.l.b16 %v7439
    %v8598 = vunpack.c.l.b16 %v7440
    %v8599 = vunpack.c.h.b16 %v7440
    %v8600 = vunpack.c.l.b16 %v7441
    %v8601 = vunpack.c.h.b16 %v7441
    %v8602 = vunpack.c.l.b16 %v7442
    %v8603 = vunpack.c.l.b16 %v7443
    %v8604 = vunpack.c.h.b16 %v7443
    %v8605 = vunpack.c.l.b16 %v7444
    %v8606 = vunpack.c.h.b16 %v7444
    %v8607 = vunpack.c.l.b16 %v7445
    %v8608 = vunpack.c.l.b16 %v7446
    %v8609 = vunpack.c.h.b16 %v7446
    %v8610 = vunpack.c.l.b16 %v7447
    %v8611 = vunpack.c.h.b16 %v7447
    %v8612 = vunpack.c.l.b16 %v7448
    %v8613 = vunpack.c.l.b16 %v7449
    %v8614 = vunpack.c.h.b16 %v7449
    %v8615 = vunpack.c.l.b16 %v7450
    %v8616 = vunpack.c.h.b16 %v7450
    %v8617 = vunpack.c.l.b16 %v7451
    %v8618 = vunpack.c.l.b16 %v7452
    %v8619 = vunpack.c.h.b16 %v7452
    %v8620 = vunpack.c.l.b16 %v7453
    %v8621 = vunpack.c.h.b16 %v7453
    %v8622 = vunpack.c.l.b16 %v7454
    %v8623 = vunpack.c.l.b16 %v7455
    %v8624 = vunpack.c.h.b16 %v7455
    %v8625 = vunpack.c.l.b16 %v7456
    %v8626 = vunpack.c.h.b16 %v7456
    %v8627 = vunpack.c.l.b16 %v7457
    %v8628 = vunpack.c.l.b16 %v7458
    %v8629 = vunpack.c.h.b16 %v7458
    %v8630 = vunpack.c.l.b16 %v7459
    %v8631 = vunpack.c.h.b16 %v7459
    %v8632 = vunpack.c.l.b16 %v7460
    %v8633 = vunpack.c.l.b16 %v7461
    %v8634 = vunpack.c.h.b16 %v7461
    %v8635 = vunpack.c.l.b16 %v7462
    %v8636 = vunpack.c.h.b16 %v7462
    %v8637 = vunpack.c.l.b16 %v7463
    %v8638 = vunpack.c.l.b16 %v7464
    %v8639 = vunpack.c.h.b16 %v7464
    %v8640 = vunpack.c.l.b16 %v7465
    %v8641 = vunpack.c.h.b16 %v7465
    %v8642 = vunpack.c.l.b16 %v7466
    %v8643 = vunpack.c.l.b16 %v7467
    %v8644 = vunpack.c.h.b16 %v7467
    %v8645 = vunpack.c.l.b16 %v7468
    %v8646 = vunpack.c.h.b16 %v7468
    %v8647 = vunpack.c.l.b16 %v7469
    %v8648 = vunpack.c.l.b16 %v7470
    %v8649 = vunpack.c.h.b16 %v7470
    %v8650 = vunpack.c.l.b16 %v7471
    %v8651 = vunpack.c.h.b16 %v7471
    %v8652 = vunpack.c.l.b16 %v7472
    %v8653 = vunpack.c.l.b16 %v7473
    %v8654 = vunpack.c.h.b16 %v7473
    %v8655 = vunpack.c.l.b16 %v7474
    %v8656 = vunpack.c.h.b16 %v7474
    %v8657 = vunpack.c.l.b16 %v7475
    %v8658 = vunpack.c.l.b16 %v7476
    %v8659 = vunpack.c.h.b16 %v7476
    %v8660 = vunpack.c.l.b16 %v7477
    %v8661 = vunpack.c.h.b16 %v7477
    %v8662 = vunpack.c.l.b16 %v7478
    %v8663 = vunpack.c.l.b16 %v7479
    %v8664 = vunpack.c.h.b16 %v7479
    %v8665 = vunpack.c.l.b16 %v7480
    %v8666 = vunpack.c.h.b16 %v7480
    %v8667 = vunpack.c.l.b16 %v7481
    %v8668 = vunpack.c.l.b16 %v7482
    %v8669 = vunpack.c.h.b16 %v7482
    %v8670 = vunpack.c.l.b16 %v7483
    %v8671 = vunpack.c.h.b16 %v7483
    %v8672 = vunpack.c.l.b16 %v7484
    %v8673 = vunpack.c.l.b16 %v7485
    %v8674 = vunpack.c.h.b16 %v7485
    %v8675 = vunpack.c.l.b16 %v7486
    %v8676 = vunpack.c.h.b16 %v7486
    %v8677 = vunpack.c.l.b16 %v7487
    %v8678 = vunpack.c.l.b16 %v7488
    %v8679 = vunpack.c.h.b16 %v7488
    %v8680 = vunpack.c.l.b16 %v7489
    %v8681 = vunpack.c.h.b16 %v7489
    %v8682 = vunpack.c.l.b16 %v7490
    %v8683 = vunpack.c.l.b16 %v7491
    %v8684 = vunpack.c.h.b16 %v7491
    %v8685 = vunpack.c.l.b16 %v7492
    %v8686 = vunpack.c.h.b16 %v7492
    %v8687 = vunpack.c.l.b16 %v7493
    %v8688 = vunpack.c.l.b16 %v7494
    %v8689 = vunpack.c.h.b16 %v7494
    %v8690 = vunpack.c.l.b16 %v7495
    %v8691 = vunpack.c.h.b16 %v7495
    %v8692 = vunpack.c.l.b16 %v7496
    %v8693 = vunpack.c.l.b16 %v7497
    %v8694 = vunpack.c.h.b16 %v7497
    %v8695 = vunpack.c.l.b16 %v7498
    %v8696 = vunpack.c.h.b16 %v7498
    %v8697 = vunpack.c.l.b16 %v7499
    %v8698 = vunpack.c.l.b16 %v7500
    %v8699 = vunpack.c.h.b16 %v7500
    %v8700 = vunpack.c.l.b16 %v7501
    %v8701 = vunpack.c.h.b16 %v7501
    %v8702 = vunpack.c.l.b16 %v7502
    %v8703 = vunpack.c.l.b16 %v7503
    %v8704 = vunpack.c.h.b16 %v7503
    %v8705 = vunpack.c.l.b16 %v7504
    %v8706 = vunpack.c.h.b16 %v7504
    %v8707 = vunpack.c.l.b16 %v7505
    %v8708 = vunpack.c.l.b16 %v7506
    %v8709 = vunpack.c.h.b16 %v7506
    %v8710 = vunpack.c.l.b16 %v7507
    %v8711 = vunpack.c.h.b16 %v7507
    %v8712 = vunpack.c.l.b16 %v7508
    %v8713 = vunpack.c.l.b16 %v7509
    %v8714 = vunpack.c.h.b16 %v7509
    %v8715 = vunpack.c.l.b16 %v7510
    %v8716 = vunpack.c.h.b16 %v7510
    %v8717 = vunpack.c.l.b16 %v7511
    %v8718 = vunpack.c.l.b16 %v7512
    %v8719 = vunpack.c.h.b16 %v7512
    %v8720 = vunpack.c.l.b16 %v7513
    %v8721 = vunpack.c.h.b16 %v7513
    %v8722 = vunpack.c.l.b16 %v7514
    %v8723 = vunpack.c.l.b16 %v7515
    %v8724 = vunpack.c.h.b16 %v7515
    %v8725 = vunpack.c.l.b16 %v7516
    %v8726 = vunpack.c.h.b16 %v7516
    %v8727 = vunpack.c.l.b16 %v7517
    %v8728 = vunpack.c.l.b16 %v7518
    %v8729 = vunpack.c.h.b16 %v7518
    %v8730 = vunpack.c.l.b16 %v7519
    %v8731 = vunpack.c.h.b16 %v7519
    %v8732 = vunpack.c.l.b16 %v7520
    %v8733 = vunpack.c.l.b16 %v7521
    %v8734 = vunpack.c.h.b16 %v7521
    %v8735 = vunpack.c.l.b16 %v7522
    %v8736 = vunpack.c.h.b16 %v7522
    %v8737 = vunpack.c.l.b16 %v7523
    %v8738 = vunpack.c.l.b16 %v7524
    %v8739 = vunpack.c.h.b16 %v7524
    %v8740 = vunpack.c.l.b16 %v7525
    %v8741 = vunpack.c.h.b16 %v7525
    %v8742 = vunpack.c.l.b16 %v7526
    %v8743 = vunpack.c.l.b16 %v7527
    %v8744 = vunpack.c.h.b16 %v7527
    %v8745 = vunpack.c.l.b16 %v7528
    %v8746 = vunpack.c.h.b16 %v7528
    %v8747 = vunpack.c.l.b16 %v7529
    %v8748 = vunpack.c.l.b16 %v7530
    %v8749 = vunpack.c.h.b16 %v7530
    %v8750 = vunpack.c.l.b16 %v7531
    %v8751 = vunpack.c.h.b16 %v7531
    %v8752 = vunpack.c.l.b16 %v7532
    %v8753 = vunpack.c.l.b16 %v7533
    %v8754 = vunpack.c.h.b16 %v7533
    %v8755 = vunpack.c.l.b16 %v7534
    %v8756 = vunpack.c.h.b16 %v7534
    %v8757 = vunpack.c.l.b16 %v7535
    %v8758 = vunpack.c.l.b16 %v7536
    %v8759 = vunpack.c.h.b16 %v7536
    %v8760 = vunpack.c.l.b16 %v7537
    %v8761 = vunpack.c.h.b16 %v7537
    %v8762 = vunpack.c.l.b16 %v7538
    %v8763 = vunpack.c.l.b16 %v7539
    %v8764 = vunpack.c.h.b16 %v7539
    %v8765 = vunpack.c.l.b16 %v7540
    %v8766 = vunpack.c.h.b16 %v7540
    %v8767 = vunpack.c.l.b16 %v7541
    %v8768 = vunpack.c.l.b16 %v7542
    %v8769 = vunpack.c.h.b16 %v7542
    %v8770 = vunpack.c.l.b16 %v7543
    %v8771 = vunpack.c.h.b16 %v7543
    %v8772 = vunpack.c.l.b16 %v7544
    %v8773 = vunpack.c.l.b16 %v7545
    %v8774 = vunpack.c.h.b16 %v7545
    %v8775 = vunpack.c.l.b16 %v7546
    %v8776 = vunpack.c.h.b16 %v7546
    %v8777 = vunpack.c.l.b16 %v7547
    %v8778 = vunpack.c.l.b16 %v7548
    %v8779 = vunpack.c.h.b16 %v7548
    %v8780 = vunpack.c.l.b16 %v7549
    %v8781 = vunpack.c.h.b16 %v7549
    %v8782 = vunpack.c.l.b16 %v7550
    %v8783 = vunpack.c.l.b16 %v7551
    %v8784 = vunpack.c.h.b16 %v7551
    %v8785 = vunpack.c.l.b16 %v7552
    %v8786 = vunpack.c.h.b16 %v7552
    %v8787 = vunpack.c.l.b16 %v7553
    %v8788 = vunpack.c.l.b16 %v7554
    %v8789 = vunpack.c.h.b16 %v7554
    %v8790 = vunpack.c.l.b16 %v7555
    %v8791 = vunpack.c.h.b16 %v7555
    %v8792 = vunpack.c.l.b16 %v7556
    %v8793 = vunpack.c.l.b16 %v7557
    %v8794 = vunpack.c.h.b16 %v7557
    %v8795 = vunpack.c.l.b16 %v7558
    %v8796 = vunpack.c.h.b16 %v7558
    %v8797 = vunpack.c.l.b16 %v7559
    %v8798 = vunpack.c.l.b16 %v7560
    %v8799 = vunpack.c.h.b16 %v7560
    %v8800 = vunpack.c.l.b16 %v7561
    %v8801 = vunpack.c.h.b16 %v7561
    %v8802 = vunpack.c.l.b16 %v7562
    %v8803 = vunpack.c.l.b16 %v7563
    %v8804 = vunpack.c.h.b16 %v7563
    %v8805 = vunpack.c.l.b16 %v7564
    %v8806 = vunpack.c.h.b16 %v7564
    %v8807 = vunpack.c.l.b16 %v7565
    %v8808 = vunpack.c.l.b16 %v7566
    %v8809 = vunpack.c.h.b16 %v7566
    %v8810 = vunpack.c.l.b16 %v7567
    %v8811 = vunpack.c.h.b16 %v7567
    %v8812 = vunpack.c.l.b16 %v7568
    %v8813 = vunpack.c.l.b16 %v7569
    %v8814 = vunpack.c.h.b16 %v7569
    %v8815 = vunpack.c.l.b16 %v7570
    %v8816 = vunpack.c.h.b16 %v7570
    %v8817 = vunpack.c.l.b16 %v7571
    %v8818 = vunpack.c.l.b16 %v7572
    %v8819 = vunpack.c.h.b16 %v7572
    %v8820 = vunpack.c.l.b16 %v7573
    %v8821 = vunpack.c.h.b16 %v7573
    %v8822 = vunpack.c.l.b16 %v7574
    %v8823 = vunpack.c.l.b16 %v7575
    %v8824 = vunpack.c.h.b16 %v7575
    %v8825 = vunpack.c.l.b16 %v7576
    %v8826 = vunpack.c.h.b16 %v7576
    %v8827 = vunpack.c.l.b16 %v7577
    %v8828 = vunpack.c.l.b16 %v7578
    %v8829 = vunpack.c.h.b16 %v7578
    %v8830 = vunpack.c.l.b16 %v7579
    %v8831 = vunpack.c.h.b16 %v7579
    %v8832 = vunpack.c.l.b16 %v7580
    %v8833 = vunpack.c.l.b16 %v7581
    %v8834 = vunpack.c.h.b16 %v7581
    %v8835 = vunpack.c.l.b16 %v7582
    %v8836 = vunpack.c.h.b16 %v7582
    %v8837 = vunpack.c.l.b16 %v7583
    %v8838 = vunpack.c.l.b16 %v7584
    %v8839 = vunpack.c.h.b16 %v7584
    %v8840 = vunpack.c.l.b16 %v7585
    %v8841 = vunpack.c.h.b16 %v7585
    %v8842 = vunpack.c.l.b16 %v7586
    %v8843 = vunpack.c.l.b16 %v7587
    %v8844 = vunpack.c.h.b16 %v7587
    %v8845 = vunpack.c.l.b16 %v7588
    %v8846 = vunpack.c.h.b16 %v7588
    %v8847 = vunpack.c.l.b16 %v7589
    %v8848 = vunpack.c.l.b16 %v7590
    %v8849 = vunpack.c.h.b16 %v7590
    %v8850 = vunpack.c.l.b16 %v7591
    %v8851 = vunpack.c.h.b16 %v7591
    %v8852 = vunpack.c.l.b16 %v7592
    %v8853 = vunpack.c.l.b16 %v7593
    %v8854 = vunpack.c.h.b16 %v7593
    %v8855 = vunpack.c.l.b16 %v7594
    %v8856 = vunpack.c.h.b16 %v7594
    %v8857 = vunpack.c.l.b16 %v7595
    %v8858 = vunpack.c.l.b16 %v7596
    %v8859 = vunpack.c.h.b16 %v7596
    %v8860 = vunpack.c.l.b16 %v7597
    %v8861 = vunpack.c.h.b16 %v7597
    %v8862 = vunpack.c.l.b16 %v7598
    %v8863 = vunpack.c.l.b16 %v7599
    %v8864 = vunpack.c.h.b16 %v7599
    %v8865 = vunpack.c.l.b16 %v7600
    %v8866 = vunpack.c.h.b16 %v7600
    %v8867 = vunpack.c.l.b16 %v7601
    %v8868 = vunpack.c.l.b16 %v7602
    %v8869 = vunpack.c.h.b16 %v7602
    %v8870 = vunpack.c.l.b16 %v7603
    %v8871 = vunpack.c.h.b16 %v7603
    %v8872 = vunpack.c.l.b16 %v7604
    %v8873 = vunpack.c.l.b16 %v7605
    %v8874 = vunpack.c.h.b16 %v7605
    %v8875 = vunpack.c.l.b16 %v7606
    %v8876 = vunpack.c.h.b16 %v7606
    %v8877 = vunpack.c.l.b16 %v7607
    %v8878 = vunpack.c.l.b16 %v7608
    %v8879 = vunpack.c.h.b16 %v7608
    %v8880 = vunpack.c.l.b16 %v7609
    %v8881 = vunpack.c.h.b16 %v7609
    %v8882 = vunpack.c.l.b16 %v7610
    %v8883 = vunpack.c.l.b16 %v7611
    %v8884 = vunpack.c.h.b16 %v7611
    %v8885 = vunpack.c.l.b16 %v7612
    %v8886 = vunpack.c.h.b16 %v7612
    %v8887 = vunpack.c.l.b16 %v7613
    %v8888 = vunpack.c.l.b16 %v7614
    %v8889 = vunpack.c.h.b16 %v7614
    %v8890 = vunpack.c.l.b16 %v7615
    %v8891 = vunpack.c.h.b16 %v7615
    %v8892 = vunpack.c.l.b16 %v7616
    %v8893 = vunpack.c.l.b16 %v7617
    %v8894 = vunpack.c.h.b16 %v7617
    %v8895 = vunpack.c.l.b16 %v7618
    %v8896 = vunpack.c.h.b16 %v7618
    %v8897 = vunpack.c.l.b16 %v7619
    %v8898 = vunpack.c.l.b16 %v7620
    %v8899 = vunpack.c.h.b16 %v7620
    %v8900 = vunpack.c.l.b16 %v7621
    %v8901 = vunpack.c.h.b16 %v7621
    %v8902 = vunpack.c.l.b16 %v7622
    %v8903 = vunpack.c.l.b16 %v7623
    %v8904 = vunpack.c.h.b16 %v7623
    %v8905 = vunpack.c.l.b16 %v7624
    %v8906 = vunpack.c.h.b16 %v7624
    %v8907 = vunpack.c.l.b16 %v7625
    %v8908 = vunpack.c.l.b16 %v7626
    %v8909 = vunpack.c.h.b16 %v7626
    %v8910 = vunpack.c.l.b16 %v7627
    %v8911 = vunpack.c.h.b16 %v7627
    %v8912 = vunpack.c.l.b16 %v7628
    %v8913 = vunpack.c.l.b16 %v7629
    %v8914 = vunpack.c.h.b16 %v7629
    %v8915 = vunpack.c.l.b16 %v7630
    %v8916 = vunpack.c.h.b16 %v7630
    %v8917 = vunpack.c.l.b16 %v7631
    %v8918 = vunpack.c.l.b16 %v7632
    %v8919 = vunpack.c.h.b16 %v7632
    %v8920 = vunpack.c.l.b16 %v7633
    %v8921 = vunpack.c.h.b16 %v7633
    %v8922 = vunpack.c.l.b16 %v7634
    %v8923 = vunpack.c.l.b16 %v7635
    %v8924 = vunpack.c.h.b16 %v7635
    %v8925 = vunpack.c.l.b16 %v7636
    %v8926 = vunpack.c.h.b16 %v7636
    %v8927 = vunpack.c.l.b16 %v7637
    %v8928 = vunpack.c.l.b16 %v7638
    %v8929 = vunpack.c.h.b16 %v7638
    %v8930 = vunpack.c.l.b16 %v7639
    %v8931 = vunpack.c.h.b16 %v7639
    %v8932 = vunpack.c.l.b16 %v7640
    %v8933 = vunpack.c.l.b16 %v7641
    %v8934 = vunpack.c.h.b16 %v7641
    %v8935 = vunpack.c.l.b16 %v7642
    %v8936 = vunpack.c.h.b16 %v7642
    %v8937 = vunpack.c.l.b16 %v7643
    %v8938 = vunpack.c.l.b16 %v7644
    %v8939 = vunpack.c.h.b16 %v7644
    %v8940 = vunpack.c.l.b16 %v7645
    %v8941 = vunpack.c.h.b16 %v7645
    %v8942 = vunpack.c.l.b16 %v7646
    %v8943 = vunpack.c.l.b16 %v7647
    %v8944 = vunpack.c.h.b16 %v7647
    %v8945 = vunpack.c.l.b16 %v7648
    %v8946 = vunpack.c.h.b16 %v7648
    %v8947 = vunpack.c.l.b16 %v7649
    %v8948 = vunpack.c.l.b16 %v7650
    %v8949 = vunpack.c.h.b16 %v7650
    %v8950 = vunpack.c.l.b16 %v7651
    %v8951 = vunpack.c.h.b16 %v7651
    %v8952 = vunpack.c.l.b16 %v7652
    %v8953 = vunpack.c.l.b16 %v7653
    %v8954 = vunpack.c.h.b16 %v7653
    %v8955 = vunpack.c.l.b16 %v7654
    %v8956 = vunpack.c.h.b16 %v7654
    %v8957 = vunpack.c.l.b16 %v7655
    %v8958 = vunpack.c.l.b16 %v7656
    %v8959 = vunpack.c.h.b16 %v7656
    %v8960 = vunpack.c.l.b16 %v7657
    %v8961 = vunpack.c.h.b16 %v7657
    %v8962 = vunpack.c.l.b16 %v7658
    %v8963 = vunpack.c.l.b16 %v7659
    %v8964 = vunpack.c.h.b16 %v7659
    %v8965 = vunpack.c.l.b16 %v7660
    %v8966 = vunpack.c.h.b16 %v7660
    %v8967 = vunpack.c.l.b16 %v7661
    %v8968 = vunpack.c.l.b16 %v7662
    %v8969 = vunpack.c.h.b16 %v7662
    %v8970 = vunpack.c.l.b16 %v7663
    %v8971 = vunpack.c.h.b16 %v7663
    %v8972 = vunpack.c.l.b16 %v7664
    %v8973 = vunpack.c.l.b16 %v7665
    %v8974 = vunpack.c.h.b16 %v7665
    %v8975 = vunpack.c.l.b16 %v7666
    %v8976 = vunpack.c.h.b16 %v7666
    %v8977 = vunpack.c.l.b16 %v7667
    %v8978 = vunpack.c.l.b16 %v7668
    %v8979 = vunpack.c.h.b16 %v7668
    %v8980 = vunpack.c.l.b16 %v7669
    %v8981 = vunpack.c.h.b16 %v7669
    %v8982 = vunpack.c.l.b16 %v7670
    %v8983 = vunpack.c.l.b16 %v7671
    %v8984 = vunpack.c.h.b16 %v7671
    %v8985 = vunpack.c.l.b16 %v7672
    %v8986 = vunpack.c.h.b16 %v7672
    %v8987 = vunpack.c.l.b16 %v7673
    %v8988 = vunpack.c.l.b16 %v7674
    %v8989 = vunpack.c.h.b16 %v7674
    %v8990 = vunpack.c.l.b16 %v7675
    %v8991 = vunpack.c.h.b16 %v7675
    %v8992 = vunpack.c.l.b16 %v7676
    %v8993 = vunpack.c.l.b16 %v7677
    %v8994 = vunpack.c.h.b16 %v7677
    %v8995 = vunpack.c.l.b16 %v7678
    %v8996 = vunpack.c.h.b16 %v7678
    %v8997 = vunpack.c.l.b16 %v7679
    %v8998 = vunpack.c.l.b16 %v7680
    %v8999 = vunpack.c.h.b16 %v7680
    %v9000 = vunpack.c.l.b16 %v7681
    %v9001 = vunpack.c.h.b16 %v7681
    %v9002 = vunpack.c.l.b16 %v7682
    %v9003 = vunpack.c.l.b16 %v7683
    %v9004 = vunpack.c.h.b16 %v7683
    %v9005 = vunpack.c.l.b16 %v7684
    %v9006 = vunpack.c.h.b16 %v7684
    %v9007 = vunpack.c.l.b16 %v7685
    %v9008 = vunpack.c.l.b16 %v7686
    %v9009 = vunpack.c.h.b16 %v7686
    %v9010 = vunpack.c.l.b16 %v7687
    %v9011 = vunpack.c.h.b16 %v7687
    %v9012 = vunpack.c.l.b16 %v7688
    %v9013 = vunpack.c.l.b16 %v7689
    %v9014 = vunpack.c.h.b16 %v7689
    %v9015 = vunpack.c.l.b16 %v7690
    %v9016 = vunpack.c.h.b16 %v7690
    %v9017 = vunpack.c.l.b16 %v7691
    %v9018 = vunpack.c.l.b16 %v7692
    %v9019 = vunpack.c.h.b16 %v7692
    %v9020 = vunpack.c.l.b16 %v7693
    %v9021 = vunpack.c.h.b16 %v7693
    %v9022 = vunpack.c.l.b16 %v7694
    %v9023 = vunpack.c.l.b16 %v7695
    %v9024 = vunpack.c.h.b16 %v7695
    %v9025 = vunpack.c.l.b16 %v7696
    %v9026 = vunpack.c.h.b16 %v7696
    %v9027 = vunpack.c.l.b16 %v7697
    %v9028 = vunpack.c.l.b16 %v7698
    %v9029 = vunpack.c.h.b16 %v7698
    %v9030 = vunpack.c.l.b16 %v7699
    %v9031 = vunpack.c.h.b16 %v7699
    %v9032 = vunpack.c.l.b16 %v7700
    %v9033 = vunpack.c.l.b16 %v7701
    %v9034 = vunpack.c.h.b16 %v7701
    %v9035 = vunpack.c.l.b16 %v7702
    %v9036 = vunpack.c.h.b16 %v7702
    %v9037 = vunpack.c.l.b16 %v7703
    %v9038 = vunpack.c.l.b16 %v7704
    %v9039 = vunpack.c.h.b16 %v7704
    %v9040 = vunpack.c.l.b16 %v7705
    %v9041 = vunpack.c.h.b16 %v7705
    %v9042 = vunpack.c.l.b16 %v7706
    %v9043 = vunpack.c.l.b16 %v7707
    %v9044 = vunpack.c.h.b16 %v7707
    %v9045 = vunpack.c.l.b16 %v7708
    %v9046 = vunpack.c.h.b16 %v7708
    %v9047 = vunpack.c.l.b16 %v7709
    %v9048 = vunpack.c.l.b16 %v7710
    %v9049 = vunpack.c.h.b16 %v7710
    %v9050 = vunpack.c.l.b16 %v7711
    %v9051 = vunpack.c.h.b16 %v7711
    %v9052 = vunpack.c.l.b16 %v7712
    %v9053 = vunpack.c.l.b16 %v7713
    %v9054 = vunpack.c.h.b16 %v7713
    %v9055 = vunpack.c.l.b16 %v7714
    %v9056 = vunpack.c.h.b16 %v7714
    %v9057 = vunpack.c.l.b16 %v7715
    %v9058 = vunpack.c.l.b16 %v7716
    %v9059 = vunpack.c.h.b16 %v7716
    %v9060 = vunpack.c.l.b16 %v7717
    %v9061 = vunpack.c.h.b16 %v7717
    %v9062 = vunpack.c.l.b16 %v7718
    %v9063 = vunpack.c.l.b16 %v7719
    %v9064 = vunpack.c.h.b16 %v7719
    %v9065 = vunpack.c.l.b16 %v7720
    %v9066 = vunpack.c.h.b16 %v7720
    %v9067 = vunpack.c.l.b16 %v7721
    %v9068 = vunpack.c.l.b16 %v7722
    %v9069 = vunpack.c.h.b16 %v7722
    %v9070 = vunpack.c.l.b16 %v7723
    %v9071 = vunpack.c.h.b16 %v7723
    %v9072 = vunpack.c.l.b16 %v7724
    %v9073 = vunpack.c.l.b16 %v7725
    %v9074 = vunpack.c.h.b16 %v7725
    %v9075 = vunpack.c.l.b16 %v7726
    %v9076 = vunpack.c.h.b16 %v7726
    %v9077 = vunpack.c.l.b16 %v7727
    %v9078 = vunpack.c.l.b16 %v7728
    %v9079 = vunpack.c.h.b16 %v7728
    %v9080 = vunpack.c.l.b16 %v7729
    %v9081 = vunpack.c.h.b16 %v7729
    %v9082 = vunpack.c.l.b16 %v7730
    %v9083 = vunpack.c.l.b16 %v7731
    %v9084 = vunpack.c.h.b16 %v7731
    %v9085 = vunpack.c.l.b16 %v7732
    %v9086 = vunpack.c.h.b16 %v7732
    %v9087 = vunpack.c.l.b16 %v7733
    %v9088 = vunpack.c.l.b16 %v7734
    %v9089 = vunpack.c.h.b16 %v7734
    %v9090 = vunpack.c.l.b16 %v7735
    %v9091 = vunpack.c.h.b16 %v7735
    %v9092 = vunpack.c.l.b16 %v7736
    %v9093 = vunpack.c.l.b16 %v7737
    %v9094 = vunpack.c.h.b16 %v7737
    %v9095 = vunpack.c.l.b16 %v7738
    %v9096 = vunpack.c.h.b16 %v7738
    %v9097 = vunpack.c.l.b16 %v7739
    %v9098 = vunpack.c.l.b16 %v7740
    %v9099 = vunpack.c.h.b16 %v7740
    %v9100 = vunpack.c.l.b16 %v7741
    %v9101 = vunpack.c.h.b16 %v7741
    %v9102 = vunpack.c.l.b16 %v7742
    %v9103 = vunpack.c.l.b16 %v7743
    %v9104 = vunpack.c.h.b16 %v7743
    %v9105 = vunpack.c.l.b16 %v7744
    %v9106 = vunpack.c.h.b16 %v7744
    %v9107 = vunpack.c.l.b16 %v7745
    %v9108 = vunpack.c.l.b16 %v7746
    %v9109 = vunpack.c.h.b16 %v7746
    %v9110 = vunpack.c.l.b16 %v7747
    %v9111 = vunpack.c.h.b16 %v7747
    %v9112 = vunpack.c.l.b16 %v7748
    %v9113 = vunpack.c.l.b16 %v7749
    %v9114 = vunpack.c.h.b16 %v7749
    %v9115 = vunpack.c.l.b16 %v7750
    %v9116 = vunpack.c.h.b16 %v7750
    %v9117 = vunpack.c.l.b16 %v7751
    %v9118 = vunpack.c.l.b16 %v7752
    %v9119 = vunpack.c.h.b16 %v7752
    %v9120 = vunpack.c.l.b16 %v7753
    %v9121 = vunpack.c.h.b16 %v7753
    %v9122 = vunpack.c.l.b16 %v7754
    %v9123 = vunpack.c.l.b16 %v7755
    %v9124 = vunpack.c.h.b16 %v7755
    %v9125 = vunpack.c.l.b16 %v7756
    %v9126 = vunpack.c.h.b16 %v7756
    %v9127 = vunpack.c.l.b16 %v7757
    %v9128 = vunpack.c.l.b16 %v7758
    %v9129 = vunpack.c.h.b16 %v7758
    %v9130 = vunpack.c.l.b16 %v7759
    %v9131 = vunpack.c.h.b16 %v7759
    %v9132 = vunpack.c.l.b16 %v7760
    %v9133 = vunpack.c.l.b16 %v7761
    %v9134 = vunpack.c.h.b16 %v7761
    %v9135 = vunpack.c.l.b16 %v7762
    %v9136 = vunpack.c.h.b16 %v7762
    %v9137 = vunpack.c.l.b16 %v7763
    %v9138 = vunpack.c.l.b16 %v7764
    %v9139 = vunpack.c.h.b16 %v7764
    %v9140 = vunpack.c.l.b16 %v7765
    %v9141 = vunpack.c.h.b16 %v7765
    %v9142 = vunpack.c.l.b16 %v7766
    %v9143 = vunpack.c.l.b16 %v7767
    %v9144 = vunpack.c.h.b16 %v7767
    %v9145 = vunpack.c.l.b16 %v7768
    %v9146 = vunpack.c.h.b16 %v7768
    %v9147 = vunpack.c.l.b16 %v7769
    %v9148 = vunpack.c.l.b16 %v7770
    %v9149 = vunpack.c.h.b16 %v7770
    %v9150 = vunpack.c.l.b16 %v7771
    %v9151 = vunpack.c.h.b16 %v7771
    %v9152 = vunpack.c.l.b16 %v7772
    %v9153 = vunpack.c.l.b16 %v7773
    %v9154 = vunpack.c.h.b16 %v7773
    %v9155 = vunpack.c.l.b16 %v7774
    %v9156 = vunpack.c.h.b16 %v7774
    %v9157 = vunpack.c.l.b16 %v7775
    %v9158 = vunpack.c.l.b16 %v7776
    %v9159 = vunpack.c.h.b16 %v7776
    %v9160 = vunpack.c.l.b16 %v7777
    %v9161 = vunpack.c.h.b16 %v7777
    %v9162 = vunpack.c.l.b16 %v7778
    %v9163 = vunpack.c.l.b16 %v7779
    %v9164 = vunpack.c.h.b16 %v7779
    %v9165 = vunpack.c.l.b16 %v7780
    %v9166 = vunpack.c.h.b16 %v7780
    %v9167 = vunpack.c.l.b16 %v7781
    %v9168 = vunpack.c.l.b16 %v7782
    %v9169 = vunpack.c.h.b16 %v7782
    %v9170 = vunpack.c.l.b16 %v7783
    %v9171 = vunpack.c.h.b16 %v7783
    %v9172 = vunpack.c.l.b16 %v7784
    %v9173 = vunpack.c.l.b16 %v7785
    %v9174 = vunpack.c.h.b16 %v7785
    %v9175 = vunpack.c.l.b16 %v7786
    %v9176 = vunpack.c.h.b16 %v7786
    %v9177 = vunpack.c.l.b16 %v7787
    %v9178 = vunpack.c.l.b16 %v7788
    %v9179 = vunpack.c.h.b16 %v7788
    %v9180 = vunpack.c.l.b16 %v7789
    %v9181 = vunpack.c.h.b16 %v7789
    %v9182 = vunpack.c.l.b16 %v7790
    %v9183 = vunpack.c.l.b16 %v7791
    %v9184 = vunpack.c.h.b16 %v7791
    %v9185 = vunpack.c.l.b16 %v7792
    %v9186 = vunpack.c.h.b16 %v7792
    %v9187 = vunpack.c.l.b16 %v7793
    %v9188 = vunpack.c.l.b16 %v7794
    %v9189 = vunpack.c.h.b16 %v7794
    %v9190 = vunpack.c.l.b16 %v7795
    %v9191 = vunpack.c.h.b16 %v7795
    %v9192 = vunpack.c.l.b16 %v7796
    %v9193 = vunpack.c.l.b16 %v7797
    %v9194 = vunpack.c.h.b16 %v7797
    %v9195 = vunpack.c.l.b16 %v7798
    %v9196 = vunpack.c.h.b16 %v7798
    %v9197 = vunpack.c.l.b16 %v7799
    %v9198 = vunpack.c.l.b16 %v7800
    %v9199 = vunpack.c.h.b16 %v7800
    %v9200 = vunpack.c.l.b16 %v7801
    %v9201 = vunpack.c.h.b16 %v7801
    %v9202 = vunpack.c.l.b16 %v7802
    %v9203 = vunpack.c.l.b16 %v7803
    %v9204 = vunpack.c.h.b16 %v7803
    %v9205 = vunpack.c.l.b16 %v7804
    %v9206 = vunpack.c.h.b16 %v7804
    %v9207 = vunpack.c.l.b16 %v7805
    %v9208 = vunpack.c.l.b16 %v7806
    %v9209 = vunpack.c.h.b16 %v7806
    %v9210 = vunpack.c.l.b16 %v7807
    %v9211 = vunpack.c.h.b16 %v7807
    %v9212 = vunpack.c.l.b16 %v7808
    %v9213 = vunpack.c.l.b16 %v7809
    %v9214 = vunpack.c.h.b16 %v7809
    %v9215 = vunpack.c.l.b16 %v7810
    %v9216 = vunpack.c.h.b16 %v7810
    %v9217 = vunpack.c.l.b16 %v7811
    %v9218 = vunpack.c.l.b16 %v7812
    %v9219 = vunpack.c.h.b16 %v7812
    %v9220 = vunpack.c.l.b16 %v7813
    %v9221 = vunpack.c.h.b16 %v7813
    %v9222 = vunpack.c.l.b16 %v7814
    %v9223 = vunpack.c.l.b16 %v7815
    %v9224 = vunpack.c.h.b16 %v7815
    %v9225 = vunpack.c.l.b16 %v7816
    %v9226 = vunpack.c.h.b16 %v7816
    %v9227 = vunpack.c.l.b16 %v7817
    %v9228 = vunpack.c.l.b16 %v7818
    %v9229 = vunpack.c.h.b16 %v7818
    %v9230 = vunpack.c.l.b16 %v7819
    %v9231 = vunpack.c.h.b16 %v7819
    %v9232 = vunpack.c.l.b16 %v7820
    %v9233 = vunpack.c.l.b16 %v7821
    %v9234 = vunpack.c.h.b16 %v7821
    %v9235 = vunpack.c.l.b16 %v7822
    %v9236 = vunpack.c.h.b16 %v7822
    %v9237 = vunpack.c.l.b16 %v7823
    %v9238 = vunpack.c.l.b16 %v7824
    %v9239 = vunpack.c.h.b16 %v7824
    %v9240 = vunpack.c.l.b16 %v7825
    %v9241 = vunpack.c.h.b16 %v7825
    %v9242 = vunpack.c.l.b16 %v7826
    %v9243 = vunpack.c.l.b16 %v7827
    %v9244 = vunpack.c.h.b16 %v7827
    %v9245 = vunpack.c.l.b16 %v7828
    %v9246 = vunpack.c.h.b16 %v7828
    %v9247 = vunpack.c.l.b16 %v7829
    %v9248 = vunpack.c.l.b16 %v7830
    %v9249 = vunpack.c.h.b16 %v7830
    %v9250 = vunpack.c.l.b16 %v7831
    %v9251 = vunpack.c.h.b16 %v7831
    %v9252 = vunpack.c.l.b16 %v7832
    %v9253 = vunpack.c.l.b16 %v7833
    %v9254 = vunpack.c.h.b16 %v7833
    %v9255 = vunpack.c.l.b16 %v7834
    %v9256 = vunpack.c.h.b16 %v7834
    %v9257 = vunpack.c.l.b16 %v7835
    %v9258 = vunpack.c.l.b16 %v7836
    %v9259 = vunpack.c.h.b16 %v7836
    %v9260 = vunpack.c.l.b16 %v7837
    %v9261 = vunpack.c.h.b16 %v7837
    %v9262 = vunpack.c.l.b16 %v7838
    %v9263 = vunpack.c.l.b16 %v7839
    %v9264 = vunpack.c.h.b16 %v7839
    %v9265 = vunpack.c.l.b16 %v7840
    %v9266 = vunpack.c.h.b16 %v7840
    %v9267 = vunpack.c.l.b16 %v7841
    %v9268 = vunpack.c.l.b16 %v7842
    %v9269 = vunpack.c.h.b16 %v7842
    %v9270 = vunpack.c.l.b16 %v7843
    %v9271 = vunpack.c.h.b16 %v7843
    %v9272 = vunpack.c.l.b16 %v7844
    %v9273 = vunpack.c.l.b16 %v7845
    %v9274 = vunpack.c.h.b16 %v7845
    %v9275 = vunpack.c.l.b16 %v7846
    %v9276 = vunpack.c.h.b16 %v7846
    %v9277 = vunpack.c.l.b16 %v7847
    %v9278 = vunpack.c.l.b16 %v7848
    %v9279 = vunpack.c.h.b16 %v7848
    %v9280 = vunpack.c.l.b16 %v7849
    %v9281 = vunpack.c.h.b16 %v7849
    %v9282 = vunpack.c.l.b16 %v7850
    %v9283 = vunpack.c.l.b16 %v7851
    %v9284 = vunpack.c.h.b16 %v7851
    %v9285 = vunpack.c.l.b16 %v7852
    %v9286 = vunpack.c.h.b16 %v7852
    %v9287 = vunpack.c.l.b16 %v7853
    %v9288 = vunpack.c.l.b16 %v7854
    %v9289 = vunpack.c.h.b16 %v7854
    %v9290 = vunpack.c.l.b16 %v7855
    %v9291 = vunpack.c.h.b16 %v7855
    %v9292 = vunpack.c.l.b16 %v7856
    %v9293 = vunpack.c.l.b16 %v7857
    %v9294 = vunpack.c.h.b16 %v7857
    %v9295 = vunpack.c.l.b16 %v7858
    %v9296 = vunpack.c.h.b16 %v7858
    %v9297 = vunpack.c.l.b16 %v7859
    %v9298 = vunpack.c.l.b16 %v7860
    %v9299 = vunpack.c.h.b16 %v7860
    %v9300 = vunpack.c.l.b16 %v7861
    %v9301 = vunpack.c.h.b16 %v7861
    %v9302 = vunpack.c.l.b16 %v7862
    %v9303 = vunpack.c.l.b16 %v7863
    %v9304 = vunpack.c.h.b16 %v7863
    %v9305 = vunpack.c.l.b16 %v7864
    %v9306 = vunpack.c.h.b16 %v7864
    %v9307 = vunpack.c.l.b16 %v7865
    %v9308 = vunpack.c.l.b16 %v7866
    %v9309 = vunpack.c.h.b16 %v7866
    %v9310 = vunpack.c.l.b16 %v7867
    %v9311 = vunpack.c.h.b16 %v7867
    %v9312 = vunpack.c.l.b16 %v7868
    %v9313 = vunpack.c.l.b16 %v7869
    %v9314 = vunpack.c.h.b16 %v7869
    %v9315 = vunpack.c.l.b16 %v7870
    %v9316 = vunpack.c.h.b16 %v7870
    %v9317 = vunpack.c.l.b16 %v7871
    %v9318 = vunpack.c.l.b16 %v7872
    %v9319 = vunpack.c.h.b16 %v7872
    %v9320 = vunpack.c.l.b16 %v7873
    %v9321 = vunpack.c.h.b16 %v7873
    %v9322 = vunpack.c.l.b16 %v7874
    %v9323 = vunpack.c.l.b16 %v7875
    %v9324 = vunpack.c.h.b16 %v7875
    %v9325 = vunpack.c.l.b16 %v7876
    %v9326 = vunpack.c.h.b16 %v7876
    %v9327 = vunpack.c.l.b16 %v7877
    %v9328 = vunpack.c.l.b16 %v7878
    %v9329 = vunpack.c.h.b16 %v7878
    %v9330 = vunpack.c.l.b16 %v7879
    %v9331 = vunpack.c.h.b16 %v7879
    %v9332 = vunpack.c.l.b16 %v7880
    %v9333 = vunpack.c.l.b16 %v7881
    %v9334 = vunpack.c.h.b16 %v7881
    %v9335 = vunpack.c.l.b16 %v7882
    %v9336 = vunpack.c.h.b16 %v7882
    %v9337 = vunpack.c.l.b16 %v7883
    %v9338 = vunpack.c.l.b16 %v7884
    %v9339 = vunpack.c.h.b16 %v7884
    %v9340 = vunpack.c.l.b16 %v7885
    %v9341 = vunpack.c.h.b16 %v7885
    %v9342 = vunpack.c.l.b16 %v7886
    %v9343 = vunpack.c.l.b16 %v7887
    %v9344 = vunpack.c.h.b16 %v7887
    %v9345 = vunpack.c.l.b16 %v7888
    %v9346 = vunpack.c.h.b16 %v7888
    %v9347 = vunpack.c.l.b16 %v7889
    %v9348 = vunpack.c.l.b16 %v7890
    %v9349 = vunpack.c.h.b16 %v7890
    %v9350 = vunpack.c.l.b16 %v7891
    %v9351 = vunpack.c.h.b16 %v7891
    %v9352 = vunpack.c.l.b16 %v7892
    %v9353 = vunpack.c.l.b16 %v7893
    %v9354 = vunpack.c.h.b16 %v7893
    %v9355 = vunpack.c.l.b16 %v7894
    %v9356 = vunpack.c.h.b16 %v7894
    %v9357 = vunpack.c.l.b16 %v7895
    %v9358 = vunpack.c.l.b16 %v7896
    %v9359 = vunpack.c.h.b16 %v7896
    %v9360 = vunpack.c.l.b16 %v7897
    %v9361 = vunpack.c.h.b16 %v7897
    %v9362 = vunpack.c.l.b16 %v7898
    %v9363 = vunpack.c.l.b16 %v7899
    %v9364 = vunpack.c.h.b16 %v7899
    %v9365 = vunpack.c.l.b16 %v7900
    %v9366 = vunpack.c.h.b16 %v7900
    %v9367 = vunpack.c.l.b16 %v7901
    %v9368 = vunpack.c.l.b16 %v7902
    %v9369 = vunpack.c.h.b16 %v7902
    %v9370 = vunpack.c.l.b16 %v7903
    %v9371 = vunpack.c.h.b16 %v7903
    %v9372 = vunpack.c.l.b16 %v7904
    %v9373 = vunpack.c.l.b16 %v7905
    %v9374 = vunpack.c.h.b16 %v7905
    %v9375 = vunpack.c.l.b16 %v7906
    %v9376 = vunpack.c.h.b16 %v7906
    %v9377 = vunpack.c.l.b16 %v7907
    %v9378 = vunpack.c.l.b16 %v7908
    %v9379 = vunpack.c.h.b16 %v7908
    %v9380 = vunpack.c.l.b16 %v7909
    %v9381 = vunpack.c.h.b16 %v7909
    %v9382 = vunpack.c.l.b16 %v7910
    %v9383 = vunpack.c.l.b16 %v7911
    %v9384 = vunpack.c.h.b16 %v7911
    %v9385 = vunpack.c.l.b16 %v7912
    %v9386 = vunpack.c.h.b16 %v7912
    %v9387 = vunpack.c.l.b16 %v7913
    %v9388 = vunpack.c.l.b16 %v7914
    %v9389 = vunpack.c.h.b16 %v7914
    %v9390 = vunpack.c.l.b16 %v7915
    %v9391 = vunpack.c.h.b16 %v7915
    %v9392 = vunpack.c.l.b16 %v7916
    %v9393 = vunpack.c.l.b16 %v7917
    %v9394 = vunpack.c.h.b16 %v7917
    %v9395 = vunpack.c.l.b16 %v7918
    %v9396 = vunpack.c.h.b16 %v7918
    %v9397 = vunpack.c.l.b16 %v7919
    %v9398 = vunpack.c.l.b16 %v7920
    %v9399 = vunpack.c.h.b16 %v7920
    %v9400 = vunpack.c.l.b16 %v7921
    %v9401 = vunpack.c.h.b16 %v7921
    %v9402 = vunpack.c.l.b16 %v7922
    %v9403 = vunpack.c.l.b16 %v7923
    %v9404 = vunpack.c.h.b16 %v7923
    %v9405 = vunpack.c.l.b16 %v7924
    %v9406 = vunpack.c.h.b16 %v7924
    %v9407 = vunpack.c.l.b16 %v7925
    %v9408 = vunpack.c.l.b16 %v7926
    %v9409 = vunpack.c.h.b16 %v7926
    %v9410 = vunpack.c.l.b16 %v7927
    %v9411 = vunpack.c.h.b16 %v7927
    %v9412 = vunpack.c.l.b16 %v7928
    %v9413 = vunpack.c.l.b16 %v7929
    %v9414 = vunpack.c.h.b16 %v7929
    %v9415 = vunpack.c.l.b16 %v7930
    %v9416 = vunpack.c.h.b16 %v7930
    %v9417 = vunpack.c.l.b16 %v7931
    %v9418 = vunpack.c.l.b16 %v7932
    %v9419 = vunpack.c.h.b16 %v7932
    %v9420 = vunpack.c.l.b16 %v7933
    %v9421 = vunpack.c.h.b16 %v7933
    %v9422 = vunpack.c.l.b16 %v7934
    %v9423 = vunpack.c.l.b16 %v7935
    %v9424 = vunpack.c.h.b16 %v7935
    %v9425 = vunpack.c.l.b16 %v7936
    %v9426 = vunpack.c.h.b16 %v7936
    %v9427 = vunpack.c.l.b16 %v7937
    %v9428 = vunpack.c.l.b16 %v7938
    %v9429 = vunpack.c.h.b16 %v7938
    %v9430 = vunpack.c.l.b16 %v7939
    %v9431 = vunpack.c.h.b16 %v7939
    %v9432 = vunpack.c.l.b16 %v7940
    %v9433 = vunpack.c.l.b16 %v7941
    %v9434 = vunpack.c.h.b16 %v7941
    %v9435 = vunpack.c.l.b16 %v7942
    %v9436 = vunpack.c.h.b16 %v7942
    %v9437 = vunpack.c.l.b16 %v7943
    %v9438 = vunpack.c.l.b16 %v7944
    %v9439 = vunpack.c.h.b16 %v7944
    %v9440 = vunpack.c.l.b16 %v7945
    %v9441 = vunpack.c.h.b16 %v7945
    %v9442 = vunpack.c.l.b16 %v7946
    %v9443 = vunpack.c.l.b16 %v7947
    %v9444 = vunpack.c.h.b16 %v7947
    %v9445 = vunpack.c.l.b16 %v7948
    %v9446 = vunpack.c.h.b16 %v7948
    %v9447 = vunpack.c.l.b16 %v7949
    %v9448 = vunpack.c.l.b16 %v7950
    %v9449 = vunpack.c.h.b16 %v7950
    %v9450 = vunpack.c.l.b16 %v7951
    %v9451 = vunpack.c.h.b16 %v7951
    %v9452 = vunpack.c.l.b16 %v7952
    %v9453 = vunpack.c.l.b16 %v7953
    %v9454 = vunpack.c.h.b16 %v7953
    %v9455 = vunpack.c.l.b16 %v7954
    %v9456 = vunpack.c.h.b16 %v7954
    %v9457 = vunpack.c.l.b16 %v7955
    %v9458 = vunpack.c.l.b16 %v7956
    %v9459 = vunpack.c.h.b16 %v7956
    %v9460 = vunpack.c.l.b16 %v7957
    %v9461 = vunpack.c.h.b16 %v7957
    %v9462 = vunpack.c.l.b16 %v7958
    %v9463 = vunpack.c.l.b16 %v7959
    %v9464 = vunpack.c.h.b16 %v7959
    %v9465 = vunpack.c.l.b16 %v7960
    %v9466 = vunpack.c.h.b16 %v7960
    %v9467 = vunpack.c.l.b16 %v7961
    %v9468 = vunpack.c.l.b16 %v7962
    %v9469 = vunpack.c.h.b16 %v7962
    %v9470 = vunpack.c.l.b16 %v7963
    %v9471 = vunpack.c.h.b16 %v7963
    %v9472 = vunpack.c.l.b16 %v7964
    %v9473 = vunpack.c.l.b16 %v7965
    %v9474 = vunpack.c.h.b16 %v7965
    %v9475 = vunpack.c.l.b16 %v7966
    %v9476 = vunpack.c.h.b16 %v7966
    %v9477 = vunpack.c.l.b16 %v7967
    %v9478 = vunpack.c.l.b16 %v7968
    %v9479 = vunpack.c.h.b16 %v7968
    %v9480 = vunpack.c.l.b16 %v7969
    %v9481 = vunpack.c.h.b16 %v7969
    %v9482 = vunpack.c.l.b16 %v7970
    %v9483 = vunpack.c.l.b16 %v7971
    %v9484 = vunpack.c.h.b16 %v7971
    %v9485 = vunpack.c.l.b16 %v7972
    %v9486 = vunpack.c.h.b16 %v7972
    %v9487 = vunpack.c.l.b16 %v7973
    %v9488 = vunpack.c.l.b16 %v7974
    %v9489 = vunpack.c.h.b16 %v7974
    %v9490 = vunpack.c.l.b16 %v7975
    %v9491 = vunpack.c.h.b16 %v7975
    %v9492 = vunpack.c.l.b16 %v7976
    %v9493 = vunpack.c.l.b16 %v7977
    %v9494 = vunpack.c.h.b16 %v7977
    %v9495 = vunpack.c.l.b16 %v7978
    %v9496 = vunpack.c.h.b16 %v7978
    %v9497 = vunpack.c.l.b16 %v7979
    %v9498 = vunpack.c.l.b16 %v7980
    %v9499 = vunpack.c.h.b16 %v7980
    %v9500 = vunpack.c.l.b16 %v7981
    %v9501 = vunpack.c.h.b16 %v7981
    %v9502 = vunpack.c.l.b16 %v7982
    %v9503 = vunpack.c.l.b16 %v7983
    %v9504 = vunpack.c.h.b16 %v7983
    %v9505 = vunpack.c.l.b16 %v7984
    %v9506 = vunpack.c.h.b16 %v7984
    %v9507 = vunpack.c.l.b16 %v7985
    %v9508 = vunpack.c.l.b16 %v7986
    %v9509 = vunpack.c.h.b16 %v7986
    %v9510 = vunpack.c.l.b16 %v7987
    %v9511 = vunpack.c.h.b16 %v7987
    %v9512 = vunpack.c.l.b16 %v7988
    %v9513 = vunpack.c.l.b16 %v7989
    %v9514 = vunpack.c.h.b16 %v7989
    %v9515 = vunpack.c.l.b16 %v7990
    %v9516 = vunpack.c.h.b16 %v7990
    %v9517 = vunpack.c.l.b16 %v7991
    %v9518 = vunpack.c.l.b16 %v7992
    %v9519 = vunpack.c.h.b16 %v7992
    %v9520 = vunpack.c.l.b16 %v7993
    %v9521 = vunpack.c.h.b16 %v7993
    %v9522 = vunpack.c.l.b16 %v7994
    %v9523 = vunpack.c.l.b16 %v7995
    %v9524 = vunpack.c.h.b16 %v7995
    %v9525 = vunpack.c.l.b16 %v7996
    %v9526 = vunpack.c.h.b16 %v7996
    %v9527 = vunpack.c.l.b16 %v7997
    %v9528 = vunpack.c.l.b16 %v7998
    %v9529 = vunpack.c.h.b16 %v7998
    %v9530 = vunpack.c.l.b16 %v7999
    %v9531 = vunpack.c.h.b16 %v7999
    %v9532 = vunpack.c.l.b16 %v8000
    %v9533 = vunpack.c.l.b16 %v8001
    %v9534 = vunpack.c.h.b16 %v8001
    %v9535 = vunpack.c.l.b16 %v8002
    %v9536 = vunpack.c.h.b16 %v8002
    %v9537 = vunpack.c.l.b16 %v8003
    %v9538 = vunpack.c.l.b16 %v8004
    %v9539 = vunpack.c.h.b16 %v8004
    %v9540 = vunpack.c.l.b16 %v8005
    %v9541 = vunpack.c.h.b16 %v8005
    %v9542 = vunpack.c.l.b16 %v8006
    %v9543 = vpack.c.b16 %v8588, %v8583
    %v9544 = vpack.c.b16 %v8589, %v8584
    %v9545 = vpack.c.b16 %v8590, %v8585
    %v9546 = vpack.c.b16 %v8591, %v8586
    %v9547 = vpack.c.b16 %v8592, %v8587
    %v9548 = vpack.c.b16 %v8598, %v8593
    %v9549 = vpack.c.b16 %v8599, %v8594
    %v9550 = vpack.c.b16 %v8600, %v8595
    %v9551 = vpack.c.b16 %v8601, %v8596
    %v9552 = vpack.c.b16 %v8602, %v8597
    %v9553 = vpack.c.b16 %v8608, %v8603
    %v9554 = vpack.c.b16 %v8609, %v8604
    %v9555 = vpack.c.b16 %v8610, %v8605
    %v9556 = vpack.c.b16 %v8611, %v8606
    %v9557 = vpack.c.b16 %v8612, %v8607
    %v9558 = vpack.c.b16 %v8618, %v8613
    %v9559 = vpack.c.b16 %v8619, %v8614
    %v9560 = vpack.c.b16 %v8620, %v8615
    %v9561 = vpack.c.b16 %v8621, %v8616
    %v9562 = vpack.c.b16 %v8622, %v8617
    %v9563 = vpack.c.b16 %v8628, %v8623
    %v9564 = vpack.c.b16 %v8629, %v8624
    %v9565 = vpack.c.b16 %v8630, %v8625
    %v9566 = vpack.c.b16 %v8631, %v8626
    %v9567 = vpack.c.b16 %v8632, %v8627
    %v9568 = vpack.c.b16 %v8638, %v8633
    %v9569 = vpack.c.b16 %v8639, %v8634
    %v9570 = vpack.c.b16 %v8640, %v8635
    %v9571 = vpack.c.b16 %v8641, %v8636
    %v9572 = vpack.c.b16 %v8642, %v8637
    %v9573 = vpack.c.b16 %v8648, %v8643
    %v9574 = vpack.c.b16 %v8649, %v8644
    %v9575 = vpack.c.b16 %v8650, %v8645
    %v9576 = vpack.c.b16 %v8651, %v8646
    %v9577 = vpack.c.b16 %v8652, %v8647
    %v9578 = vpack.c.b16 %v8658, %v8653
    %v9579 = vpack.c.b16 %v8659, %v8654
    %v9580 = vpack.c.b16 %v8660, %v8655
    %v9581 = vpack.c.b16 %v8661, %v8656
    %v9582 = vpack.c.b16 %v8662, %v8657
    %v9583 = vpack.c.b16 %v8668, %v8663
    %v9584 = vpack.c.b16 %v8669, %v8664
    %v9585 = vpack.c.b16 %v8670, %v8665
    %v9586 = vpack.c.b16 %v8671, %v8666
    %v9587 = vpack.c.b16 %v8672, %v8667
    %v9588 = vpack.c.b16 %v8678, %v8673
    %v9589 = vpack.c.b16 %v8679, %v8674
    %v9590 = vpack.c.b16 %v8680, %v8675
    %v9591 = vpack.c.b16 %v8681, %v8676
    %v9592 = vpack.c.b16 %v8682, %v8677
    %v9593 = vpack.c.b16 %v8688, %v8683
    %v9594 = vpack.c.b16 %v8689, %v8684
    %v9595 = vpack.c.b16 %v8690, %v8685
    %v9596 = vpack.c.b16 %v8691, %v8686
    %v9597 = vpack.c.b16 %v8692, %v8687
    %v9598 = vpack.c.b16 %v8698, %v8693
    %v9599 = vpack.c.b16 %v8699, %v8694
    %v9600 = vpack.c.b16 %v8700, %v8695
    %v9601 = vpack.c.b16 %v8701, %v8696
    %v9602 = vpack.c.b16 %v8702, %v8697
    %v9603 = vpack.c.b16 %v8708, %v8703
    %v9604 = vpack.c.b16 %v8709, %v8704
    %v9605 = vpack.c.b16 %v8710, %v8705
    %v9606 = vpack.c.b16 %v8711, %v8706
    %v9607 = vpack.c.b16 %v8712, %v8707
    %v9608 = vpack.c.b16 %v8718, %v8713
    %v9609 = vpack.c.b16 %v8719, %v8714
    %v9610 = vpack.c.b16 %v8720, %v8715
    %v9611 = vpack.c.b16 %v8721, %v8716
    %v9612 = vpack.c.b16 %v8722, %v8717
    %v9613 = vpack.c.b16 %v8728, %v8723
    %v9614 = vpack.c.b16 %v8729, %v8724
    %v9615 = vpack.c.b16 %v8730, %v8725
    %v9616 = vpack.c.b16 %v8731, %v8726
    %v9617 = vpack.c.b16 %v8732, %v8727
    %v9618 = vpack.c.b16 %v8738, %v8733
    %v9619 = vpack.c.b16 %v8739, %v8734
    %v9620 = vpack.c.b16 %v8740, %v8735
    %v9621 = vpack.c.b16 %v8741, %v8736
    %v9622 = vpack.c.b16 %v8742, %v8737
    %v9623 = vpack.c.b16 %v8748, %v8743
    %v9624 = vpack.c.b16 %v8749, %v8744
    %v9625 = vpack.c.b16 %v8750, %v8745
    %v9626 = vpack.c.b16 %v8751, %v8746
    %v9627 = vpack.c.b16 %v8752, %v8747
    %v9628 = vpack.c.b16 %v8758, %v8753
    %v9629 = vpack.c.b16 %v8759, %v8754
    %v9630 = vpack.c.b16 %v8760, %v8755
    %v9631 = vpack.c.b16 %v8761, %v8756
    %v9632 = vpack.c.b16 %v8762, %v8757
    %v9633 = vpack.c.b16 %v8768, %v8763
    %v9634 = vpack.c.b16 %v8769, %v8764
    %v9635 = vpack.c.b16 %v8770, %v8765
    %v9636 = vpack.c.b16 %v8771, %v8766
    %v9637 = vpack.c.b16 %v8772, %v8767
    %v9638 = vpack.c.b16 %v8778, %v8773
    %v9639 = vpack.c.b16 %v8779, %v8774
    %v9640 = vpack.c.b16 %v8780, %v8775
    %v9641 = vpack.c.b16 %v8781, %v8776
    %v9642 = vpack.c.b16 %v8782, %v8777
    %v9643 = vpack.c.b16 %v8788, %v8783
    %v9644 = vpack.c.b16 %v8789, %v8784
    %v9645 = vpack.c.b16 %v8790, %v8785
    %v9646 = vpack.c.b16 %v8791, %v8786
    %v9647 = vpack.c.b16 %v8792, %v8787
    %v9648 = vpack.c.b16 %v8798, %v8793
    %v9649 = vpack.c.b16 %v8799, %v8794
    %v9650 = vpack.c.b16 %v8800, %v8795
    %v9651 = vpack.c.b16 %v8801, %v8796
    %v9652 = vpack.c.b16 %v8802, %v8797
    %v9653 = vpack.c.b16 %v8808, %v8803
    %v9654 = vpack.c.b16 %v8809, %v8804
    %v9655 = vpack.c.b16 %v8810, %v8805
    %v9656 = vpack.c.b16 %v8811, %v8806
    %v9657 = vpack.c.b16 %v8812, %v8807
    %v9658 = vpack.c.b16 %v8818, %v8813
    %v9659 = vpack.c.b16 %v8819, %v8814
    %v9660 = vpack.c.b16 %v8820, %v8815
    %v9661 = vpack.c.b16 %v8821, %v8816
    %v9662 = vpack.c.b16 %v8822, %v8817
    %v9663 = vpack.c.b16 %v8828, %v8823
    %v9664 = vpack.c.b16 %v8829, %v8824
    %v9665 = vpack.c.b16 %v8830, %v8825
    %v9666 = vpack.c.b16 %v8831, %v8826
    %v9667 = vpack.c.b16 %v8832, %v8827
    %v9668 = vpack.c.b16 %v8838, %v8833
    %v9669 = vpack.c.b16 %v8839, %v8834
    %v9670 = vpack.c.b16 %v8840, %v8835
    %v9671 = vpack.c.b16 %v8841, %v8836
    %v9672 = vpack.c.b16 %v8842, %v8837
    %v9673 = vpack.c.b16 %v8848, %v8843
    %v9674 = vpack.c.b16 %v8849, %v8844
    %v9675 = vpack.c.b16 %v8850, %v8845
    %v9676 = vpack.c.b16 %v8851, %v8846
    %v9677 = vpack.c.b16 %v8852, %v8847
    %v9678 = vpack.c.b16 %v8858, %v8853
    %v9679 = vpack.c.b16 %v8859, %v8854
    %v9680 = vpack.c.b16 %v8860, %v8855
    %v9681 = vpack.c.b16 %v8861, %v8856
    %v9682 = vpack.c.b16 %v8862, %v8857
    %v9683 = vpack.c.b16 %v8868, %v8863
    %v9684 = vpack.c.b16 %v8869, %v8864
    %v9685 = vpack.c.b16 %v8870, %v8865
    %v9686 = vpack.c.b16 %v8871, %v8866
    %v9687 = vpack.c.b16 %v8872, %v8867
    %v9688 = vpack.c.b16 %v8878, %v8873
    %v9689 = vpack.c.b16 %v8879, %v8874
    %v9690 = vpack.c.b16 %v8880, %v8875
    %v9691 = vpack.c.b16 %v8881, %v8876
    %v9692 = vpack.c.b16 %v8882, %v8877
    %v9693 = vpack.c.b16 %v8888, %v8883
    %v9694 = vpack.c.b16 %v8889, %v8884
    %v9695 = vpack.c.b16 %v8890, %v8885
    %v9696 = vpack.c.b16 %v8891, %v8886
    %v9697 = vpack.c.b16 %v8892, %v8887
    %v9698 = vpack.c.b16 %v8898, %v8893
    %v9699 = vpack.c.b16 %v8899, %v8894
    %v9700 = vpack.c.b16 %v8900, %v8895
    %v9701 = vpack.c.b16 %v8901, %v8896
    %v9702 = vpack.c.b16 %v8902, %v8897
    %v9703 = vpack.c.b16 %v8908, %v8903
    %v9704 = vpack.c.b16 %v8909, %v8904
    %v9705 = vpack.c.b16 %v8910, %v8905
    %v9706 = vpack.c.b16 %v8911, %v8906
    %v9707 = vpack.c.b16 %v8912, %v8907
    %v9708 = vpack.c.b16 %v8918, %v8913
    %v9709 = vpack.c.b16 %v8919, %v8914
    %v9710 = vpack.c.b16 %v8920, %v8915
    %v9711 = vpack.c.b16 %v8921, %v8916
    %v9712 = vpack.c.b16 %v8922, %v8917
    %v9713 = vpack.c.b16 %v8928, %v8923
    %v9714 = vpack.c.b16 %v8929, %v8924
    %v9715 = vpack.c.b16 %v8930, %v8925
    %v9716 = vpack.c.b16 %v8931, %v8926
    %v9717 = vpack.c.b16 %v8932, %v8927
    %v9718 = vpack.c.b16 %v8938, %v8933
    %v9719 = vpack.c.b16 %v8939, %v8934
    %v9720 = vpack.c.b16 %v8940, %v8935
    %v9721 = vpack.c.b16 %v8941, %v8936
    %v9722 = vpack.c.b16 %v8942, %v8937
    %v9723 = vpack.c.b16 %v8948, %v8943
    %v9724 = vpack.c.b16 %v8949, %v8944
    %v9725 = vpack.c.b16 %v8950, %v8945
    %v9726 = vpack.c.b16 %v8951, %v8946
    %v9727 = vpack.c.b16 %v8952, %v8947
    %v9728 = vpack.c.b16 %v8958, %v8953
    %v9729 = vpack.c.b16 %v8959, %v8954
    %v9730 = vpack.c.b16 %v8960, %v8955
    %v9731 = vpack.c.b16 %v8961, %v8956
    %v9732 = vpack.c.b16 %v8962, %v8957
    %v9733 = vpack.c.b16 %v8968, %v8963
    %v9734 = vpack.c.b16 %v8969, %v8964
    %v9735 = vpack.c.b16 %v8970, %v8965
    %v9736 = vpack.c.b16 %v8971, %v8966
    %v9737 = vpack.c.b16 %v8972, %v8967
    %v9738 = vpack.c.b16 %v8978, %v8973
    %v9739 = vpack.c.b16 %v8979, %v8974
    %v9740 = vpack.c.b16 %v8980, %v8975
    %v9741 = vpack.c.b16 %v8981, %v8976
    %v9742 = vpack.c.b16 %v8982, %v8977
    %v9743 = vpack.c.b16 %v8988, %v8983
    %v9744 = vpack.c.b16 %v8989, %v8984
    %v9745 = vpack.c.b16 %v8990, %v8985
    %v9746 = vpack.c.b16 %v8991, %v8986
    %v9747 = vpack.c.b16 %v8992, %v8987
    %v9748 = vpack.c.b16 %v8998, %v8993
    %v9749 = vpack.c.b16 %v8999, %v8994
    %v9750 = vpack.c.b16 %v9000, %v8995
    %v9751 = vpack.c.b16 %v9001, %v8996
    %v9752 = vpack.c.b16 %v9002, %v8997
    %v9753 = vpack.c.b16 %v9008, %v9003
    %v9754 = vpack.c.b16 %v9009, %v9004
    %v9755 = vpack.c.b16 %v9010, %v9005
    %v9756 = vpack.c.b16 %v9011, %v9006
    %v9757 = vpack.c.b16 %v9012, %v9007
    %v9758 = vpack.c.b16 %v9018, %v9013
    %v9759 = vpack.c.b16 %v9019, %v9014
    %v9760 = vpack.c.b16 %v9020, %v9015
    %v9761 = vpack.c.b16 %v9021, %v9016
    %v9762 = vpack.c.b16 %v9022, %v9017
    %v9763 = vpack.c.b16 %v9028, %v9023
    %v9764 = vpack.c.b16 %v9029, %v9024
    %v9765 = vpack.c.b16 %v9030, %v9025
    %v9766 = vpack.c.b16 %v9031, %v9026
    %v9767 = vpack.c.b16 %v9032, %v9027
    %v9768 = vpack.c.b16 %v9038, %v9033
    %v9769 = vpack.c.b16 %v9039, %v9034
    %v9770 = vpack.c.b16 %v9040, %v9035
    %v9771 = vpack.c.b16 %v9041, %v9036
    %v9772 = vpack.c.b16 %v9042, %v9037
    %v9773 = vpack.c.b16 %v9048, %v9043
    %v9774 = vpack.c.b16 %v9049, %v9044
    %v9775 = vpack.c.b16 %v9050, %v9045
    %v9776 = vpack.c.b16 %v9051, %v9046
    %v9777 = vpack.c.b16 %v9052, %v9047
    %v9778 = vpack.c.b16 %v9058, %v9053
    %v9779 = vpack.c.b16 %v9059, %v9054
    %v9780 = vpack.c.b16 %v9060, %v9055
    %v9781 = vpack.c.b16 %v9061, %v9056
    %v9782 = vpack.c.b16 %v9062, %v9057
    %v9783 = vpack.c.b16 %v9068, %v9063
    %v9784 = vpack.c.b16 %v9069, %v9064
    %v9785 = vpack.c.b16 %v9070, %v9065
    %v9786 = vpack.c.b16 %v9071, %v9066
    %v9787 = vpack.c.b16 %v9072, %v9067
    %v9788 = vpack.c.b16 %v9078, %v9073
    %v9789 = vpack.c.b16 %v9079, %v9074
    %v9790 = vpack.c.b16 %v9080, %v9075
    %v9791 = vpack.c.b16 %v9081, %v9076
    %v9792 = vpack.c.b16 %v9082, %v9077
    %v9793 = vpack.c.b16 %v9088, %v9083
    %v9794 = vpack.c.b16 %v9089, %v9084
    %v9795 = vpack.c.b16 %v9090, %v9085
    %v9796 = vpack.c.b16 %v9091, %v9086
    %v9797 = vpack.c.b16 %v9092, %v9087
    %v9798 = vpack.c.b16 %v9098, %v9093
    %v9799 = vpack.c.b16 %v9099, %v9094
    %v9800 = vpack.c.b16 %v9100, %v9095
    %v9801 = vpack.c.b16 %v9101, %v9096
    %v9802 = vpack.c.b16 %v9102, %v9097
    %v9803 = vpack.c.b16 %v9108, %v9103
    %v9804 = vpack.c.b16 %v9109, %v9104
    %v9805 = vpack.c.b16 %v9110, %v9105
    %v9806 = vpack.c.b16 %v9111, %v9106
    %v9807 = vpack.c.b16 %v9112, %v9107
    %v9808 = vpack.c.b16 %v9118, %v9113
    %v9809 = vpack.c.b16 %v9119, %v9114
    %v9810 = vpack.c.b16 %v9120, %v9115
    %v9811 = vpack.c.b16 %v9121, %v9116
    %v9812 = vpack.c.b16 %v9122, %v9117
    %v9813 = vpack.c.b16 %v9128, %v9123
    %v9814 = vpack.c.b16 %v9129, %v9124
    %v9815 = vpack.c.b16 %v9130, %v9125
    %v9816 = vpack.c.b16 %v9131, %v9126
    %v9817 = vpack.c.b16 %v9132, %v9127
    %v9818 = vpack.c.b16 %v9138, %v9133
    %v9819 = vpack.c.b16 %v9139, %v9134
    %v9820 = vpack.c.b16 %v9140, %v9135
    %v9821 = vpack.c.b16 %v9141, %v9136
    %v9822 = vpack.c.b16 %v9142, %v9137
    %v9823 = vpack.c.b16 %v9148, %v9143
    %v9824 = vpack.c.b16 %v9149, %v9144
    %v9825 = vpack.c.b16 %v9150, %v9145
    %v9826 = vpack.c.b16 %v9151, %v9146
    %v9827 = vpack.c.b16 %v9152, %v9147
    %v9828 = vpack.c.b16 %v9158, %v9153
    %v9829 = vpack.c.b16 %v9159, %v9154
    %v9830 = vpack.c.b16 %v9160, %v9155
    %v9831 = vpack.c.b16 %v9161, %v9156
    %v9832 = vpack.c.b16 %v9162, %v9157
    %v9833 = vpack.c.b16 %v9168, %v9163
    %v9834 = vpack.c.b16 %v9169, %v9164
    %v9835 = vpack.c.b16 %v9170, %v9165
    %v9836 = vpack.c.b16 %v9171, %v9166
    %v9837 = vpack.c.b16 %v9172, %v9167
    %v9838 = vpack.c.b16 %v9178, %v9173
    %v9839 = vpack.c.b16 %v9179, %v9174
    %v9840 = vpack.c.b16 %v9180, %v9175
    %v9841 = vpack.c.b16 %v9181, %v9176
    %v9842 = vpack.c.b16 %v9182, %v9177
    %v9843 = vpack.c.b16 %v9188, %v9183
    %v9844 = vpack.c.b16 %v9189, %v9184
    %v9845 = vpack.c.b16 %v9190, %v9185
    %v9846 = vpack.c.b16 %v9191, %v9186
    %v9847 = vpack.c.b16 %v9192, %v9187
    %v9848 = vpack.c.b16 %v9198, %v9193
    %v9849 = vpack.c.b16 %v9199, %v9194
    %v9850 = vpack.c.b16 %v9200, %v9195
    %v9851 = vpack.c.b16 %v9201, %v9196
    %v9852 = vpack.c.b16 %v9202, %v9197
    %v9853 = vpack.c.b16 %v9208, %v9203
    %v9854 = vpack.c.b16 %v9209, %v9204
    %v9855 = vpack.c.b16 %v9210, %v9205
    %v9856 = vpack.c.b16 %v9211, %v9206
    %v9857 = vpack.c.b16 %v9212, %v9207
    %v9858 = vpack.c.b16 %v9218, %v9213
    %v9859 = vpack.c.b16 %v9219, %v9214
    %v9860 = vpack.c.b16 %v9220, %v9215
    %v9861 = vpack.c.b16 %v9221, %v9216
    %v9862 = vpack.c.b16 %v9222, %v9217
    %v9863 = vpack.c.b16 %v9228, %v9223
    %v9864 = vpack.c.b16 %v9229, %v9224
    %v9865 = vpack.c.b16 %v9230, %v9225
    %v9866 = vpack.c.b16 %v9231, %v9226
    %v9867 = vpack.c.b16 %v9232, %v9227
    %v9868 = vpack.c.b16 %v9238, %v9233
    %v9869 = vpack.c.b16 %v9239, %v9234
    %v9870 = vpack.c.b16 %v9240, %v9235
    %v9871 = vpack.c.b16 %v9241, %v9236
    %v9872 = vpack.c.b16 %v9242, %v9237
    %v9873 = vpack.c.b16 %v9248, %v9243
    %v9874 = vpack.c.b16 %v9249, %v9244
    %v9875 = vpack.c.b16 %v9250, %v9245
    %v9876 = vpack.c.b16 %v9251, %v9246
    %v9877 = vpack.c.b16 %v9252, %v9247
    %v9878 = vpack.c.b16 %v9258, %v9253
    %v9879 = vpack.c.b16 %v9259, %v9254
    %v9880 = vpack.c.b16 %v9260, %v9255
    %v9881 = vpack.c.b16 %v9261, %v9256
    %v9882 = vpack.c.b16 %v9262, %v9257
    %v9883 = vpack.c.b16 %v9268, %v9263
    %v9884 = vpack.c.b16 %v9269, %v9264
    %v9885 = vpack.c.b16 %v9270, %v9265
    %v9886 = vpack.c.b16 %v9271, %v9266
    %v9887 = vpack.c.b16 %v9272, %v9267
    %v9888 = vpack.c.b16 %v9278, %v9273
    %v9889 = vpack.c.b16 %v9279, %v9274
    %v9890 = vpack.c.b16 %v9280, %v9275
    %v9891 = vpack.c.b16 %v9281, %v9276
    %v9892 = vpack.c.b16 %v9282, %v9277
    %v9893 = vpack.c.b16 %v9288, %v9283
    %v9894 = vpack.c.b16 %v9289, %v9284
    %v9895 = vpack.c.b16 %v9290, %v9285
    %v9896 = vpack.c.b16 %v9291, %v9286
    %v9897 = vpack.c.b16 %v9292, %v9287
    %v9898 = vpack.c.b16 %v9298, %v9293
    %v9899 = vpack.c.b16 %v9299, %v9294
    %v9900 = vpack.c.b16 %v9300, %v9295
    %v9901 = vpack.c.b16 %v9301, %v9296
    %v9902 = vpack.c.b16 %v9302, %v9297
    %v9903 = vpack.c.b16 %v9308, %v9303
    %v9904 = vpack.c.b16 %v9309, %v9304
    %v9905 = vpack.c.b16 %v9310, %v9305
    %v9906 = vpack.c.b16 %v9311, %v9306
    %v9907 = vpack.c.b16 %v9312, %v9307
    %v9908 = vpack.c.b16 %v9318, %v9313
    %v9909 = vpack.c.b16 %v9319, %v9314
    %v9910 = vpack.c.b16 %v9320, %v9315
    %v9911 = vpack.c.b16 %v9321, %v9316
    %v9912 = vpack.c.b16 %v9322, %v9317
    %v9913 = vpack.c.b16 %v9328, %v9323
    %v9914 = vpack.c.b16 %v9329, %v9324
    %v9915 = vpack.c.b16 %v9330, %v9325
    %v9916 = vpack.c.b16 %v9331, %v9326
    %v9917 = vpack.c.b16 %v9332, %v9327
    %v9918 = vpack.c.b16 %v9338, %v9333
    %v9919 = vpack.c.b16 %v9339, %v9334
    %v9920 = vpack.c.b16 %v9340, %v9335
    %v9921 = vpack.c.b16 %v9341, %v9336
    %v9922 = vpack.c.b16 %v9342, %v9337
    %v9923 = vpack.c.b16 %v9348, %v9343
    %v9924 = vpack.c.b16 %v9349, %v9344
    %v9925 = vpack.c.b16 %v9350, %v9345
    %v9926 = vpack.c.b16 %v9351, %v9346
    %v9927 = vpack.c.b16 %v9352, %v9347
    %v9928 = vpack.c.b16 %v9358, %v9353
    %v9929 = vpack.c.b16 %v9359, %v9354
    %v9930 = vpack.c.b16 %v9360, %v9355
    %v9931 = vpack.c.b16 %v9361, %v9356
    %v9932 = vpack.c.b16 %v9362, %v9357
    %v9933 = vpack.c.b16 %v9368, %v9363
    %v9934 = vpack.c.b16 %v9369, %v9364
    %v9935 = vpack.c.b16 %v9370, %v9365
    %v9936 = vpack.c.b16 %v9371, %v9366
    %v9937 = vpack.c.b16 %v9372, %v9367
    %v9938 = vpack.c.b16 %v9378, %v9373
    %v9939 = vpack.c.b16 %v9379, %v9374
    %v9940 = vpack.c.b16 %v9380, %v9375
    %v9941 = vpack.c.b16 %v9381, %v9376
    %v9942 = vpack.c.b16 %v9382, %v9377
    %v9943 = vpack.c.b16 %v9388, %v9383
    %v9944 = vpack.c.b16 %v9389, %v9384
    %v9945 = vpack.c.b16 %v9390, %v9385
    %v9946 = vpack.c.b16 %v9391, %v9386
    %v9947 = vpack.c.b16 %v9392, %v9387
    %v9948 = vpack.c.b16 %v9398, %v9393
    %v9949 = vpack.c.b16 %v9399, %v9394
    %v9950 = vpack.c.b16 %v9400, %v9395
    %v9951 = vpack.c.b16 %v9401, %v9396
    %v9952 = vpack.c.b16 %v9402, %v9397
    %v9953 = vpack.c.b16 %v9408, %v9403
    %v9954 = vpack.c.b16 %v9409, %v9404
    %v9955 = vpack.c.b16 %v9410, %v9405
    %v9956 = vpack.c.b16 %v9411, %v9406
    %v9957 = vpack.c.b16 %v9412, %v9407
    %v9958 = vpack.c.b16 %v9418, %v9413
    %v9959 = vpack.c.b16 %v9419, %v9414
    %v9960 = vpack.c.b16 %v9420, %v9415
    %v9961 = vpack.c.b16 %v9421, %v9416
    %v9962 = vpack.c.b16 %v9422, %v9417
    %v9963 = vpack.c.b16 %v9428, %v9423
    %v9964 = vpack.c.b16 %v9429, %v9424
    %v9965 = vpack.c.b16 %v9430, %v9425
    %v9966 = vpack.c.b16 %v9431, %v9426
    %v9967 = vpack.c.b16 %v9432, %v9427
    %v9968 = vpack.c.b16 %v9438, %v9433
    %v9969 = vpack.c.b16 %v9439, %v9434
    %v9970 = vpack.c.b16 %v9440, %v9435
    %v9971 = vpack.c.b16 %v9441, %v9436
    %v9972 = vpack.c.b16 %v9442, %v9437
    %v9973 = vpack.c.b16 %v9448, %v9443
    %v9974 = vpack.c.b16 %v9449, %v9444
    %v9975 = vpack.c.b16 %v9450, %v9445
    %v9976 = vpack.c.b16 %v9451, %v9446
    %v9977 = vpack.c.b16 %v9452, %v9447
    %v9978 = vpack.c.b16 %v9458, %v9453
    %v9979 = vpack.c.b16 %v9459, %v9454
    %v9980 = vpack.c.b16 %v9460, %v9455
    %v9981 = vpack.c.b16 %v9461, %v9456
    %v9982 = vpack.c.b16 %v9462, %v9457
    %v9983 = vpack.c.b16 %v9468, %v9463
    %v9984 = vpack.c.b16 %v9469, %v9464
    %v9985 = vpack.c.b16 %v9470, %v9465
    %v9986 = vpack.c.b16 %v9471, %v9466
    %v9987 = vpack.c.b16 %v9472, %v9467
    %v9988 = vpack.c.b16 %v9478, %v9473
    %v9989 = vpack.c.b16 %v9479, %v9474
    %v9990 = vpack.c.b16 %v9480, %v9475
    %v9991 = vpack.c.b16 %v9481, %v9476
    %v9992 = vpack.c.b16 %v9482, %v9477
    %v9993 = vpack.c.b16 %v9488, %v9483
    %v9994 = vpack.c.b16 %v9489, %v9484
    %v9995 = vpack.c.b16 %v9490, %v9485
    %v9996 = vpack.c.b16 %v9491, %v9486
    %v9997 = vpack.c.b16 %v9492, %v9487
    %v9998 = vpack.c.b16 %v9498, %v9493
    %v9999 = vpack.c.b16 %v9499, %v9494
    %v10000 = vpack.c.b16 %v9500, %v9495
    %v10001 = vpack.c.b16 %v9501, %v9496
    %v10002 = vpack.c.b16 %v9502, %v9497
    %v10003 = vpack.c.b16 %v9508, %v9503
    %v10004 = vpack.c.b16 %v9509, %v9504
    %v10005 = vpack.c.b16 %v9510, %v9505
    %v10006 = vpack.c.b16 %v9511, %v9506
    %v10007 = vpack.c.b16 %v9512, %v9507
    %v10008 = vpack.c.b16 %v9518, %v9513
    %v10009 = vpack.c.b16 %v9519, %v9514
    %v10010 = vpack.c.b16 %v9520, %v9515
    %v10011 = vpack.c.b16 %v9521, %v9516
    %v10012 = vpack.c.b16 %v9522, %v9517
    %v10013 = vpack.c.b16 %v9528, %v9523
    %v10014 = vpack.c.b16 %v9529, %v9524
    %v10015 = vpack.c.b16 %v9530, %v9525
    %v10016 = vpack.c.b16 %v9531, %v9526
    %v10017 = vpack.c.b16 %v9532, %v9527
    %v10018 = vpack.c.b16 %v9538, %v9533
    %v10019 = vpack.c.b16 %v9539, %v9534
    %v10020 = vpack.c.b16 %v9540, %v9535
    %v10021 = vpack.c.b16 %v9541, %v9536
    %v10022 = vpack.c.b16 %v9542, %v9537
    %10503 = vmatpush.bf16.msra.mxu0 %v9578
    %10504 = vmatpush.bf16.msra.mxu0 %v9573
    %10505 = vmatpush.bf16.msra.mxu0 %v9568
    %10506 = vmatpush.bf16.msra.mxu0 %v9563
    %10507 = vmatpush.bf16.msra.mxu0 %v9558
    %10508 = vmatpush.bf16.msra.mxu0 %v9553
    %10509 = vmatpush.bf16.msra.mxu0 %v9548
    %10510 = vmatpush.bf16.msra.mxu0 %v9543
    %10511 = vmatmul.bf16.gmra.mxu0 %v7419
    %v10512 = vpop.f32.mrf.mxu0
    %v10513 = vadd.f32 0.0, %v10512
    %v10514 = vpop.f32.mrf.mxu0
    %v10515 = vadd.f32 0.0, %v10514
    %10516 = vdwg.mxu0
    %10517 = vmatpush.bf16.msra.mxu0 %v9618
    %10518 = vmatpush.bf16.msra.mxu0 %v9613
    %10519 = vmatpush.bf16.msra.mxu0 %v9608
    %10520 = vmatpush.bf16.msra.mxu0 %v9603
    %10521 = vmatpush.bf16.msra.mxu0 %v9598
    %10522 = vmatpush.bf16.msra.mxu0 %v9593
    %10523 = vmatpush.bf16.msra.mxu0 %v9588
    %10524 = vmatpush.bf16.msra.mxu0 %v9583
    %10525 = vmatmul.bf16.gmra.mxu0 %v7420
    %v10526 = vpop.f32.mrf.mxu0
    %v10527 = vadd.f32 %v10513, %v10526
    %v10528 = vpop.f32.mrf.mxu0
    %v10529 = vadd.f32 %v10515, %v10528
    %10530 = vdwg.mxu0
    %10531 = vmatpush.bf16.msra.mxu0 %v9658
    %10532 = vmatpush.bf16.msra.mxu0 %v9653
    %10533 = vmatpush.bf16.msra.mxu0 %v9648
    %10534 = vmatpush.bf16.msra.mxu0 %v9643
    %10535 = vmatpush.bf16.msra.mxu0 %v9638
    %10536 = vmatpush.bf16.msra.mxu0 %v9633
    %10537 = vmatpush.bf16.msra.mxu0 %v9628
    %10538 = vmatpush.bf16.msra.mxu0 %v9623
    %10539 = vmatmul.bf16.gmra.mxu0 %v7421
    %v10540 = vpop.f32.mrf.mxu0
    %v10541 = vadd.f32 %v10527, %v10540
    %v10542 = vpop.f32.mrf.mxu0
    %v10543 = vadd.f32 %v10529, %v10542
    %10544 = vdwg.mxu0
    %10545 = vmatpush.bf16.msra.mxu0 %v9698
    %10546 = vmatpush.bf16.msra.mxu0 %v9693
    %10547 = vmatpush.bf16.msra.mxu0 %v9688
    %10548 = vmatpush.bf16.msra.mxu0 %v9683
    %10549 = vmatpush.bf16.msra.mxu0 %v9678
    %10550 = vmatpush.bf16.msra.mxu0 %v9673
    %10551 = vmatpush.bf16.msra.mxu0 %v9668
    %10552 = vmatpush.bf16.msra.mxu0 %v9663
    %10553 = vmatmul.bf16.gmra.mxu0 %v7422
    %v10554 = vpop.f32.mrf.mxu0
    %v10555 = vadd.f32 %v10541, %v10554
    %v10556 = vpop.f32.mrf.mxu0
    %v10557 = vadd.f32 %v10543, %v10556
    %10558 = vdwg.mxu0
    %10559 = vmatpush.bf16.msra.mxu0 %v9738
    %10560 = vmatpush.bf16.msra.mxu0 %v9733
    %10561 = vmatpush.bf16.msra.mxu0 %v9728
    %10562 = vmatpush.bf16.msra.mxu0 %v9723
    %10563 = vmatpush.bf16.msra.mxu0 %v9718
    %10564 = vmatpush.bf16.msra.mxu0 %v9713
    %10565 = vmatpush.bf16.msra.mxu0 %v9708
    %10566 = vmatpush.bf16.msra.mxu0 %v9703
    %10567 = vmatmul.bf16.gmra.mxu0 %v7423
    %v10568 = vpop.f32.mrf.mxu0
    %v10569 = vadd.f32 %v10555, %v10568
    %v10570 = vpop.f32.mrf.mxu0
    %v10571 = vadd.f32 %v10557, %v10570
    %10572 = vdwg.mxu0
    %10573 = vmatpush.bf16.msra.mxu0 %v9778
    %10574 = vmatpush.bf16.msra.mxu0 %v9773
    %10575 = vmatpush.bf16.msra.mxu0 %v9768
    %10576 = vmatpush.bf16.msra.mxu0 %v9763
    %10577 = vmatpush.bf16.msra.mxu0 %v9758
    %10578 = vmatpush.bf16.msra.mxu0 %v9753
    %10579 = vmatpush.bf16.msra.mxu0 %v9748
    %10580 = vmatpush.bf16.msra.mxu0 %v9743
    %10581 = vmatmul.bf16.gmra.mxu0 %v7424
    %v10582 = vpop.f32.mrf.mxu0
    %v10583 = vadd.f32 %v10569, %v10582
    %v10584 = vpop.f32.mrf.mxu0
    %v10585 = vadd.f32 %v10571, %v10584
    %10586 = vdwg.mxu0
    %10587 = vmatpush.bf16.msra.mxu0 %v9818
    %10588 = vmatpush.bf16.msra.mxu0 %v9813
    %10589 = vmatpush.bf16.msra.mxu0 %v9808
    %10590 = vmatpush.bf16.msra.mxu0 %v9803
    %10591 = vmatpush.bf16.msra.mxu0 %v9798
    %10592 = vmatpush.bf16.msra.mxu0 %v9793
    %10593 = vmatpush.bf16.msra.mxu0 %v9788
    %10594 = vmatpush.bf16.msra.mxu0 %v9783
    %10595 = vmatmul.bf16.gmra.mxu0 %v7425
    %v10596 = vpop.f32.mrf.mxu0
    %v10597 = vadd.f32 %v10583, %v10596
    %v10598 = vpop.f32.mrf.mxu0
    %v10599 = vadd.f32 %v10585, %v10598
    %10600 = vdwg.mxu0
    %10601 = vmatpush.bf16.msra.mxu0 %v9858
    %10602 = vmatpush.bf16.msra.mxu0 %v9853
    %10603 = vmatpush.bf16.msra.mxu0 %v9848
    %10604 = vmatpush.bf16.msra.mxu0 %v9843
    %10605 = vmatpush.bf16.msra.mxu0 %v9838
    %10606 = vmatpush.bf16.msra.mxu0 %v9833
    %10607 = vmatpush.bf16.msra.mxu0 %v9828
    %10608 = vmatpush.bf16.msra.mxu0 %v9823
    %10609 = vmatmul.bf16.gmra.mxu0 %v7426
    %v10610 = vpop.f32.mrf.mxu0
    %v10611 = vadd.f32 %v10597, %v10610
    %v10612 = vpop.f32.mrf.mxu0
    %v10613 = vadd.f32 %v10599, %v10612
    %10614 = vdwg.mxu0
    %10615 = vmatpush.bf16.msra.mxu0 %v9898
    %10616 = vmatpush.bf16.msra.mxu0 %v9893
    %10617 = vmatpush.bf16.msra.mxu0 %v9888
    %10618 = vmatpush.bf16.msra.mxu0 %v9883
    %10619 = vmatpush.bf16.msra.mxu0 %v9878
    %10620 = vmatpush.bf16.msra.mxu0 %v9873
    %10621 = vmatpush.bf16.msra.mxu0 %v9868
    %10622 = vmatpush.bf16.msra.mxu0 %v9863
    %10623 = vmatmul.bf16.gmra.mxu0 %v7427
    %v10624 = vpop.f32.mrf.mxu0
    %v10625 = vadd.f32 %v10611, %v10624
    %v10626 = vpop.f32.mrf.mxu0
    %v10627 = vadd.f32 %v10613, %v10626
    %10628 = vdwg.mxu0
    %10629 = vmatpush.bf16.msra.mxu0 %v9938
    %10630 = vmatpush.bf16.msra.mxu0 %v9933
    %10631 = vmatpush.bf16.msra.mxu0 %v9928
    %10632 = vmatpush.bf16.msra.mxu0 %v9923
    %10633 = vmatpush.bf16.msra.mxu0 %v9918
    %10634 = vmatpush.bf16.msra.mxu0 %v9913
    %10635 = vmatpush.bf16.msra.mxu0 %v9908
    %10636 = vmatpush.bf16.msra.mxu0 %v9903
    %10637 = vmatmul.bf16.gmra.mxu0 %v7428
    %v10638 = vpop.f32.mrf.mxu0
    %v10639 = vadd.f32 %v10625, %v10638
    %v10640 = vpop.f32.mrf.mxu0
    %v10641 = vadd.f32 %v10627, %v10640
    %10642 = vdwg.mxu0
    %10643 = vmatpush.bf16.msra.mxu0 %v9978
    %10644 = vmatpush.bf16.msra.mxu0 %v9973
    %10645 = vmatpush.bf16.msra.mxu0 %v9968
    %10646 = vmatpush.bf16.msra.mxu0 %v9963
    %10647 = vmatpush.bf16.msra.mxu0 %v9958
    %10648 = vmatpush.bf16.msra.mxu0 %v9953
    %10649 = vmatpush.bf16.msra.mxu0 %v9948
    %10650 = vmatpush.bf16.msra.mxu0 %v9943
    %10651 = vmatmul.bf16.gmra.mxu0 %v7429
    %v10652 = vpop.f32.mrf.mxu0
    %v10653 = vadd.f32 %v10639, %v10652
    %v10654 = vpop.f32.mrf.mxu0
    %v10655 = vadd.f32 %v10641, %v10654
    %10656 = vdwg.mxu0
    %10657 = vmatpush.bf16.msra.mxu0 %v10018
    %10658 = vmatpush.bf16.msra.mxu0 %v10013
    %10659 = vmatpush.bf16.msra.mxu0 %v10008
    %10660 = vmatpush.bf16.msra.mxu0 %v10003
    %10661 = vmatpush.bf16.msra.mxu0 %v9998
    %10662 = vmatpush.bf16.msra.mxu0 %v9993
    %10663 = vmatpush.bf16.msra.mxu0 %v9988
    %10664 = vmatpush.bf16.msra.mxu0 %v9983
    %10665 = vmatmul.bf16.gmra.mxu0 %v7430
    %v10666 = vpop.f32.mrf.mxu0
    %v10667 = vadd.f32 %v10653, %v10666
    %v10668 = vpop.f32.mrf.mxu0
    %v10669 = vadd.f32 %v10655, %v10668
    %10670 = vdwg.mxu0
    %10671 = vmatpush.bf16.msra.mxu0 %v9579
    %10672 = vmatpush.bf16.msra.mxu0 %v9574
    %10673 = vmatpush.bf16.msra.mxu0 %v9569
    %10674 = vmatpush.bf16.msra.mxu0 %v9564
    %10675 = vmatpush.bf16.msra.mxu0 %v9559
    %10676 = vmatpush.bf16.msra.mxu0 %v9554
    %10677 = vmatpush.bf16.msra.mxu0 %v9549
    %10678 = vmatpush.bf16.msra.mxu0 %v9544
    %10679 = vmatmul.bf16.gmra.mxu0 %v7419
    %v10680 = vpop.f32.mrf.mxu0
    %v10681 = vadd.f32 0.0, %v10680
    %v10682 = vpop.f32.mrf.mxu0
    %v10683 = vadd.f32 0.0, %v10682
    %10684 = vdwg.mxu0
    %10685 = vmatpush.bf16.msra.mxu0 %v9619
    %10686 = vmatpush.bf16.msra.mxu0 %v9614
    %10687 = vmatpush.bf16.msra.mxu0 %v9609
    %10688 = vmatpush.bf16.msra.mxu0 %v9604
    %10689 = vmatpush.bf16.msra.mxu0 %v9599
    %10690 = vmatpush.bf16.msra.mxu0 %v9594
    %10691 = vmatpush.bf16.msra.mxu0 %v9589
    %10692 = vmatpush.bf16.msra.mxu0 %v9584
    %10693 = vmatmul.bf16.gmra.mxu0 %v7420
    %v10694 = vpop.f32.mrf.mxu0
    %v10695 = vadd.f32 %v10681, %v10694
    %v10696 = vpop.f32.mrf.mxu0
    %v10697 = vadd.f32 %v10683, %v10696
    %10698 = vdwg.mxu0
    %10699 = vmatpush.bf16.msra.mxu0 %v9659
    %10700 = vmatpush.bf16.msra.mxu0 %v9654
    %10701 = vmatpush.bf16.msra.mxu0 %v9649
    %10702 = vmatpush.bf16.msra.mxu0 %v9644
    %10703 = vmatpush.bf16.msra.mxu0 %v9639
    %10704 = vmatpush.bf16.msra.mxu0 %v9634
    %10705 = vmatpush.bf16.msra.mxu0 %v9629
    %10706 = vmatpush.bf16.msra.mxu0 %v9624
    %10707 = vmatmul.bf16.gmra.mxu0 %v7421
    %v10708 = vpop.f32.mrf.mxu0
    %v10709 = vadd.f32 %v10695, %v10708
    %v10710 = vpop.f32.mrf.mxu0
    %v10711 = vadd.f32 %v10697, %v10710
    %10712 = vdwg.mxu0
    %10713 = vmatpush.bf16.msra.mxu0 %v9699
    %10714 = vmatpush.bf16.msra.mxu0 %v9694
    %10715 = vmatpush.bf16.msra.mxu0 %v9689
    %10716 = vmatpush.bf16.msra.mxu0 %v9684
    %10717 = vmatpush.bf16.msra.mxu0 %v9679
    %10718 = vmatpush.bf16.msra.mxu0 %v9674
    %10719 = vmatpush.bf16.msra.mxu0 %v9669
    %10720 = vmatpush.bf16.msra.mxu0 %v9664
    %10721 = vmatmul.bf16.gmra.mxu0 %v7422
    %v10722 = vpop.f32.mrf.mxu0
    %v10723 = vadd.f32 %v10709, %v10722
    %v10724 = vpop.f32.mrf.mxu0
    %v10725 = vadd.f32 %v10711, %v10724
    %10726 = vdwg.mxu0
    %10727 = vmatpush.bf16.msra.mxu0 %v9739
    %10728 = vmatpush.bf16.msra.mxu0 %v9734
    %10729 = vmatpush.bf16.msra.mxu0 %v9729
    %10730 = vmatpush.bf16.msra.mxu0 %v9724
    %10731 = vmatpush.bf16.msra.mxu0 %v9719
    %10732 = vmatpush.bf16.msra.mxu0 %v9714
    %10733 = vmatpush.bf16.msra.mxu0 %v9709
    %10734 = vmatpush.bf16.msra.mxu0 %v9704
    %10735 = vmatmul.bf16.gmra.mxu0 %v7423
    %v10736 = vpop.f32.mrf.mxu0
    %v10737 = vadd.f32 %v10723, %v10736
    %v10738 = vpop.f32.mrf.mxu0
    %v10739 = vadd.f32 %v10725, %v10738
    %10740 = vdwg.mxu0
    %10741 = vmatpush.bf16.msra.mxu0 %v9779
    %10742 = vmatpush.bf16.msra.mxu0 %v9774
    %10743 = vmatpush.bf16.msra.mxu0 %v9769
    %10744 = vmatpush.bf16.msra.mxu0 %v9764
    %10745 = vmatpush.bf16.msra.mxu0 %v9759
    %10746 = vmatpush.bf16.msra.mxu0 %v9754
    %10747 = vmatpush.bf16.msra.mxu0 %v9749
    %10748 = vmatpush.bf16.msra.mxu0 %v9744
    %10749 = vmatmul.bf16.gmra.mxu0 %v7424
    %v10750 = vpop.f32.mrf.mxu0
    %v10751 = vadd.f32 %v10737, %v10750
    %v10752 = vpop.f32.mrf.mxu0
    %v10753 = vadd.f32 %v10739, %v10752
    %10754 = vdwg.mxu0
    %10755 = vmatpush.bf16.msra.mxu0 %v9819
    %10756 = vmatpush.bf16.msra.mxu0 %v9814
    %10757 = vmatpush.bf16.msra.mxu0 %v9809
    %10758 = vmatpush.bf16.msra.mxu0 %v9804
    %10759 = vmatpush.bf16.msra.mxu0 %v9799
    %10760 = vmatpush.bf16.msra.mxu0 %v9794
    %10761 = vmatpush.bf16.msra.mxu0 %v9789
    %10762 = vmatpush.bf16.msra.mxu0 %v9784
    %10763 = vmatmul.bf16.gmra.mxu0 %v7425
    %v10764 = vpop.f32.mrf.mxu0
    %v10765 = vadd.f32 %v10751, %v10764
    %v10766 = vpop.f32.mrf.mxu0
    %v10767 = vadd.f32 %v10753, %v10766
    %10768 = vdwg.mxu0
    %10769 = vmatpush.bf16.msra.mxu0 %v9859
    %10770 = vmatpush.bf16.msra.mxu0 %v9854
    %10771 = vmatpush.bf16.msra.mxu0 %v9849
    %10772 = vmatpush.bf16.msra.mxu0 %v9844
    %10773 = vmatpush.bf16.msra.mxu0 %v9839
    %10774 = vmatpush.bf16.msra.mxu0 %v9834
    %10775 = vmatpush.bf16.msra.mxu0 %v9829
    %10776 = vmatpush.bf16.msra.mxu0 %v9824
    %10777 = vmatmul.bf16.gmra.mxu0 %v7426
    %v10778 = vpop.f32.mrf.mxu0
    %v10779 = vadd.f32 %v10765, %v10778
    %v10780 = vpop.f32.mrf.mxu0
    %v10781 = vadd.f32 %v10767, %v10780
    %10782 = vdwg.mxu0
    %10783 = vmatpush.bf16.msra.mxu0 %v9899
    %10784 = vmatpush.bf16.msra.mxu0 %v9894
    %10785 = vmatpush.bf16.msra.mxu0 %v9889
    %10786 = vmatpush.bf16.msra.mxu0 %v9884
    %10787 = vmatpush.bf16.msra.mxu0 %v9879
    %10788 = vmatpush.bf16.msra.mxu0 %v9874
    %10789 = vmatpush.bf16.msra.mxu0 %v9869
    %10790 = vmatpush.bf16.msra.mxu0 %v9864
    %10791 = vmatmul.bf16.gmra.mxu0 %v7427
    %v10792 = vpop.f32.mrf.mxu0
    %v10793 = vadd.f32 %v10779, %v10792
    %v10794 = vpop.f32.mrf.mxu0
    %v10795 = vadd.f32 %v10781, %v10794
    %10796 = vdwg.mxu0
    %10797 = vmatpush.bf16.msra.mxu0 %v9939
    %10798 = vmatpush.bf16.msra.mxu0 %v9934
    %10799 = vmatpush.bf16.msra.mxu0 %v9929
    %10800 = vmatpush.bf16.msra.mxu0 %v9924
    %10801 = vmatpush.bf16.msra.mxu0 %v9919
    %10802 = vmatpush.bf16.msra.mxu0 %v9914
    %10803 = vmatpush.bf16.msra.mxu0 %v9909
    %10804 = vmatpush.bf16.msra.mxu0 %v9904
    %10805 = vmatmul.bf16.gmra.mxu0 %v7428
    %v10806 = vpop.f32.mrf.mxu0
    %v10807 = vadd.f32 %v10793, %v10806
    %v10808 = vpop.f32.mrf.mxu0
    %v10809 = vadd.f32 %v10795, %v10808
    %10810 = vdwg.mxu0
    %10811 = vmatpush.bf16.msra.mxu0 %v9979
    %10812 = vmatpush.bf16.msra.mxu0 %v9974
    %10813 = vmatpush.bf16.msra.mxu0 %v9969
    %10814 = vmatpush.bf16.msra.mxu0 %v9964
    %10815 = vmatpush.bf16.msra.mxu0 %v9959
    %10816 = vmatpush.bf16.msra.mxu0 %v9954
    %10817 = vmatpush.bf16.msra.mxu0 %v9949
    %10818 = vmatpush.bf16.msra.mxu0 %v9944
    %10819 = vmatmul.bf16.gmra.mxu0 %v7429
    %v10820 = vpop.f32.mrf.mxu0
    %v10821 = vadd.f32 %v10807, %v10820
    %v10822 = vpop.f32.mrf.mxu0
    %v10823 = vadd.f32 %v10809, %v10822
    %10824 = vdwg.mxu0
    %10825 = vmatpush.bf16.msra.mxu0 %v10019
    %10826 = vmatpush.bf16.msra.mxu0 %v10014
    %10827 = vmatpush.bf16.msra.mxu0 %v10009
    %10828 = vmatpush.bf16.msra.mxu0 %v10004
    %10829 = vmatpush.bf16.msra.mxu0 %v9999
    %10830 = vmatpush.bf16.msra.mxu0 %v9994
    %10831 = vmatpush.bf16.msra.mxu0 %v9989
    %10832 = vmatpush.bf16.msra.mxu0 %v9984
    %10833 = vmatmul.bf16.gmra.mxu0 %v7430
    %v10834 = vpop.f32.mrf.mxu0
    %v10835 = vadd.f32 %v10821, %v10834
    %v10836 = vpop.f32.mrf.mxu0
    %v10837 = vadd.f32 %v10823, %v10836
    %10838 = vdwg.mxu0
    %10839 = vmatpush.bf16.msra.mxu0 %v9580
    %10840 = vmatpush.bf16.msra.mxu0 %v9575
    %10841 = vmatpush.bf16.msra.mxu0 %v9570
    %10842 = vmatpush.bf16.msra.mxu0 %v9565
    %10843 = vmatpush.bf16.msra.mxu0 %v9560
    %10844 = vmatpush.bf16.msra.mxu0 %v9555
    %10845 = vmatpush.bf16.msra.mxu0 %v9550
    %10846 = vmatpush.bf16.msra.mxu0 %v9545
    %10847 = vmatmul.bf16.gmra.mxu0 %v7419
    %v10848 = vpop.f32.mrf.mxu0
    %v10849 = vadd.f32 0.0, %v10848
    %v10850 = vpop.f32.mrf.mxu0
    %v10851 = vadd.f32 0.0, %v10850
    %10852 = vdwg.mxu0
    %10853 = vmatpush.bf16.msra.mxu0 %v9620
    %10854 = vmatpush.bf16.msra.mxu0 %v9615
    %10855 = vmatpush.bf16.msra.mxu0 %v9610
    %10856 = vmatpush.bf16.msra.mxu0 %v9605
    %10857 = vmatpush.bf16.msra.mxu0 %v9600
    %10858 = vmatpush.bf16.msra.mxu0 %v9595
    %10859 = vmatpush.bf16.msra.mxu0 %v9590
    %10860 = vmatpush.bf16.msra.mxu0 %v9585
    %10861 = vmatmul.bf16.gmra.mxu0 %v7420
    %v10862 = vpop.f32.mrf.mxu0
    %v10863 = vadd.f32 %v10849, %v10862
    %v10864 = vpop.f32.mrf.mxu0
    %v10865 = vadd.f32 %v10851, %v10864
    %10866 = vdwg.mxu0
    %10867 = vmatpush.bf16.msra.mxu0 %v9660
    %10868 = vmatpush.bf16.msra.mxu0 %v9655
    %10869 = vmatpush.bf16.msra.mxu0 %v9650
    %10870 = vmatpush.bf16.msra.mxu0 %v9645
    %10871 = vmatpush.bf16.msra.mxu0 %v9640
    %10872 = vmatpush.bf16.msra.mxu0 %v9635
    %10873 = vmatpush.bf16.msra.mxu0 %v9630
    %10874 = vmatpush.bf16.msra.mxu0 %v9625
    %10875 = vmatmul.bf16.gmra.mxu0 %v7421
    %v10876 = vpop.f32.mrf.mxu0
    %v10877 = vadd.f32 %v10863, %v10876
    %v10878 = vpop.f32.mrf.mxu0
    %v10879 = vadd.f32 %v10865, %v10878
    %10880 = vdwg.mxu0
    %10881 = vmatpush.bf16.msra.mxu0 %v9700
    %10882 = vmatpush.bf16.msra.mxu0 %v9695
    %10883 = vmatpush.bf16.msra.mxu0 %v9690
    %10884 = vmatpush.bf16.msra.mxu0 %v9685
    %10885 = vmatpush.bf16.msra.mxu0 %v9680
    %10886 = vmatpush.bf16.msra.mxu0 %v9675
    %10887 = vmatpush.bf16.msra.mxu0 %v9670
    %10888 = vmatpush.bf16.msra.mxu0 %v9665
    %10889 = vmatmul.bf16.gmra.mxu0 %v7422
    %v10890 = vpop.f32.mrf.mxu0
    %v10891 = vadd.f32 %v10877, %v10890
    %v10892 = vpop.f32.mrf.mxu0
    %v10893 = vadd.f32 %v10879, %v10892
    %10894 = vdwg.mxu0
    %10895 = vmatpush.bf16.msra.mxu0 %v9740
    %10896 = vmatpush.bf16.msra.mxu0 %v9735
    %10897 = vmatpush.bf16.msra.mxu0 %v9730
    %10898 = vmatpush.bf16.msra.mxu0 %v9725
    %10899 = vmatpush.bf16.msra.mxu0 %v9720
    %10900 = vmatpush.bf16.msra.mxu0 %v9715
    %10901 = vmatpush.bf16.msra.mxu0 %v9710
    %10902 = vmatpush.bf16.msra.mxu0 %v9705
    %10903 = vmatmul.bf16.gmra.mxu0 %v7423
    %v10904 = vpop.f32.mrf.mxu0
    %v10905 = vadd.f32 %v10891, %v10904
    %v10906 = vpop.f32.mrf.mxu0
    %v10907 = vadd.f32 %v10893, %v10906
    %10908 = vdwg.mxu0
    %10909 = vmatpush.bf16.msra.mxu0 %v9780
    %10910 = vmatpush.bf16.msra.mxu0 %v9775
    %10911 = vmatpush.bf16.msra.mxu0 %v9770
    %10912 = vmatpush.bf16.msra.mxu0 %v9765
    %10913 = vmatpush.bf16.msra.mxu0 %v9760
    %10914 = vmatpush.bf16.msra.mxu0 %v9755
    %10915 = vmatpush.bf16.msra.mxu0 %v9750
    %10916 = vmatpush.bf16.msra.mxu0 %v9745
    %10917 = vmatmul.bf16.gmra.mxu0 %v7424
    %v10918 = vpop.f32.mrf.mxu0
    %v10919 = vadd.f32 %v10905, %v10918
    %v10920 = vpop.f32.mrf.mxu0
    %v10921 = vadd.f32 %v10907, %v10920
    %10922 = vdwg.mxu0
    %10923 = vmatpush.bf16.msra.mxu0 %v9820
    %10924 = vmatpush.bf16.msra.mxu0 %v9815
    %10925 = vmatpush.bf16.msra.mxu0 %v9810
    %10926 = vmatpush.bf16.msra.mxu0 %v9805
    %10927 = vmatpush.bf16.msra.mxu0 %v9800
    %10928 = vmatpush.bf16.msra.mxu0 %v9795
    %10929 = vmatpush.bf16.msra.mxu0 %v9790
    %10930 = vmatpush.bf16.msra.mxu0 %v9785
    %10931 = vmatmul.bf16.gmra.mxu0 %v7425
    %v10932 = vpop.f32.mrf.mxu0
    %v10933 = vadd.f32 %v10919, %v10932
    %v10934 = vpop.f32.mrf.mxu0
    %v10935 = vadd.f32 %v10921, %v10934
    %10936 = vdwg.mxu0
    %10937 = vmatpush.bf16.msra.mxu0 %v9860
    %10938 = vmatpush.bf16.msra.mxu0 %v9855
    %10939 = vmatpush.bf16.msra.mxu0 %v9850
    %10940 = vmatpush.bf16.msra.mxu0 %v9845
    %10941 = vmatpush.bf16.msra.mxu0 %v9840
    %10942 = vmatpush.bf16.msra.mxu0 %v9835
    %10943 = vmatpush.bf16.msra.mxu0 %v9830
    %10944 = vmatpush.bf16.msra.mxu0 %v9825
    %10945 = vmatmul.bf16.gmra.mxu0 %v7426
    %v10946 = vpop.f32.mrf.mxu0
    %v10947 = vadd.f32 %v10933, %v10946
    %v10948 = vpop.f32.mrf.mxu0
    %v10949 = vadd.f32 %v10935, %v10948
    %10950 = vdwg.mxu0
    %10951 = vmatpush.bf16.msra.mxu0 %v9900
    %10952 = vmatpush.bf16.msra.mxu0 %v9895
    %10953 = vmatpush.bf16.msra.mxu0 %v9890
    %10954 = vmatpush.bf16.msra.mxu0 %v9885
    %10955 = vmatpush.bf16.msra.mxu0 %v9880
    %10956 = vmatpush.bf16.msra.mxu0 %v9875
    %10957 = vmatpush.bf16.msra.mxu0 %v9870
    %10958 = vmatpush.bf16.msra.mxu0 %v9865
    %10959 = vmatmul.bf16.gmra.mxu0 %v7427
    %v10960 = vpop.f32.mrf.mxu0
    %v10961 = vadd.f32 %v10947, %v10960
    %v10962 = vpop.f32.mrf.mxu0
    %v10963 = vadd.f32 %v10949, %v10962
    %10964 = vdwg.mxu0
    %10965 = vmatpush.bf16.msra.mxu0 %v9940
    %10966 = vmatpush.bf16.msra.mxu0 %v9935
    %10967 = vmatpush.bf16.msra.mxu0 %v9930
    %10968 = vmatpush.bf16.msra.mxu0 %v9925
    %10969 = vmatpush.bf16.msra.mxu0 %v9920
    %10970 = vmatpush.bf16.msra.mxu0 %v9915
    %10971 = vmatpush.bf16.msra.mxu0 %v9910
    %10972 = vmatpush.bf16.msra.mxu0 %v9905
    %10973 = vmatmul.bf16.gmra.mxu0 %v7428
    %v10974 = vpop.f32.mrf.mxu0
    %v10975 = vadd.f32 %v10961, %v10974
    %v10976 = vpop.f32.mrf.mxu0
    %v10977 = vadd.f32 %v10963, %v10976
    %10978 = vdwg.mxu0
    %10979 = vmatpush.bf16.msra.mxu0 %v9980
    %10980 = vmatpush.bf16.msra.mxu0 %v9975
    %10981 = vmatpush.bf16.msra.mxu0 %v9970
    %10982 = vmatpush.bf16.msra.mxu0 %v9965
    %10983 = vmatpush.bf16.msra.mxu0 %v9960
    %10984 = vmatpush.bf16.msra.mxu0 %v9955
    %10985 = vmatpush.bf16.msra.mxu0 %v9950
    %10986 = vmatpush.bf16.msra.mxu0 %v9945
    %10987 = vmatmul.bf16.gmra.mxu0 %v7429
    %v10988 = vpop.f32.mrf.mxu0
    %v10989 = vadd.f32 %v10975, %v10988
    %v10990 = vpop.f32.mrf.mxu0
    %v10991 = vadd.f32 %v10977, %v10990
    %10992 = vdwg.mxu0
    %10993 = vmatpush.bf16.msra.mxu0 %v10020
    %10994 = vmatpush.bf16.msra.mxu0 %v10015
    %10995 = vmatpush.bf16.msra.mxu0 %v10010
    %10996 = vmatpush.bf16.msra.mxu0 %v10005
    %10997 = vmatpush.bf16.msra.mxu0 %v10000
    %10998 = vmatpush.bf16.msra.mxu0 %v9995
    %10999 = vmatpush.bf16.msra.mxu0 %v9990
    %11000 = vmatpush.bf16.msra.mxu0 %v9985
    %11001 = vmatmul.bf16.gmra.mxu0 %v7430
    %v11002 = vpop.f32.mrf.mxu0
    %v11003 = vadd.f32 %v10989, %v11002
    %v11004 = vpop.f32.mrf.mxu0
    %v11005 = vadd.f32 %v10991, %v11004
    %11006 = vdwg.mxu0
    %11007 = vmatpush.bf16.msra.mxu0 %v9581
    %11008 = vmatpush.bf16.msra.mxu0 %v9576
    %11009 = vmatpush.bf16.msra.mxu0 %v9571
    %11010 = vmatpush.bf16.msra.mxu0 %v9566
    %11011 = vmatpush.bf16.msra.mxu0 %v9561
    %11012 = vmatpush.bf16.msra.mxu0 %v9556
    %11013 = vmatpush.bf16.msra.mxu0 %v9551
    %11014 = vmatpush.bf16.msra.mxu0 %v9546
    %11015 = vmatmul.bf16.gmra.mxu0 %v7419
    %v11016 = vpop.f32.mrf.mxu0
    %v11017 = vadd.f32 0.0, %v11016
    %v11018 = vpop.f32.mrf.mxu0
    %v11019 = vadd.f32 0.0, %v11018
    %11020 = vdwg.mxu0
    %11021 = vmatpush.bf16.msra.mxu0 %v9621
    %11022 = vmatpush.bf16.msra.mxu0 %v9616
    %11023 = vmatpush.bf16.msra.mxu0 %v9611
    %11024 = vmatpush.bf16.msra.mxu0 %v9606
    %11025 = vmatpush.bf16.msra.mxu0 %v9601
    %11026 = vmatpush.bf16.msra.mxu0 %v9596
    %11027 = vmatpush.bf16.msra.mxu0 %v9591
    %11028 = vmatpush.bf16.msra.mxu0 %v9586
    %11029 = vmatmul.bf16.gmra.mxu0 %v7420
    %v11030 = vpop.f32.mrf.mxu0
    %v11031 = vadd.f32 %v11017, %v11030
    %v11032 = vpop.f32.mrf.mxu0
    %v11033 = vadd.f32 %v11019, %v11032
    %11034 = vdwg.mxu0
    %11035 = vmatpush.bf16.msra.mxu0 %v9661
    %11036 = vmatpush.bf16.msra.mxu0 %v9656
    %11037 = vmatpush.bf16.msra.mxu0 %v9651
    %11038 = vmatpush.bf16.msra.mxu0 %v9646
    %11039 = vmatpush.bf16.msra.mxu0 %v9641
    %11040 = vmatpush.bf16.msra.mxu0 %v9636
    %11041 = vmatpush.bf16.msra.mxu0 %v9631
    %11042 = vmatpush.bf16.msra.mxu0 %v9626
    %11043 = vmatmul.bf16.gmra.mxu0 %v7421
    %v11044 = vpop.f32.mrf.mxu0
    %v11045 = vadd.f32 %v11031, %v11044
    %v11046 = vpop.f32.mrf.mxu0
    %v11047 = vadd.f32 %v11033, %v11046
    %11048 = vdwg.mxu0
    %11049 = vmatpush.bf16.msra.mxu0 %v9701
    %11050 = vmatpush.bf16.msra.mxu0 %v9696
    %11051 = vmatpush.bf16.msra.mxu0 %v9691
    %11052 = vmatpush.bf16.msra.mxu0 %v9686
    %11053 = vmatpush.bf16.msra.mxu0 %v9681
    %11054 = vmatpush.bf16.msra.mxu0 %v9676
    %11055 = vmatpush.bf16.msra.mxu0 %v9671
    %11056 = vmatpush.bf16.msra.mxu0 %v9666
    %11057 = vmatmul.bf16.gmra.mxu0 %v7422
    %v11058 = vpop.f32.mrf.mxu0
    %v11059 = vadd.f32 %v11045, %v11058
    %v11060 = vpop.f32.mrf.mxu0
    %v11061 = vadd.f32 %v11047, %v11060
    %11062 = vdwg.mxu0
    %11063 = vmatpush.bf16.msra.mxu0 %v9741
    %11064 = vmatpush.bf16.msra.mxu0 %v9736
    %11065 = vmatpush.bf16.msra.mxu0 %v9731
    %11066 = vmatpush.bf16.msra.mxu0 %v9726
    %11067 = vmatpush.bf16.msra.mxu0 %v9721
    %11068 = vmatpush.bf16.msra.mxu0 %v9716
    %11069 = vmatpush.bf16.msra.mxu0 %v9711
    %11070 = vmatpush.bf16.msra.mxu0 %v9706
    %11071 = vmatmul.bf16.gmra.mxu0 %v7423
    %v11072 = vpop.f32.mrf.mxu0
    %v11073 = vadd.f32 %v11059, %v11072
    %v11074 = vpop.f32.mrf.mxu0
    %v11075 = vadd.f32 %v11061, %v11074
    %11076 = vdwg.mxu0
    %11077 = vmatpush.bf16.msra.mxu0 %v9781
    %11078 = vmatpush.bf16.msra.mxu0 %v9776
    %11079 = vmatpush.bf16.msra.mxu0 %v9771
    %11080 = vmatpush.bf16.msra.mxu0 %v9766
    %11081 = vmatpush.bf16.msra.mxu0 %v9761
    %11082 = vmatpush.bf16.msra.mxu0 %v9756
    %11083 = vmatpush.bf16.msra.mxu0 %v9751
    %11084 = vmatpush.bf16.msra.mxu0 %v9746
    %11085 = vmatmul.bf16.gmra.mxu0 %v7424
    %v11086 = vpop.f32.mrf.mxu0
    %v11087 = vadd.f32 %v11073, %v11086
    %v11088 = vpop.f32.mrf.mxu0
    %v11089 = vadd.f32 %v11075, %v11088
    %11090 = vdwg.mxu0
    %11091 = vmatpush.bf16.msra.mxu0 %v9821
    %11092 = vmatpush.bf16.msra.mxu0 %v9816
    %11093 = vmatpush.bf16.msra.mxu0 %v9811
    %11094 = vmatpush.bf16.msra.mxu0 %v9806
    %11095 = vmatpush.bf16.msra.mxu0 %v9801
    %11096 = vmatpush.bf16.msra.mxu0 %v9796
    %11097 = vmatpush.bf16.msra.mxu0 %v9791
    %11098 = vmatpush.bf16.msra.mxu0 %v9786
    %11099 = vmatmul.bf16.gmra.mxu0 %v7425
    %v11100 = vpop.f32.mrf.mxu0
    %v11101 = vadd.f32 %v11087, %v11100
    %v11102 = vpop.f32.mrf.mxu0
    %v11103 = vadd.f32 %v11089, %v11102
    %11104 = vdwg.mxu0
    %11105 = vmatpush.bf16.msra.mxu0 %v9861
    %11106 = vmatpush.bf16.msra.mxu0 %v9856
    %11107 = vmatpush.bf16.msra.mxu0 %v9851
    %11108 = vmatpush.bf16.msra.mxu0 %v9846
    %11109 = vmatpush.bf16.msra.mxu0 %v9841
    %11110 = vmatpush.bf16.msra.mxu0 %v9836
    %11111 = vmatpush.bf16.msra.mxu0 %v9831
    %11112 = vmatpush.bf16.msra.mxu0 %v9826
    %11113 = vmatmul.bf16.gmra.mxu0 %v7426
    %v11114 = vpop.f32.mrf.mxu0
    %v11115 = vadd.f32 %v11101, %v11114
    %v11116 = vpop.f32.mrf.mxu0
    %v11117 = vadd.f32 %v11103, %v11116
    %11118 = vdwg.mxu0
    %11119 = vmatpush.bf16.msra.mxu0 %v9901
    %11120 = vmatpush.bf16.msra.mxu0 %v9896
    %11121 = vmatpush.bf16.msra.mxu0 %v9891
    %11122 = vmatpush.bf16.msra.mxu0 %v9886
    %11123 = vmatpush.bf16.msra.mxu0 %v9881
    %11124 = vmatpush.bf16.msra.mxu0 %v9876
    %11125 = vmatpush.bf16.msra.mxu0 %v9871
    %11126 = vmatpush.bf16.msra.mxu0 %v9866
    %11127 = vmatmul.bf16.gmra.mxu0 %v7427
    %v11128 = vpop.f32.mrf.mxu0
    %v11129 = vadd.f32 %v11115, %v11128
    %v11130 = vpop.f32.mrf.mxu0
    %v11131 = vadd.f32 %v11117, %v11130
    %11132 = vdwg.mxu0
    %11133 = vmatpush.bf16.msra.mxu0 %v9941
    %11134 = vmatpush.bf16.msra.mxu0 %v9936
    %11135 = vmatpush.bf16.msra.mxu0 %v9931
    %11136 = vmatpush.bf16.msra.mxu0 %v9926
    %11137 = vmatpush.bf16.msra.mxu0 %v9921
    %11138 = vmatpush.bf16.msra.mxu0 %v9916
    %11139 = vmatpush.bf16.msra.mxu0 %v9911
    %11140 = vmatpush.bf16.msra.mxu0 %v9906
    %11141 = vmatmul.bf16.gmra.mxu0 %v7428
    %v11142 = vpop.f32.mrf.mxu0
    %v11143 = vadd.f32 %v11129, %v11142
    %v11144 = vpop.f32.mrf.mxu0
    %v11145 = vadd.f32 %v11131, %v11144
    %11146 = vdwg.mxu0
    %11147 = vmatpush.bf16.msra.mxu0 %v9981
    %11148 = vmatpush.bf16.msra.mxu0 %v9976
    %11149 = vmatpush.bf16.msra.mxu0 %v9971
    %11150 = vmatpush.bf16.msra.mxu0 %v9966
    %11151 = vmatpush.bf16.msra.mxu0 %v9961
    %11152 = vmatpush.bf16.msra.mxu0 %v9956
    %11153 = vmatpush.bf16.msra.mxu0 %v9951
    %11154 = vmatpush.bf16.msra.mxu0 %v9946
    %11155 = vmatmul.bf16.gmra.mxu0 %v7429
    %v11156 = vpop.f32.mrf.mxu0
    %v11157 = vadd.f32 %v11143, %v11156
    %v11158 = vpop.f32.mrf.mxu0
    %v11159 = vadd.f32 %v11145, %v11158
    %11160 = vdwg.mxu0
    %11161 = vmatpush.bf16.msra.mxu0 %v10021
    %11162 = vmatpush.bf16.msra.mxu0 %v10016
    %11163 = vmatpush.bf16.msra.mxu0 %v10011
    %11164 = vmatpush.bf16.msra.mxu0 %v10006
    %11165 = vmatpush.bf16.msra.mxu0 %v10001
    %11166 = vmatpush.bf16.msra.mxu0 %v9996
    %11167 = vmatpush.bf16.msra.mxu0 %v9991
    %11168 = vmatpush.bf16.msra.mxu0 %v9986
    %11169 = vmatmul.bf16.gmra.mxu0 %v7430
    %v11170 = vpop.f32.mrf.mxu0
    %v11171 = vadd.f32 %v11157, %v11170
    %v11172 = vpop.f32.mrf.mxu0
    %v11173 = vadd.f32 %v11159, %v11172
    %11174 = vdwg.mxu0
    %11175 = vmatpush.bf16.msra.mxu0 %v9582
    %11176 = vmatpush.bf16.msra.mxu0 %v9577
    %11177 = vmatpush.bf16.msra.mxu0 %v9572
    %11178 = vmatpush.bf16.msra.mxu0 %v9567
    %11179 = vmatpush.bf16.msra.mxu0 %v9562
    %11180 = vmatpush.bf16.msra.mxu0 %v9557
    %11181 = vmatpush.bf16.msra.mxu0 %v9552
    %11182 = vmatpush.bf16.msra.mxu0 %v9547
    %11183 = vmatmul.bf16.gmra.mxu0 %v7419
    %v11184 = vpop.f32.mrf.mxu0
    %v11185 = vadd.f32 0.0, %v11184
    %v11186 = vpop.f32.mrf.mxu0
    %v11187 = vadd.f32 0.0, %v11186
    %11188 = vdwg.mxu0
    %11189 = vmatpush.bf16.msra.mxu0 %v9622
    %11190 = vmatpush.bf16.msra.mxu0 %v9617
    %11191 = vmatpush.bf16.msra.mxu0 %v9612
    %11192 = vmatpush.bf16.msra.mxu0 %v9607
    %11193 = vmatpush.bf16.msra.mxu0 %v9602
    %11194 = vmatpush.bf16.msra.mxu0 %v9597
    %11195 = vmatpush.bf16.msra.mxu0 %v9592
    %11196 = vmatpush.bf16.msra.mxu0 %v9587
    %11197 = vmatmul.bf16.gmra.mxu0 %v7420
    %v11198 = vpop.f32.mrf.mxu0
    %v11199 = vadd.f32 %v11185, %v11198
    %v11200 = vpop.f32.mrf.mxu0
    %v11201 = vadd.f32 %v11187, %v11200
    %11202 = vdwg.mxu0
    %11203 = vmatpush.bf16.msra.mxu0 %v9662
    %11204 = vmatpush.bf16.msra.mxu0 %v9657
    %11205 = vmatpush.bf16.msra.mxu0 %v9652
    %11206 = vmatpush.bf16.msra.mxu0 %v9647
    %11207 = vmatpush.bf16.msra.mxu0 %v9642
    %11208 = vmatpush.bf16.msra.mxu0 %v9637
    %11209 = vmatpush.bf16.msra.mxu0 %v9632
    %11210 = vmatpush.bf16.msra.mxu0 %v9627
    %11211 = vmatmul.bf16.gmra.mxu0 %v7421
    %v11212 = vpop.f32.mrf.mxu0
    %v11213 = vadd.f32 %v11199, %v11212
    %v11214 = vpop.f32.mrf.mxu0
    %v11215 = vadd.f32 %v11201, %v11214
    %11216 = vdwg.mxu0
    %11217 = vmatpush.bf16.msra.mxu0 %v9702
    %11218 = vmatpush.bf16.msra.mxu0 %v9697
    %11219 = vmatpush.bf16.msra.mxu0 %v9692
    %11220 = vmatpush.bf16.msra.mxu0 %v9687
    %11221 = vmatpush.bf16.msra.mxu0 %v9682
    %11222 = vmatpush.bf16.msra.mxu0 %v9677
    %11223 = vmatpush.bf16.msra.mxu0 %v9672
    %11224 = vmatpush.bf16.msra.mxu0 %v9667
    %11225 = vmatmul.bf16.gmra.mxu0 %v7422
    %v11226 = vpop.f32.mrf.mxu0
    %v11227 = vadd.f32 %v11213, %v11226
    %v11228 = vpop.f32.mrf.mxu0
    %v11229 = vadd.f32 %v11215, %v11228
    %11230 = vdwg.mxu0
    %11231 = vmatpush.bf16.msra.mxu0 %v9742
    %11232 = vmatpush.bf16.msra.mxu0 %v9737
    %11233 = vmatpush.bf16.msra.mxu0 %v9732
    %11234 = vmatpush.bf16.msra.mxu0 %v9727
    %11235 = vmatpush.bf16.msra.mxu0 %v9722
    %11236 = vmatpush.bf16.msra.mxu0 %v9717
    %11237 = vmatpush.bf16.msra.mxu0 %v9712
    %11238 = vmatpush.bf16.msra.mxu0 %v9707
    %11239 = vmatmul.bf16.gmra.mxu0 %v7423
    %v11240 = vpop.f32.mrf.mxu0
    %v11241 = vadd.f32 %v11227, %v11240
    %v11242 = vpop.f32.mrf.mxu0
    %v11243 = vadd.f32 %v11229, %v11242
    %11244 = vdwg.mxu0
    %11245 = vmatpush.bf16.msra.mxu0 %v9782
    %11246 = vmatpush.bf16.msra.mxu0 %v9777
    %11247 = vmatpush.bf16.msra.mxu0 %v9772
    %11248 = vmatpush.bf16.msra.mxu0 %v9767
    %11249 = vmatpush.bf16.msra.mxu0 %v9762
    %11250 = vmatpush.bf16.msra.mxu0 %v9757
    %11251 = vmatpush.bf16.msra.mxu0 %v9752
    %11252 = vmatpush.bf16.msra.mxu0 %v9747
    %11253 = vmatmul.bf16.gmra.mxu0 %v7424
    %v11254 = vpop.f32.mrf.mxu0
    %v11255 = vadd.f32 %v11241, %v11254
    %v11256 = vpop.f32.mrf.mxu0
    %v11257 = vadd.f32 %v11243, %v11256
    %11258 = vdwg.mxu0
    %11259 = vmatpush.bf16.msra.mxu0 %v9822
    %11260 = vmatpush.bf16.msra.mxu0 %v9817
    %11261 = vmatpush.bf16.msra.mxu0 %v9812
    %11262 = vmatpush.bf16.msra.mxu0 %v9807
    %11263 = vmatpush.bf16.msra.mxu0 %v9802
    %11264 = vmatpush.bf16.msra.mxu0 %v9797
    %11265 = vmatpush.bf16.msra.mxu0 %v9792
    %11266 = vmatpush.bf16.msra.mxu0 %v9787
    %11267 = vmatmul.bf16.gmra.mxu0 %v7425
    %v11268 = vpop.f32.mrf.mxu0
    %v11269 = vadd.f32 %v11255, %v11268
    %v11270 = vpop.f32.mrf.mxu0
    %v11271 = vadd.f32 %v11257, %v11270
    %11272 = vdwg.mxu0
    %11273 = vmatpush.bf16.msra.mxu0 %v9862
    %11274 = vmatpush.bf16.msra.mxu0 %v9857
    %11275 = vmatpush.bf16.msra.mxu0 %v9852
    %11276 = vmatpush.bf16.msra.mxu0 %v9847
    %11277 = vmatpush.bf16.msra.mxu0 %v9842
    %11278 = vmatpush.bf16.msra.mxu0 %v9837
    %11279 = vmatpush.bf16.msra.mxu0 %v9832
    %11280 = vmatpush.bf16.msra.mxu0 %v9827
    %11281 = vmatmul.bf16.gmra.mxu0 %v7426
    %v11282 = vpop.f32.mrf.mxu0
    %v11283 = vadd.f32 %v11269, %v11282
    %v11284 = vpop.f32.mrf.mxu0
    %v11285 = vadd.f32 %v11271, %v11284
    %11286 = vdwg.mxu0
    %11287 = vmatpush.bf16.msra.mxu0 %v9902
    %11288 = vmatpush.bf16.msra.mxu0 %v9897
    %11289 = vmatpush.bf16.msra.mxu0 %v9892
    %11290 = vmatpush.bf16.msra.mxu0 %v9887
    %11291 = vmatpush.bf16.msra.mxu0 %v9882
    %11292 = vmatpush.bf16.msra.mxu0 %v9877
    %11293 = vmatpush.bf16.msra.mxu0 %v9872
    %11294 = vmatpush.bf16.msra.mxu0 %v9867
    %11295 = vmatmul.bf16.gmra.mxu0 %v7427
    %v11296 = vpop.f32.mrf.mxu0
    %v11297 = vadd.f32 %v11283, %v11296
    %v11298 = vpop.f32.mrf.mxu0
    %v11299 = vadd.f32 %v11285, %v11298
    %11300 = vdwg.mxu0
    %11301 = vmatpush.bf16.msra.mxu0 %v9942
    %11302 = vmatpush.bf16.msra.mxu0 %v9937
    %11303 = vmatpush.bf16.msra.mxu0 %v9932
    %11304 = vmatpush.bf16.msra.mxu0 %v9927
    %11305 = vmatpush.bf16.msra.mxu0 %v9922
    %11306 = vmatpush.bf16.msra.mxu0 %v9917
    %11307 = vmatpush.bf16.msra.mxu0 %v9912
    %11308 = vmatpush.bf16.msra.mxu0 %v9907
    %11309 = vmatmul.bf16.gmra.mxu0 %v7428
    %v11310 = vpop.f32.mrf.mxu0
    %v11311 = vadd.f32 %v11297, %v11310
    %v11312 = vpop.f32.mrf.mxu0
    %v11313 = vadd.f32 %v11299, %v11312
    %11314 = vdwg.mxu0
    %11315 = vmatpush.bf16.msra.mxu0 %v9982
    %11316 = vmatpush.bf16.msra.mxu0 %v9977
    %11317 = vmatpush.bf16.msra.mxu0 %v9972
    %11318 = vmatpush.bf16.msra.mxu0 %v9967
    %11319 = vmatpush.bf16.msra.mxu0 %v9962
    %11320 = vmatpush.bf16.msra.mxu0 %v9957
    %11321 = vmatpush.bf16.msra.mxu0 %v9952
    %11322 = vmatpush.bf16.msra.mxu0 %v9947
    %11323 = vmatmul.bf16.gmra.mxu0 %v7429
    %v11324 = vpop.f32.mrf.mxu0
    %v11325 = vadd.f32 %v11311, %v11324
    %v11326 = vpop.f32.mrf.mxu0
    %v11327 = vadd.f32 %v11313, %v11326
    %11328 = vdwg.mxu0
    %11329 = vmatpush.bf16.msra.mxu0 %v10022
    %11330 = vmatpush.bf16.msra.mxu0 %v10017
    %11331 = vmatpush.bf16.msra.mxu0 %v10012
    %11332 = vmatpush.bf16.msra.mxu0 %v10007
    %11333 = vmatpush.bf16.msra.mxu0 %v10002
    %11334 = vmatpush.bf16.msra.mxu0 %v9997
    %11335 = vmatpush.bf16.msra.mxu0 %v9992
    %11336 = vmatpush.bf16.msra.mxu0 %v9987
    %11337 = vmatmul.bf16.gmra.mxu0 %v7430
    %v11338 = vpop.f32.mrf.mxu0
    %v11339 = vadd.f32 %v11325, %v11338
    %v11340 = vpop.f32.mrf.mxu0
    %v11341 = vadd.f32 %v11327, %v11340
    %11342 = vdwg.mxu0
    %v11343 = vpack.c.bf16 %v10835, %v10667
    %v11344 = vpack.c.bf16 %v11171, %v11003
    %v11345 = vpack.c.bf16 %v11339, %v11339
    %v11346 = vpack.c.bf16 %v10837, %v10669
    %v11347 = vpack.c.bf16 %v11173, %v11005
    %v11348 = vpack.c.bf16 %v11341, %v11341
    %11349 = vst [vmem:[#allocation2] sm:$0xff] %v11343
    %11350 = vst [vmem:[#allocation2 + $0x8] sm:$0xff] %v11344
    %vm11351 = vcmask 519168
    %11352 = vst.msk [vmem:[#allocation2 + $0x10] sm:$0xf] %vm11351, %v11345
    %11353 = vst [vmem:[#allocation2 + $0x14] sm:$0xff] %v11346
    %11354 = vst [vmem:[#allocation2 + $0x1c] sm:$0xff] %v11347
    %11355 = vst.msk [vmem:[#allocation2 + $0x24] sm:$0xf] %vm11351, %v11348
    // Predicated region
    $region14: #{tpu_custom_call.1} parent=1 // pred_check
      _
    $region15: #{tpu_custom_call.1} parent=1 // pred_check_branch
      %11357 = sbr.rel (0) target = $region17
    $region16: #{tpu_custom_call.1} parent=1 // pred_region
      %11359 = vsyncadd [#allocation3], 0
      %s11360 = sshll.u32 [#allocation2], 4
      %s11361 = int_to_ptr.vmem [resolvable:$true] %s11360
      %s11362 = sshll.u32 %s3, 4
      %s11363 = int_to_ptr.hbm [resolvable:$true] %s11362
      %11368 = dma.vmem_to_hbm [thread:$0]  %s11361, 640, %s11363, [#allocation3], 320, 320, 20
    $region17: #{tpu_custom_call.1} parent=1 // pred_fallthru
      _
    // Predicated region
    $region18: #{tpu_custom_call.1} parent=1 // pred_check
      _
    $region19: #{tpu_custom_call.1} parent=1 // pred_check_branch
      %11370 = sbr.rel (0) target = $region21
    $region20: #{tpu_custom_call.1} parent=1 // pred_region
      %11372 = dma.done [#allocation3], 640
    $region21: #{tpu_custom_call.1} parent=1 // pred_fallthru
      _
    %11373 = vsyncpa [#allocation3], 1

</llo_original>
